<compile_context>
chip_gen: v7x
topology: tpu7x:2x2x1
jax: 0.10.0
libtpu: 0.0.40
codegen_flags: <defaults>
</compile_context>

<pallas_src>
import functools

import jax
import jax.numpy as jnp
from jax import lax
from jax.experimental import pallas as pl
from jax.experimental.pallas import tpu as pltpu

# ----------------------------- hyperparameters -----------------------------
N_TIME_SERIES = 4        # n_time_series
FORECAST_HISTORY = 16    # forecast_history (T)
N_EMBD = 12              # position-embedding width
N_HEAD = 4               # n_head
NUM_LAYER = 2            # num_layer
Q_LEN = 4                # q_len (causal conv kernel size for query/key)
SCALE_ATT = True
LIN_LAYERS = (64, 32)    # FE linear head widths
D_MODEL = N_TIME_SERIES + N_EMBD   # per-token width inside the blocks (= 16)
MAX_BLOCK_B = 8          # batch elements per grid step (Bb*T = up to 128 MXU rows)

# Matmul-operand dtype.  jnp.float32 keeps parity with the f32 PyTorch reference; set to
# jnp.bfloat16 on v6e/v7x for MXU-native operands (LayerNorm/softmax/ReLU stay f32).
MM_DTYPE = jnp.float32


def _mm(a, b):
    return jnp.dot(a.astype(MM_DTYPE), b.astype(MM_DTYPE),
                   preferred_element_type=jnp.float32)


def _layer_norm(x, g, b, eps=1e-5):
    mu = jnp.mean(x, axis=-1, keepdims=True)
    var = jnp.mean((x - mu) ** 2, axis=-1, keepdims=True)
    return g * (x - mu) / jnp.sqrt(var + eps) + b


# ----------------------------- Pallas kernel -------------------------------
def fused_fe_kernel(x_ref, mask_ref, po_ref,
                    wqkv_ref, bqkv_ref, wproj_ref, bproj_ref,
                    g1_ref, b1_ref, wfc_ref, bfc_ref, wcp_ref, bcp_ref,
                    g2_ref, b2_ref,
                    w1_ref, bl1_ref, w2_ref, bl2_ref,
                    out_ref, *, n_head, q_len, num_layer, t_len, bb):
    """ConvTransformerFE forward for one batch block (bb elements), fully in VMEM.

    Rows are time-major within the block: row r = t*bb + b  (t in [0,T), b in [0,bb)).
    """
    BT = t_len * bb
    C = x_ref.shape[2]
    E = po_ref.shape[1]
    D = C + E
    H = n_head

    # --- embedding: concat(x, position embedding) along the feature (lane) dim ---
    # x and the pre-tiled position embedding arrive already in time-major row order.
    x = x_ref[0].astype(jnp.float32)                        # (BT, C)
    h = jnp.concatenate([x, po_ref[...]], axis=-1)          # (BT, D)

    mask_bias = mask_ref[...]                               # (BT, BT) block-diag causal
    row_idx = lax.broadcasted_iota(jnp.int32, (BT, 1), 0)   # masks invalid conv taps

    for l in range(num_layer):
        # Causal Conv1d(D -> 3*H*D, kernel=q_len) producing q||k||v as ONE matmul on the
        # unfolded input x_unf[r, k*D + d] = h[r - (q_len-1-k)*bb, d] (zero where t < s).
        # Shifted copies use pltpu.roll (XLU slot) -- no shift-matrix MXU matmuls.
        pieces = []
        for k in range(q_len):
            s = q_len - 1 - k
            if s == 0:
                pieces.append(h)
            else:
                rolled = pltpu.roll(h, shift=s * bb, axis=0)
                pieces.append(jnp.where(row_idx >= s * bb, rolled, 0.0))
        x_unf = jnp.concatenate(pieces, axis=1)              # (BT, q_len*D)
        qkv = _mm(x_unf, wqkv_ref[l]) + bqkv_ref[l]          # (BT, 3*H*D)

        # Multi-head causal attention (1/sqrt(D) already folded into the query columns).
        heads = []
        for hh in range(H):
            q_h = qkv[:, hh * D:(hh + 1) * D]                               # (BT, D)
            k_h = qkv[:, H * D + hh * D:H * D + (hh + 1) * D]               # (BT, D)
            v_h = qkv[:, 2 * H * D + hh * D:2 * H * D + (hh + 1) * D]       # (BT, D)
            s_att = _mm(q_h, k_h.T) + mask_bias              # mask BEFORE max-subtraction
            s_att = s_att - jnp.max(s_att, axis=-1, keepdims=True)
            p = jnp.exp(s_att)
            inv_l = pl.reciprocal(jnp.sum(p, axis=-1, keepdims=True), approx=False)
            heads.append(_mm(p * inv_l, v_h))
        merged = jnp.concatenate(heads, axis=1)              # (BT, H*D) == merge_heads
        attn = _mm(merged, wproj_ref[l]) + bproj_ref[l]      # c_proj -> (BT, D)

        # Block: LayerNorm(x + attn) -> MLP -> LayerNorm(residual)
        ln1 = _layer_norm(h + attn, g1_ref[l], b1_ref[l])
        hid = jnp.maximum(_mm(ln1, wfc_ref[l]) + bfc_ref[l], 0.0)
        mlp = _mm(hid, wcp_ref[l]) + bcp_ref[l]
        h = _layer_norm(ln1 + mlp, g2_ref[l], b2_ref[l])

    # torch.flatten(start_dim=1): feat[b, t*D + d] = h[t*bb + b, d].  In time-major row
    # order the per-t pieces are contiguous sublane slices -> T slices + one lane concat.
    feat = jnp.concatenate([h[t * bb:(t + 1) * bb, :] for t in range(t_len)], axis=1)
    z = jnp.maximum(_mm(feat, w1_ref[...]) + bl1_ref[...], 0.0)
    z = jnp.maximum(_mm(z, w2_ref[...]) + bl2_ref[...], 0.0)
    out_ref[0] = z.astype(out_ref.dtype)                     # lane-dense (bb, 32) store


# ----------------------------- wrapper --------------------------------------
def _pick_block_b(batch):
    """Largest Bb <= MAX_BLOCK_B that still leaves >= 2 grid steps when batch >= 2
    (keeps both v7x TensorCores busy via dimension_semantics=('parallel',))."""
    bb = max(1, min(MAX_BLOCK_B, batch))
    while bb > 1 and -(-batch // bb) < 2:
        bb //= 2
    return bb


def conv_transformer_fe(x, params, block_b=None):
    """ConvTransformerFE forward.  x: [B, T, n_time_series] -> features [B, LIN_LAYERS[-1]]."""
    B, T, C = x.shape
    f_out = params['w2'].shape[1]

    Bb = _pick_block_b(B) if block_b is None else block_b
    G = -(-B // Bb)                      # grid steps (batch blocks)
    B_pad = G * Bb

    # Layout plumbing (tiny host-side ops, outside the kernel): pad the batch and lay
    # each block out time-major: x_tm[g, t*Bb + b, :] = x[g*Bb + b, t, :].
    xp = jnp.pad(x.astype(jnp.float32), ((0, B_pad - B), (0, 0), (0, 0)))
    x_tm = xp.reshape(G, Bb, T, C).transpose(0, 2, 1, 3).reshape(G, T * Bb, C)

    # Constants shared by every grid step (built once host-side; hoisted out of kernel).
    po_tm = jnp.repeat(params['po_embed'].astype(jnp.float32), Bb, axis=0)   # (T*Bb, E)
    r = jnp.arange(T * Bb)
    same_b = (r[:, None] % Bb) == (r[None, :] % Bb)
    causal = (r[None, :] // Bb) <= (r[:, None] // Bb)
    mask = jnp.where(same_b & causal, 0.0, -1e9).astype(jnp.float32)         # block-diag

    weights = [params[k] for k in
               ('wqkv', 'bqkv', 'wproj', 'bproj', 'g1', 'b1',
                'wfc', 'bfc', 'wcp', 'bcp', 'g2', 'b2',
                'w1', 'bl1', 'w2', 'bl2')]

    def const_spec(w):                   # full-block, shared across the batch-block grid
        nd = w.ndim
        return pl.BlockSpec(w.shape, lambda g, _nd=nd: (0,) * _nd)

    kernel = functools.partial(fused_fe_kernel, n_head=N_HEAD, q_len=Q_LEN,
                               num_layer=NUM_LAYER, t_len=T, bb=Bb)

    out = pl.pallas_call(
        kernel,
        grid=(G,),
        in_specs=[pl.BlockSpec((1, T * Bb, C), lambda g: (g, 0, 0)),
                  const_spec(mask), const_spec(po_tm)] +
                 [const_spec(w) for w in weights],
        out_specs=pl.BlockSpec((1, Bb, f_out), lambda g: (g, 0, 0)),
        out_shape=jax.ShapeDtypeStruct((G, Bb, f_out), jnp.float32),
        compiler_params=pltpu.CompilerParams(dimension_semantics=("parallel",)),
    )(x_tm, mask, po_tm, *weights)
    return out.reshape(B_pad, f_out)[:B]


# ----------------------------- parameter init -------------------------------
def init_params(key):
    keys = iter(jax.random.split(key, 64))

    def nrm(shape, std):
        return std * jax.random.normal(next(keys), shape, jnp.float32)

    D, H, T, QL, L = D_MODEL, N_HEAD, FORECAST_HISTORY, Q_LEN, NUM_LAYER
    inv_scale = 1.0 / float(jnp.sqrt(jnp.float32(D)))

    params = {'po_embed': nrm((T, N_EMBD), 0.02)}          # nn.Embedding, std=0.02

    per_block = {k: [] for k in ('wqkv', 'bqkv', 'wproj', 'bproj',
                                 'g1', 'b1', 'wfc', 'bfc', 'wcp', 'bcp', 'g2', 'b2')}
    for _ in range(L):
        # query_key Conv1d weight (q_len, D, 2*H*D) pre-unfolded to (q_len*D, 2*H*D)
        wqk = nrm((QL, D, 2 * H * D), 0.01).reshape(QL * D, 2 * H * D)
        bqk = jnp.zeros((1, 2 * H * D), jnp.float32)
        if SCALE_ATT:
            # fold 1/sqrt(D) into the query half (first H*D output channels) — exact
            scale_vec = jnp.concatenate([jnp.full((H * D,), inv_scale, jnp.float32),
                                         jnp.ones((H * D,), jnp.float32)])
            wqk = wqk * scale_vec[None, :]
            bqk = bqk * scale_vec[None, :]
        # value Linear(D -> H*D) fused into the same matmul: the last D rows of the
        # unfolded input are exactly h (the k = q_len-1 tap), so wv only occupies the
        # last D rows of the value column block.
        wv = nrm((D, H * D), 0.02)
        bv = jnp.zeros((1, H * D), jnp.float32)
        wv_block = jnp.zeros((QL * D, H * D), jnp.float32).at[(QL - 1) * D:, :].set(wv)
        per_block['wqkv'].append(jnp.concatenate([wqk, wv_block], axis=1))
        per_block['bqkv'].append(jnp.concatenate([bqk, bv], axis=1))
        per_block['wproj'].append(nrm((H * D, D), 0.02))   # c_proj pre-reshaped (H*D, D)
        per_block['bproj'].append(jnp.zeros((1, D), jnp.float32))
        per_block['g1'].append(jnp.ones((1, D), jnp.float32))
        per_block['b1'].append(jnp.zeros((1, D), jnp.float32))
        per_block['wfc'].append(nrm((D, 4 * D), 0.02))
        per_block['bfc'].append(jnp.zeros((1, 4 * D), jnp.float32))
        per_block['wcp'].append(nrm((4 * D, D), 0.02))
        per_block['bcp'].append(jnp.zeros((1, D), jnp.float32))
        per_block['g2'].append(jnp.ones((1, D), jnp.float32))
        per_block['b2'].append(jnp.zeros((1, D), jnp.float32))
    params.update({k: jnp.stack(v) for k, v in per_block.items()})   # leading layer dim

    # FE linear head: (D * T) -> 64 -> 32 ; Linear -> Dropout(id) -> ReLU
    sizes = [D * T] + list(LIN_LAYERS)
    params['w1'] = nrm((sizes[0], sizes[1]), 0.01)
    params['bl1'] = jnp.zeros((1, sizes[1]), jnp.float32)
    params['w2'] = nrm((sizes[1], sizes[2]), 0.01)
    params['bl2'] = jnp.zeros((1, sizes[2]), jnp.float32)
    return params


# ----------------------------- main ------------------------------------------
if __name__ == "__main__":
    key = jax.random.PRNGKey(0)
    kx, kp = jax.random.split(key)
    B = 16   # -> Bb=8 per grid step (Bb*T = 128 MXU rows), 2 grid steps for megacore
    x = jax.random.normal(kx, (B, FORECAST_HISTORY, N_TIME_SERIES), jnp.float32)
    params = init_params(kp)

    feats = jax.jit(conv_transformer_fe)(x, params)
    jax.block_until_ready(feats)

    assert feats.shape == (B, LIN_LAYERS[-1])
    assert bool(jnp.all(jnp.isfinite(feats)))
    assert bool(jnp.all(feats >= 0.0))        # final ReLU output is non-negative
    print("KERNEL_OK")
</pallas_src>

<mosaic_0001>
module attributes {stable_mosaic.version = 11 : i64} {
  func.func @fused_fe_kernel(%arg0: i32, %arg1: memref<1x128x4xf32, #tpu.memory_space<vmem>>, %arg2: memref<128x128xf32, #tpu.memory_space<vmem>>, %arg3: memref<128x12xf32, #tpu.memory_space<vmem>>, %arg4: memref<2x64x192xf32, #tpu.memory_space<vmem>>, %arg5: memref<2x1x192xf32, #tpu.memory_space<vmem>>, %arg6: memref<2x64x16xf32, #tpu.memory_space<vmem>>, %arg7: memref<2x1x16xf32, #tpu.memory_space<vmem>>, %arg8: memref<2x1x16xf32, #tpu.memory_space<vmem>>, %arg9: memref<2x1x16xf32, #tpu.memory_space<vmem>>, %arg10: memref<2x16x64xf32, #tpu.memory_space<vmem>>, %arg11: memref<2x1x64xf32, #tpu.memory_space<vmem>>, %arg12: memref<2x64x16xf32, #tpu.memory_space<vmem>>, %arg13: memref<2x1x16xf32, #tpu.memory_space<vmem>>, %arg14: memref<2x1x16xf32, #tpu.memory_space<vmem>>, %arg15: memref<2x1x16xf32, #tpu.memory_space<vmem>>, %arg16: memref<256x64xf32, #tpu.memory_space<vmem>>, %arg17: memref<1x64xf32, #tpu.memory_space<vmem>>, %arg18: memref<64x32xf32, #tpu.memory_space<vmem>>, %arg19: memref<1x32xf32, #tpu.memory_space<vmem>>, %arg20: memref<1x8x32xf32, #tpu.memory_space<vmem>>) attributes {dimension_semantics = [#tpu.dimension_semantics<parallel>], iteration_bounds = array<i64: 2>, scalar_prefetch = 0 : i64, scratch_operands = 0 : i64, tpu.core_type = #tpu.core_type<tc>, window_params = [{transform_indices = @transform_0, window_bounds = array<i64: 1, 128, 4>}, {pipeline_mode = #tpu.pipeline_mode<synchronous>, transform_indices = @transform_1, window_bounds = array<i64: 128, 128>}, {pipeline_mode = #tpu.pipeline_mode<synchronous>, transform_indices = @transform_2, window_bounds = array<i64: 128, 12>}, {pipeline_mode = #tpu.pipeline_mode<synchronous>, transform_indices = @transform_3, window_bounds = array<i64: 2, 64, 192>}, {pipeline_mode = #tpu.pipeline_mode<synchronous>, transform_indices = @transform_4, window_bounds = array<i64: 2, 1, 192>}, {pipeline_mode = #tpu.pipeline_mode<synchronous>, transform_indices = @transform_5, window_bounds = array<i64: 2, 64, 16>}, {pipeline_mode = #tpu.pipeline_mode<synchronous>, transform_indices = @transform_6, window_bounds = array<i64: 2, 1, 16>}, {pipeline_mode = #tpu.pipeline_mode<synchronous>, transform_indices = @transform_7, window_bounds = array<i64: 2, 1, 16>}, {pipeline_mode = #tpu.pipeline_mode<synchronous>, transform_indices = @transform_8, window_bounds = array<i64: 2, 1, 16>}, {pipeline_mode = #tpu.pipeline_mode<synchronous>, transform_indices = @transform_9, window_bounds = array<i64: 2, 16, 64>}, {pipeline_mode = #tpu.pipeline_mode<synchronous>, transform_indices = @transform_10, window_bounds = array<i64: 2, 1, 64>}, {pipeline_mode = #tpu.pipeline_mode<synchronous>, transform_indices = @transform_11, window_bounds = array<i64: 2, 64, 16>}, {pipeline_mode = #tpu.pipeline_mode<synchronous>, transform_indices = @transform_12, window_bounds = array<i64: 2, 1, 16>}, {pipeline_mode = #tpu.pipeline_mode<synchronous>, transform_indices = @transform_13, window_bounds = array<i64: 2, 1, 16>}, {pipeline_mode = #tpu.pipeline_mode<synchronous>, transform_indices = @transform_14, window_bounds = array<i64: 2, 1, 16>}, {pipeline_mode = #tpu.pipeline_mode<synchronous>, transform_indices = @transform_15, window_bounds = array<i64: 256, 64>}, {pipeline_mode = #tpu.pipeline_mode<synchronous>, transform_indices = @transform_16, window_bounds = array<i64: 1, 64>}, {pipeline_mode = #tpu.pipeline_mode<synchronous>, transform_indices = @transform_17, window_bounds = array<i64: 64, 32>}, {pipeline_mode = #tpu.pipeline_mode<synchronous>, transform_indices = @transform_18, window_bounds = array<i64: 1, 32>}, {transform_indices = @transform_19, window_bounds = array<i64: 1, 8, 32>}]} {
    %c0 = arith.constant 0 : index
    %c0_0 = arith.constant 0 : index
    %c0_1 = arith.constant 0 : index
    %0 = vector.load %arg1[%c0, %c0_0, %c0_1] : memref<1x128x4xf32, #tpu.memory_space<vmem>>, vector<1x128x4xf32>
    %1 = vector.shape_cast %0 : vector<1x128x4xf32> to vector<128x4xf32>
    %c0_2 = arith.constant 0 : index
    %c0_3 = arith.constant 0 : index
    %2 = vector.load %arg3[%c0_2, %c0_3] : memref<128x12xf32, #tpu.memory_space<vmem>>, vector<128x12xf32>
    %3 = tpu.concatenate %1, %2 in 1 : vector<128x4xf32>, vector<128x12xf32> -> vector<128x16xf32>
    %c0_4 = arith.constant 0 : index
    %c0_5 = arith.constant 0 : index
    %4 = vector.load %arg2[%c0_4, %c0_5] : memref<128x128xf32, #tpu.memory_space<vmem>>, vector<128x128xf32>
    %5 = tpu.iota {dimensions = array<i32: 0>} : vector<128x1xi32>
    %c24_i32 = arith.constant 24 : i32
    %6 = tpu.dynamic_rotate %3 by %c24_i32 dim 0 : vector<128x16xf32>, i32 -> vector<128x16xf32>
    %c24_i32_6 = arith.constant 24 : i32
    %7 = vector.broadcast %c24_i32_6 : i32 to vector<128x1xi32>
    %8 = arith.cmpi sge, %5, %7 : vector<128x1xi32>
    %cst = arith.constant 0.000000e+00 : f32
    %9 = vector.shape_cast %8 : vector<128x1xi1> to vector<128x1xi1>
    %10 = vector.broadcast %9 : vector<128x1xi1> to vector<128x16xi1>
    %11 = vector.broadcast %cst : f32 to vector<128x16xf32>
    %12 = arith.select %10, %6, %11 : vector<128x16xi1>, vector<128x16xf32>
    %c16_i32 = arith.constant 16 : i32
    %13 = tpu.dynamic_rotate %3 by %c16_i32 dim 0 : vector<128x16xf32>, i32 -> vector<128x16xf32>
    %c16_i32_7 = arith.constant 16 : i32
    %14 = vector.broadcast %c16_i32_7 : i32 to vector<128x1xi32>
    %15 = arith.cmpi sge, %5, %14 : vector<128x1xi32>
    %cst_8 = arith.constant 0.000000e+00 : f32
    %16 = vector.shape_cast %15 : vector<128x1xi1> to vector<128x1xi1>
    %17 = vector.broadcast %16 : vector<128x1xi1> to vector<128x16xi1>
    %18 = vector.broadcast %cst_8 : f32 to vector<128x16xf32>
    %19 = arith.select %17, %13, %18 : vector<128x16xi1>, vector<128x16xf32>
    %c8_i32 = arith.constant 8 : i32
    %20 = tpu.dynamic_rotate %3 by %c8_i32 dim 0 : vector<128x16xf32>, i32 -> vector<128x16xf32>
    %c8_i32_9 = arith.constant 8 : i32
    %21 = vector.broadcast %c8_i32_9 : i32 to vector<128x1xi32>
    %22 = arith.cmpi sge, %5, %21 : vector<128x1xi32>
    %cst_10 = arith.constant 0.000000e+00 : f32
    %23 = vector.shape_cast %22 : vector<128x1xi1> to vector<128x1xi1>
    %24 = vector.broadcast %23 : vector<128x1xi1> to vector<128x16xi1>
    %25 = vector.broadcast %cst_10 : f32 to vector<128x16xf32>
    %26 = arith.select %24, %20, %25 : vector<128x16xi1>, vector<128x16xf32>
    %27 = tpu.concatenate %12, %19, %26, %3 in 1 : vector<128x16xf32>, vector<128x16xf32>, vector<128x16xf32>, vector<128x16xf32> -> vector<128x64xf32>
    %c0_11 = arith.constant 0 : index
    %c0_12 = arith.constant 0 : index
    %c0_13 = arith.constant 0 : index
    %28 = vector.load %arg4[%c0_11, %c0_12, %c0_13] : memref<2x64x192xf32, #tpu.memory_space<vmem>>, vector<1x64x192xf32>
    %29 = vector.shape_cast %28 : vector<1x64x192xf32> to vector<64x192xf32>
    %cst_14 = arith.constant dense<0.000000e+00> : vector<128x192xf32>
    %30 = tpu.matmul %27, %29, %cst_14 {dimension_numbers = #tpu.dot_dimension_numbers<[1], [0], [0], [1], [0, 0, 1, 1], [], []>} : vector<128x64xf32>, vector<64x192xf32>, vector<128x192xf32> -> vector<128x192xf32>
    %c0_15 = arith.constant 0 : index
    %c0_16 = arith.constant 0 : index
    %c0_17 = arith.constant 0 : index
    %31 = vector.load %arg5[%c0_15, %c0_16, %c0_17] : memref<2x1x192xf32, #tpu.memory_space<vmem>>, vector<1x1x192xf32>
    %32 = vector.shape_cast %31 : vector<1x1x192xf32> to vector<1x192xf32>
    %33 = vector.broadcast %32 : vector<1x192xf32> to vector<128x192xf32>
    %34 = arith.addf %30, %33 : vector<128x192xf32>
    %35 = vector.extract_strided_slice %34 {offsets = [0, 0], sizes = [128, 16], strides = [1, 1]} : vector<128x192xf32> to vector<128x16xf32>
    %36 = vector.extract_strided_slice %34 {offsets = [0, 64], sizes = [128, 16], strides = [1, 1]} : vector<128x192xf32> to vector<128x16xf32>
    %37 = vector.extract_strided_slice %34 {offsets = [0, 128], sizes = [128, 16], strides = [1, 1]} : vector<128x192xf32> to vector<128x16xf32>
    %38 = tpu.transpose %36, [1, 0] : vector<128x16xf32> -> vector<16x128xf32>
    %cst_18 = arith.constant dense<0.000000e+00> : vector<128x128xf32>
    %39 = tpu.matmul %35, %38, %cst_18 {dimension_numbers = #tpu.dot_dimension_numbers<[1], [0], [0], [1], [0, 0, 1, 1], [], []>} : vector<128x16xf32>, vector<16x128xf32>, vector<128x128xf32> -> vector<128x128xf32>
    %40 = arith.addf %39, %4 : vector<128x128xf32>
    %cst_19 = arith.constant dense<0xFF800000> : vector<128xf32>
    %41 = vector.multi_reduction <maximumf>, %40, %cst_19 [1] : vector<128x128xf32> to vector<128xf32>
    %42 = vector.shape_cast %41 : vector<128xf32> to vector<128x1xf32>
    %43 = vector.broadcast %42 : vector<128x1xf32> to vector<128x128xf32>
    %44 = arith.subf %40, %43 : vector<128x128xf32>
    %45 = math.exp %44 : vector<128x128xf32>
    %cst_20 = arith.constant dense<0.000000e+00> : vector<128xf32>
    %46 = vector.multi_reduction <add>, %45, %cst_20 [1] : vector<128x128xf32> to vector<128xf32>
    %47 = vector.shape_cast %46 : vector<128xf32> to vector<128x1xf32>
    %48 = tpu.reciprocal %47 : vector<128x1xf32> -> vector<128x1xf32>
    %49 = vector.broadcast %48 : vector<128x1xf32> to vector<128x128xf32>
    %50 = arith.mulf %45, %49 : vector<128x128xf32>
    %cst_21 = arith.constant dense<0.000000e+00> : vector<128x16xf32>
    %51 = tpu.matmul %50, %37, %cst_21 {dimension_numbers = #tpu.dot_dimension_numbers<[1], [0], [0], [1], [0, 0, 1, 1], [], []>} : vector<128x128xf32>, vector<128x16xf32>, vector<128x16xf32> -> vector<128x16xf32>
    %52 = vector.extract_strided_slice %34 {offsets = [0, 16], sizes = [128, 16], strides = [1, 1]} : vector<128x192xf32> to vector<128x16xf32>
    %53 = vector.extract_strided_slice %34 {offsets = [0, 80], sizes = [128, 16], strides = [1, 1]} : vector<128x192xf32> to vector<128x16xf32>
    %54 = vector.extract_strided_slice %34 {offsets = [0, 144], sizes = [128, 16], strides = [1, 1]} : vector<128x192xf32> to vector<128x16xf32>
    %55 = tpu.transpose %53, [1, 0] : vector<128x16xf32> -> vector<16x128xf32>
    %cst_22 = arith.constant dense<0.000000e+00> : vector<128x128xf32>
    %56 = tpu.matmul %52, %55, %cst_22 {dimension_numbers = #tpu.dot_dimension_numbers<[1], [0], [0], [1], [0, 0, 1, 1], [], []>} : vector<128x16xf32>, vector<16x128xf32>, vector<128x128xf32> -> vector<128x128xf32>
    %57 = arith.addf %56, %4 : vector<128x128xf32>
    %cst_23 = arith.constant dense<0xFF800000> : vector<128xf32>
    %58 = vector.multi_reduction <maximumf>, %57, %cst_23 [1] : vector<128x128xf32> to vector<128xf32>
    %59 = vector.shape_cast %58 : vector<128xf32> to vector<128x1xf32>
    %60 = vector.broadcast %59 : vector<128x1xf32> to vector<128x128xf32>
    %61 = arith.subf %57, %60 : vector<128x128xf32>
    %62 = math.exp %61 : vector<128x128xf32>
    %cst_24 = arith.constant dense<0.000000e+00> : vector<128xf32>
    %63 = vector.multi_reduction <add>, %62, %cst_24 [1] : vector<128x128xf32> to vector<128xf32>
    %64 = vector.shape_cast %63 : vector<128xf32> to vector<128x1xf32>
    %65 = tpu.reciprocal %64 : vector<128x1xf32> -> vector<128x1xf32>
    %66 = vector.broadcast %65 : vector<128x1xf32> to vector<128x128xf32>
    %67 = arith.mulf %62, %66 : vector<128x128xf32>
    %cst_25 = arith.constant dense<0.000000e+00> : vector<128x16xf32>
    %68 = tpu.matmul %67, %54, %cst_25 {dimension_numbers = #tpu.dot_dimension_numbers<[1], [0], [0], [1], [0, 0, 1, 1], [], []>} : vector<128x128xf32>, vector<128x16xf32>, vector<128x16xf32> -> vector<128x16xf32>
    %69 = vector.extract_strided_slice %34 {offsets = [0, 32], sizes = [128, 16], strides = [1, 1]} : vector<128x192xf32> to vector<128x16xf32>
    %70 = vector.extract_strided_slice %34 {offsets = [0, 96], sizes = [128, 16], strides = [1, 1]} : vector<128x192xf32> to vector<128x16xf32>
    %71 = vector.extract_strided_slice %34 {offsets = [0, 160], sizes = [128, 16], strides = [1, 1]} : vector<128x192xf32> to vector<128x16xf32>
    %72 = tpu.transpose %70, [1, 0] : vector<128x16xf32> -> vector<16x128xf32>
    %cst_26 = arith.constant dense<0.000000e+00> : vector<128x128xf32>
    %73 = tpu.matmul %69, %72, %cst_26 {dimension_numbers = #tpu.dot_dimension_numbers<[1], [0], [0], [1], [0, 0, 1, 1], [], []>} : vector<128x16xf32>, vector<16x128xf32>, vector<128x128xf32> -> vector<128x128xf32>
    %74 = arith.addf %73, %4 : vector<128x128xf32>
    %cst_27 = arith.constant dense<0xFF800000> : vector<128xf32>
    %75 = vector.multi_reduction <maximumf>, %74, %cst_27 [1] : vector<128x128xf32> to vector<128xf32>
    %76 = vector.shape_cast %75 : vector<128xf32> to vector<128x1xf32>
    %77 = vector.broadcast %76 : vector<128x1xf32> to vector<128x128xf32>
    %78 = arith.subf %74, %77 : vector<128x128xf32>
    %79 = math.exp %78 : vector<128x128xf32>
    %cst_28 = arith.constant dense<0.000000e+00> : vector<128xf32>
    %80 = vector.multi_reduction <add>, %79, %cst_28 [1] : vector<128x128xf32> to vector<128xf32>
    %81 = vector.shape_cast %80 : vector<128xf32> to vector<128x1xf32>
    %82 = tpu.reciprocal %81 : vector<128x1xf32> -> vector<128x1xf32>
    %83 = vector.broadcast %82 : vector<128x1xf32> to vector<128x128xf32>
    %84 = arith.mulf %79, %83 : vector<128x128xf32>
    %cst_29 = arith.constant dense<0.000000e+00> : vector<128x16xf32>
    %85 = tpu.matmul %84, %71, %cst_29 {dimension_numbers = #tpu.dot_dimension_numbers<[1], [0], [0], [1], [0, 0, 1, 1], [], []>} : vector<128x128xf32>, vector<128x16xf32>, vector<128x16xf32> -> vector<128x16xf32>
    %86 = vector.extract_strided_slice %34 {offsets = [0, 48], sizes = [128, 16], strides = [1, 1]} : vector<128x192xf32> to vector<128x16xf32>
    %87 = vector.extract_strided_slice %34 {offsets = [0, 112], sizes = [128, 16], strides = [1, 1]} : vector<128x192xf32> to vector<128x16xf32>
    %88 = vector.extract_strided_slice %34 {offsets = [0, 176], sizes = [128, 16], strides = [1, 1]} : vector<128x192xf32> to vector<128x16xf32>
    %89 = tpu.transpose %87, [1, 0] : vector<128x16xf32> -> vector<16x128xf32>
    %cst_30 = arith.constant dense<0.000000e+00> : vector<128x128xf32>
    %90 = tpu.matmul %86, %89, %cst_30 {dimension_numbers = #tpu.dot_dimension_numbers<[1], [0], [0], [1], [0, 0, 1, 1], [], []>} : vector<128x16xf32>, vector<16x128xf32>, vector<128x128xf32> -> vector<128x128xf32>
    %91 = arith.addf %90, %4 : vector<128x128xf32>
    %cst_31 = arith.constant dense<0xFF800000> : vector<128xf32>
    %92 = vector.multi_reduction <maximumf>, %91, %cst_31 [1] : vector<128x128xf32> to vector<128xf32>
    %93 = vector.shape_cast %92 : vector<128xf32> to vector<128x1xf32>
    %94 = vector.broadcast %93 : vector<128x1xf32> to vector<128x128xf32>
    %95 = arith.subf %91, %94 : vector<128x128xf32>
    %96 = math.exp %95 : vector<128x128xf32>
    %cst_32 = arith.constant dense<0.000000e+00> : vector<128xf32>
    %97 = vector.multi_reduction <add>, %96, %cst_32 [1] : vector<128x128xf32> to vector<128xf32>
    %98 = vector.shape_cast %97 : vector<128xf32> to vector<128x1xf32>
    %99 = tpu.reciprocal %98 : vector<128x1xf32> -> vector<128x1xf32>
    %100 = vector.broadcast %99 : vector<128x1xf32> to vector<128x128xf32>
    %101 = arith.mulf %96, %100 : vector<128x128xf32>
    %cst_33 = arith.constant dense<0.000000e+00> : vector<128x16xf32>
    %102 = tpu.matmul %101, %88, %cst_33 {dimension_numbers = #tpu.dot_dimension_numbers<[1], [0], [0], [1], [0, 0, 1, 1], [], []>} : vector<128x128xf32>, vector<128x16xf32>, vector<128x16xf32> -> vector<128x16xf32>
    %103 = tpu.concatenate %51, %68, %85, %102 in 1 : vector<128x16xf32>, vector<128x16xf32>, vector<128x16xf32>, vector<128x16xf32> -> vector<128x64xf32>
    %c0_34 = arith.constant 0 : index
    %c0_35 = arith.constant 0 : index
    %c0_36 = arith.constant 0 : index
    %104 = vector.load %arg6[%c0_34, %c0_35, %c0_36] : memref<2x64x16xf32, #tpu.memory_space<vmem>>, vector<1x64x16xf32>
    %105 = vector.shape_cast %104 : vector<1x64x16xf32> to vector<64x16xf32>
    %cst_37 = arith.constant dense<0.000000e+00> : vector<128x16xf32>
    %106 = tpu.matmul %103, %105, %cst_37 {dimension_numbers = #tpu.dot_dimension_numbers<[1], [0], [0], [1], [0, 0, 1, 1], [], []>} : vector<128x64xf32>, vector<64x16xf32>, vector<128x16xf32> -> vector<128x16xf32>
    %c0_38 = arith.constant 0 : index
    %c0_39 = arith.constant 0 : index
    %c0_40 = arith.constant 0 : index
    %107 = vector.load %arg7[%c0_38, %c0_39, %c0_40] : memref<2x1x16xf32, #tpu.memory_space<vmem>>, vector<1x1x16xf32>
    %108 = vector.shape_cast %107 : vector<1x1x16xf32> to vector<1x16xf32>
    %109 = vector.broadcast %108 : vector<1x16xf32> to vector<128x16xf32>
    %110 = arith.addf %106, %109 : vector<128x16xf32>
    %111 = arith.addf %3, %110 : vector<128x16xf32>
    %c0_41 = arith.constant 0 : index
    %c0_42 = arith.constant 0 : index
    %c0_43 = arith.constant 0 : index
    %112 = vector.load %arg8[%c0_41, %c0_42, %c0_43] : memref<2x1x16xf32, #tpu.memory_space<vmem>>, vector<1x1x16xf32>
    %113 = vector.shape_cast %112 : vector<1x1x16xf32> to vector<1x16xf32>
    %c0_44 = arith.constant 0 : index
    %c0_45 = arith.constant 0 : index
    %c0_46 = arith.constant 0 : index
    %114 = vector.load %arg9[%c0_44, %c0_45, %c0_46] : memref<2x1x16xf32, #tpu.memory_space<vmem>>, vector<1x1x16xf32>
    %115 = vector.shape_cast %114 : vector<1x1x16xf32> to vector<1x16xf32>
    %cst_47 = arith.constant dense<0.000000e+00> : vector<128xf32>
    %116 = vector.multi_reduction <add>, %111, %cst_47 [1] : vector<128x16xf32> to vector<128xf32>
    %117 = vector.shape_cast %116 : vector<128xf32> to vector<128x1xf32>
    %cst_48 = arith.constant 1.600000e+01 : f32
    %118 = vector.broadcast %cst_48 : f32 to vector<128x1xf32>
    %119 = arith.divf %117, %118 : vector<128x1xf32>
    %120 = vector.broadcast %119 : vector<128x1xf32> to vector<128x16xf32>
    %121 = arith.subf %111, %120 : vector<128x16xf32>
    %122 = arith.mulf %121, %121 : vector<128x16xf32>
    %cst_49 = arith.constant dense<0.000000e+00> : vector<128xf32>
    %123 = vector.multi_reduction <add>, %122, %cst_49 [1] : vector<128x16xf32> to vector<128xf32>
    %124 = vector.shape_cast %123 : vector<128xf32> to vector<128x1xf32>
    %cst_50 = arith.constant 1.600000e+01 : f32
    %125 = vector.broadcast %cst_50 : f32 to vector<128x1xf32>
    %126 = arith.divf %124, %125 : vector<128x1xf32>
    %127 = vector.broadcast %119 : vector<128x1xf32> to vector<128x16xf32>
    %128 = arith.subf %111, %127 : vector<128x16xf32>
    %129 = vector.broadcast %113 : vector<1x16xf32> to vector<128x16xf32>
    %130 = arith.mulf %129, %128 : vector<128x16xf32>
    %cst_51 = arith.constant 9.99999974E-6 : f32
    %131 = vector.broadcast %cst_51 : f32 to vector<128x1xf32>
    %132 = arith.addf %126, %131 : vector<128x1xf32>
    %133 = math.sqrt %132 : vector<128x1xf32>
    %134 = vector.broadcast %133 : vector<128x1xf32> to vector<128x16xf32>
    %135 = arith.divf %130, %134 : vector<128x16xf32>
    %136 = vector.broadcast %115 : vector<1x16xf32> to vector<128x16xf32>
    %137 = arith.addf %135, %136 : vector<128x16xf32>
    %c0_52 = arith.constant 0 : index
    %c0_53 = arith.constant 0 : index
    %c0_54 = arith.constant 0 : index
    %138 = vector.load %arg10[%c0_52, %c0_53, %c0_54] : memref<2x16x64xf32, #tpu.memory_space<vmem>>, vector<1x16x64xf32>
    %139 = vector.shape_cast %138 : vector<1x16x64xf32> to vector<16x64xf32>
    %cst_55 = arith.constant dense<0.000000e+00> : vector<128x64xf32>
    %140 = tpu.matmul %137, %139, %cst_55 {dimension_numbers = #tpu.dot_dimension_numbers<[1], [0], [0], [1], [0, 0, 1, 1], [], []>} : vector<128x16xf32>, vector<16x64xf32>, vector<128x64xf32> -> vector<128x64xf32>
    %c0_56 = arith.constant 0 : index
    %c0_57 = arith.constant 0 : index
    %c0_58 = arith.constant 0 : index
    %141 = vector.load %arg11[%c0_56, %c0_57, %c0_58] : memref<2x1x64xf32, #tpu.memory_space<vmem>>, vector<1x1x64xf32>
    %142 = vector.shape_cast %141 : vector<1x1x64xf32> to vector<1x64xf32>
    %143 = vector.broadcast %142 : vector<1x64xf32> to vector<128x64xf32>
    %144 = arith.addf %140, %143 : vector<128x64xf32>
    %cst_59 = arith.constant 0.000000e+00 : f32
    %145 = vector.broadcast %cst_59 : f32 to vector<128x64xf32>
    %146 = arith.maximumf %144, %145 : vector<128x64xf32>
    %c0_60 = arith.constant 0 : index
    %c0_61 = arith.constant 0 : index
    %c0_62 = arith.constant 0 : index
    %147 = vector.load %arg12[%c0_60, %c0_61, %c0_62] : memref<2x64x16xf32, #tpu.memory_space<vmem>>, vector<1x64x16xf32>
    %148 = vector.shape_cast %147 : vector<1x64x16xf32> to vector<64x16xf32>
    %cst_63 = arith.constant dense<0.000000e+00> : vector<128x16xf32>
    %149 = tpu.matmul %146, %148, %cst_63 {dimension_numbers = #tpu.dot_dimension_numbers<[1], [0], [0], [1], [0, 0, 1, 1], [], []>} : vector<128x64xf32>, vector<64x16xf32>, vector<128x16xf32> -> vector<128x16xf32>
    %c0_64 = arith.constant 0 : index
    %c0_65 = arith.constant 0 : index
    %c0_66 = arith.constant 0 : index
    %150 = vector.load %arg13[%c0_64, %c0_65, %c0_66] : memref<2x1x16xf32, #tpu.memory_space<vmem>>, vector<1x1x16xf32>
    %151 = vector.shape_cast %150 : vector<1x1x16xf32> to vector<1x16xf32>
    %152 = vector.broadcast %151 : vector<1x16xf32> to vector<128x16xf32>
    %153 = arith.addf %149, %152 : vector<128x16xf32>
    %154 = arith.addf %137, %153 : vector<128x16xf32>
    %c0_67 = arith.constant 0 : index
    %c0_68 = arith.constant 0 : index
    %c0_69 = arith.constant 0 : index
    %155 = vector.load %arg14[%c0_67, %c0_68, %c0_69] : memref<2x1x16xf32, #tpu.memory_space<vmem>>, vector<1x1x16xf32>
    %156 = vector.shape_cast %155 : vector<1x1x16xf32> to vector<1x16xf32>
    %c0_70 = arith.constant 0 : index
    %c0_71 = arith.constant 0 : index
    %c0_72 = arith.constant 0 : index
    %157 = vector.load %arg15[%c0_70, %c0_71, %c0_72] : memref<2x1x16xf32, #tpu.memory_space<vmem>>, vector<1x1x16xf32>
    %158 = vector.shape_cast %157 : vector<1x1x16xf32> to vector<1x16xf32>
    %cst_73 = arith.constant dense<0.000000e+00> : vector<128xf32>
    %159 = vector.multi_reduction <add>, %154, %cst_73 [1] : vector<128x16xf32> to vector<128xf32>
    %160 = vector.shape_cast %159 : vector<128xf32> to vector<128x1xf32>
    %cst_74 = arith.constant 1.600000e+01 : f32
    %161 = vector.broadcast %cst_74 : f32 to vector<128x1xf32>
    %162 = arith.divf %160, %161 : vector<128x1xf32>
    %163 = vector.broadcast %162 : vector<128x1xf32> to vector<128x16xf32>
    %164 = arith.subf %154, %163 : vector<128x16xf32>
    %165 = arith.mulf %164, %164 : vector<128x16xf32>
    %cst_75 = arith.constant dense<0.000000e+00> : vector<128xf32>
    %166 = vector.multi_reduction <add>, %165, %cst_75 [1] : vector<128x16xf32> to vector<128xf32>
    %167 = vector.shape_cast %166 : vector<128xf32> to vector<128x1xf32>
    %cst_76 = arith.constant 1.600000e+01 : f32
    %168 = vector.broadcast %cst_76 : f32 to vector<128x1xf32>
    %169 = arith.divf %167, %168 : vector<128x1xf32>
    %170 = vector.broadcast %162 : vector<128x1xf32> to vector<128x16xf32>
    %171 = arith.subf %154, %170 : vector<128x16xf32>
    %172 = vector.broadcast %156 : vector<1x16xf32> to vector<128x16xf32>
    %173 = arith.mulf %172, %171 : vector<128x16xf32>
    %cst_77 = arith.constant 9.99999974E-6 : f32
    %174 = vector.broadcast %cst_77 : f32 to vector<128x1xf32>
    %175 = arith.addf %169, %174 : vector<128x1xf32>
    %176 = math.sqrt %175 : vector<128x1xf32>
    %177 = vector.broadcast %176 : vector<128x1xf32> to vector<128x16xf32>
    %178 = arith.divf %173, %177 : vector<128x16xf32>
    %179 = vector.broadcast %158 : vector<1x16xf32> to vector<128x16xf32>
    %180 = arith.addf %178, %179 : vector<128x16xf32>
    %c24_i32_78 = arith.constant 24 : i32
    %181 = tpu.dynamic_rotate %180 by %c24_i32_78 dim 0 : vector<128x16xf32>, i32 -> vector<128x16xf32>
    %c24_i32_79 = arith.constant 24 : i32
    %182 = vector.broadcast %c24_i32_79 : i32 to vector<128x1xi32>
    %183 = arith.cmpi sge, %5, %182 : vector<128x1xi32>
    %cst_80 = arith.constant 0.000000e+00 : f32
    %184 = vector.shape_cast %183 : vector<128x1xi1> to vector<128x1xi1>
    %185 = vector.broadcast %184 : vector<128x1xi1> to vector<128x16xi1>
    %186 = vector.broadcast %cst_80 : f32 to vector<128x16xf32>
    %187 = arith.select %185, %181, %186 : vector<128x16xi1>, vector<128x16xf32>
    %c16_i32_81 = arith.constant 16 : i32
    %188 = tpu.dynamic_rotate %180 by %c16_i32_81 dim 0 : vector<128x16xf32>, i32 -> vector<128x16xf32>
    %c16_i32_82 = arith.constant 16 : i32
    %189 = vector.broadcast %c16_i32_82 : i32 to vector<128x1xi32>
    %190 = arith.cmpi sge, %5, %189 : vector<128x1xi32>
    %cst_83 = arith.constant 0.000000e+00 : f32
    %191 = vector.shape_cast %190 : vector<128x1xi1> to vector<128x1xi1>
    %192 = vector.broadcast %191 : vector<128x1xi1> to vector<128x16xi1>
    %193 = vector.broadcast %cst_83 : f32 to vector<128x16xf32>
    %194 = arith.select %192, %188, %193 : vector<128x16xi1>, vector<128x16xf32>
    %c8_i32_84 = arith.constant 8 : i32
    %195 = tpu.dynamic_rotate %180 by %c8_i32_84 dim 0 : vector<128x16xf32>, i32 -> vector<128x16xf32>
    %c8_i32_85 = arith.constant 8 : i32
    %196 = vector.broadcast %c8_i32_85 : i32 to vector<128x1xi32>
    %197 = arith.cmpi sge, %5, %196 : vector<128x1xi32>
    %cst_86 = arith.constant 0.000000e+00 : f32
    %198 = vector.shape_cast %197 : vector<128x1xi1> to vector<128x1xi1>
    %199 = vector.broadcast %198 : vector<128x1xi1> to vector<128x16xi1>
    %200 = vector.broadcast %cst_86 : f32 to vector<128x16xf32>
    %201 = arith.select %199, %195, %200 : vector<128x16xi1>, vector<128x16xf32>
    %202 = tpu.concatenate %187, %194, %201, %180 in 1 : vector<128x16xf32>, vector<128x16xf32>, vector<128x16xf32>, vector<128x16xf32> -> vector<128x64xf32>
    %c1 = arith.constant 1 : index
    %c0_87 = arith.constant 0 : index
    %c0_88 = arith.constant 0 : index
    %203 = vector.load %arg4[%c1, %c0_87, %c0_88] : memref<2x64x192xf32, #tpu.memory_space<vmem>>, vector<1x64x192xf32>
    %204 = vector.shape_cast %203 : vector<1x64x192xf32> to vector<64x192xf32>
    %cst_89 = arith.constant dense<0.000000e+00> : vector<128x192xf32>
    %205 = tpu.matmul %202, %204, %cst_89 {dimension_numbers = #tpu.dot_dimension_numbers<[1], [0], [0], [1], [0, 0, 1, 1], [], []>} : vector<128x64xf32>, vector<64x192xf32>, vector<128x192xf32> -> vector<128x192xf32>
    %c1_90 = arith.constant 1 : index
    %c0_91 = arith.constant 0 : index
    %c0_92 = arith.constant 0 : index
    %206 = vector.load %arg5[%c1_90, %c0_91, %c0_92] : memref<2x1x192xf32, #tpu.memory_space<vmem>>, vector<1x1x192xf32>
    %207 = vector.shape_cast %206 : vector<1x1x192xf32> to vector<1x192xf32>
    %208 = vector.broadcast %207 : vector<1x192xf32> to vector<128x192xf32>
    %209 = arith.addf %205, %208 : vector<128x192xf32>
    %210 = vector.extract_strided_slice %209 {offsets = [0, 0], sizes = [128, 16], strides = [1, 1]} : vector<128x192xf32> to vector<128x16xf32>
    %211 = vector.extract_strided_slice %209 {offsets = [0, 64], sizes = [128, 16], strides = [1, 1]} : vector<128x192xf32> to vector<128x16xf32>
    %212 = vector.extract_strided_slice %209 {offsets = [0, 128], sizes = [128, 16], strides = [1, 1]} : vector<128x192xf32> to vector<128x16xf32>
    %213 = tpu.transpose %211, [1, 0] : vector<128x16xf32> -> vector<16x128xf32>
    %cst_93 = arith.constant dense<0.000000e+00> : vector<128x128xf32>
    %214 = tpu.matmul %210, %213, %cst_93 {dimension_numbers = #tpu.dot_dimension_numbers<[1], [0], [0], [1], [0, 0, 1, 1], [], []>} : vector<128x16xf32>, vector<16x128xf32>, vector<128x128xf32> -> vector<128x128xf32>
    %215 = arith.addf %214, %4 : vector<128x128xf32>
    %cst_94 = arith.constant dense<0xFF800000> : vector<128xf32>
    %216 = vector.multi_reduction <maximumf>, %215, %cst_94 [1] : vector<128x128xf32> to vector<128xf32>
    %217 = vector.shape_cast %216 : vector<128xf32> to vector<128x1xf32>
    %218 = vector.broadcast %217 : vector<128x1xf32> to vector<128x128xf32>
    %219 = arith.subf %215, %218 : vector<128x128xf32>
    %220 = math.exp %219 : vector<128x128xf32>
    %cst_95 = arith.constant dense<0.000000e+00> : vector<128xf32>
    %221 = vector.multi_reduction <add>, %220, %cst_95 [1] : vector<128x128xf32> to vector<128xf32>
    %222 = vector.shape_cast %221 : vector<128xf32> to vector<128x1xf32>
    %223 = tpu.reciprocal %222 : vector<128x1xf32> -> vector<128x1xf32>
    %224 = vector.broadcast %223 : vector<128x1xf32> to vector<128x128xf32>
    %225 = arith.mulf %220, %224 : vector<128x128xf32>
    %cst_96 = arith.constant dense<0.000000e+00> : vector<128x16xf32>
    %226 = tpu.matmul %225, %212, %cst_96 {dimension_numbers = #tpu.dot_dimension_numbers<[1], [0], [0], [1], [0, 0, 1, 1], [], []>} : vector<128x128xf32>, vector<128x16xf32>, vector<128x16xf32> -> vector<128x16xf32>
    %227 = vector.extract_strided_slice %209 {offsets = [0, 16], sizes = [128, 16], strides = [1, 1]} : vector<128x192xf32> to vector<128x16xf32>
    %228 = vector.extract_strided_slice %209 {offsets = [0, 80], sizes = [128, 16], strides = [1, 1]} : vector<128x192xf32> to vector<128x16xf32>
    %229 = vector.extract_strided_slice %209 {offsets = [0, 144], sizes = [128, 16], strides = [1, 1]} : vector<128x192xf32> to vector<128x16xf32>
    %230 = tpu.transpose %228, [1, 0] : vector<128x16xf32> -> vector<16x128xf32>
    %cst_97 = arith.constant dense<0.000000e+00> : vector<128x128xf32>
    %231 = tpu.matmul %227, %230, %cst_97 {dimension_numbers = #tpu.dot_dimension_numbers<[1], [0], [0], [1], [0, 0, 1, 1], [], []>} : vector<128x16xf32>, vector<16x128xf32>, vector<128x128xf32> -> vector<128x128xf32>
    %232 = arith.addf %231, %4 : vector<128x128xf32>
    %cst_98 = arith.constant dense<0xFF800000> : vector<128xf32>
    %233 = vector.multi_reduction <maximumf>, %232, %cst_98 [1] : vector<128x128xf32> to vector<128xf32>
    %234 = vector.shape_cast %233 : vector<128xf32> to vector<128x1xf32>
    %235 = vector.broadcast %234 : vector<128x1xf32> to vector<128x128xf32>
    %236 = arith.subf %232, %235 : vector<128x128xf32>
    %237 = math.exp %236 : vector<128x128xf32>
    %cst_99 = arith.constant dense<0.000000e+00> : vector<128xf32>
    %238 = vector.multi_reduction <add>, %237, %cst_99 [1] : vector<128x128xf32> to vector<128xf32>
    %239 = vector.shape_cast %238 : vector<128xf32> to vector<128x1xf32>
    %240 = tpu.reciprocal %239 : vector<128x1xf32> -> vector<128x1xf32>
    %241 = vector.broadcast %240 : vector<128x1xf32> to vector<128x128xf32>
    %242 = arith.mulf %237, %241 : vector<128x128xf32>
    %cst_100 = arith.constant dense<0.000000e+00> : vector<128x16xf32>
    %243 = tpu.matmul %242, %229, %cst_100 {dimension_numbers = #tpu.dot_dimension_numbers<[1], [0], [0], [1], [0, 0, 1, 1], [], []>} : vector<128x128xf32>, vector<128x16xf32>, vector<128x16xf32> -> vector<128x16xf32>
    %244 = vector.extract_strided_slice %209 {offsets = [0, 32], sizes = [128, 16], strides = [1, 1]} : vector<128x192xf32> to vector<128x16xf32>
    %245 = vector.extract_strided_slice %209 {offsets = [0, 96], sizes = [128, 16], strides = [1, 1]} : vector<128x192xf32> to vector<128x16xf32>
    %246 = vector.extract_strided_slice %209 {offsets = [0, 160], sizes = [128, 16], strides = [1, 1]} : vector<128x192xf32> to vector<128x16xf32>
    %247 = tpu.transpose %245, [1, 0] : vector<128x16xf32> -> vector<16x128xf32>
    %cst_101 = arith.constant dense<0.000000e+00> : vector<128x128xf32>
    %248 = tpu.matmul %244, %247, %cst_101 {dimension_numbers = #tpu.dot_dimension_numbers<[1], [0], [0], [1], [0, 0, 1, 1], [], []>} : vector<128x16xf32>, vector<16x128xf32>, vector<128x128xf32> -> vector<128x128xf32>
    %249 = arith.addf %248, %4 : vector<128x128xf32>
    %cst_102 = arith.constant dense<0xFF800000> : vector<128xf32>
    %250 = vector.multi_reduction <maximumf>, %249, %cst_102 [1] : vector<128x128xf32> to vector<128xf32>
    %251 = vector.shape_cast %250 : vector<128xf32> to vector<128x1xf32>
    %252 = vector.broadcast %251 : vector<128x1xf32> to vector<128x128xf32>
    %253 = arith.subf %249, %252 : vector<128x128xf32>
    %254 = math.exp %253 : vector<128x128xf32>
    %cst_103 = arith.constant dense<0.000000e+00> : vector<128xf32>
    %255 = vector.multi_reduction <add>, %254, %cst_103 [1] : vector<128x128xf32> to vector<128xf32>
    %256 = vector.shape_cast %255 : vector<128xf32> to vector<128x1xf32>
    %257 = tpu.reciprocal %256 : vector<128x1xf32> -> vector<128x1xf32>
    %258 = vector.broadcast %257 : vector<128x1xf32> to vector<128x128xf32>
    %259 = arith.mulf %254, %258 : vector<128x128xf32>
    %cst_104 = arith.constant dense<0.000000e+00> : vector<128x16xf32>
    %260 = tpu.matmul %259, %246, %cst_104 {dimension_numbers = #tpu.dot_dimension_numbers<[1], [0], [0], [1], [0, 0, 1, 1], [], []>} : vector<128x128xf32>, vector<128x16xf32>, vector<128x16xf32> -> vector<128x16xf32>
    %261 = vector.extract_strided_slice %209 {offsets = [0, 48], sizes = [128, 16], strides = [1, 1]} : vector<128x192xf32> to vector<128x16xf32>
    %262 = vector.extract_strided_slice %209 {offsets = [0, 112], sizes = [128, 16], strides = [1, 1]} : vector<128x192xf32> to vector<128x16xf32>
    %263 = vector.extract_strided_slice %209 {offsets = [0, 176], sizes = [128, 16], strides = [1, 1]} : vector<128x192xf32> to vector<128x16xf32>
    %264 = tpu.transpose %262, [1, 0] : vector<128x16xf32> -> vector<16x128xf32>
    %cst_105 = arith.constant dense<0.000000e+00> : vector<128x128xf32>
    %265 = tpu.matmul %261, %264, %cst_105 {dimension_numbers = #tpu.dot_dimension_numbers<[1], [0], [0], [1], [0, 0, 1, 1], [], []>} : vector<128x16xf32>, vector<16x128xf32>, vector<128x128xf32> -> vector<128x128xf32>
    %266 = arith.addf %265, %4 : vector<128x128xf32>
    %cst_106 = arith.constant dense<0xFF800000> : vector<128xf32>
    %267 = vector.multi_reduction <maximumf>, %266, %cst_106 [1] : vector<128x128xf32> to vector<128xf32>
    %268 = vector.shape_cast %267 : vector<128xf32> to vector<128x1xf32>
    %269 = vector.broadcast %268 : vector<128x1xf32> to vector<128x128xf32>
    %270 = arith.subf %266, %269 : vector<128x128xf32>
    %271 = math.exp %270 : vector<128x128xf32>
    %cst_107 = arith.constant dense<0.000000e+00> : vector<128xf32>
    %272 = vector.multi_reduction <add>, %271, %cst_107 [1] : vector<128x128xf32> to vector<128xf32>
    %273 = vector.shape_cast %272 : vector<128xf32> to vector<128x1xf32>
    %274 = tpu.reciprocal %273 : vector<128x1xf32> -> vector<128x1xf32>
    %275 = vector.broadcast %274 : vector<128x1xf32> to vector<128x128xf32>
    %276 = arith.mulf %271, %275 : vector<128x128xf32>
    %cst_108 = arith.constant dense<0.000000e+00> : vector<128x16xf32>
    %277 = tpu.matmul %276, %263, %cst_108 {dimension_numbers = #tpu.dot_dimension_numbers<[1], [0], [0], [1], [0, 0, 1, 1], [], []>} : vector<128x128xf32>, vector<128x16xf32>, vector<128x16xf32> -> vector<128x16xf32>
    %278 = tpu.concatenate %226, %243, %260, %277 in 1 : vector<128x16xf32>, vector<128x16xf32>, vector<128x16xf32>, vector<128x16xf32> -> vector<128x64xf32>
    %c1_109 = arith.constant 1 : index
    %c0_110 = arith.constant 0 : index
    %c0_111 = arith.constant 0 : index
    %279 = vector.load %arg6[%c1_109, %c0_110, %c0_111] : memref<2x64x16xf32, #tpu.memory_space<vmem>>, vector<1x64x16xf32>
    %280 = vector.shape_cast %279 : vector<1x64x16xf32> to vector<64x16xf32>
    %cst_112 = arith.constant dense<0.000000e+00> : vector<128x16xf32>
    %281 = tpu.matmul %278, %280, %cst_112 {dimension_numbers = #tpu.dot_dimension_numbers<[1], [0], [0], [1], [0, 0, 1, 1], [], []>} : vector<128x64xf32>, vector<64x16xf32>, vector<128x16xf32> -> vector<128x16xf32>
    %c1_113 = arith.constant 1 : index
    %c0_114 = arith.constant 0 : index
    %c0_115 = arith.constant 0 : index
    %282 = vector.load %arg7[%c1_113, %c0_114, %c0_115] : memref<2x1x16xf32, #tpu.memory_space<vmem>>, vector<1x1x16xf32>
    %283 = vector.shape_cast %282 : vector<1x1x16xf32> to vector<1x16xf32>
    %284 = vector.broadcast %283 : vector<1x16xf32> to vector<128x16xf32>
    %285 = arith.addf %281, %284 : vector<128x16xf32>
    %286 = arith.addf %180, %285 : vector<128x16xf32>
    %c1_116 = arith.constant 1 : index
    %c0_117 = arith.constant 0 : index
    %c0_118 = arith.constant 0 : index
    %287 = vector.load %arg8[%c1_116, %c0_117, %c0_118] : memref<2x1x16xf32, #tpu.memory_space<vmem>>, vector<1x1x16xf32>
    %288 = vector.shape_cast %287 : vector<1x1x16xf32> to vector<1x16xf32>
    %c1_119 = arith.constant 1 : index
    %c0_120 = arith.constant 0 : index
    %c0_121 = arith.constant 0 : index
    %289 = vector.load %arg9[%c1_119, %c0_120, %c0_121] : memref<2x1x16xf32, #tpu.memory_space<vmem>>, vector<1x1x16xf32>
    %290 = vector.shape_cast %289 : vector<1x1x16xf32> to vector<1x16xf32>
    %cst_122 = arith.constant dense<0.000000e+00> : vector<128xf32>
    %291 = vector.multi_reduction <add>, %286, %cst_122 [1] : vector<128x16xf32> to vector<128xf32>
    %292 = vector.shape_cast %291 : vector<128xf32> to vector<128x1xf32>
    %cst_123 = arith.constant 1.600000e+01 : f32
    %293 = vector.broadcast %cst_123 : f32 to vector<128x1xf32>
    %294 = arith.divf %292, %293 : vector<128x1xf32>
    %295 = vector.broadcast %294 : vector<128x1xf32> to vector<128x16xf32>
    %296 = arith.subf %286, %295 : vector<128x16xf32>
    %297 = arith.mulf %296, %296 : vector<128x16xf32>
    %cst_124 = arith.constant dense<0.000000e+00> : vector<128xf32>
    %298 = vector.multi_reduction <add>, %297, %cst_124 [1] : vector<128x16xf32> to vector<128xf32>
    %299 = vector.shape_cast %298 : vector<128xf32> to vector<128x1xf32>
    %cst_125 = arith.constant 1.600000e+01 : f32
    %300 = vector.broadcast %cst_125 : f32 to vector<128x1xf32>
    %301 = arith.divf %299, %300 : vector<128x1xf32>
    %302 = vector.broadcast %294 : vector<128x1xf32> to vector<128x16xf32>
    %303 = arith.subf %286, %302 : vector<128x16xf32>
    %304 = vector.broadcast %288 : vector<1x16xf32> to vector<128x16xf32>
    %305 = arith.mulf %304, %303 : vector<128x16xf32>
    %cst_126 = arith.constant 9.99999974E-6 : f32
    %306 = vector.broadcast %cst_126 : f32 to vector<128x1xf32>
    %307 = arith.addf %301, %306 : vector<128x1xf32>
    %308 = math.sqrt %307 : vector<128x1xf32>
    %309 = vector.broadcast %308 : vector<128x1xf32> to vector<128x16xf32>
    %310 = arith.divf %305, %309 : vector<128x16xf32>
    %311 = vector.broadcast %290 : vector<1x16xf32> to vector<128x16xf32>
    %312 = arith.addf %310, %311 : vector<128x16xf32>
    %c1_127 = arith.constant 1 : index
    %c0_128 = arith.constant 0 : index
    %c0_129 = arith.constant 0 : index
    %313 = vector.load %arg10[%c1_127, %c0_128, %c0_129] : memref<2x16x64xf32, #tpu.memory_space<vmem>>, vector<1x16x64xf32>
    %314 = vector.shape_cast %313 : vector<1x16x64xf32> to vector<16x64xf32>
    %cst_130 = arith.constant dense<0.000000e+00> : vector<128x64xf32>
    %315 = tpu.matmul %312, %314, %cst_130 {dimension_numbers = #tpu.dot_dimension_numbers<[1], [0], [0], [1], [0, 0, 1, 1], [], []>} : vector<128x16xf32>, vector<16x64xf32>, vector<128x64xf32> -> vector<128x64xf32>
    %c1_131 = arith.constant 1 : index
    %c0_132 = arith.constant 0 : index
    %c0_133 = arith.constant 0 : index
    %316 = vector.load %arg11[%c1_131, %c0_132, %c0_133] : memref<2x1x64xf32, #tpu.memory_space<vmem>>, vector<1x1x64xf32>
    %317 = vector.shape_cast %316 : vector<1x1x64xf32> to vector<1x64xf32>
    %318 = vector.broadcast %317 : vector<1x64xf32> to vector<128x64xf32>
    %319 = arith.addf %315, %318 : vector<128x64xf32>
    %cst_134 = arith.constant 0.000000e+00 : f32
    %320 = vector.broadcast %cst_134 : f32 to vector<128x64xf32>
    %321 = arith.maximumf %319, %320 : vector<128x64xf32>
    %c1_135 = arith.constant 1 : index
    %c0_136 = arith.constant 0 : index
    %c0_137 = arith.constant 0 : index
    %322 = vector.load %arg12[%c1_135, %c0_136, %c0_137] : memref<2x64x16xf32, #tpu.memory_space<vmem>>, vector<1x64x16xf32>
    %323 = vector.shape_cast %322 : vector<1x64x16xf32> to vector<64x16xf32>
    %cst_138 = arith.constant dense<0.000000e+00> : vector<128x16xf32>
    %324 = tpu.matmul %321, %323, %cst_138 {dimension_numbers = #tpu.dot_dimension_numbers<[1], [0], [0], [1], [0, 0, 1, 1], [], []>} : vector<128x64xf32>, vector<64x16xf32>, vector<128x16xf32> -> vector<128x16xf32>
    %c1_139 = arith.constant 1 : index
    %c0_140 = arith.constant 0 : index
    %c0_141 = arith.constant 0 : index
    %325 = vector.load %arg13[%c1_139, %c0_140, %c0_141] : memref<2x1x16xf32, #tpu.memory_space<vmem>>, vector<1x1x16xf32>
    %326 = vector.shape_cast %325 : vector<1x1x16xf32> to vector<1x16xf32>
    %327 = vector.broadcast %326 : vector<1x16xf32> to vector<128x16xf32>
    %328 = arith.addf %324, %327 : vector<128x16xf32>
    %329 = arith.addf %312, %328 : vector<128x16xf32>
    %c1_142 = arith.constant 1 : index
    %c0_143 = arith.constant 0 : index
    %c0_144 = arith.constant 0 : index
    %330 = vector.load %arg14[%c1_142, %c0_143, %c0_144] : memref<2x1x16xf32, #tpu.memory_space<vmem>>, vector<1x1x16xf32>
    %331 = vector.shape_cast %330 : vector<1x1x16xf32> to vector<1x16xf32>
    %c1_145 = arith.constant 1 : index
    %c0_146 = arith.constant 0 : index
    %c0_147 = arith.constant 0 : index
    %332 = vector.load %arg15[%c1_145, %c0_146, %c0_147] : memref<2x1x16xf32, #tpu.memory_space<vmem>>, vector<1x1x16xf32>
    %333 = vector.shape_cast %332 : vector<1x1x16xf32> to vector<1x16xf32>
    %cst_148 = arith.constant dense<0.000000e+00> : vector<128xf32>
    %334 = vector.multi_reduction <add>, %329, %cst_148 [1] : vector<128x16xf32> to vector<128xf32>
    %335 = vector.shape_cast %334 : vector<128xf32> to vector<128x1xf32>
    %cst_149 = arith.constant 1.600000e+01 : f32
    %336 = vector.broadcast %cst_149 : f32 to vector<128x1xf32>
    %337 = arith.divf %335, %336 : vector<128x1xf32>
    %338 = vector.broadcast %337 : vector<128x1xf32> to vector<128x16xf32>
    %339 = arith.subf %329, %338 : vector<128x16xf32>
    %340 = arith.mulf %339, %339 : vector<128x16xf32>
    %cst_150 = arith.constant dense<0.000000e+00> : vector<128xf32>
    %341 = vector.multi_reduction <add>, %340, %cst_150 [1] : vector<128x16xf32> to vector<128xf32>
    %342 = vector.shape_cast %341 : vector<128xf32> to vector<128x1xf32>
    %cst_151 = arith.constant 1.600000e+01 : f32
    %343 = vector.broadcast %cst_151 : f32 to vector<128x1xf32>
    %344 = arith.divf %342, %343 : vector<128x1xf32>
    %345 = vector.broadcast %337 : vector<128x1xf32> to vector<128x16xf32>
    %346 = arith.subf %329, %345 : vector<128x16xf32>
    %347 = vector.broadcast %331 : vector<1x16xf32> to vector<128x16xf32>
    %348 = arith.mulf %347, %346 : vector<128x16xf32>
    %cst_152 = arith.constant 9.99999974E-6 : f32
    %349 = vector.broadcast %cst_152 : f32 to vector<128x1xf32>
    %350 = arith.addf %344, %349 : vector<128x1xf32>
    %351 = math.sqrt %350 : vector<128x1xf32>
    %352 = vector.broadcast %351 : vector<128x1xf32> to vector<128x16xf32>
    %353 = arith.divf %348, %352 : vector<128x16xf32>
    %354 = vector.broadcast %333 : vector<1x16xf32> to vector<128x16xf32>
    %355 = arith.addf %353, %354 : vector<128x16xf32>
    %356 = vector.extract_strided_slice %355 {offsets = [0, 0], sizes = [8, 16], strides = [1, 1]} : vector<128x16xf32> to vector<8x16xf32>
    %357 = vector.extract_strided_slice %355 {offsets = [8, 0], sizes = [8, 16], strides = [1, 1]} : vector<128x16xf32> to vector<8x16xf32>
    %358 = vector.extract_strided_slice %355 {offsets = [16, 0], sizes = [8, 16], strides = [1, 1]} : vector<128x16xf32> to vector<8x16xf32>
    %359 = vector.extract_strided_slice %355 {offsets = [24, 0], sizes = [8, 16], strides = [1, 1]} : vector<128x16xf32> to vector<8x16xf32>
    %360 = vector.extract_strided_slice %355 {offsets = [32, 0], sizes = [8, 16], strides = [1, 1]} : vector<128x16xf32> to vector<8x16xf32>
    %361 = vector.extract_strided_slice %355 {offsets = [40, 0], sizes = [8, 16], strides = [1, 1]} : vector<128x16xf32> to vector<8x16xf32>
    %362 = vector.extract_strided_slice %355 {offsets = [48, 0], sizes = [8, 16], strides = [1, 1]} : vector<128x16xf32> to vector<8x16xf32>
    %363 = vector.extract_strided_slice %355 {offsets = [56, 0], sizes = [8, 16], strides = [1, 1]} : vector<128x16xf32> to vector<8x16xf32>
    %364 = vector.extract_strided_slice %355 {offsets = [64, 0], sizes = [8, 16], strides = [1, 1]} : vector<128x16xf32> to vector<8x16xf32>
    %365 = vector.extract_strided_slice %355 {offsets = [72, 0], sizes = [8, 16], strides = [1, 1]} : vector<128x16xf32> to vector<8x16xf32>
    %366 = vector.extract_strided_slice %355 {offsets = [80, 0], sizes = [8, 16], strides = [1, 1]} : vector<128x16xf32> to vector<8x16xf32>
    %367 = vector.extract_strided_slice %355 {offsets = [88, 0], sizes = [8, 16], strides = [1, 1]} : vector<128x16xf32> to vector<8x16xf32>
    %368 = vector.extract_strided_slice %355 {offsets = [96, 0], sizes = [8, 16], strides = [1, 1]} : vector<128x16xf32> to vector<8x16xf32>
    %369 = vector.extract_strided_slice %355 {offsets = [104, 0], sizes = [8, 16], strides = [1, 1]} : vector<128x16xf32> to vector<8x16xf32>
    %370 = vector.extract_strided_slice %355 {offsets = [112, 0], sizes = [8, 16], strides = [1, 1]} : vector<128x16xf32> to vector<8x16xf32>
    %371 = vector.extract_strided_slice %355 {offsets = [120, 0], sizes = [8, 16], strides = [1, 1]} : vector<128x16xf32> to vector<8x16xf32>
    %372 = tpu.concatenate %356, %357, %358, %359, %360, %361, %362, %363, %364, %365, %366, %367, %368, %369, %370, %371 in 1 : vector<8x16xf32>, vector<8x16xf32>, vector<8x16xf32>, vector<8x16xf32>, vector<8x16xf32>, vector<8x16xf32>, vector<8x16xf32>, vector<8x16xf32>, vector<8x16xf32>, vector<8x16xf32>, vector<8x16xf32>, vector<8x16xf32>, vector<8x16xf32>, vector<8x16xf32>, vector<8x16xf32>, vector<8x16xf32> -> vector<8x256xf32>
    %c0_153 = arith.constant 0 : index
    %c0_154 = arith.constant 0 : index
    %373 = vector.load %arg16[%c0_153, %c0_154] : memref<256x64xf32, #tpu.memory_space<vmem>>, vector<256x64xf32>
    %cst_155 = arith.constant dense<0.000000e+00> : vector<8x64xf32>
    %374 = tpu.matmul %372, %373, %cst_155 {dimension_numbers = #tpu.dot_dimension_numbers<[1], [0], [0], [1], [0, 0, 1, 1], [], []>} : vector<8x256xf32>, vector<256x64xf32>, vector<8x64xf32> -> vector<8x64xf32>
    %c0_156 = arith.constant 0 : index
    %c0_157 = arith.constant 0 : index
    %375 = vector.load %arg17[%c0_156, %c0_157] : memref<1x64xf32, #tpu.memory_space<vmem>>, vector<1x64xf32>
    %376 = vector.broadcast %375 : vector<1x64xf32> to vector<8x64xf32>
    %377 = arith.addf %374, %376 : vector<8x64xf32>
    %cst_158 = arith.constant 0.000000e+00 : f32
    %378 = vector.broadcast %cst_158 : f32 to vector<8x64xf32>
    %379 = arith.maximumf %377, %378 : vector<8x64xf32>
    %c0_159 = arith.constant 0 : index
    %c0_160 = arith.constant 0 : index
    %380 = vector.load %arg18[%c0_159, %c0_160] : memref<64x32xf32, #tpu.memory_space<vmem>>, vector<64x32xf32>
    %cst_161 = arith.constant dense<0.000000e+00> : vector<8x32xf32>
    %381 = tpu.matmul %379, %380, %cst_161 {dimension_numbers = #tpu.dot_dimension_numbers<[1], [0], [0], [1], [0, 0, 1, 1], [], []>} : vector<8x64xf32>, vector<64x32xf32>, vector<8x32xf32> -> vector<8x32xf32>
    %c0_162 = arith.constant 0 : index
    %c0_163 = arith.constant 0 : index
    %382 = vector.load %arg19[%c0_162, %c0_163] : memref<1x32xf32, #tpu.memory_space<vmem>>, vector<1x32xf32>
    %383 = vector.broadcast %382 : vector<1x32xf32> to vector<8x32xf32>
    %384 = arith.addf %381, %383 : vector<8x32xf32>
    %cst_164 = arith.constant 0.000000e+00 : f32
    %385 = vector.broadcast %cst_164 : f32 to vector<8x32xf32>
    %386 = arith.maximumf %384, %385 : vector<8x32xf32>
    %c0_165 = arith.constant 0 : index
    %c0_166 = arith.constant 0 : index
    %c0_167 = arith.constant 0 : index
    %387 = vector.load %arg20[%c0_165, %c0_166, %c0_167] : memref<1x8x32xf32, #tpu.memory_space<vmem>>, vector<1x8x32xf32>
    %388 = vector.shape_cast %387 : vector<1x8x32xf32> to vector<8x32xf32>
    %389 = vector.shape_cast %386 : vector<8x32xf32> to vector<1x8x32xf32>
    tpu.vector_store %arg20[%c0_165, %c0_166, %c0_167], %389 {strides = array<i32>} : memref<1x8x32xf32, #tpu.memory_space<vmem>>, vector<1x8x32xf32>,
    return
  }
  func.func @transform_0(%arg0: i32) -> (i32, i32, i32) {
    %c0_i32 = arith.constant 0 : i32
    %c0_i32_0 = arith.constant 0 : i32
    %c0_i32_1 = arith.constant 0 : i32
    return %arg0, %c0_i32, %c0_i32_0 : i32, i32, i32
  }
  func.func @transform_1(%arg0: i32) -> (i32, i32) {
    %c0_i32 = arith.constant 0 : i32
    %c0_i32_0 = arith.constant 0 : i32
    %c0_i32_1 = arith.constant 0 : i32
    return %c0_i32, %c0_i32_0 : i32, i32
  }
  func.func @transform_2(%arg0: i32) -> (i32, i32) {
    %c0_i32 = arith.constant 0 : i32
    %c0_i32_0 = arith.constant 0 : i32
    %c0_i32_1 = arith.constant 0 : i32
    return %c0_i32, %c0_i32_0 : i32, i32
  }
  func.func @transform_3(%arg0: i32) -> (i32, i32, i32) {
    %c0_i32 = arith.constant 0 : i32
    %c0_i32_0 = arith.constant 0 : i32
    %c0_i32_1 = arith.constant 0 : i32
    %c0_i32_2 = arith.constant 0 : i32
    return %c0_i32, %c0_i32_0, %c0_i32_1 : i32, i32, i32
  }
  func.func @transform_4(%arg0: i32) -> (i32, i32, i32) {
    %c0_i32 = arith.constant 0 : i32
    %c0_i32_0 = arith.constant 0 : i32
    %c0_i32_1 = arith.constant 0 : i32
    %c0_i32_2 = arith.constant 0 : i32
    return %c0_i32, %c0_i32_0, %c0_i32_1 : i32, i32, i32
  }
  func.func @transform_5(%arg0: i32) -> (i32, i32, i32) {
    %c0_i32 = arith.constant 0 : i32
    %c0_i32_0 = arith.constant 0 : i32
    %c0_i32_1 = arith.constant 0 : i32
    %c0_i32_2 = arith.constant 0 : i32
    return %c0_i32, %c0_i32_0, %c0_i32_1 : i32, i32, i32
  }
  func.func @transform_6(%arg0: i32) -> (i32, i32, i32) {
    %c0_i32 = arith.constant 0 : i32
    %c0_i32_0 = arith.constant 0 : i32
    %c0_i32_1 = arith.constant 0 : i32
    %c0_i32_2 = arith.constant 0 : i32
    return %c0_i32, %c0_i32_0, %c0_i32_1 : i32, i32, i32
  }
  func.func @transform_7(%arg0: i32) -> (i32, i32, i32) {
    %c0_i32 = arith.constant 0 : i32
    %c0_i32_0 = arith.constant 0 : i32
    %c0_i32_1 = arith.constant 0 : i32
    %c0_i32_2 = arith.constant 0 : i32
    return %c0_i32, %c0_i32_0, %c0_i32_1 : i32, i32, i32
  }
  func.func @transform_8(%arg0: i32) -> (i32, i32, i32) {
    %c0_i32 = arith.constant 0 : i32
    %c0_i32_0 = arith.constant 0 : i32
    %c0_i32_1 = arith.constant 0 : i32
    %c0_i32_2 = arith.constant 0 : i32
    return %c0_i32, %c0_i32_0, %c0_i32_1 : i32, i32, i32
  }
  func.func @transform_9(%arg0: i32) -> (i32, i32, i32) {
    %c0_i32 = arith.constant 0 : i32
    %c0_i32_0 = arith.constant 0 : i32
    %c0_i32_1 = arith.constant 0 : i32
    %c0_i32_2 = arith.constant 0 : i32
    return %c0_i32, %c0_i32_0, %c0_i32_1 : i32, i32, i32
  }
  func.func @transform_10(%arg0: i32) -> (i32, i32, i32) {
    %c0_i32 = arith.constant 0 : i32
    %c0_i32_0 = arith.constant 0 : i32
    %c0_i32_1 = arith.constant 0 : i32
    %c0_i32_2 = arith.constant 0 : i32
    return %c0_i32, %c0_i32_0, %c0_i32_1 : i32, i32, i32
  }
  func.func @transform_11(%arg0: i32) -> (i32, i32, i32) {
    %c0_i32 = arith.constant 0 : i32
    %c0_i32_0 = arith.constant 0 : i32
    %c0_i32_1 = arith.constant 0 : i32
    %c0_i32_2 = arith.constant 0 : i32
    return %c0_i32, %c0_i32_0, %c0_i32_1 : i32, i32, i32
  }
  func.func @transform_12(%arg0: i32) -> (i32, i32, i32) {
    %c0_i32 = arith.constant 0 : i32
    %c0_i32_0 = arith.constant 0 : i32
    %c0_i32_1 = arith.constant 0 : i32
    %c0_i32_2 = arith.constant 0 : i32
    return %c0_i32, %c0_i32_0, %c0_i32_1 : i32, i32, i32
  }
  func.func @transform_13(%arg0: i32) -> (i32, i32, i32) {
    %c0_i32 = arith.constant 0 : i32
    %c0_i32_0 = arith.constant 0 : i32
    %c0_i32_1 = arith.constant 0 : i32
    %c0_i32_2 = arith.constant 0 : i32
    return %c0_i32, %c0_i32_0, %c0_i32_1 : i32, i32, i32
  }
  func.func @transform_14(%arg0: i32) -> (i32, i32, i32) {
    %c0_i32 = arith.constant 0 : i32
    %c0_i32_0 = arith.constant 0 : i32
    %c0_i32_1 = arith.constant 0 : i32
    %c0_i32_2 = arith.constant 0 : i32
    return %c0_i32, %c0_i32_0, %c0_i32_1 : i32, i32, i32
  }
  func.func @transform_15(%arg0: i32) -> (i32, i32) {
    %c0_i32 = arith.constant 0 : i32
    %c0_i32_0 = arith.constant 0 : i32
    %c0_i32_1 = arith.constant 0 : i32
    return %c0_i32, %c0_i32_0 : i32, i32
  }
  func.func @transform_16(%arg0: i32) -> (i32, i32) {
    %c0_i32 = arith.constant 0 : i32
    %c0_i32_0 = arith.constant 0 : i32
    %c0_i32_1 = arith.constant 0 : i32
    return %c0_i32, %c0_i32_0 : i32, i32
  }
  func.func @transform_17(%arg0: i32) -> (i32, i32) {
    %c0_i32 = arith.constant 0 : i32
    %c0_i32_0 = arith.constant 0 : i32
    %c0_i32_1 = arith.constant 0 : i32
    return %c0_i32, %c0_i32_0 : i32, i32
  }
  func.func @transform_18(%arg0: i32) -> (i32, i32) {
    %c0_i32 = arith.constant 0 : i32
    %c0_i32_0 = arith.constant 0 : i32
    %c0_i32_1 = arith.constant 0 : i32
    return %c0_i32, %c0_i32_0 : i32, i32
  }
  func.func @transform_19(%arg0: i32) -> (i32, i32, i32) {
    %c0_i32 = arith.constant 0 : i32
    %c0_i32_0 = arith.constant 0 : i32
    %c0_i32_1 = arith.constant 0 : i32
    return %arg0, %c0_i32, %c0_i32_0 : i32, i32, i32
  }
}

</mosaic_0001>

<llo_original>
// kernel: conv_transformer_fe.1
$region0: #{conv_transformer_fe.1}
  #allocation0 [shape = 'u32[]', space=smem, size = 0x4, offset = 0x4, fixed_abs, tag = 'smem constant byte address 0x4 - core index']
  #allocation1 [shape = 'u32[144,128]{1,0:T(1,128)}', space=vmem, size = 0x12000, scoped, tag = 'internal scratch']
  %s0 = inlined_call_operand.vmem [shape: f32[2,128,4], index: 0, kind: input, shape index: {}]
  %s1 = inlined_call_operand.vmem [shape: f32[128,128], index: 1, kind: input, shape index: {}]
  %s2 = inlined_call_operand.vmem [shape: f32[128,12], index: 2, kind: input, shape index: {}]
  %s3 = inlined_call_operand.vmem [shape: f32[2,64,192], index: 3, kind: input, shape index: {}]
  %s4 = inlined_call_operand.vmem [shape: f32[2,1,192], index: 4, kind: input, shape index: {}]
  %s5 = inlined_call_operand.vmem [shape: f32[2,64,16], index: 5, kind: input, shape index: {}]
  %s6 = inlined_call_operand.vmem [shape: f32[2,1,16], index: 6, kind: input, shape index: {}]
  %s7 = inlined_call_operand.vmem [shape: f32[2,1,16], index: 7, kind: input, shape index: {}]
  %s8 = inlined_call_operand.vmem [shape: f32[2,1,16], index: 8, kind: input, shape index: {}]
  %s9 = inlined_call_operand.vmem [shape: f32[2,16,64], index: 9, kind: input, shape index: {}]
  %s10 = inlined_call_operand.vmem [shape: f32[2,1,64], index: 10, kind: input, shape index: {}]
  %s11 = inlined_call_operand.vmem [shape: f32[2,64,16], index: 11, kind: input, shape index: {}]
  %s12 = inlined_call_operand.vmem [shape: f32[2,1,16], index: 12, kind: input, shape index: {}]
  %s13 = inlined_call_operand.vmem [shape: f32[2,1,16], index: 13, kind: input, shape index: {}]
  %s14 = inlined_call_operand.vmem [shape: f32[2,1,16], index: 14, kind: input, shape index: {}]
  %s15 = inlined_call_operand.vmem [shape: f32[256,64], index: 15, kind: input, shape index: {}]
  %s16 = inlined_call_operand.vmem [shape: f32[1,64], index: 16, kind: input, shape index: {}]
  %s17 = inlined_call_operand.vmem [shape: f32[64,32], index: 17, kind: input, shape index: {}]
  %s18 = inlined_call_operand.vmem [shape: f32[1,32], index: 18, kind: input, shape index: {}]
  %s19 = inlined_call_operand.hbm [shape: f32[2,8,32], index: 19, kind: output, shape index: {}]
  %s20 = sld [smem:[#allocation0]]
  $region109: #{conv_transformer_fe.1} parent=0
    _
  %s22 = ssub.s32 1, %s20
  %s23 = scalar_select 0, %s22, %s20
  $region1: #{conv_transformer_fe.1} parent=0
    #allocation2 [shape = 'u8[8192]{0}', space=vmem, size = 0x2000, scoped, tag = 'output window, operand 0']
    #allocation3 [shape = 's32[2]{0}', space=sflag, size = 0x8, scoped, tag = 'scoped memory for conv_transformer_fe.1']
    %24 = vsyncpa [#allocation3], 0
    %s25 = scalar_lea.sflag [#allocation3], 1
    %26 = vsyncpa %s25, 0
    loop: start=0, step=1, limit=4
    $region2: #{conv_transformer_fe.1} parent=1 // loop_pre_header
      _
    $region3: #{conv_transformer_fe.1} parent=1 // loop_header
      %s28 = sphi 0, %s32
      %p29 = scmp.ge.s32.totalorder %s28, 4
      %s38 = sphi 0, %s40
      %s41 = sphi 0, %s38
      %s42 = sphi 0, %s41
      %s58 = sphi 0, %s42
      %s62 = sphi 0, %s62
      %s64 = sphi 0, %s62
      %s65 = sphi 0, %s64
      %s79 = sphi 0, %s65
      %s83 = sphi 0, %s83
      %s85 = sphi 0, %s83
      %s86 = sphi 0, %s85
      %s100 = sphi 0, %s86
      %s104 = sphi 0, %s104
      %s106 = sphi 0, %s104
      %s107 = sphi 0, %s106
      %s121 = sphi 0, %s107
      %s125 = sphi 0, %s125
      %s127 = sphi 0, %s125
      %s128 = sphi 0, %s127
      %s142 = sphi 0, %s128
      %s146 = sphi 0, %s146
      %s148 = sphi 0, %s146
      %s149 = sphi 0, %s148
      %s163 = sphi 0, %s149
      %s167 = sphi 0, %s167
      %s169 = sphi 0, %s167
      %s170 = sphi 0, %s169
      %s184 = sphi 0, %s170
      %s188 = sphi 0, %s188
      %s190 = sphi 0, %s188
      %s191 = sphi 0, %s190
      %s205 = sphi 0, %s191
      %s209 = sphi 0, %s209
      %s211 = sphi 0, %s209
      %s212 = sphi 0, %s211
      %s226 = sphi 0, %s212
      %s230 = sphi 0, %s230
      %s232 = sphi 0, %s230
      %s233 = sphi 0, %s232
      %s247 = sphi 0, %s233
      %s251 = sphi 0, %s251
      %s253 = sphi 0, %s251
      %s254 = sphi 0, %s253
      %s268 = sphi 0, %s254
      %s272 = sphi 0, %s272
      %s274 = sphi 0, %s272
      %s275 = sphi 0, %s274
      %s289 = sphi 0, %s275
      %s293 = sphi 0, %s293
      %s295 = sphi 0, %s293
      %s296 = sphi 0, %s295
      %s310 = sphi 0, %s296
      %s314 = sphi 0, %s314
      %s316 = sphi 0, %s314
      %s317 = sphi 0, %s316
      %s331 = sphi 0, %s317
      %s335 = sphi 0, %s335
      %s337 = sphi 0, %s335
      %s338 = sphi 0, %s337
      %s352 = sphi 0, %s338
      %s356 = sphi 0, %s356
      %s358 = sphi 0, %s356
      %s359 = sphi 0, %s358
      %s373 = sphi 0, %s359
      %s377 = sphi 0, %s377
      %s379 = sphi 0, %s377
      %s380 = sphi 0, %s379
      %s394 = sphi 0, %s380
      %s398 = sphi 0, %s398
      %s400 = sphi 0, %s398
      %s401 = sphi 0, %s400
      %s415 = sphi 0, %s401
      %s419 = sphi 0, %s419
      %s421 = sphi 0, %s419
      %s422 = sphi 0, %s421
      %s436 = sphi 0, %s422
      %s442 = sphi 0, %s444
      %s445 = sphi 0, %s442
      %s446 = sphi 0, %s445
      %s462 = sphi 0, %s446
    $region4: #{conv_transformer_fe.1} parent=1 // loop_header_branch
      %31 = sbr.rel (%p29) target = $region8
    $region5: #{conv_transformer_fe.1} parent=1 // loop_body
      %s33 = ssub.s32 %s28, 1
      %s34 = ssub.s32 %s28, 2
      %s35 = sadd.s32 %s28, 1
      %s36 = ssub.s32 %s28, %s35
      %p37 = scmp.eq.s32.totalorder %s36, 0
      %s39 = sadd.s32 %s38, 1
      %s40 = scalar_select %p37, %s38, %s39
      %p43 = pneg %p37
      %p44 = scmp.eq.s32.totalorder %s28, 1
      %p45 = por %p43, %p44
      %p46 = scmp.ne.s32.totalorder %s38, %s41
      %p47 = scmp.eq.s32.totalorder %s28, 0
      %p48 = por %p46, %p47
      %p49 = scmp.ne.s32.totalorder %s38, %s41
      %p50 = scmp.eq.s32.totalorder %s33, 1
      %p51 = por %p49, %p50
      %p52 = scmp.ne.s32.totalorder %s41, %s42
      %p53 = scmp.eq.s32.totalorder %s33, 0
      %p54 = por %p52, %p53
      %p55 = scmp.ne.s32.totalorder %s41, %s42
      %p56 = scmp.eq.s32.totalorder %s34, 1
      %p57 = por %p55, %p56
      %p59 = scmp.ne.s32.totalorder %s42, %s58
      %p60 = scmp.eq.s32.totalorder %s34, 0
      %p61 = por %p59, %p60
      %s63 = sadd.s32 %s62, 1
      %p66 = scmp.eq.s32.totalorder %s28, 1
      %p67 = scmp.ne.s32.totalorder %s62, %s64
      %p68 = scmp.eq.s32.totalorder %s28, 0
      %p69 = por %p67, %p68
      %p70 = scmp.ne.s32.totalorder %s62, %s64
      %p71 = scmp.eq.s32.totalorder %s33, 1
      %p72 = por %p70, %p71
      %p73 = scmp.ne.s32.totalorder %s64, %s65
      %p74 = scmp.eq.s32.totalorder %s33, 0
      %p75 = por %p73, %p74
      %p76 = scmp.ne.s32.totalorder %s64, %s65
      %p77 = scmp.eq.s32.totalorder %s34, 1
      %p78 = por %p76, %p77
      %p80 = scmp.ne.s32.totalorder %s65, %s79
      %p81 = scmp.eq.s32.totalorder %s34, 0
      %p82 = por %p80, %p81
      %s84 = sadd.s32 %s83, 1
      %p87 = scmp.eq.s32.totalorder %s28, 1
      %p88 = scmp.ne.s32.totalorder %s83, %s85
      %p89 = scmp.eq.s32.totalorder %s28, 0
      %p90 = por %p88, %p89
      %p91 = scmp.ne.s32.totalorder %s83, %s85
      %p92 = scmp.eq.s32.totalorder %s33, 1
      %p93 = por %p91, %p92
      %p94 = scmp.ne.s32.totalorder %s85, %s86
      %p95 = scmp.eq.s32.totalorder %s33, 0
      %p96 = por %p94, %p95
      %p97 = scmp.ne.s32.totalorder %s85, %s86
      %p98 = scmp.eq.s32.totalorder %s34, 1
      %p99 = por %p97, %p98
      %p101 = scmp.ne.s32.totalorder %s86, %s100
      %p102 = scmp.eq.s32.totalorder %s34, 0
      %p103 = por %p101, %p102
      %s105 = sadd.s32 %s104, 1
      %p108 = scmp.eq.s32.totalorder %s28, 1
      %p109 = scmp.ne.s32.totalorder %s104, %s106
      %p110 = scmp.eq.s32.totalorder %s28, 0
      %p111 = por %p109, %p110
      %p112 = scmp.ne.s32.totalorder %s104, %s106
      %p113 = scmp.eq.s32.totalorder %s33, 1
      %p114 = por %p112, %p113
      %p115 = scmp.ne.s32.totalorder %s106, %s107
      %p116 = scmp.eq.s32.totalorder %s33, 0
      %p117 = por %p115, %p116
      %p118 = scmp.ne.s32.totalorder %s106, %s107
      %p119 = scmp.eq.s32.totalorder %s34, 1
      %p120 = por %p118, %p119
      %p122 = scmp.ne.s32.totalorder %s107, %s121
      %p123 = scmp.eq.s32.totalorder %s34, 0
      %p124 = por %p122, %p123
      %s126 = sadd.s32 %s125, 1
      %p129 = scmp.eq.s32.totalorder %s28, 1
      %p130 = scmp.ne.s32.totalorder %s125, %s127
      %p131 = scmp.eq.s32.totalorder %s28, 0
      %p132 = por %p130, %p131
      %p133 = scmp.ne.s32.totalorder %s125, %s127
      %p134 = scmp.eq.s32.totalorder %s33, 1
      %p135 = por %p133, %p134
      %p136 = scmp.ne.s32.totalorder %s127, %s128
      %p137 = scmp.eq.s32.totalorder %s33, 0
      %p138 = por %p136, %p137
      %p139 = scmp.ne.s32.totalorder %s127, %s128
      %p140 = scmp.eq.s32.totalorder %s34, 1
      %p141 = por %p139, %p140
      %p143 = scmp.ne.s32.totalorder %s128, %s142
      %p144 = scmp.eq.s32.totalorder %s34, 0
      %p145 = por %p143, %p144
      %s147 = sadd.s32 %s146, 1
      %p150 = scmp.eq.s32.totalorder %s28, 1
      %p151 = scmp.ne.s32.totalorder %s146, %s148
      %p152 = scmp.eq.s32.totalorder %s28, 0
      %p153 = por %p151, %p152
      %p154 = scmp.ne.s32.totalorder %s146, %s148
      %p155 = scmp.eq.s32.totalorder %s33, 1
      %p156 = por %p154, %p155
      %p157 = scmp.ne.s32.totalorder %s148, %s149
      %p158 = scmp.eq.s32.totalorder %s33, 0
      %p159 = por %p157, %p158
      %p160 = scmp.ne.s32.totalorder %s148, %s149
      %p161 = scmp.eq.s32.totalorder %s34, 1
      %p162 = por %p160, %p161
      %p164 = scmp.ne.s32.totalorder %s149, %s163
      %p165 = scmp.eq.s32.totalorder %s34, 0
      %p166 = por %p164, %p165
      %s168 = sadd.s32 %s167, 1
      %p171 = scmp.eq.s32.totalorder %s28, 1
      %p172 = scmp.ne.s32.totalorder %s167, %s169
      %p173 = scmp.eq.s32.totalorder %s28, 0
      %p174 = por %p172, %p173
      %p175 = scmp.ne.s32.totalorder %s167, %s169
      %p176 = scmp.eq.s32.totalorder %s33, 1
      %p177 = por %p175, %p176
      %p178 = scmp.ne.s32.totalorder %s169, %s170
      %p179 = scmp.eq.s32.totalorder %s33, 0
      %p180 = por %p178, %p179
      %p181 = scmp.ne.s32.totalorder %s169, %s170
      %p182 = scmp.eq.s32.totalorder %s34, 1
      %p183 = por %p181, %p182
      %p185 = scmp.ne.s32.totalorder %s170, %s184
      %p186 = scmp.eq.s32.totalorder %s34, 0
      %p187 = por %p185, %p186
      %s189 = sadd.s32 %s188, 1
      %p192 = scmp.eq.s32.totalorder %s28, 1
      %p193 = scmp.ne.s32.totalorder %s188, %s190
      %p194 = scmp.eq.s32.totalorder %s28, 0
      %p195 = por %p193, %p194
      %p196 = scmp.ne.s32.totalorder %s188, %s190
      %p197 = scmp.eq.s32.totalorder %s33, 1
      %p198 = por %p196, %p197
      %p199 = scmp.ne.s32.totalorder %s190, %s191
      %p200 = scmp.eq.s32.totalorder %s33, 0
      %p201 = por %p199, %p200
      %p202 = scmp.ne.s32.totalorder %s190, %s191
      %p203 = scmp.eq.s32.totalorder %s34, 1
      %p204 = por %p202, %p203
      %p206 = scmp.ne.s32.totalorder %s191, %s205
      %p207 = scmp.eq.s32.totalorder %s34, 0
      %p208 = por %p206, %p207
      %s210 = sadd.s32 %s209, 1
      %p213 = scmp.eq.s32.totalorder %s28, 1
      %p214 = scmp.ne.s32.totalorder %s209, %s211
      %p215 = scmp.eq.s32.totalorder %s28, 0
      %p216 = por %p214, %p215
      %p217 = scmp.ne.s32.totalorder %s209, %s211
      %p218 = scmp.eq.s32.totalorder %s33, 1
      %p219 = por %p217, %p218
      %p220 = scmp.ne.s32.totalorder %s211, %s212
      %p221 = scmp.eq.s32.totalorder %s33, 0
      %p222 = por %p220, %p221
      %p223 = scmp.ne.s32.totalorder %s211, %s212
      %p224 = scmp.eq.s32.totalorder %s34, 1
      %p225 = por %p223, %p224
      %p227 = scmp.ne.s32.totalorder %s212, %s226
      %p228 = scmp.eq.s32.totalorder %s34, 0
      %p229 = por %p227, %p228
      %s231 = sadd.s32 %s230, 1
      %p234 = scmp.eq.s32.totalorder %s28, 1
      %p235 = scmp.ne.s32.totalorder %s230, %s232
      %p236 = scmp.eq.s32.totalorder %s28, 0
      %p237 = por %p235, %p236
      %p238 = scmp.ne.s32.totalorder %s230, %s232
      %p239 = scmp.eq.s32.totalorder %s33, 1
      %p240 = por %p238, %p239
      %p241 = scmp.ne.s32.totalorder %s232, %s233
      %p242 = scmp.eq.s32.totalorder %s33, 0
      %p243 = por %p241, %p242
      %p244 = scmp.ne.s32.totalorder %s232, %s233
      %p245 = scmp.eq.s32.totalorder %s34, 1
      %p246 = por %p244, %p245
      %p248 = scmp.ne.s32.totalorder %s233, %s247
      %p249 = scmp.eq.s32.totalorder %s34, 0
      %p250 = por %p248, %p249
      %s252 = sadd.s32 %s251, 1
      %p255 = scmp.eq.s32.totalorder %s28, 1
      %p256 = scmp.ne.s32.totalorder %s251, %s253
      %p257 = scmp.eq.s32.totalorder %s28, 0
      %p258 = por %p256, %p257
      %p259 = scmp.ne.s32.totalorder %s251, %s253
      %p260 = scmp.eq.s32.totalorder %s33, 1
      %p261 = por %p259, %p260
      %p262 = scmp.ne.s32.totalorder %s253, %s254
      %p263 = scmp.eq.s32.totalorder %s33, 0
      %p264 = por %p262, %p263
      %p265 = scmp.ne.s32.totalorder %s253, %s254
      %p266 = scmp.eq.s32.totalorder %s34, 1
      %p267 = por %p265, %p266
      %p269 = scmp.ne.s32.totalorder %s254, %s268
      %p270 = scmp.eq.s32.totalorder %s34, 0
      %p271 = por %p269, %p270
      %s273 = sadd.s32 %s272, 1
      %p276 = scmp.eq.s32.totalorder %s28, 1
      %p277 = scmp.ne.s32.totalorder %s272, %s274
      %p278 = scmp.eq.s32.totalorder %s28, 0
      %p279 = por %p277, %p278
      %p280 = scmp.ne.s32.totalorder %s272, %s274
      %p281 = scmp.eq.s32.totalorder %s33, 1
      %p282 = por %p280, %p281
      %p283 = scmp.ne.s32.totalorder %s274, %s275
      %p284 = scmp.eq.s32.totalorder %s33, 0
      %p285 = por %p283, %p284
      %p286 = scmp.ne.s32.totalorder %s274, %s275
      %p287 = scmp.eq.s32.totalorder %s34, 1
      %p288 = por %p286, %p287
      %p290 = scmp.ne.s32.totalorder %s275, %s289
      %p291 = scmp.eq.s32.totalorder %s34, 0
      %p292 = por %p290, %p291
      %s294 = sadd.s32 %s293, 1
      %p297 = scmp.eq.s32.totalorder %s28, 1
      %p298 = scmp.ne.s32.totalorder %s293, %s295
      %p299 = scmp.eq.s32.totalorder %s28, 0
      %p300 = por %p298, %p299
      %p301 = scmp.ne.s32.totalorder %s293, %s295
      %p302 = scmp.eq.s32.totalorder %s33, 1
      %p303 = por %p301, %p302
      %p304 = scmp.ne.s32.totalorder %s295, %s296
      %p305 = scmp.eq.s32.totalorder %s33, 0
      %p306 = por %p304, %p305
      %p307 = scmp.ne.s32.totalorder %s295, %s296
      %p308 = scmp.eq.s32.totalorder %s34, 1
      %p309 = por %p307, %p308
      %p311 = scmp.ne.s32.totalorder %s296, %s310
      %p312 = scmp.eq.s32.totalorder %s34, 0
      %p313 = por %p311, %p312
      %s315 = sadd.s32 %s314, 1
      %p318 = scmp.eq.s32.totalorder %s28, 1
      %p319 = scmp.ne.s32.totalorder %s314, %s316
      %p320 = scmp.eq.s32.totalorder %s28, 0
      %p321 = por %p319, %p320
      %p322 = scmp.ne.s32.totalorder %s314, %s316
      %p323 = scmp.eq.s32.totalorder %s33, 1
      %p324 = por %p322, %p323
      %p325 = scmp.ne.s32.totalorder %s316, %s317
      %p326 = scmp.eq.s32.totalorder %s33, 0
      %p327 = por %p325, %p326
      %p328 = scmp.ne.s32.totalorder %s316, %s317
      %p329 = scmp.eq.s32.totalorder %s34, 1
      %p330 = por %p328, %p329
      %p332 = scmp.ne.s32.totalorder %s317, %s331
      %p333 = scmp.eq.s32.totalorder %s34, 0
      %p334 = por %p332, %p333
      %s336 = sadd.s32 %s335, 1
      %p339 = scmp.eq.s32.totalorder %s28, 1
      %p340 = scmp.ne.s32.totalorder %s335, %s337
      %p341 = scmp.eq.s32.totalorder %s28, 0
      %p342 = por %p340, %p341
      %p343 = scmp.ne.s32.totalorder %s335, %s337
      %p344 = scmp.eq.s32.totalorder %s33, 1
      %p345 = por %p343, %p344
      %p346 = scmp.ne.s32.totalorder %s337, %s338
      %p347 = scmp.eq.s32.totalorder %s33, 0
      %p348 = por %p346, %p347
      %p349 = scmp.ne.s32.totalorder %s337, %s338
      %p350 = scmp.eq.s32.totalorder %s34, 1
      %p351 = por %p349, %p350
      %p353 = scmp.ne.s32.totalorder %s338, %s352
      %p354 = scmp.eq.s32.totalorder %s34, 0
      %p355 = por %p353, %p354
      %s357 = sadd.s32 %s356, 1
      %p360 = scmp.eq.s32.totalorder %s28, 1
      %p361 = scmp.ne.s32.totalorder %s356, %s358
      %p362 = scmp.eq.s32.totalorder %s28, 0
      %p363 = por %p361, %p362
      %p364 = scmp.ne.s32.totalorder %s356, %s358
      %p365 = scmp.eq.s32.totalorder %s33, 1
      %p366 = por %p364, %p365
      %p367 = scmp.ne.s32.totalorder %s358, %s359
      %p368 = scmp.eq.s32.totalorder %s33, 0
      %p369 = por %p367, %p368
      %p370 = scmp.ne.s32.totalorder %s358, %s359
      %p371 = scmp.eq.s32.totalorder %s34, 1
      %p372 = por %p370, %p371
      %p374 = scmp.ne.s32.totalorder %s359, %s373
      %p375 = scmp.eq.s32.totalorder %s34, 0
      %p376 = por %p374, %p375
      %s378 = sadd.s32 %s377, 1
      %p381 = scmp.eq.s32.totalorder %s28, 1
      %p382 = scmp.ne.s32.totalorder %s377, %s379
      %p383 = scmp.eq.s32.totalorder %s28, 0
      %p384 = por %p382, %p383
      %p385 = scmp.ne.s32.totalorder %s377, %s379
      %p386 = scmp.eq.s32.totalorder %s33, 1
      %p387 = por %p385, %p386
      %p388 = scmp.ne.s32.totalorder %s379, %s380
      %p389 = scmp.eq.s32.totalorder %s33, 0
      %p390 = por %p388, %p389
      %p391 = scmp.ne.s32.totalorder %s379, %s380
      %p392 = scmp.eq.s32.totalorder %s34, 1
      %p393 = por %p391, %p392
      %p395 = scmp.ne.s32.totalorder %s380, %s394
      %p396 = scmp.eq.s32.totalorder %s34, 0
      %p397 = por %p395, %p396
      %s399 = sadd.s32 %s398, 1
      %p402 = scmp.eq.s32.totalorder %s28, 1
      %p403 = scmp.ne.s32.totalorder %s398, %s400
      %p404 = scmp.eq.s32.totalorder %s28, 0
      %p405 = por %p403, %p404
      %p406 = scmp.ne.s32.totalorder %s398, %s400
      %p407 = scmp.eq.s32.totalorder %s33, 1
      %p408 = por %p406, %p407
      %p409 = scmp.ne.s32.totalorder %s400, %s401
      %p410 = scmp.eq.s32.totalorder %s33, 0
      %p411 = por %p409, %p410
      %p412 = scmp.ne.s32.totalorder %s400, %s401
      %p413 = scmp.eq.s32.totalorder %s34, 1
      %p414 = por %p412, %p413
      %p416 = scmp.ne.s32.totalorder %s401, %s415
      %p417 = scmp.eq.s32.totalorder %s34, 0
      %p418 = por %p416, %p417
      %s420 = sadd.s32 %s419, 1
      %p423 = scmp.eq.s32.totalorder %s28, 1
      %p424 = scmp.ne.s32.totalorder %s419, %s421
      %p425 = scmp.eq.s32.totalorder %s28, 0
      %p426 = por %p424, %p425
      %p427 = scmp.ne.s32.totalorder %s419, %s421
      %p428 = scmp.eq.s32.totalorder %s33, 1
      %p429 = por %p427, %p428
      %p430 = scmp.ne.s32.totalorder %s421, %s422
      %p431 = scmp.eq.s32.totalorder %s33, 0
      %p432 = por %p430, %p431
      %p433 = scmp.ne.s32.totalorder %s421, %s422
      %p434 = scmp.eq.s32.totalorder %s34, 1
      %p435 = por %p433, %p434
      %p437 = scmp.ne.s32.totalorder %s422, %s436
      %p438 = scmp.eq.s32.totalorder %s34, 0
      %p439 = por %p437, %p438
      %s440 = ssub.s32 %s28, %s35
      %p441 = scmp.eq.s32.totalorder %s440, 0
      %s443 = sadd.s32 %s442, 1
      %s444 = scalar_select %p441, %s442, %s443
      %p447 = pneg %p441
      %p448 = scmp.eq.s32.totalorder %s28, 1
      %p449 = por %p447, %p448
      %p450 = scmp.ne.s32.totalorder %s442, %s445
      %p451 = scmp.eq.s32.totalorder %s28, 0
      %p452 = por %p450, %p451
      %p453 = scmp.ne.s32.totalorder %s442, %s445
      %p454 = scmp.eq.s32.totalorder %s33, 1
      %p455 = por %p453, %p454
      %p456 = scmp.ne.s32.totalorder %s445, %s446
      %p457 = scmp.eq.s32.totalorder %s33, 0
      %p458 = por %p456, %p457
      %p459 = scmp.ne.s32.totalorder %s445, %s446
      %p460 = scmp.eq.s32.totalorder %s34, 1
      %p461 = por %p459, %p460
      %p463 = scmp.ne.s32.totalorder %s446, %s462
      %p464 = scmp.eq.s32.totalorder %s34, 0
      %p465 = por %p463, %p464
      %p466 = scmp.le.s32.totalorder 1, %s28
      %p467 = scmp.lt.s32.totalorder %s28, 3
      %p468 = pnand %p466, %p467
      %p469 = pneg %p468
      // Predicated region
      $region9: #{conv_transformer_fe.1} parent=5 // pred_check
        _
      $region10: #{conv_transformer_fe.1} parent=5 // pred_check_branch
        %471 = sbr.rel (%p468) target = $region12
      $region11: #{conv_transformer_fe.1} parent=5 // pred_region
        %s472 = ssub.s32 %s28, 1
        // Predicated region
        $region13: #{conv_transformer_fe.1} parent=11 // pred_check
          %p473 = pneg %p75
        $region14: #{conv_transformer_fe.1} parent=11 // pred_check_branch
          %475 = sbr.rel (%p473) target = $region16
        $region15: #{conv_transformer_fe.1} parent=11 // pred_region
          _
        $region16: #{conv_transformer_fe.1} parent=11 // pred_fallthru
          _
        // Predicated region
        $region17: #{conv_transformer_fe.1} parent=11 // pred_check
          %p476 = pneg %p96
        $region18: #{conv_transformer_fe.1} parent=11 // pred_check_branch
          %478 = sbr.rel (%p476) target = $region20
        $region19: #{conv_transformer_fe.1} parent=11 // pred_region
          _
        $region20: #{conv_transformer_fe.1} parent=11 // pred_fallthru
          _
        // Predicated region
        $region21: #{conv_transformer_fe.1} parent=11 // pred_check
          %p479 = pneg %p117
        $region22: #{conv_transformer_fe.1} parent=11 // pred_check_branch
          %481 = sbr.rel (%p479) target = $region24
        $region23: #{conv_transformer_fe.1} parent=11 // pred_region
          _
        $region24: #{conv_transformer_fe.1} parent=11 // pred_fallthru
          _
        // Predicated region
        $region25: #{conv_transformer_fe.1} parent=11 // pred_check
          %p482 = pneg %p138
        $region26: #{conv_transformer_fe.1} parent=11 // pred_check_branch
          %484 = sbr.rel (%p482) target = $region28
        $region27: #{conv_transformer_fe.1} parent=11 // pred_region
          _
        $region28: #{conv_transformer_fe.1} parent=11 // pred_fallthru
          _
        // Predicated region
        $region29: #{conv_transformer_fe.1} parent=11 // pred_check
          %p485 = pneg %p159
        $region30: #{conv_transformer_fe.1} parent=11 // pred_check_branch
          %487 = sbr.rel (%p485) target = $region32
        $region31: #{conv_transformer_fe.1} parent=11 // pred_region
          _
        $region32: #{conv_transformer_fe.1} parent=11 // pred_fallthru
          _
        // Predicated region
        $region33: #{conv_transformer_fe.1} parent=11 // pred_check
          %p488 = pneg %p180
        $region34: #{conv_transformer_fe.1} parent=11 // pred_check_branch
          %490 = sbr.rel (%p488) target = $region36
        $region35: #{conv_transformer_fe.1} parent=11 // pred_region
          _
        $region36: #{conv_transformer_fe.1} parent=11 // pred_fallthru
          _
        // Predicated region
        $region37: #{conv_transformer_fe.1} parent=11 // pred_check
          %p491 = pneg %p201
        $region38: #{conv_transformer_fe.1} parent=11 // pred_check_branch
          %493 = sbr.rel (%p491) target = $region40
        $region39: #{conv_transformer_fe.1} parent=11 // pred_region
          _
        $region40: #{conv_transformer_fe.1} parent=11 // pred_fallthru
          _
        // Predicated region
        $region41: #{conv_transformer_fe.1} parent=11 // pred_check
          %p494 = pneg %p222
        $region42: #{conv_transformer_fe.1} parent=11 // pred_check_branch
          %496 = sbr.rel (%p494) target = $region44
        $region43: #{conv_transformer_fe.1} parent=11 // pred_region
          _
        $region44: #{conv_transformer_fe.1} parent=11 // pred_fallthru
          _
        // Predicated region
        $region45: #{conv_transformer_fe.1} parent=11 // pred_check
          %p497 = pneg %p243
        $region46: #{conv_transformer_fe.1} parent=11 // pred_check_branch
          %499 = sbr.rel (%p497) target = $region48
        $region47: #{conv_transformer_fe.1} parent=11 // pred_region
          _
        $region48: #{conv_transformer_fe.1} parent=11 // pred_fallthru
          _
        // Predicated region
        $region49: #{conv_transformer_fe.1} parent=11 // pred_check
          %p500 = pneg %p264
        $region50: #{conv_transformer_fe.1} parent=11 // pred_check_branch
          %502 = sbr.rel (%p500) target = $region52
        $region51: #{conv_transformer_fe.1} parent=11 // pred_region
          _
        $region52: #{conv_transformer_fe.1} parent=11 // pred_fallthru
          _
        // Predicated region
        $region53: #{conv_transformer_fe.1} parent=11 // pred_check
          %p503 = pneg %p285
        $region54: #{conv_transformer_fe.1} parent=11 // pred_check_branch
          %505 = sbr.rel (%p503) target = $region56
        $region55: #{conv_transformer_fe.1} parent=11 // pred_region
          _
        $region56: #{conv_transformer_fe.1} parent=11 // pred_fallthru
          _
        // Predicated region
        $region57: #{conv_transformer_fe.1} parent=11 // pred_check
          %p506 = pneg %p306
        $region58: #{conv_transformer_fe.1} parent=11 // pred_check_branch
          %508 = sbr.rel (%p506) target = $region60
        $region59: #{conv_transformer_fe.1} parent=11 // pred_region
          _
        $region60: #{conv_transformer_fe.1} parent=11 // pred_fallthru
          _
        // Predicated region
        $region61: #{conv_transformer_fe.1} parent=11 // pred_check
          %p509 = pneg %p327
        $region62: #{conv_transformer_fe.1} parent=11 // pred_check_branch
          %511 = sbr.rel (%p509) target = $region64
        $region63: #{conv_transformer_fe.1} parent=11 // pred_region
          _
        $region64: #{conv_transformer_fe.1} parent=11 // pred_fallthru
          _
        // Predicated region
        $region65: #{conv_transformer_fe.1} parent=11 // pred_check
          %p512 = pneg %p348
        $region66: #{conv_transformer_fe.1} parent=11 // pred_check_branch
          %514 = sbr.rel (%p512) target = $region68
        $region67: #{conv_transformer_fe.1} parent=11 // pred_region
          _
        $region68: #{conv_transformer_fe.1} parent=11 // pred_fallthru
          _
        // Predicated region
        $region69: #{conv_transformer_fe.1} parent=11 // pred_check
          %p515 = pneg %p369
        $region70: #{conv_transformer_fe.1} parent=11 // pred_check_branch
          %517 = sbr.rel (%p515) target = $region72
        $region71: #{conv_transformer_fe.1} parent=11 // pred_region
          _
        $region72: #{conv_transformer_fe.1} parent=11 // pred_fallthru
          _
        // Predicated region
        $region73: #{conv_transformer_fe.1} parent=11 // pred_check
          %p518 = pneg %p390
        $region74: #{conv_transformer_fe.1} parent=11 // pred_check_branch
          %520 = sbr.rel (%p518) target = $region76
        $region75: #{conv_transformer_fe.1} parent=11 // pred_region
          _
        $region76: #{conv_transformer_fe.1} parent=11 // pred_fallthru
          _
        // Predicated region
        $region77: #{conv_transformer_fe.1} parent=11 // pred_check
          %p521 = pneg %p411
        $region78: #{conv_transformer_fe.1} parent=11 // pred_check_branch
          %523 = sbr.rel (%p521) target = $region80
        $region79: #{conv_transformer_fe.1} parent=11 // pred_region
          _
        $region80: #{conv_transformer_fe.1} parent=11 // pred_fallthru
          _
        // Predicated region
        $region81: #{conv_transformer_fe.1} parent=11 // pred_check
          %p524 = pneg %p432
        $region82: #{conv_transformer_fe.1} parent=11 // pred_check_branch
          %526 = sbr.rel (%p524) target = $region84
        $region83: #{conv_transformer_fe.1} parent=11 // pred_region
          _
        $region84: #{conv_transformer_fe.1} parent=11 // pred_fallthru
          _
      $region12: #{conv_transformer_fe.1} parent=5 // pred_fallthru
        _
      %p527 = scmp.lt.s32.totalorder %s28, 2
      // Predicated region
      $region85: #{conv_transformer_fe.1} parent=5 // pred_check
        %p528 = pneg %p527
      $region86: #{conv_transformer_fe.1} parent=5 // pred_check_branch
        %530 = sbr.rel (%p528) target = $region88
      $region87: #{conv_transformer_fe.1} parent=5 // pred_region
        // Predicated region
        $region89: #{conv_transformer_fe.1} parent=87 // pred_check
          %p531 = pneg %p48
        $region90: #{conv_transformer_fe.1} parent=87 // pred_check_branch
          %533 = sbr.rel (%p531) target = $region92
        $region91: #{conv_transformer_fe.1} parent=87 // pred_region
          %p534 = scmp.lt.s32.totalorder %s28, 1
          %s535 = scalar_select %p534, %s28, 1
          %s536 = smul.addr %s535, 16
          %s537 = smul.addr %s536, 8
          %s538 = scalar_lea.vmem %s0, %s537
        $region92: #{conv_transformer_fe.1} parent=87 // pred_fallthru
          _
      $region88: #{conv_transformer_fe.1} parent=5 // pred_fallthru
        _
      %p539 = scmp.le.s32.totalorder 1, %s28
      %p540 = scmp.lt.s32.totalorder %s28, 3
      %p541 = pnand %p539, %p540
      %p542 = pneg %p541
      // Predicated region
      $region93: #{conv_transformer_fe.1} parent=5 // pred_check
        _
      $region94: #{conv_transformer_fe.1} parent=5 // pred_check_branch
        %544 = sbr.rel (%p541) target = $region96
      $region95: #{conv_transformer_fe.1} parent=5 // pred_region
        %s545 = ssub.s32 %s28, 1
        %p546 = scmp.lt.s32.totalorder %s33, 1
        %s547 = scalar_select %p546, %s33, 1
        %s548 = smul.addr %s547, 16
        %s549 = smul.addr %s548, 8
        %s550 = scalar_lea.vmem %s0, %s549
        %p551 = pneg %p54
        %p552 = pneg %p51
        %p553 = pneg %p75
        %p554 = pneg %p72
        %p555 = pneg %p96
        %p556 = pneg %p93
        %p557 = pneg %p117
        %p558 = pneg %p114
        %p559 = pneg %p138
        %p560 = pneg %p135
        %p561 = pneg %p159
        %p562 = pneg %p156
        %p563 = pneg %p180
        %p564 = pneg %p177
        %p565 = pneg %p201
        %p566 = pneg %p198
        %p567 = pneg %p222
        %p568 = pneg %p219
        %p569 = pneg %p243
        %p570 = pneg %p240
        %p571 = pneg %p264
        %p572 = pneg %p261
        %p573 = pneg %p285
        %p574 = pneg %p282
        %p575 = pneg %p306
        %p576 = pneg %p303
        %p577 = pneg %p327
        %p578 = pneg %p324
        %p579 = pneg %p348
        %p580 = pneg %p345
        %p581 = pneg %p369
        %p582 = pneg %p366
        %p583 = pneg %p390
        %p584 = pneg %p387
        %p585 = pneg %p411
        %p586 = pneg %p408
        %p587 = pneg %p432
        %p588 = pneg %p429
        %p589 = pneg %p458
        %p590 = pneg %p455
        %s591 = sand.u32 %s445, 1
        %s592 = scalar_lea.sflag [#allocation3], %s591
        %s593 = sand.u32 %s445, 1
        %s594 = smul.addr %s593, 8
        %s595 = scalar_lea.vmem [#allocation2], %s594
        %p596 = scmp.lt.s32.totalorder %s33, 1
        %s597 = scalar_select %p596, %s33, 1
        %s598 = smul.addr %s597, 16
        %s599 = smul.addr %s598, 8
        %s600 = scalar_lea.vmem %s0, %s599
        %v601 = vld [vmem:[%s600] sm:$0xff]
        %v602 = vld [vmem:[%s600 + $0x8] sm:$0xff]
        %v603 = vld [vmem:[%s600 + $0x10] sm:$0xff]
        %v604 = vld [vmem:[%s600 + $0x18] sm:$0xff]
        %v605 = vld [vmem:[%s600 + $0x20] sm:$0xff]
        %v606 = vld [vmem:[%s600 + $0x28] sm:$0xff]
        %v607 = vld [vmem:[%s600 + $0x30] sm:$0xff]
        %v608 = vld [vmem:[%s600 + $0x38] sm:$0xff]
        %v609 = vld [vmem:[%s600 + $0x40] sm:$0xff]
        %v610 = vld [vmem:[%s600 + $0x48] sm:$0xff]
        %v611 = vld [vmem:[%s600 + $0x50] sm:$0xff]
        %v612 = vld [vmem:[%s600 + $0x58] sm:$0xff]
        %v613 = vld [vmem:[%s600 + $0x60] sm:$0xff]
        %v614 = vld [vmem:[%s600 + $0x68] sm:$0xff]
        %v615 = vld [vmem:[%s600 + $0x70] sm:$0xff]
        %v616 = vld [vmem:[%s600 + $0x78] sm:$0xff]
        %v617 = vld [vmem:[%s2] sm:$0xff]
        %v618 = vld [vmem:[%s2 + $0x8] sm:$0xff]
        %v619 = vld [vmem:[%s2 + $0x10] sm:$0xff]
        %v620 = vld [vmem:[%s2 + $0x18] sm:$0xff]
        %v621 = vld [vmem:[%s2 + $0x20] sm:$0xff]
        %v622 = vld [vmem:[%s2 + $0x28] sm:$0xff]
        %v623 = vld [vmem:[%s2 + $0x30] sm:$0xff]
        %v624 = vld [vmem:[%s2 + $0x38] sm:$0xff]
        %v625 = vld [vmem:[%s2 + $0x40] sm:$0xff]
        %v626 = vld [vmem:[%s2 + $0x48] sm:$0xff]
        %v627 = vld [vmem:[%s2 + $0x50] sm:$0xff]
        %v628 = vld [vmem:[%s2 + $0x58] sm:$0xff]
        %v629 = vld [vmem:[%s2 + $0x60] sm:$0xff]
        %v630 = vld [vmem:[%s2 + $0x68] sm:$0xff]
        %v631 = vld [vmem:[%s2 + $0x70] sm:$0xff]
        %v632 = vld [vmem:[%s2 + $0x78] sm:$0xff]
        %649 = vrot.lane.b32.xlu0 %v617, 4
        %v650 = vpop.permute.xlu0 %649
        %651 = vrot.lane.b32.xlu0 %v618, 4
        %v652 = vpop.permute.xlu0 %651
        %653 = vrot.lane.b32.xlu0 %v619, 4
        %v654 = vpop.permute.xlu0 %653
        %655 = vrot.lane.b32.xlu0 %v620, 4
        %v656 = vpop.permute.xlu0 %655
        %657 = vrot.lane.b32.xlu0 %v621, 4
        %v658 = vpop.permute.xlu0 %657
        %659 = vrot.lane.b32.xlu0 %v622, 4
        %v660 = vpop.permute.xlu0 %659
        %661 = vrot.lane.b32.xlu0 %v623, 4
        %v662 = vpop.permute.xlu0 %661
        %663 = vrot.lane.b32.xlu0 %v624, 4
        %v664 = vpop.permute.xlu0 %663
        %665 = vrot.lane.b32.xlu0 %v625, 4
        %v666 = vpop.permute.xlu0 %665
        %667 = vrot.lane.b32.xlu0 %v626, 4
        %v668 = vpop.permute.xlu0 %667
        %669 = vrot.lane.b32.xlu0 %v627, 4
        %v670 = vpop.permute.xlu0 %669
        %671 = vrot.lane.b32.xlu0 %v628, 4
        %v672 = vpop.permute.xlu0 %671
        %673 = vrot.lane.b32.xlu0 %v629, 4
        %v674 = vpop.permute.xlu0 %673
        %675 = vrot.lane.b32.xlu0 %v630, 4
        %v676 = vpop.permute.xlu0 %675
        %677 = vrot.lane.b32.xlu0 %v631, 4
        %v678 = vpop.permute.xlu0 %677
        %679 = vrot.lane.b32.xlu0 %v632, 4
        %v680 = vpop.permute.xlu0 %679
        %vm697 = vcmask 31744
        %v698 = vsel %vm697, %v601, %v650
        %v699 = vsel %vm697, %v602, %v652
        %v700 = vsel %vm697, %v603, %v654
        %v701 = vsel %vm697, %v604, %v656
        %v702 = vsel %vm697, %v605, %v658
        %v703 = vsel %vm697, %v606, %v660
        %v704 = vsel %vm697, %v607, %v662
        %v705 = vsel %vm697, %v608, %v664
        %v706 = vsel %vm697, %v609, %v666
        %v707 = vsel %vm697, %v610, %v668
        %v708 = vsel %vm697, %v611, %v670
        %v709 = vsel %vm697, %v612, %v672
        %v710 = vsel %vm697, %v613, %v674
        %v711 = vsel %vm697, %v614, %v676
        %v712 = vsel %vm697, %v615, %v678
        %v713 = vsel %vm697, %v616, %v680
        %v714 = vld [vmem:[%s1] sm:$0xff]
        %v715 = vld [vmem:[%s1 + $0x8] sm:$0xff]
        %v716 = vld [vmem:[%s1 + $0x10] sm:$0xff]
        %v717 = vld [vmem:[%s1 + $0x18] sm:$0xff]
        %v718 = vld [vmem:[%s1 + $0x20] sm:$0xff]
        %v719 = vld [vmem:[%s1 + $0x28] sm:$0xff]
        %v720 = vld [vmem:[%s1 + $0x30] sm:$0xff]
        %v721 = vld [vmem:[%s1 + $0x38] sm:$0xff]
        %v722 = vld [vmem:[%s1 + $0x40] sm:$0xff]
        %v723 = vld [vmem:[%s1 + $0x48] sm:$0xff]
        %v724 = vld [vmem:[%s1 + $0x50] sm:$0xff]
        %v725 = vld [vmem:[%s1 + $0x58] sm:$0xff]
        %v726 = vld [vmem:[%s1 + $0x60] sm:$0xff]
        %v727 = vld [vmem:[%s1 + $0x68] sm:$0xff]
        %v728 = vld [vmem:[%s1 + $0x70] sm:$0xff]
        %v729 = vld [vmem:[%s1 + $0x78] sm:$0xff]
        %v730 = vlaneseq
        %v731 = vshrl.u32 %v730, 7
        %v732 = vadd.s32 %v731, 8
        %v733 = vadd.s32 %v731, 16
        %v734 = vadd.s32 %v731, 24
        %v735 = vadd.s32 %v731, 32
        %v736 = vadd.s32 %v731, 40
        %v737 = vadd.s32 %v731, 48
        %v738 = vadd.s32 %v731, 56
        %v739 = vadd.s32 %v731, 64
        %v740 = vadd.s32 %v731, 72
        %v741 = vadd.s32 %v731, 80
        %v742 = vadd.s32 %v731, 88
        %v743 = vadd.s32 %v731, 96
        %v744 = vadd.s32 %v731, 104
        %v745 = vadd.s32 %v731, 112
        %v746 = vadd.s32 %v731, 120
        %vm747 = vcmp.ge.s32.totalorder %v731, 24
        %vm748 = vcmp.ge.s32.totalorder %v732, 24
        %vm749 = vcmp.ge.s32.totalorder %v733, 24
        %vm750 = vcmp.ge.s32.totalorder %v734, 24
        %vm751 = vcmp.ge.s32.totalorder %v735, 24
        %vm752 = vcmp.ge.s32.totalorder %v736, 24
        %vm753 = vcmp.ge.s32.totalorder %v737, 24
        %vm754 = vcmp.ge.s32.totalorder %v738, 24
        %vm755 = vcmp.ge.s32.totalorder %v739, 24
        %vm756 = vcmp.ge.s32.totalorder %v740, 24
        %vm757 = vcmp.ge.s32.totalorder %v741, 24
        %vm758 = vcmp.ge.s32.totalorder %v742, 24
        %vm759 = vcmp.ge.s32.totalorder %v743, 24
        %vm760 = vcmp.ge.s32.totalorder %v744, 24
        %vm761 = vcmp.ge.s32.totalorder %v745, 24
        %vm762 = vcmp.ge.s32.totalorder %v746, 24
        %v763 = vsel %vm747, 1, 0
        %v764 = vsel %vm748, 1, 0
        %v765 = vsel %vm749, 1, 0
        %v766 = vsel %vm750, 1, 0
        %v767 = vsel %vm751, 1, 0
        %v768 = vsel %vm752, 1, 0
        %v769 = vsel %vm753, 1, 0
        %v770 = vsel %vm754, 1, 0
        %v771 = vsel %vm755, 1, 0
        %v772 = vsel %vm756, 1, 0
        %v773 = vsel %vm757, 1, 0
        %v774 = vsel %vm758, 1, 0
        %v775 = vsel %vm759, 1, 0
        %v776 = vsel %vm760, 1, 0
        %v777 = vsel %vm761, 1, 0
        %v778 = vsel %vm762, 1, 0
        %vm779 = vcmp.eq.s32.totalorder %v763, 1
        %vm780 = vcmp.eq.s32.totalorder %v764, 1
        %vm781 = vcmp.eq.s32.totalorder %v765, 1
        %vm782 = vcmp.eq.s32.totalorder %v766, 1
        %vm783 = vcmp.eq.s32.totalorder %v767, 1
        %vm784 = vcmp.eq.s32.totalorder %v768, 1
        %vm785 = vcmp.eq.s32.totalorder %v769, 1
        %vm786 = vcmp.eq.s32.totalorder %v770, 1
        %vm787 = vcmp.eq.s32.totalorder %v771, 1
        %vm788 = vcmp.eq.s32.totalorder %v772, 1
        %vm789 = vcmp.eq.s32.totalorder %v773, 1
        %vm790 = vcmp.eq.s32.totalorder %v774, 1
        %vm791 = vcmp.eq.s32.totalorder %v775, 1
        %vm792 = vcmp.eq.s32.totalorder %v776, 1
        %vm793 = vcmp.eq.s32.totalorder %v777, 1
        %vm794 = vcmp.eq.s32.totalorder %v778, 1
        %v795 = vsel %vm779, %v711, 0.0
        %v796 = vsel %vm780, %v712, 0.0
        %v797 = vsel %vm781, %v713, 0.0
        %v798 = vsel %vm782, %v698, 0.0
        %v799 = vsel %vm783, %v699, 0.0
        %v800 = vsel %vm784, %v700, 0.0
        %v801 = vsel %vm785, %v701, 0.0
        %v802 = vsel %vm786, %v702, 0.0
        %v803 = vsel %vm787, %v703, 0.0
        %v804 = vsel %vm788, %v704, 0.0
        %v805 = vsel %vm789, %v705, 0.0
        %v806 = vsel %vm790, %v706, 0.0
        %v807 = vsel %vm791, %v707, 0.0
        %v808 = vsel %vm792, %v708, 0.0
        %v809 = vsel %vm793, %v709, 0.0
        %v810 = vsel %vm794, %v710, 0.0
        %vm811 = vcmp.ge.s32.totalorder %v731, 16
        %vm812 = vcmp.ge.s32.totalorder %v732, 16
        %vm813 = vcmp.ge.s32.totalorder %v733, 16
        %vm814 = vcmp.ge.s32.totalorder %v734, 16
        %vm815 = vcmp.ge.s32.totalorder %v735, 16
        %vm816 = vcmp.ge.s32.totalorder %v736, 16
        %vm817 = vcmp.ge.s32.totalorder %v737, 16
        %vm818 = vcmp.ge.s32.totalorder %v738, 16
        %vm819 = vcmp.ge.s32.totalorder %v739, 16
        %vm820 = vcmp.ge.s32.totalorder %v740, 16
        %vm821 = vcmp.ge.s32.totalorder %v741, 16
        %vm822 = vcmp.ge.s32.totalorder %v742, 16
        %vm823 = vcmp.ge.s32.totalorder %v743, 16
        %vm824 = vcmp.ge.s32.totalorder %v744, 16
        %vm825 = vcmp.ge.s32.totalorder %v745, 16
        %vm826 = vcmp.ge.s32.totalorder %v746, 16
        %v827 = vsel %vm811, 1, 0
        %v828 = vsel %vm812, 1, 0
        %v829 = vsel %vm813, 1, 0
        %v830 = vsel %vm814, 1, 0
        %v831 = vsel %vm815, 1, 0
        %v832 = vsel %vm816, 1, 0
        %v833 = vsel %vm817, 1, 0
        %v834 = vsel %vm818, 1, 0
        %v835 = vsel %vm819, 1, 0
        %v836 = vsel %vm820, 1, 0
        %v837 = vsel %vm821, 1, 0
        %v838 = vsel %vm822, 1, 0
        %v839 = vsel %vm823, 1, 0
        %v840 = vsel %vm824, 1, 0
        %v841 = vsel %vm825, 1, 0
        %v842 = vsel %vm826, 1, 0
        %vm843 = vcmp.eq.s32.totalorder %v827, 1
        %vm844 = vcmp.eq.s32.totalorder %v828, 1
        %vm845 = vcmp.eq.s32.totalorder %v829, 1
        %vm846 = vcmp.eq.s32.totalorder %v830, 1
        %vm847 = vcmp.eq.s32.totalorder %v831, 1
        %vm848 = vcmp.eq.s32.totalorder %v832, 1
        %vm849 = vcmp.eq.s32.totalorder %v833, 1
        %vm850 = vcmp.eq.s32.totalorder %v834, 1
        %vm851 = vcmp.eq.s32.totalorder %v835, 1
        %vm852 = vcmp.eq.s32.totalorder %v836, 1
        %vm853 = vcmp.eq.s32.totalorder %v837, 1
        %vm854 = vcmp.eq.s32.totalorder %v838, 1
        %vm855 = vcmp.eq.s32.totalorder %v839, 1
        %vm856 = vcmp.eq.s32.totalorder %v840, 1
        %vm857 = vcmp.eq.s32.totalorder %v841, 1
        %vm858 = vcmp.eq.s32.totalorder %v842, 1
        %v859 = vsel %vm843, %v712, 0.0
        %v860 = vsel %vm844, %v713, 0.0
        %v861 = vsel %vm845, %v698, 0.0
        %v862 = vsel %vm846, %v699, 0.0
        %v863 = vsel %vm847, %v700, 0.0
        %v864 = vsel %vm848, %v701, 0.0
        %v865 = vsel %vm849, %v702, 0.0
        %v866 = vsel %vm850, %v703, 0.0
        %v867 = vsel %vm851, %v704, 0.0
        %v868 = vsel %vm852, %v705, 0.0
        %v869 = vsel %vm853, %v706, 0.0
        %v870 = vsel %vm854, %v707, 0.0
        %v871 = vsel %vm855, %v708, 0.0
        %v872 = vsel %vm856, %v709, 0.0
        %v873 = vsel %vm857, %v710, 0.0
        %v874 = vsel %vm858, %v711, 0.0
        %vm875 = vcmp.ge.s32.totalorder %v731, 8
        %vm876 = vcmp.ge.s32.totalorder %v732, 8
        %vm877 = vcmp.ge.s32.totalorder %v733, 8
        %vm878 = vcmp.ge.s32.totalorder %v734, 8
        %vm879 = vcmp.ge.s32.totalorder %v735, 8
        %vm880 = vcmp.ge.s32.totalorder %v736, 8
        %vm881 = vcmp.ge.s32.totalorder %v737, 8
        %vm882 = vcmp.ge.s32.totalorder %v738, 8
        %vm883 = vcmp.ge.s32.totalorder %v739, 8
        %vm884 = vcmp.ge.s32.totalorder %v740, 8
        %vm885 = vcmp.ge.s32.totalorder %v741, 8
        %vm886 = vcmp.ge.s32.totalorder %v742, 8
        %vm887 = vcmp.ge.s32.totalorder %v743, 8
        %vm888 = vcmp.ge.s32.totalorder %v744, 8
        %vm889 = vcmp.ge.s32.totalorder %v745, 8
        %vm890 = vcmp.ge.s32.totalorder %v746, 8
        %v891 = vsel %vm875, 1, 0
        %v892 = vsel %vm876, 1, 0
        %v893 = vsel %vm877, 1, 0
        %v894 = vsel %vm878, 1, 0
        %v895 = vsel %vm879, 1, 0
        %v896 = vsel %vm880, 1, 0
        %v897 = vsel %vm881, 1, 0
        %v898 = vsel %vm882, 1, 0
        %v899 = vsel %vm883, 1, 0
        %v900 = vsel %vm884, 1, 0
        %v901 = vsel %vm885, 1, 0
        %v902 = vsel %vm886, 1, 0
        %v903 = vsel %vm887, 1, 0
        %v904 = vsel %vm888, 1, 0
        %v905 = vsel %vm889, 1, 0
        %v906 = vsel %vm890, 1, 0
        %vm907 = vcmp.eq.s32.totalorder %v891, 1
        %vm908 = vcmp.eq.s32.totalorder %v892, 1
        %vm909 = vcmp.eq.s32.totalorder %v893, 1
        %vm910 = vcmp.eq.s32.totalorder %v894, 1
        %vm911 = vcmp.eq.s32.totalorder %v895, 1
        %vm912 = vcmp.eq.s32.totalorder %v896, 1
        %vm913 = vcmp.eq.s32.totalorder %v897, 1
        %vm914 = vcmp.eq.s32.totalorder %v898, 1
        %vm915 = vcmp.eq.s32.totalorder %v899, 1
        %vm916 = vcmp.eq.s32.totalorder %v900, 1
        %vm917 = vcmp.eq.s32.totalorder %v901, 1
        %vm918 = vcmp.eq.s32.totalorder %v902, 1
        %vm919 = vcmp.eq.s32.totalorder %v903, 1
        %vm920 = vcmp.eq.s32.totalorder %v904, 1
        %vm921 = vcmp.eq.s32.totalorder %v905, 1
        %vm922 = vcmp.eq.s32.totalorder %v906, 1
        %v923 = vsel %vm907, %v713, 0.0
        %v924 = vsel %vm908, %v698, 0.0
        %v925 = vsel %vm909, %v699, 0.0
        %v926 = vsel %vm910, %v700, 0.0
        %v927 = vsel %vm911, %v701, 0.0
        %v928 = vsel %vm912, %v702, 0.0
        %v929 = vsel %vm913, %v703, 0.0
        %v930 = vsel %vm914, %v704, 0.0
        %v931 = vsel %vm915, %v705, 0.0
        %v932 = vsel %vm916, %v706, 0.0
        %v933 = vsel %vm917, %v707, 0.0
        %v934 = vsel %vm918, %v708, 0.0
        %v935 = vsel %vm919, %v709, 0.0
        %v936 = vsel %vm920, %v710, 0.0
        %v937 = vsel %vm921, %v711, 0.0
        %v938 = vsel %vm922, %v712, 0.0
        %955 = vrot.lane.b32.xlu0 %v859, 16
        %v956 = vpop.permute.xlu0 %955
        %957 = vrot.lane.b32.xlu0 %v860, 16
        %v958 = vpop.permute.xlu0 %957
        %959 = vrot.lane.b32.xlu0 %v861, 16
        %v960 = vpop.permute.xlu0 %959
        %961 = vrot.lane.b32.xlu0 %v862, 16
        %v962 = vpop.permute.xlu0 %961
        %963 = vrot.lane.b32.xlu0 %v863, 16
        %v964 = vpop.permute.xlu0 %963
        %965 = vrot.lane.b32.xlu0 %v864, 16
        %v966 = vpop.permute.xlu0 %965
        %967 = vrot.lane.b32.xlu0 %v865, 16
        %v968 = vpop.permute.xlu0 %967
        %969 = vrot.lane.b32.xlu0 %v866, 16
        %v970 = vpop.permute.xlu0 %969
        %971 = vrot.lane.b32.xlu0 %v867, 16
        %v972 = vpop.permute.xlu0 %971
        %973 = vrot.lane.b32.xlu0 %v868, 16
        %v974 = vpop.permute.xlu0 %973
        %975 = vrot.lane.b32.xlu0 %v869, 16
        %v976 = vpop.permute.xlu0 %975
        %977 = vrot.lane.b32.xlu0 %v870, 16
        %v978 = vpop.permute.xlu0 %977
        %979 = vrot.lane.b32.xlu0 %v871, 16
        %v980 = vpop.permute.xlu0 %979
        %981 = vrot.lane.b32.xlu0 %v872, 16
        %v982 = vpop.permute.xlu0 %981
        %983 = vrot.lane.b32.xlu0 %v873, 16
        %v984 = vpop.permute.xlu0 %983
        %985 = vrot.lane.b32.xlu0 %v874, 16
        %v986 = vpop.permute.xlu0 %985
        %1019 = vrot.lane.b32.xlu0 %v923, 32
        %v1020 = vpop.permute.xlu0 %1019
        %1021 = vrot.lane.b32.xlu0 %v924, 32
        %v1022 = vpop.permute.xlu0 %1021
        %1023 = vrot.lane.b32.xlu0 %v925, 32
        %v1024 = vpop.permute.xlu0 %1023
        %1025 = vrot.lane.b32.xlu0 %v926, 32
        %v1026 = vpop.permute.xlu0 %1025
        %1027 = vrot.lane.b32.xlu0 %v927, 32
        %v1028 = vpop.permute.xlu0 %1027
        %1029 = vrot.lane.b32.xlu0 %v928, 32
        %v1030 = vpop.permute.xlu0 %1029
        %1031 = vrot.lane.b32.xlu0 %v929, 32
        %v1032 = vpop.permute.xlu0 %1031
        %1033 = vrot.lane.b32.xlu0 %v930, 32
        %v1034 = vpop.permute.xlu0 %1033
        %1035 = vrot.lane.b32.xlu0 %v931, 32
        %v1036 = vpop.permute.xlu0 %1035
        %1037 = vrot.lane.b32.xlu0 %v932, 32
        %v1038 = vpop.permute.xlu0 %1037
        %1039 = vrot.lane.b32.xlu0 %v933, 32
        %v1040 = vpop.permute.xlu0 %1039
        %1041 = vrot.lane.b32.xlu0 %v934, 32
        %v1042 = vpop.permute.xlu0 %1041
        %1043 = vrot.lane.b32.xlu0 %v935, 32
        %v1044 = vpop.permute.xlu0 %1043
        %1045 = vrot.lane.b32.xlu0 %v936, 32
        %v1046 = vpop.permute.xlu0 %1045
        %1047 = vrot.lane.b32.xlu0 %v937, 32
        %v1048 = vpop.permute.xlu0 %1047
        %1049 = vrot.lane.b32.xlu0 %v938, 32
        %v1050 = vpop.permute.xlu0 %1049
        %1083 = vrot.lane.b32.xlu0 %v698, 48
        %v1084 = vpop.permute.xlu0 %1083
        %1085 = vrot.lane.b32.xlu0 %v699, 48
        %v1086 = vpop.permute.xlu0 %1085
        %1087 = vrot.lane.b32.xlu0 %v700, 48
        %v1088 = vpop.permute.xlu0 %1087
        %1089 = vrot.lane.b32.xlu0 %v701, 48
        %v1090 = vpop.permute.xlu0 %1089
        %1091 = vrot.lane.b32.xlu0 %v702, 48
        %v1092 = vpop.permute.xlu0 %1091
        %1093 = vrot.lane.b32.xlu0 %v703, 48
        %v1094 = vpop.permute.xlu0 %1093
        %1095 = vrot.lane.b32.xlu0 %v704, 48
        %v1096 = vpop.permute.xlu0 %1095
        %1097 = vrot.lane.b32.xlu0 %v705, 48
        %v1098 = vpop.permute.xlu0 %1097
        %1099 = vrot.lane.b32.xlu0 %v706, 48
        %v1100 = vpop.permute.xlu0 %1099
        %1101 = vrot.lane.b32.xlu0 %v707, 48
        %v1102 = vpop.permute.xlu0 %1101
        %1103 = vrot.lane.b32.xlu0 %v708, 48
        %v1104 = vpop.permute.xlu0 %1103
        %1105 = vrot.lane.b32.xlu0 %v709, 48
        %v1106 = vpop.permute.xlu0 %1105
        %1107 = vrot.lane.b32.xlu0 %v710, 48
        %v1108 = vpop.permute.xlu0 %1107
        %1109 = vrot.lane.b32.xlu0 %v711, 48
        %v1110 = vpop.permute.xlu0 %1109
        %1111 = vrot.lane.b32.xlu0 %v712, 48
        %v1112 = vpop.permute.xlu0 %1111
        %1113 = vrot.lane.b32.xlu0 %v713, 48
        %v1114 = vpop.permute.xlu0 %1113
        %vm1131 = vcmask 130048
        %v1132 = vsel %vm1131, %v795, %v956
        %v1133 = vsel %vm1131, %v796, %v958
        %v1134 = vsel %vm1131, %v797, %v960
        %v1135 = vsel %vm1131, %v798, %v962
        %v1136 = vsel %vm1131, %v799, %v964
        %v1137 = vsel %vm1131, %v800, %v966
        %v1138 = vsel %vm1131, %v801, %v968
        %v1139 = vsel %vm1131, %v802, %v970
        %v1140 = vsel %vm1131, %v803, %v972
        %v1141 = vsel %vm1131, %v804, %v974
        %v1142 = vsel %vm1131, %v805, %v976
        %v1143 = vsel %vm1131, %v806, %v978
        %v1144 = vsel %vm1131, %v807, %v980
        %v1145 = vsel %vm1131, %v808, %v982
        %v1146 = vsel %vm1131, %v809, %v984
        %v1147 = vsel %vm1131, %v810, %v986
        %vm1148 = vcmask 261120
        %v1149 = vsel %vm1148, %v1132, %v1020
        %v1150 = vsel %vm1148, %v1133, %v1022
        %v1151 = vsel %vm1148, %v1134, %v1024
        %v1152 = vsel %vm1148, %v1135, %v1026
        %v1153 = vsel %vm1148, %v1136, %v1028
        %v1154 = vsel %vm1148, %v1137, %v1030
        %v1155 = vsel %vm1148, %v1138, %v1032
        %v1156 = vsel %vm1148, %v1139, %v1034
        %v1157 = vsel %vm1148, %v1140, %v1036
        %v1158 = vsel %vm1148, %v1141, %v1038
        %v1159 = vsel %vm1148, %v1142, %v1040
        %v1160 = vsel %vm1148, %v1143, %v1042
        %v1161 = vsel %vm1148, %v1144, %v1044
        %v1162 = vsel %vm1148, %v1145, %v1046
        %v1163 = vsel %vm1148, %v1146, %v1048
        %v1164 = vsel %vm1148, %v1147, %v1050
        %vm1165 = vcmask 392192
        %v1166 = vsel %vm1165, %v1149, %v1084
        %v1167 = vsel %vm1165, %v1150, %v1086
        %v1168 = vsel %vm1165, %v1151, %v1088
        %v1169 = vsel %vm1165, %v1152, %v1090
        %v1170 = vsel %vm1165, %v1153, %v1092
        %v1171 = vsel %vm1165, %v1154, %v1094
        %v1172 = vsel %vm1165, %v1155, %v1096
        %v1173 = vsel %vm1165, %v1156, %v1098
        %v1174 = vsel %vm1165, %v1157, %v1100
        %v1175 = vsel %vm1165, %v1158, %v1102
        %v1176 = vsel %vm1165, %v1159, %v1104
        %v1177 = vsel %vm1165, %v1160, %v1106
        %v1178 = vsel %vm1165, %v1161, %v1108
        %v1179 = vsel %vm1165, %v1162, %v1110
        %v1180 = vsel %vm1165, %v1163, %v1112
        %v1181 = vsel %vm1165, %v1164, %v1114
        %v1182 = vld [vmem:[%s3] sm:$0xff]
        %v1183 = vld [vmem:[%s3 + $0x8] sm:$0xff]
        %v1184 = vld [vmem:[%s3 + $0x10] sm:$0xff]
        %v1185 = vld [vmem:[%s3 + $0x18] sm:$0xff]
        %v1186 = vld [vmem:[%s3 + $0x20] sm:$0xff]
        %v1187 = vld [vmem:[%s3 + $0x28] sm:$0xff]
        %v1188 = vld [vmem:[%s3 + $0x30] sm:$0xff]
        %v1189 = vld [vmem:[%s3 + $0x38] sm:$0xff]
        %v1190 = vld [vmem:[%s3 + $0x40] sm:$0xff]
        %v1191 = vld [vmem:[%s3 + $0x48] sm:$0xff]
        %v1192 = vld [vmem:[%s3 + $0x50] sm:$0xff]
        %v1193 = vld [vmem:[%s3 + $0x58] sm:$0xff]
        %v1194 = vld [vmem:[%s3 + $0x60] sm:$0xff]
        %v1195 = vld [vmem:[%s3 + $0x68] sm:$0xff]
        %v1196 = vld [vmem:[%s3 + $0x70] sm:$0xff]
        %v1197 = vld [vmem:[%s3 + $0x78] sm:$0xff]
        %v1198 = vld [vmem:[%s4] sm:$0x3]
        %v1200 = vlaneseq
        %v1201 = vshrl.u32 %v1200, 7
        %v1202 = vsub.s32 0, %v1201
        %v1203 = vrot.slane %v1198, %v1202
        %v1204 = vlaneseq
        %v1205 = vshrl.u32 %v1204, 7
        %v1206 = vsub.s32 1, %v1205
        %v1207 = vrot.slane %v1198, %v1206
        %vm1210 = vcmask 523264
        %v1212 = vsel %vm1210, %v1166, 0
        %v1215 = vsel %vm1210, %v1167, 0
        %v1218 = vsel %vm1210, %v1168, 0
        %v1221 = vsel %vm1210, %v1169, 0
        %v1224 = vsel %vm1210, %v1170, 0
        %v1227 = vsel %vm1210, %v1171, 0
        %v1230 = vsel %vm1210, %v1172, 0
        %v1233 = vsel %vm1210, %v1173, 0
        %v1236 = vsel %vm1210, %v1174, 0
        %v1239 = vsel %vm1210, %v1175, 0
        %v1242 = vsel %vm1210, %v1176, 0
        %v1245 = vsel %vm1210, %v1177, 0
        %v1248 = vsel %vm1210, %v1178, 0
        %v1251 = vsel %vm1210, %v1179, 0
        %v1254 = vsel %vm1210, %v1180, 0
        %v1257 = vsel %vm1210, %v1181, 0
        %1259 = vmatprep.subr.mxu0 %v1183
        %1260 = vmatpush1.msra.mxu0 %v1182
        %1261 = vmatprep.subr.mxu0 %v1185
        %1262 = vmatpush1.msra.mxu0 %v1184
        %1263 = vmatprep.subr.mxu0 %v1187
        %1264 = vmatpush1.msra.mxu0 %v1186
        %1265 = vmatprep.subr.mxu0 %v1189
        %1266 = vmatpush1.msra.mxu0 %v1188
        %1267 = vmatprep.subr.mxu0 %v1191
        %1268 = vmatpush1.msra.mxu0 %v1190
        %1269 = vmatprep.subr.mxu0 %v1193
        %1270 = vmatpush1.msra.mxu0 %v1192
        %1271 = vmatprep.subr.mxu0 %v1195
        %1272 = vmatpush1.msra.mxu0 %v1194
        %1273 = vmatprep.subr.mxu0 %v1197
        %1274 = vmatpush1.msra.mxu0 %v1196
        %1275 = vmatprep.subr.mxu0 0.0
        %1276 = vmatpush1.msra.mxu0 0.0
        %1277 = vmatprep.subr.mxu0 0.0
        %1278 = vmatpush1.msra.mxu0 0.0
        %1279 = vmatprep.subr.mxu0 0.0
        %1280 = vmatpush1.msra.mxu0 0.0
        %1281 = vmatprep.subr.mxu0 0.0
        %1282 = vmatpush1.msra.mxu0 0.0
        %1283 = vmatprep.subr.mxu0 0.0
        %1284 = vmatpush1.msra.mxu0 0.0
        %1285 = vmatprep.subr.mxu0 0.0
        %1286 = vmatpush1.msra.mxu0 0.0
        %1287 = vmatprep.subr.mxu0 0.0
        %1288 = vmatpush1.msra.mxu0 0.0
        %1289 = vmatprep.subr.mxu0 0.0
        %1290 = vmatpush1.msra.mxu0 0.0
        %1291 = vmatprep.subr.mxu0 0.0
        %1292 = vmatpush1.msra.mxu0 0.0
        %1293 = vmatprep.subr.mxu0 0.0
        %1294 = vmatpush1.msra.mxu0 0.0
        %1295 = vmatprep.subr.mxu0 0.0
        %1296 = vmatpush1.msra.mxu0 0.0
        %1297 = vmatprep.subr.mxu0 0.0
        %1298 = vmatpush1.msra.mxu0 0.0
        %1299 = vmatprep.subr.mxu0 0.0
        %1300 = vmatpush1.msra.mxu0 0.0
        %1301 = vmatprep.subr.mxu0 0.0
        %1302 = vmatpush1.msra.mxu0 0.0
        %1303 = vmatprep.subr.mxu0 0.0
        %1304 = vmatpush1.msra.mxu0 0.0
        %1305 = vmatprep.subr.mxu0 0.0
        %1306 = vmatpush1.msra.mxu0 0.0
        %1307 = vmatprep.subr.mxu0 0.0
        %1308 = vmatpush1.msra.mxu0 0.0
        %1309 = vmatprep.subr.mxu0 0.0
        %1310 = vmatpush1.msra.mxu0 0.0
        %1311 = vmatprep.subr.mxu0 0.0
        %1312 = vmatpush1.msra.mxu0 0.0
        %1313 = vmatprep.subr.mxu0 0.0
        %1314 = vmatpush1.msra.mxu0 0.0
        %1315 = vmatprep.subr.mxu0 0.0
        %1316 = vmatpush1.msra.mxu0 0.0
        %1317 = vmatprep.subr.mxu0 0.0
        %1318 = vmatpush1.msra.mxu0 0.0
        %1319 = vmatprep.subr.mxu0 0.0
        %1320 = vmatpush1.msra.mxu0 0.0
        %1321 = vmatprep.subr.mxu0 0.0
        %1322 = vmatpush1.msra.mxu0 0.0
        %1323 = vmatprep.mubr.f32.mxu0 0.0
        %1324 = vmatmul.mubr.f32.gmra.mrb[0].mxu0 %v1212
        %v1325 = vpop.f32.mrb[0].mxu0
        %v1326 = vadd.f32 %v1203, %v1325
        %v1327 = vpop.f32.mrb[0].mxu0
        %v1328 = vadd.f32 %v1207, %v1327
        %1329 = vmatprep.mubr.f32.mxu0 0.0
        %1330 = vmatmul.mubr.f32.gmra.mrb[0].mxu0 %v1215
        %v1331 = vpop.f32.mrb[0].mxu0
        %v1332 = vadd.f32 %v1203, %v1331
        %v1333 = vpop.f32.mrb[0].mxu0
        %v1334 = vadd.f32 %v1207, %v1333
        %1335 = vmatprep.mubr.f32.mxu0 0.0
        %1336 = vmatmul.mubr.f32.gmra.mrb[0].mxu0 %v1218
        %v1337 = vpop.f32.mrb[0].mxu0
        %v1338 = vadd.f32 %v1203, %v1337
        %v1339 = vpop.f32.mrb[0].mxu0
        %v1340 = vadd.f32 %v1207, %v1339
        %1341 = vmatprep.mubr.f32.mxu0 0.0
        %1342 = vmatmul.mubr.f32.gmra.mrb[0].mxu0 %v1221
        %v1343 = vpop.f32.mrb[0].mxu0
        %v1344 = vadd.f32 %v1203, %v1343
        %v1345 = vpop.f32.mrb[0].mxu0
        %v1346 = vadd.f32 %v1207, %v1345
        %1347 = vmatprep.mubr.f32.mxu0 0.0
        %1348 = vmatmul.mubr.f32.gmra.mrb[0].mxu0 %v1224
        %v1349 = vpop.f32.mrb[0].mxu0
        %v1350 = vadd.f32 %v1203, %v1349
        %v1351 = vpop.f32.mrb[0].mxu0
        %v1352 = vadd.f32 %v1207, %v1351
        %1353 = vmatprep.mubr.f32.mxu0 0.0
        %1354 = vmatmul.mubr.f32.gmra.mrb[0].mxu0 %v1227
        %v1355 = vpop.f32.mrb[0].mxu0
        %v1356 = vadd.f32 %v1203, %v1355
        %v1357 = vpop.f32.mrb[0].mxu0
        %v1358 = vadd.f32 %v1207, %v1357
        %1359 = vmatprep.mubr.f32.mxu0 0.0
        %1360 = vmatmul.mubr.f32.gmra.mrb[0].mxu0 %v1230
        %v1361 = vpop.f32.mrb[0].mxu0
        %v1362 = vadd.f32 %v1203, %v1361
        %v1363 = vpop.f32.mrb[0].mxu0
        %v1364 = vadd.f32 %v1207, %v1363
        %1365 = vmatprep.mubr.f32.mxu0 0.0
        %1366 = vmatmul.mubr.f32.gmra.mrb[0].mxu0 %v1233
        %v1367 = vpop.f32.mrb[0].mxu0
        %v1368 = vadd.f32 %v1203, %v1367
        %v1369 = vpop.f32.mrb[0].mxu0
        %v1370 = vadd.f32 %v1207, %v1369
        %1371 = vmatprep.mubr.f32.mxu0 0.0
        %1372 = vmatmul.mubr.f32.gmra.mrb[0].mxu0 %v1236
        %v1373 = vpop.f32.mrb[0].mxu0
        %v1374 = vadd.f32 %v1203, %v1373
        %v1375 = vpop.f32.mrb[0].mxu0
        %v1376 = vadd.f32 %v1207, %v1375
        %1377 = vmatprep.mubr.f32.mxu0 0.0
        %1378 = vmatmul.mubr.f32.gmra.mrb[0].mxu0 %v1239
        %v1379 = vpop.f32.mrb[0].mxu0
        %v1380 = vadd.f32 %v1203, %v1379
        %v1381 = vpop.f32.mrb[0].mxu0
        %v1382 = vadd.f32 %v1207, %v1381
        %1383 = vmatprep.mubr.f32.mxu0 0.0
        %1384 = vmatmul.mubr.f32.gmra.mrb[0].mxu0 %v1242
        %v1385 = vpop.f32.mrb[0].mxu0
        %v1386 = vadd.f32 %v1203, %v1385
        %v1387 = vpop.f32.mrb[0].mxu0
        %v1388 = vadd.f32 %v1207, %v1387
        %1389 = vmatprep.mubr.f32.mxu0 0.0
        %1390 = vmatmul.mubr.f32.gmra.mrb[0].mxu0 %v1245
        %v1391 = vpop.f32.mrb[0].mxu0
        %v1392 = vadd.f32 %v1203, %v1391
        %v1393 = vpop.f32.mrb[0].mxu0
        %v1394 = vadd.f32 %v1207, %v1393
        %1395 = vmatprep.mubr.f32.mxu0 0.0
        %1396 = vmatmul.mubr.f32.gmra.mrb[0].mxu0 %v1248
        %v1397 = vpop.f32.mrb[0].mxu0
        %v1398 = vadd.f32 %v1203, %v1397
        %v1399 = vpop.f32.mrb[0].mxu0
        %v1400 = vadd.f32 %v1207, %v1399
        %1401 = vmatprep.mubr.f32.mxu0 0.0
        %1402 = vmatmul.mubr.f32.gmra.mrb[0].mxu0 %v1251
        %v1403 = vpop.f32.mrb[0].mxu0
        %v1404 = vadd.f32 %v1203, %v1403
        %v1405 = vpop.f32.mrb[0].mxu0
        %v1406 = vadd.f32 %v1207, %v1405
        %1407 = vmatprep.mubr.f32.mxu0 0.0
        %1408 = vmatmul.mubr.f32.gmra.mrb[0].mxu0 %v1254
        %v1409 = vpop.f32.mrb[0].mxu0
        %v1410 = vadd.f32 %v1203, %v1409
        %v1411 = vpop.f32.mrb[0].mxu0
        %v1412 = vadd.f32 %v1207, %v1411
        %1413 = vmatprep.mubr.f32.mxu0 0.0
        %1414 = vmatmul.mubr.f32.gmra.mrb[0].mxu0 %v1257
        %v1415 = vpop.f32.mrb[0].mxu0
        %v1416 = vadd.f32 %v1203, %v1415
        %v1417 = vpop.f32.mrb[0].mxu0
        %v1418 = vadd.f32 %v1207, %v1417
        %1419 = vdwg.mxu0
        %1436 = vrot.lane.b32.xlu0 %v1326, 64
        %v1437 = vpop.permute.xlu0 %1436
        %1438 = vrot.lane.b32.xlu0 %v1332, 64
        %v1439 = vpop.permute.xlu0 %1438
        %1440 = vrot.lane.b32.xlu0 %v1338, 64
        %v1441 = vpop.permute.xlu0 %1440
        %1442 = vrot.lane.b32.xlu0 %v1344, 64
        %v1443 = vpop.permute.xlu0 %1442
        %1444 = vrot.lane.b32.xlu0 %v1350, 64
        %v1445 = vpop.permute.xlu0 %1444
        %1446 = vrot.lane.b32.xlu0 %v1356, 64
        %v1447 = vpop.permute.xlu0 %1446
        %1448 = vrot.lane.b32.xlu0 %v1362, 64
        %v1449 = vpop.permute.xlu0 %1448
        %1450 = vrot.lane.b32.xlu0 %v1368, 64
        %v1451 = vpop.permute.xlu0 %1450
        %1452 = vrot.lane.b32.xlu0 %v1374, 64
        %v1453 = vpop.permute.xlu0 %1452
        %1454 = vrot.lane.b32.xlu0 %v1380, 64
        %v1455 = vpop.permute.xlu0 %1454
        %1456 = vrot.lane.b32.xlu0 %v1386, 64
        %v1457 = vpop.permute.xlu0 %1456
        %1458 = vrot.lane.b32.xlu0 %v1392, 64
        %v1459 = vpop.permute.xlu0 %1458
        %1460 = vrot.lane.b32.xlu0 %v1398, 64
        %v1461 = vpop.permute.xlu0 %1460
        %1462 = vrot.lane.b32.xlu0 %v1404, 64
        %v1463 = vpop.permute.xlu0 %1462
        %1464 = vrot.lane.b32.xlu0 %v1410, 64
        %v1465 = vpop.permute.xlu0 %1464
        %1466 = vrot.lane.b32.xlu0 %v1416, 64
        %v1467 = vpop.permute.xlu0 %1466
        %v1468 = vsel %vm1131, %v1326, 0
        %v1470 = vsel %vm1131, %v1332, 0
        %v1472 = vsel %vm1131, %v1338, 0
        %v1474 = vsel %vm1131, %v1344, 0
        %v1476 = vsel %vm1131, %v1350, 0
        %v1478 = vsel %vm1131, %v1356, 0
        %v1480 = vsel %vm1131, %v1362, 0
        %v1482 = vsel %vm1131, %v1368, 0
        %v1484 = vsel %vm1131, %v1374, 0
        %v1486 = vsel %vm1131, %v1380, 0
        %v1488 = vsel %vm1131, %v1386, 0
        %v1490 = vsel %vm1131, %v1392, 0
        %v1492 = vsel %vm1131, %v1398, 0
        %v1494 = vsel %vm1131, %v1404, 0
        %v1496 = vsel %vm1131, %v1410, 0
        %v1498 = vsel %vm1131, %v1416, 0
        %v1500 = vsel %vm1131, %v1437, 0
        %v1502 = vsel %vm1131, %v1439, 0
        %v1504 = vsel %vm1131, %v1441, 0
        %v1506 = vsel %vm1131, %v1443, 0
        %v1508 = vsel %vm1131, %v1445, 0
        %v1510 = vsel %vm1131, %v1447, 0
        %v1512 = vsel %vm1131, %v1449, 0
        %v1514 = vsel %vm1131, %v1451, 0
        %v1516 = vsel %vm1131, %v1453, 0
        %v1518 = vsel %vm1131, %v1455, 0
        %v1520 = vsel %vm1131, %v1457, 0
        %v1522 = vsel %vm1131, %v1459, 0
        %v1524 = vsel %vm1131, %v1461, 0
        %v1526 = vsel %vm1131, %v1463, 0
        %v1528 = vsel %vm1131, %v1465, 0
        %v1530 = vsel %vm1131, %v1467, 0
        %1532 = vmatprep.subr.mxu0 0.0
        %1533 = vmatpush1.xpose.msra.mxu0 %v1500
        %1534 = vmatprep.subr.mxu0 0.0
        %1535 = vmatpush1.xpose.msra.mxu0 %v1502
        %1536 = vmatprep.subr.mxu0 0.0
        %1537 = vmatpush1.xpose.msra.mxu0 %v1504
        %1538 = vmatprep.subr.mxu0 0.0
        %1539 = vmatpush1.xpose.msra.mxu0 %v1506
        %1540 = vmatprep.subr.mxu0 0.0
        %1541 = vmatpush1.xpose.msra.mxu0 %v1508
        %1542 = vmatprep.subr.mxu0 0.0
        %1543 = vmatpush1.xpose.msra.mxu0 %v1510
        %1544 = vmatprep.subr.mxu0 0.0
        %1545 = vmatpush1.xpose.msra.mxu0 %v1512
        %1546 = vmatprep.subr.mxu0 0.0
        %1547 = vmatpush1.xpose.msra.mxu0 %v1514
        %1548 = vmatprep.subr.mxu0 0.0
        %1549 = vmatpush1.xpose.msra.mxu0 %v1516
        %1550 = vmatprep.subr.mxu0 0.0
        %1551 = vmatpush1.xpose.msra.mxu0 %v1518
        %1552 = vmatprep.subr.mxu0 0.0
        %1553 = vmatpush1.xpose.msra.mxu0 %v1520
        %1554 = vmatprep.subr.mxu0 0.0
        %1555 = vmatpush1.xpose.msra.mxu0 %v1522
        %1556 = vmatprep.subr.mxu0 0.0
        %1557 = vmatpush1.xpose.msra.mxu0 %v1524
        %1558 = vmatprep.subr.mxu0 0.0
        %1559 = vmatpush1.xpose.msra.mxu0 %v1526
        %1560 = vmatprep.subr.mxu0 0.0
        %1561 = vmatpush1.xpose.msra.mxu0 %v1528
        %1562 = vmatprep.subr.mxu0 0.0
        %1563 = vmatpush1.xpose.msra.mxu0 %v1530
        %1564 = vmatprep.subr.mxu0 0.0
        %1565 = vmatpush1.xpose.msra.mxu0 0.0
        %1566 = vmatprep.subr.mxu0 0.0
        %1567 = vmatpush1.xpose.msra.mxu0 0.0
        %1568 = vmatprep.subr.mxu0 0.0
        %1569 = vmatpush1.xpose.msra.mxu0 0.0
        %1570 = vmatprep.subr.mxu0 0.0
        %1571 = vmatpush1.xpose.msra.mxu0 0.0
        %1572 = vmatprep.subr.mxu0 0.0
        %1573 = vmatpush1.xpose.msra.mxu0 0.0
        %1574 = vmatprep.subr.mxu0 0.0
        %1575 = vmatpush1.xpose.msra.mxu0 0.0
        %1576 = vmatprep.subr.mxu0 0.0
        %1577 = vmatpush1.xpose.msra.mxu0 0.0
        %1578 = vmatprep.subr.mxu0 0.0
        %1579 = vmatpush1.xpose.msra.mxu0 0.0
        %1580 = vmatprep.subr.mxu0 0.0
        %1581 = vmatpush1.xpose.msra.mxu0 0.0
        %1582 = vmatprep.subr.mxu0 0.0
        %1583 = vmatpush1.xpose.msra.mxu0 0.0
        %1584 = vmatprep.subr.mxu0 0.0
        %1585 = vmatpush1.xpose.msra.mxu0 0.0
        %1586 = vmatprep.subr.mxu0 0.0
        %1587 = vmatpush1.xpose.msra.mxu0 0.0
        %1588 = vmatprep.subr.mxu0 0.0
        %1589 = vmatpush1.xpose.msra.mxu0 0.0
        %1590 = vmatprep.subr.mxu0 0.0
        %1591 = vmatpush1.xpose.msra.mxu0 0.0
        %1592 = vmatprep.subr.mxu0 0.0
        %1593 = vmatpush1.xpose.msra.mxu0 0.0
        %1594 = vmatprep.subr.mxu0 0.0
        %1595 = vmatpush1.xpose.msra.mxu0 0.0
        %1596 = vmatprep.mubr.f32.mxu0 0.0
        %1597 = vmatmul.mubr.f32.gmra.mrb[0].mxu0 %v1468
        %v1598 = vpop.f32.mrb[0].mxu0
        %v1599 = vadd.f32 %v714, %v1598
        %v1600 = vpop.f32.mrb[0].mxu0
        %1601 = vmatprep.mubr.f32.mxu0 0.0
        %1602 = vmatmul.mubr.f32.gmra.mrb[0].mxu0 %v1470
        %v1603 = vpop.f32.mrb[0].mxu0
        %v1604 = vadd.f32 %v715, %v1603
        %v1605 = vpop.f32.mrb[0].mxu0
        %1606 = vmatprep.mubr.f32.mxu0 0.0
        %1607 = vmatmul.mubr.f32.gmra.mrb[0].mxu0 %v1472
        %v1608 = vpop.f32.mrb[0].mxu0
        %v1609 = vadd.f32 %v716, %v1608
        %v1610 = vpop.f32.mrb[0].mxu0
        %1611 = vmatprep.mubr.f32.mxu0 0.0
        %1612 = vmatmul.mubr.f32.gmra.mrb[0].mxu0 %v1474
        %v1613 = vpop.f32.mrb[0].mxu0
        %v1614 = vadd.f32 %v717, %v1613
        %v1615 = vpop.f32.mrb[0].mxu0
        %1616 = vmatprep.mubr.f32.mxu0 0.0
        %1617 = vmatmul.mubr.f32.gmra.mrb[0].mxu0 %v1476
        %v1618 = vpop.f32.mrb[0].mxu0
        %v1619 = vadd.f32 %v718, %v1618
        %v1620 = vpop.f32.mrb[0].mxu0
        %1621 = vmatprep.mubr.f32.mxu0 0.0
        %1622 = vmatmul.mubr.f32.gmra.mrb[0].mxu0 %v1478
        %v1623 = vpop.f32.mrb[0].mxu0
        %v1624 = vadd.f32 %v719, %v1623
        %v1625 = vpop.f32.mrb[0].mxu0
        %1626 = vmatprep.mubr.f32.mxu0 0.0
        %1627 = vmatmul.mubr.f32.gmra.mrb[0].mxu0 %v1480
        %v1628 = vpop.f32.mrb[0].mxu0
        %v1629 = vadd.f32 %v720, %v1628
        %v1630 = vpop.f32.mrb[0].mxu0
        %1631 = vmatprep.mubr.f32.mxu0 0.0
        %1632 = vmatmul.mubr.f32.gmra.mrb[0].mxu0 %v1482
        %v1633 = vpop.f32.mrb[0].mxu0
        %v1634 = vadd.f32 %v721, %v1633
        %v1635 = vpop.f32.mrb[0].mxu0
        %1636 = vmatprep.mubr.f32.mxu0 0.0
        %1637 = vmatmul.mubr.f32.gmra.mrb[0].mxu0 %v1484
        %v1638 = vpop.f32.mrb[0].mxu0
        %v1639 = vadd.f32 %v722, %v1638
        %v1640 = vpop.f32.mrb[0].mxu0
        %1641 = vmatprep.mubr.f32.mxu0 0.0
        %1642 = vmatmul.mubr.f32.gmra.mrb[0].mxu0 %v1486
        %v1643 = vpop.f32.mrb[0].mxu0
        %v1644 = vadd.f32 %v723, %v1643
        %v1645 = vpop.f32.mrb[0].mxu0
        %1646 = vmatprep.mubr.f32.mxu0 0.0
        %1647 = vmatmul.mubr.f32.gmra.mrb[0].mxu0 %v1488
        %v1648 = vpop.f32.mrb[0].mxu0
        %v1649 = vadd.f32 %v724, %v1648
        %v1650 = vpop.f32.mrb[0].mxu0
        %1651 = vmatprep.mubr.f32.mxu0 0.0
        %1652 = vmatmul.mubr.f32.gmra.mrb[0].mxu0 %v1490
        %v1653 = vpop.f32.mrb[0].mxu0
        %v1654 = vadd.f32 %v725, %v1653
        %v1655 = vpop.f32.mrb[0].mxu0
        %1656 = vmatprep.mubr.f32.mxu0 0.0
        %1657 = vmatmul.mubr.f32.gmra.mrb[0].mxu0 %v1492
        %v1658 = vpop.f32.mrb[0].mxu0
        %v1659 = vadd.f32 %v726, %v1658
        %v1660 = vpop.f32.mrb[0].mxu0
        %1661 = vmatprep.mubr.f32.mxu0 0.0
        %1662 = vmatmul.mubr.f32.gmra.mrb[0].mxu0 %v1494
        %v1663 = vpop.f32.mrb[0].mxu0
        %v1664 = vadd.f32 %v727, %v1663
        %v1665 = vpop.f32.mrb[0].mxu0
        %1666 = vmatprep.mubr.f32.mxu0 0.0
        %1667 = vmatmul.mubr.f32.gmra.mrb[0].mxu0 %v1496
        %v1668 = vpop.f32.mrb[0].mxu0
        %v1669 = vadd.f32 %v728, %v1668
        %v1670 = vpop.f32.mrb[0].mxu0
        %1671 = vmatprep.mubr.f32.mxu0 0.0
        %1672 = vmatmul.mubr.f32.gmra.mrb[0].mxu0 %v1498
        %v1673 = vpop.f32.mrb[0].mxu0
        %v1674 = vadd.f32 %v729, %v1673
        %v1675 = vpop.f32.mrb[0].mxu0
        %1676 = vdwg.mxu0
        %1677 = vmax.xlane.f32.xlu0 %v1599
        %v1678 = vpop.xlane.xlu0 %1677
        %1679 = vmax.xlane.f32.xlu0 %v1604
        %v1680 = vpop.xlane.xlu0 %1679
        %1681 = vmax.xlane.f32.xlu0 %v1609
        %v1682 = vpop.xlane.xlu0 %1681
        %1683 = vmax.xlane.f32.xlu0 %v1614
        %v1684 = vpop.xlane.xlu0 %1683
        %1685 = vmax.xlane.f32.xlu0 %v1619
        %v1686 = vpop.xlane.xlu0 %1685
        %1687 = vmax.xlane.f32.xlu0 %v1624
        %v1688 = vpop.xlane.xlu0 %1687
        %1689 = vmax.xlane.f32.xlu0 %v1629
        %v1690 = vpop.xlane.xlu0 %1689
        %1691 = vmax.xlane.f32.xlu0 %v1634
        %v1692 = vpop.xlane.xlu0 %1691
        %1693 = vmax.xlane.f32.xlu0 %v1639
        %v1694 = vpop.xlane.xlu0 %1693
        %1695 = vmax.xlane.f32.xlu0 %v1644
        %v1696 = vpop.xlane.xlu0 %1695
        %1697 = vmax.xlane.f32.xlu0 %v1649
        %v1698 = vpop.xlane.xlu0 %1697
        %1699 = vmax.xlane.f32.xlu0 %v1654
        %v1700 = vpop.xlane.xlu0 %1699
        %1701 = vmax.xlane.f32.xlu0 %v1659
        %v1702 = vpop.xlane.xlu0 %1701
        %1703 = vmax.xlane.f32.xlu0 %v1664
        %v1704 = vpop.xlane.xlu0 %1703
        %1705 = vmax.xlane.f32.xlu0 %v1669
        %v1706 = vpop.xlane.xlu0 %1705
        %1707 = vmax.xlane.f32.xlu0 %v1674
        %v1708 = vpop.xlane.xlu0 %1707
        %v1709 = vsub.f32 %v1599, %v1678
        %v1710 = vsub.f32 %v1604, %v1680
        %v1711 = vsub.f32 %v1609, %v1682
        %v1712 = vsub.f32 %v1614, %v1684
        %v1713 = vsub.f32 %v1619, %v1686
        %v1714 = vsub.f32 %v1624, %v1688
        %v1715 = vsub.f32 %v1629, %v1690
        %v1716 = vsub.f32 %v1634, %v1692
        %v1717 = vsub.f32 %v1639, %v1694
        %v1718 = vsub.f32 %v1644, %v1696
        %v1719 = vsub.f32 %v1649, %v1698
        %v1720 = vsub.f32 %v1654, %v1700
        %v1721 = vsub.f32 %v1659, %v1702
        %v1722 = vsub.f32 %v1664, %v1704
        %v1723 = vsub.f32 %v1669, %v1706
        %v1724 = vsub.f32 %v1674, %v1708
        %v1725 = vmul.f32 %v1709, 1.442695
        %v1726 = vpow.pop %v1725
        %v1727 = vmul.f32 %v1710, 1.442695
        %v1728 = vpow.pop %v1727
        %v1729 = vmul.f32 %v1711, 1.442695
        %v1730 = vpow.pop %v1729
        %v1731 = vmul.f32 %v1712, 1.442695
        %v1732 = vpow.pop %v1731
        %v1733 = vmul.f32 %v1713, 1.442695
        %v1734 = vpow.pop %v1733
        %v1735 = vmul.f32 %v1714, 1.442695
        %v1736 = vpow.pop %v1735
        %v1737 = vmul.f32 %v1715, 1.442695
        %v1738 = vpow.pop %v1737
        %v1739 = vmul.f32 %v1716, 1.442695
        %v1740 = vpow.pop %v1739
        %v1741 = vmul.f32 %v1717, 1.442695
        %v1742 = vpow.pop %v1741
        %v1743 = vmul.f32 %v1718, 1.442695
        %v1744 = vpow.pop %v1743
        %v1745 = vmul.f32 %v1719, 1.442695
        %v1746 = vpow.pop %v1745
        %v1747 = vmul.f32 %v1720, 1.442695
        %v1748 = vpow.pop %v1747
        %v1749 = vmul.f32 %v1721, 1.442695
        %v1750 = vpow.pop %v1749
        %v1751 = vmul.f32 %v1722, 1.442695
        %v1752 = vpow.pop %v1751
        %v1753 = vmul.f32 %v1723, 1.442695
        %v1754 = vpow.pop %v1753
        %v1755 = vmul.f32 %v1724, 1.442695
        %v1756 = vpow.pop %v1755
        %1757 = vadd.xlane.f32.xlu0 %v1726
        %v1758 = vpop.xlane.xlu0 %1757
        %1759 = vadd.xlane.f32.xlu0 %v1728
        %v1760 = vpop.xlane.xlu0 %1759
        %1761 = vadd.xlane.f32.xlu0 %v1730
        %v1762 = vpop.xlane.xlu0 %1761
        %1763 = vadd.xlane.f32.xlu0 %v1732
        %v1764 = vpop.xlane.xlu0 %1763
        %1765 = vadd.xlane.f32.xlu0 %v1734
        %v1766 = vpop.xlane.xlu0 %1765
        %1767 = vadd.xlane.f32.xlu0 %v1736
        %v1768 = vpop.xlane.xlu0 %1767
        %1769 = vadd.xlane.f32.xlu0 %v1738
        %v1770 = vpop.xlane.xlu0 %1769
        %1771 = vadd.xlane.f32.xlu0 %v1740
        %v1772 = vpop.xlane.xlu0 %1771
        %1773 = vadd.xlane.f32.xlu0 %v1742
        %v1774 = vpop.xlane.xlu0 %1773
        %1775 = vadd.xlane.f32.xlu0 %v1744
        %v1776 = vpop.xlane.xlu0 %1775
        %1777 = vadd.xlane.f32.xlu0 %v1746
        %v1778 = vpop.xlane.xlu0 %1777
        %1779 = vadd.xlane.f32.xlu0 %v1748
        %v1780 = vpop.xlane.xlu0 %1779
        %1781 = vadd.xlane.f32.xlu0 %v1750
        %v1782 = vpop.xlane.xlu0 %1781
        %1783 = vadd.xlane.f32.xlu0 %v1752
        %v1784 = vpop.xlane.xlu0 %1783
        %1785 = vadd.xlane.f32.xlu0 %v1754
        %v1786 = vpop.xlane.xlu0 %1785
        %1787 = vadd.xlane.f32.xlu0 %v1756
        %v1788 = vpop.xlane.xlu0 %1787
        %v1789 = vrcp.pop %v1758
        %v1790 = vrcp.pop %v1760
        %v1791 = vrcp.pop %v1762
        %v1792 = vrcp.pop %v1764
        %v1793 = vrcp.pop %v1766
        %v1794 = vrcp.pop %v1768
        %v1795 = vrcp.pop %v1770
        %v1796 = vrcp.pop %v1772
        %v1797 = vrcp.pop %v1774
        %v1798 = vrcp.pop %v1776
        %v1799 = vrcp.pop %v1778
        %v1800 = vrcp.pop %v1780
        %v1801 = vrcp.pop %v1782
        %v1802 = vrcp.pop %v1784
        %v1803 = vrcp.pop %v1786
        %v1804 = vrcp.pop %v1788
        %v1805 = vmul.f32 %v1726, %v1789
        %v1806 = vmul.f32 %v1728, %v1790
        %v1807 = vmul.f32 %v1730, %v1791
        %v1808 = vmul.f32 %v1732, %v1792
        %v1809 = vmul.f32 %v1734, %v1793
        %v1810 = vmul.f32 %v1736, %v1794
        %v1811 = vmul.f32 %v1738, %v1795
        %v1812 = vmul.f32 %v1740, %v1796
        %v1813 = vmul.f32 %v1742, %v1797
        %v1814 = vmul.f32 %v1744, %v1798
        %v1815 = vmul.f32 %v1746, %v1799
        %v1816 = vmul.f32 %v1748, %v1800
        %v1817 = vmul.f32 %v1750, %v1801
        %v1818 = vmul.f32 %v1752, %v1802
        %v1819 = vmul.f32 %v1754, %v1803
        %v1820 = vmul.f32 %v1756, %v1804
        %1821 = vmatprep.subr.mxu0 0.0
        %1822 = vmatpush1.msra.mxu0 %v1328
        %1823 = vmatprep.subr.mxu0 0.0
        %1824 = vmatpush1.msra.mxu0 %v1334
        %1825 = vmatprep.subr.mxu0 0.0
        %1826 = vmatpush1.msra.mxu0 %v1340
        %1827 = vmatprep.subr.mxu0 0.0
        %1828 = vmatpush1.msra.mxu0 %v1346
        %1829 = vmatprep.subr.mxu0 0.0
        %1830 = vmatpush1.msra.mxu0 %v1352
        %1831 = vmatprep.subr.mxu0 0.0
        %1832 = vmatpush1.msra.mxu0 %v1358
        %1833 = vmatprep.subr.mxu0 0.0
        %1834 = vmatpush1.msra.mxu0 %v1364
        %1835 = vmatprep.subr.mxu0 0.0
        %1836 = vmatpush1.msra.mxu0 %v1370
        %1837 = vmatprep.subr.mxu0 0.0
        %1838 = vmatpush1.msra.mxu0 %v1376
        %1839 = vmatprep.subr.mxu0 0.0
        %1840 = vmatpush1.msra.mxu0 %v1382
        %1841 = vmatprep.subr.mxu0 0.0
        %1842 = vmatpush1.msra.mxu0 %v1388
        %1843 = vmatprep.subr.mxu0 0.0
        %1844 = vmatpush1.msra.mxu0 %v1394
        %1845 = vmatprep.subr.mxu0 0.0
        %1846 = vmatpush1.msra.mxu0 %v1400
        %1847 = vmatprep.subr.mxu0 0.0
        %1848 = vmatpush1.msra.mxu0 %v1406
        %1849 = vmatprep.subr.mxu0 0.0
        %1850 = vmatpush1.msra.mxu0 %v1412
        %1851 = vmatprep.subr.mxu0 0.0
        %1852 = vmatpush1.msra.mxu0 %v1418
        %1853 = vmatprep.subr.mxu0 0.0
        %1854 = vmatpush1.msra.mxu0 0.0
        %1855 = vmatprep.subr.mxu0 0.0
        %1856 = vmatpush1.msra.mxu0 0.0
        %1857 = vmatprep.subr.mxu0 0.0
        %1858 = vmatpush1.msra.mxu0 0.0
        %1859 = vmatprep.subr.mxu0 0.0
        %1860 = vmatpush1.msra.mxu0 0.0
        %1861 = vmatprep.subr.mxu0 0.0
        %1862 = vmatpush1.msra.mxu0 0.0
        %1863 = vmatprep.subr.mxu0 0.0
        %1864 = vmatpush1.msra.mxu0 0.0
        %1865 = vmatprep.subr.mxu0 0.0
        %1866 = vmatpush1.msra.mxu0 0.0
        %1867 = vmatprep.subr.mxu0 0.0
        %1868 = vmatpush1.msra.mxu0 0.0
        %1869 = vmatprep.subr.mxu0 0.0
        %1870 = vmatpush1.msra.mxu0 0.0
        %1871 = vmatprep.subr.mxu0 0.0
        %1872 = vmatpush1.msra.mxu0 0.0
        %1873 = vmatprep.subr.mxu0 0.0
        %1874 = vmatpush1.msra.mxu0 0.0
        %1875 = vmatprep.subr.mxu0 0.0
        %1876 = vmatpush1.msra.mxu0 0.0
        %1877 = vmatprep.subr.mxu0 0.0
        %1878 = vmatpush1.msra.mxu0 0.0
        %1879 = vmatprep.subr.mxu0 0.0
        %1880 = vmatpush1.msra.mxu0 0.0
        %1881 = vmatprep.subr.mxu0 0.0
        %1882 = vmatpush1.msra.mxu0 0.0
        %1883 = vmatprep.subr.mxu0 0.0
        %1884 = vmatpush1.msra.mxu0 0.0
        %1885 = vmatprep.mubr.f32.mxu0 0.0
        %1886 = vmatmul.mubr.f32.gmra.mrb[0].mxu0 %v1805
        %v1887 = vpop.f32.mrb[0].mxu0
        %v1888 = vadd.f32 0.0, %v1887
        %v1889 = vpop.f32.mrb[0].mxu0
        %1890 = vmatprep.mubr.f32.mxu0 0.0
        %1891 = vmatmul.mubr.f32.gmra.mrb[0].mxu0 %v1806
        %v1892 = vpop.f32.mrb[0].mxu0
        %v1893 = vadd.f32 0.0, %v1892
        %v1894 = vpop.f32.mrb[0].mxu0
        %1895 = vmatprep.mubr.f32.mxu0 0.0
        %1896 = vmatmul.mubr.f32.gmra.mrb[0].mxu0 %v1807
        %v1897 = vpop.f32.mrb[0].mxu0
        %v1898 = vadd.f32 0.0, %v1897
        %v1899 = vpop.f32.mrb[0].mxu0
        %1900 = vmatprep.mubr.f32.mxu0 0.0
        %1901 = vmatmul.mubr.f32.gmra.mrb[0].mxu0 %v1808
        %v1902 = vpop.f32.mrb[0].mxu0
        %v1903 = vadd.f32 0.0, %v1902
        %v1904 = vpop.f32.mrb[0].mxu0
        %1905 = vmatprep.mubr.f32.mxu0 0.0
        %1906 = vmatmul.mubr.f32.gmra.mrb[0].mxu0 %v1809
        %v1907 = vpop.f32.mrb[0].mxu0
        %v1908 = vadd.f32 0.0, %v1907
        %v1909 = vpop.f32.mrb[0].mxu0
        %1910 = vmatprep.mubr.f32.mxu0 0.0
        %1911 = vmatmul.mubr.f32.gmra.mrb[0].mxu0 %v1810
        %v1912 = vpop.f32.mrb[0].mxu0
        %v1913 = vadd.f32 0.0, %v1912
        %v1914 = vpop.f32.mrb[0].mxu0
        %1915 = vmatprep.mubr.f32.mxu0 0.0
        %1916 = vmatmul.mubr.f32.gmra.mrb[0].mxu0 %v1811
        %v1917 = vpop.f32.mrb[0].mxu0
        %v1918 = vadd.f32 0.0, %v1917
        %v1919 = vpop.f32.mrb[0].mxu0
        %1920 = vmatprep.mubr.f32.mxu0 0.0
        %1921 = vmatmul.mubr.f32.gmra.mrb[0].mxu0 %v1812
        %v1922 = vpop.f32.mrb[0].mxu0
        %v1923 = vadd.f32 0.0, %v1922
        %v1924 = vpop.f32.mrb[0].mxu0
        %1925 = vmatprep.mubr.f32.mxu0 0.0
        %1926 = vmatmul.mubr.f32.gmra.mrb[0].mxu0 %v1813
        %v1927 = vpop.f32.mrb[0].mxu0
        %v1928 = vadd.f32 0.0, %v1927
        %v1929 = vpop.f32.mrb[0].mxu0
        %1930 = vmatprep.mubr.f32.mxu0 0.0
        %1931 = vmatmul.mubr.f32.gmra.mrb[0].mxu0 %v1814
        %v1932 = vpop.f32.mrb[0].mxu0
        %v1933 = vadd.f32 0.0, %v1932
        %v1934 = vpop.f32.mrb[0].mxu0
        %1935 = vmatprep.mubr.f32.mxu0 0.0
        %1936 = vmatmul.mubr.f32.gmra.mrb[0].mxu0 %v1815
        %v1937 = vpop.f32.mrb[0].mxu0
        %v1938 = vadd.f32 0.0, %v1937
        %v1939 = vpop.f32.mrb[0].mxu0
        %1940 = vmatprep.mubr.f32.mxu0 0.0
        %1941 = vmatmul.mubr.f32.gmra.mrb[0].mxu0 %v1816
        %v1942 = vpop.f32.mrb[0].mxu0
        %v1943 = vadd.f32 0.0, %v1942
        %v1944 = vpop.f32.mrb[0].mxu0
        %1945 = vmatprep.mubr.f32.mxu0 0.0
        %1946 = vmatmul.mubr.f32.gmra.mrb[0].mxu0 %v1817
        %v1947 = vpop.f32.mrb[0].mxu0
        %v1948 = vadd.f32 0.0, %v1947
        %v1949 = vpop.f32.mrb[0].mxu0
        %1950 = vmatprep.mubr.f32.mxu0 0.0
        %1951 = vmatmul.mubr.f32.gmra.mrb[0].mxu0 %v1818
        %v1952 = vpop.f32.mrb[0].mxu0
        %v1953 = vadd.f32 0.0, %v1952
        %v1954 = vpop.f32.mrb[0].mxu0
        %1955 = vmatprep.mubr.f32.mxu0 0.0
        %1956 = vmatmul.mubr.f32.gmra.mrb[0].mxu0 %v1819
        %v1957 = vpop.f32.mrb[0].mxu0
        %v1958 = vadd.f32 0.0, %v1957
        %v1959 = vpop.f32.mrb[0].mxu0
        %1960 = vmatprep.mubr.f32.mxu0 0.0
        %1961 = vmatmul.mubr.f32.gmra.mrb[0].mxu0 %v1820
        %v1962 = vpop.f32.mrb[0].mxu0
        %v1963 = vadd.f32 0.0, %v1962
        %v1964 = vpop.f32.mrb[0].mxu0
        %1965 = vdwg.mxu0
        %1966 = vrot.lane.b32.xlu0 %v1326, 112
        %v1967 = vpop.permute.xlu0 %1966
        %1968 = vrot.lane.b32.xlu0 %v1332, 112
        %v1969 = vpop.permute.xlu0 %1968
        %1970 = vrot.lane.b32.xlu0 %v1338, 112
        %v1971 = vpop.permute.xlu0 %1970
        %1972 = vrot.lane.b32.xlu0 %v1344, 112
        %v1973 = vpop.permute.xlu0 %1972
        %1974 = vrot.lane.b32.xlu0 %v1350, 112
        %v1975 = vpop.permute.xlu0 %1974
        %1976 = vrot.lane.b32.xlu0 %v1356, 112
        %v1977 = vpop.permute.xlu0 %1976
        %1978 = vrot.lane.b32.xlu0 %v1362, 112
        %v1979 = vpop.permute.xlu0 %1978
        %1980 = vrot.lane.b32.xlu0 %v1368, 112
        %v1981 = vpop.permute.xlu0 %1980
        %1982 = vrot.lane.b32.xlu0 %v1374, 112
        %v1983 = vpop.permute.xlu0 %1982
        %1984 = vrot.lane.b32.xlu0 %v1380, 112
        %v1985 = vpop.permute.xlu0 %1984
        %1986 = vrot.lane.b32.xlu0 %v1386, 112
        %v1987 = vpop.permute.xlu0 %1986
        %1988 = vrot.lane.b32.xlu0 %v1392, 112
        %v1989 = vpop.permute.xlu0 %1988
        %1990 = vrot.lane.b32.xlu0 %v1398, 112
        %v1991 = vpop.permute.xlu0 %1990
        %1992 = vrot.lane.b32.xlu0 %v1404, 112
        %v1993 = vpop.permute.xlu0 %1992
        %1994 = vrot.lane.b32.xlu0 %v1410, 112
        %v1995 = vpop.permute.xlu0 %1994
        %1996 = vrot.lane.b32.xlu0 %v1416, 112
        %v1997 = vpop.permute.xlu0 %1996
        %1998 = vrot.lane.b32.xlu0 %v1326, 48
        %v1999 = vpop.permute.xlu0 %1998
        %2000 = vrot.lane.b32.xlu0 %v1332, 48
        %v2001 = vpop.permute.xlu0 %2000
        %2002 = vrot.lane.b32.xlu0 %v1338, 48
        %v2003 = vpop.permute.xlu0 %2002
        %2004 = vrot.lane.b32.xlu0 %v1344, 48
        %v2005 = vpop.permute.xlu0 %2004
        %2006 = vrot.lane.b32.xlu0 %v1350, 48
        %v2007 = vpop.permute.xlu0 %2006
        %2008 = vrot.lane.b32.xlu0 %v1356, 48
        %v2009 = vpop.permute.xlu0 %2008
        %2010 = vrot.lane.b32.xlu0 %v1362, 48
        %v2011 = vpop.permute.xlu0 %2010
        %2012 = vrot.lane.b32.xlu0 %v1368, 48
        %v2013 = vpop.permute.xlu0 %2012
        %2014 = vrot.lane.b32.xlu0 %v1374, 48
        %v2015 = vpop.permute.xlu0 %2014
        %2016 = vrot.lane.b32.xlu0 %v1380, 48
        %v2017 = vpop.permute.xlu0 %2016
        %2018 = vrot.lane.b32.xlu0 %v1386, 48
        %v2019 = vpop.permute.xlu0 %2018
        %2020 = vrot.lane.b32.xlu0 %v1392, 48
        %v2021 = vpop.permute.xlu0 %2020
        %2022 = vrot.lane.b32.xlu0 %v1398, 48
        %v2023 = vpop.permute.xlu0 %2022
        %2024 = vrot.lane.b32.xlu0 %v1404, 48
        %v2025 = vpop.permute.xlu0 %2024
        %2026 = vrot.lane.b32.xlu0 %v1410, 48
        %v2027 = vpop.permute.xlu0 %2026
        %2028 = vrot.lane.b32.xlu0 %v1416, 48
        %v2029 = vpop.permute.xlu0 %2028
        %v2030 = vsel %vm1131, %v1967, 0
        %v2032 = vsel %vm1131, %v1969, 0
        %v2034 = vsel %vm1131, %v1971, 0
        %v2036 = vsel %vm1131, %v1973, 0
        %v2038 = vsel %vm1131, %v1975, 0
        %v2040 = vsel %vm1131, %v1977, 0
        %v2042 = vsel %vm1131, %v1979, 0
        %v2044 = vsel %vm1131, %v1981, 0
        %v2046 = vsel %vm1131, %v1983, 0
        %v2048 = vsel %vm1131, %v1985, 0
        %v2050 = vsel %vm1131, %v1987, 0
        %v2052 = vsel %vm1131, %v1989, 0
        %v2054 = vsel %vm1131, %v1991, 0
        %v2056 = vsel %vm1131, %v1993, 0
        %v2058 = vsel %vm1131, %v1995, 0
        %v2060 = vsel %vm1131, %v1997, 0
        %v2062 = vsel %vm1131, %v1999, 0
        %v2064 = vsel %vm1131, %v2001, 0
        %v2066 = vsel %vm1131, %v2003, 0
        %v2068 = vsel %vm1131, %v2005, 0
        %v2070 = vsel %vm1131, %v2007, 0
        %v2072 = vsel %vm1131, %v2009, 0
        %v2074 = vsel %vm1131, %v2011, 0
        %v2076 = vsel %vm1131, %v2013, 0
        %v2078 = vsel %vm1131, %v2015, 0
        %v2080 = vsel %vm1131, %v2017, 0
        %v2082 = vsel %vm1131, %v2019, 0
        %v2084 = vsel %vm1131, %v2021, 0
        %v2086 = vsel %vm1131, %v2023, 0
        %v2088 = vsel %vm1131, %v2025, 0
        %v2090 = vsel %vm1131, %v2027, 0
        %v2092 = vsel %vm1131, %v2029, 0
        %2094 = vmatprep.subr.mxu0 0.0
        %2095 = vmatpush1.xpose.msra.mxu0 %v2062
        %2096 = vmatprep.subr.mxu0 0.0
        %2097 = vmatpush1.xpose.msra.mxu0 %v2064
        %2098 = vmatprep.subr.mxu0 0.0
        %2099 = vmatpush1.xpose.msra.mxu0 %v2066
        %2100 = vmatprep.subr.mxu0 0.0
        %2101 = vmatpush1.xpose.msra.mxu0 %v2068
        %2102 = vmatprep.subr.mxu0 0.0
        %2103 = vmatpush1.xpose.msra.mxu0 %v2070
        %2104 = vmatprep.subr.mxu0 0.0
        %2105 = vmatpush1.xpose.msra.mxu0 %v2072
        %2106 = vmatprep.subr.mxu0 0.0
        %2107 = vmatpush1.xpose.msra.mxu0 %v2074
        %2108 = vmatprep.subr.mxu0 0.0
        %2109 = vmatpush1.xpose.msra.mxu0 %v2076
        %2110 = vmatprep.subr.mxu0 0.0
        %2111 = vmatpush1.xpose.msra.mxu0 %v2078
        %2112 = vmatprep.subr.mxu0 0.0
        %2113 = vmatpush1.xpose.msra.mxu0 %v2080
        %2114 = vmatprep.subr.mxu0 0.0
        %2115 = vmatpush1.xpose.msra.mxu0 %v2082
        %2116 = vmatprep.subr.mxu0 0.0
        %2117 = vmatpush1.xpose.msra.mxu0 %v2084
        %2118 = vmatprep.subr.mxu0 0.0
        %2119 = vmatpush1.xpose.msra.mxu0 %v2086
        %2120 = vmatprep.subr.mxu0 0.0
        %2121 = vmatpush1.xpose.msra.mxu0 %v2088
        %2122 = vmatprep.subr.mxu0 0.0
        %2123 = vmatpush1.xpose.msra.mxu0 %v2090
        %2124 = vmatprep.subr.mxu0 0.0
        %2125 = vmatpush1.xpose.msra.mxu0 %v2092
        %2126 = vmatprep.subr.mxu0 0.0
        %2127 = vmatpush1.xpose.msra.mxu0 0.0
        %2128 = vmatprep.subr.mxu0 0.0
        %2129 = vmatpush1.xpose.msra.mxu0 0.0
        %2130 = vmatprep.subr.mxu0 0.0
        %2131 = vmatpush1.xpose.msra.mxu0 0.0
        %2132 = vmatprep.subr.mxu0 0.0
        %2133 = vmatpush1.xpose.msra.mxu0 0.0
        %2134 = vmatprep.subr.mxu0 0.0
        %2135 = vmatpush1.xpose.msra.mxu0 0.0
        %2136 = vmatprep.subr.mxu0 0.0
        %2137 = vmatpush1.xpose.msra.mxu0 0.0
        %2138 = vmatprep.subr.mxu0 0.0
        %2139 = vmatpush1.xpose.msra.mxu0 0.0
        %2140 = vmatprep.subr.mxu0 0.0
        %2141 = vmatpush1.xpose.msra.mxu0 0.0
        %2142 = vmatprep.subr.mxu0 0.0
        %2143 = vmatpush1.xpose.msra.mxu0 0.0
        %2144 = vmatprep.subr.mxu0 0.0
        %2145 = vmatpush1.xpose.msra.mxu0 0.0
        %2146 = vmatprep.subr.mxu0 0.0
        %2147 = vmatpush1.xpose.msra.mxu0 0.0
        %2148 = vmatprep.subr.mxu0 0.0
        %2149 = vmatpush1.xpose.msra.mxu0 0.0
        %2150 = vmatprep.subr.mxu0 0.0
        %2151 = vmatpush1.xpose.msra.mxu0 0.0
        %2152 = vmatprep.subr.mxu0 0.0
        %2153 = vmatpush1.xpose.msra.mxu0 0.0
        %2154 = vmatprep.subr.mxu0 0.0
        %2155 = vmatpush1.xpose.msra.mxu0 0.0
        %2156 = vmatprep.subr.mxu0 0.0
        %2157 = vmatpush1.xpose.msra.mxu0 0.0
        %2158 = vmatprep.mubr.f32.mxu0 0.0
        %2159 = vmatmul.mubr.f32.gmra.mrb[0].mxu0 %v2030
        %v2160 = vpop.f32.mrb[0].mxu0
        %v2161 = vadd.f32 %v714, %v2160
        %v2162 = vpop.f32.mrb[0].mxu0
        %2163 = vmatprep.mubr.f32.mxu0 0.0
        %2164 = vmatmul.mubr.f32.gmra.mrb[0].mxu0 %v2032
        %v2165 = vpop.f32.mrb[0].mxu0
        %v2166 = vadd.f32 %v715, %v2165
        %v2167 = vpop.f32.mrb[0].mxu0
        %2168 = vmatprep.mubr.f32.mxu0 0.0
        %2169 = vmatmul.mubr.f32.gmra.mrb[0].mxu0 %v2034
        %v2170 = vpop.f32.mrb[0].mxu0
        %v2171 = vadd.f32 %v716, %v2170
        %v2172 = vpop.f32.mrb[0].mxu0
        %2173 = vmatprep.mubr.f32.mxu0 0.0
        %2174 = vmatmul.mubr.f32.gmra.mrb[0].mxu0 %v2036
        %v2175 = vpop.f32.mrb[0].mxu0
        %v2176 = vadd.f32 %v717, %v2175
        %v2177 = vpop.f32.mrb[0].mxu0
        %2178 = vmatprep.mubr.f32.mxu0 0.0
        %2179 = vmatmul.mubr.f32.gmra.mrb[0].mxu0 %v2038
        %v2180 = vpop.f32.mrb[0].mxu0
        %v2181 = vadd.f32 %v718, %v2180
        %v2182 = vpop.f32.mrb[0].mxu0
        %2183 = vmatprep.mubr.f32.mxu0 0.0
        %2184 = vmatmul.mubr.f32.gmra.mrb[0].mxu0 %v2040
        %v2185 = vpop.f32.mrb[0].mxu0
        %v2186 = vadd.f32 %v719, %v2185
        %v2187 = vpop.f32.mrb[0].mxu0
        %2188 = vmatprep.mubr.f32.mxu0 0.0
        %2189 = vmatmul.mubr.f32.gmra.mrb[0].mxu0 %v2042
        %v2190 = vpop.f32.mrb[0].mxu0
        %v2191 = vadd.f32 %v720, %v2190
        %v2192 = vpop.f32.mrb[0].mxu0
        %2193 = vmatprep.mubr.f32.mxu0 0.0
        %2194 = vmatmul.mubr.f32.gmra.mrb[0].mxu0 %v2044
        %v2195 = vpop.f32.mrb[0].mxu0
        %v2196 = vadd.f32 %v721, %v2195
        %v2197 = vpop.f32.mrb[0].mxu0
        %2198 = vmatprep.mubr.f32.mxu0 0.0
        %2199 = vmatmul.mubr.f32.gmra.mrb[0].mxu0 %v2046
        %v2200 = vpop.f32.mrb[0].mxu0
        %v2201 = vadd.f32 %v722, %v2200
        %v2202 = vpop.f32.mrb[0].mxu0
        %2203 = vmatprep.mubr.f32.mxu0 0.0
        %2204 = vmatmul.mubr.f32.gmra.mrb[0].mxu0 %v2048
        %v2205 = vpop.f32.mrb[0].mxu0
        %v2206 = vadd.f32 %v723, %v2205
        %v2207 = vpop.f32.mrb[0].mxu0
        %2208 = vmatprep.mubr.f32.mxu0 0.0
        %2209 = vmatmul.mubr.f32.gmra.mrb[0].mxu0 %v2050
        %v2210 = vpop.f32.mrb[0].mxu0
        %v2211 = vadd.f32 %v724, %v2210
        %v2212 = vpop.f32.mrb[0].mxu0
        %2213 = vmatprep.mubr.f32.mxu0 0.0
        %2214 = vmatmul.mubr.f32.gmra.mrb[0].mxu0 %v2052
        %v2215 = vpop.f32.mrb[0].mxu0
        %v2216 = vadd.f32 %v725, %v2215
        %v2217 = vpop.f32.mrb[0].mxu0
        %2218 = vmatprep.mubr.f32.mxu0 0.0
        %2219 = vmatmul.mubr.f32.gmra.mrb[0].mxu0 %v2054
        %v2220 = vpop.f32.mrb[0].mxu0
        %v2221 = vadd.f32 %v726, %v2220
        %v2222 = vpop.f32.mrb[0].mxu0
        %2223 = vmatprep.mubr.f32.mxu0 0.0
        %2224 = vmatmul.mubr.f32.gmra.mrb[0].mxu0 %v2056
        %v2225 = vpop.f32.mrb[0].mxu0
        %v2226 = vadd.f32 %v727, %v2225
        %v2227 = vpop.f32.mrb[0].mxu0
        %2228 = vmatprep.mubr.f32.mxu0 0.0
        %2229 = vmatmul.mubr.f32.gmra.mrb[0].mxu0 %v2058
        %v2230 = vpop.f32.mrb[0].mxu0
        %v2231 = vadd.f32 %v728, %v2230
        %v2232 = vpop.f32.mrb[0].mxu0
        %2233 = vmatprep.mubr.f32.mxu0 0.0
        %2234 = vmatmul.mubr.f32.gmra.mrb[0].mxu0 %v2060
        %v2235 = vpop.f32.mrb[0].mxu0
        %v2236 = vadd.f32 %v729, %v2235
        %v2237 = vpop.f32.mrb[0].mxu0
        %2238 = vdwg.mxu0
        %2239 = vmax.xlane.f32.xlu0 %v2161
        %v2240 = vpop.xlane.xlu0 %2239
        %2241 = vmax.xlane.f32.xlu0 %v2166
        %v2242 = vpop.xlane.xlu0 %2241
        %2243 = vmax.xlane.f32.xlu0 %v2171
        %v2244 = vpop.xlane.xlu0 %2243
        %2245 = vmax.xlane.f32.xlu0 %v2176
        %v2246 = vpop.xlane.xlu0 %2245
        %2247 = vmax.xlane.f32.xlu0 %v2181
        %v2248 = vpop.xlane.xlu0 %2247
        %2249 = vmax.xlane.f32.xlu0 %v2186
        %v2250 = vpop.xlane.xlu0 %2249
        %2251 = vmax.xlane.f32.xlu0 %v2191
        %v2252 = vpop.xlane.xlu0 %2251
        %2253 = vmax.xlane.f32.xlu0 %v2196
        %v2254 = vpop.xlane.xlu0 %2253
        %2255 = vmax.xlane.f32.xlu0 %v2201
        %v2256 = vpop.xlane.xlu0 %2255
        %2257 = vmax.xlane.f32.xlu0 %v2206
        %v2258 = vpop.xlane.xlu0 %2257
        %2259 = vmax.xlane.f32.xlu0 %v2211
        %v2260 = vpop.xlane.xlu0 %2259
        %2261 = vmax.xlane.f32.xlu0 %v2216
        %v2262 = vpop.xlane.xlu0 %2261
        %2263 = vmax.xlane.f32.xlu0 %v2221
        %v2264 = vpop.xlane.xlu0 %2263
        %2265 = vmax.xlane.f32.xlu0 %v2226
        %v2266 = vpop.xlane.xlu0 %2265
        %2267 = vmax.xlane.f32.xlu0 %v2231
        %v2268 = vpop.xlane.xlu0 %2267
        %2269 = vmax.xlane.f32.xlu0 %v2236
        %v2270 = vpop.xlane.xlu0 %2269
        %v2271 = vsub.f32 %v2161, %v2240
        %v2272 = vsub.f32 %v2166, %v2242
        %v2273 = vsub.f32 %v2171, %v2244
        %v2274 = vsub.f32 %v2176, %v2246
        %v2275 = vsub.f32 %v2181, %v2248
        %v2276 = vsub.f32 %v2186, %v2250
        %v2277 = vsub.f32 %v2191, %v2252
        %v2278 = vsub.f32 %v2196, %v2254
        %v2279 = vsub.f32 %v2201, %v2256
        %v2280 = vsub.f32 %v2206, %v2258
        %v2281 = vsub.f32 %v2211, %v2260
        %v2282 = vsub.f32 %v2216, %v2262
        %v2283 = vsub.f32 %v2221, %v2264
        %v2284 = vsub.f32 %v2226, %v2266
        %v2285 = vsub.f32 %v2231, %v2268
        %v2286 = vsub.f32 %v2236, %v2270
        %v2287 = vmul.f32 %v2271, 1.442695
        %v2288 = vpow.pop %v2287
        %v2289 = vmul.f32 %v2272, 1.442695
        %v2290 = vpow.pop %v2289
        %v2291 = vmul.f32 %v2273, 1.442695
        %v2292 = vpow.pop %v2291
        %v2293 = vmul.f32 %v2274, 1.442695
        %v2294 = vpow.pop %v2293
        %v2295 = vmul.f32 %v2275, 1.442695
        %v2296 = vpow.pop %v2295
        %v2297 = vmul.f32 %v2276, 1.442695
        %v2298 = vpow.pop %v2297
        %v2299 = vmul.f32 %v2277, 1.442695
        %v2300 = vpow.pop %v2299
        %v2301 = vmul.f32 %v2278, 1.442695
        %v2302 = vpow.pop %v2301
        %v2303 = vmul.f32 %v2279, 1.442695
        %v2304 = vpow.pop %v2303
        %v2305 = vmul.f32 %v2280, 1.442695
        %v2306 = vpow.pop %v2305
        %v2307 = vmul.f32 %v2281, 1.442695
        %v2308 = vpow.pop %v2307
        %v2309 = vmul.f32 %v2282, 1.442695
        %v2310 = vpow.pop %v2309
        %v2311 = vmul.f32 %v2283, 1.442695
        %v2312 = vpow.pop %v2311
        %v2313 = vmul.f32 %v2284, 1.442695
        %v2314 = vpow.pop %v2313
        %v2315 = vmul.f32 %v2285, 1.442695
        %v2316 = vpow.pop %v2315
        %v2317 = vmul.f32 %v2286, 1.442695
        %v2318 = vpow.pop %v2317
        %2319 = vadd.xlane.f32.xlu0 %v2288
        %v2320 = vpop.xlane.xlu0 %2319
        %2321 = vadd.xlane.f32.xlu0 %v2290
        %v2322 = vpop.xlane.xlu0 %2321
        %2323 = vadd.xlane.f32.xlu0 %v2292
        %v2324 = vpop.xlane.xlu0 %2323
        %2325 = vadd.xlane.f32.xlu0 %v2294
        %v2326 = vpop.xlane.xlu0 %2325
        %2327 = vadd.xlane.f32.xlu0 %v2296
        %v2328 = vpop.xlane.xlu0 %2327
        %2329 = vadd.xlane.f32.xlu0 %v2298
        %v2330 = vpop.xlane.xlu0 %2329
        %2331 = vadd.xlane.f32.xlu0 %v2300
        %v2332 = vpop.xlane.xlu0 %2331
        %2333 = vadd.xlane.f32.xlu0 %v2302
        %v2334 = vpop.xlane.xlu0 %2333
        %2335 = vadd.xlane.f32.xlu0 %v2304
        %v2336 = vpop.xlane.xlu0 %2335
        %2337 = vadd.xlane.f32.xlu0 %v2306
        %v2338 = vpop.xlane.xlu0 %2337
        %2339 = vadd.xlane.f32.xlu0 %v2308
        %v2340 = vpop.xlane.xlu0 %2339
        %2341 = vadd.xlane.f32.xlu0 %v2310
        %v2342 = vpop.xlane.xlu0 %2341
        %2343 = vadd.xlane.f32.xlu0 %v2312
        %v2344 = vpop.xlane.xlu0 %2343
        %2345 = vadd.xlane.f32.xlu0 %v2314
        %v2346 = vpop.xlane.xlu0 %2345
        %2347 = vadd.xlane.f32.xlu0 %v2316
        %v2348 = vpop.xlane.xlu0 %2347
        %2349 = vadd.xlane.f32.xlu0 %v2318
        %v2350 = vpop.xlane.xlu0 %2349
        %v2351 = vrcp.pop %v2320
        %v2352 = vrcp.pop %v2322
        %v2353 = vrcp.pop %v2324
        %v2354 = vrcp.pop %v2326
        %v2355 = vrcp.pop %v2328
        %v2356 = vrcp.pop %v2330
        %v2357 = vrcp.pop %v2332
        %v2358 = vrcp.pop %v2334
        %v2359 = vrcp.pop %v2336
        %v2360 = vrcp.pop %v2338
        %v2361 = vrcp.pop %v2340
        %v2362 = vrcp.pop %v2342
        %v2363 = vrcp.pop %v2344
        %v2364 = vrcp.pop %v2346
        %v2365 = vrcp.pop %v2348
        %v2366 = vrcp.pop %v2350
        %v2367 = vmul.f32 %v2288, %v2351
        %v2368 = vmul.f32 %v2290, %v2352
        %v2369 = vmul.f32 %v2292, %v2353
        %v2370 = vmul.f32 %v2294, %v2354
        %v2371 = vmul.f32 %v2296, %v2355
        %v2372 = vmul.f32 %v2298, %v2356
        %v2373 = vmul.f32 %v2300, %v2357
        %v2374 = vmul.f32 %v2302, %v2358
        %v2375 = vmul.f32 %v2304, %v2359
        %v2376 = vmul.f32 %v2306, %v2360
        %v2377 = vmul.f32 %v2308, %v2361
        %v2378 = vmul.f32 %v2310, %v2362
        %v2379 = vmul.f32 %v2312, %v2363
        %v2380 = vmul.f32 %v2314, %v2364
        %v2381 = vmul.f32 %v2316, %v2365
        %v2382 = vmul.f32 %v2318, %v2366
        %2399 = vrot.lane.b32.xlu0 %v1328, 112
        %v2400 = vpop.permute.xlu0 %2399
        %2401 = vrot.lane.b32.xlu0 %v1334, 112
        %v2402 = vpop.permute.xlu0 %2401
        %2403 = vrot.lane.b32.xlu0 %v1340, 112
        %v2404 = vpop.permute.xlu0 %2403
        %2405 = vrot.lane.b32.xlu0 %v1346, 112
        %v2406 = vpop.permute.xlu0 %2405
        %2407 = vrot.lane.b32.xlu0 %v1352, 112
        %v2408 = vpop.permute.xlu0 %2407
        %2409 = vrot.lane.b32.xlu0 %v1358, 112
        %v2410 = vpop.permute.xlu0 %2409
        %2411 = vrot.lane.b32.xlu0 %v1364, 112
        %v2412 = vpop.permute.xlu0 %2411
        %2413 = vrot.lane.b32.xlu0 %v1370, 112
        %v2414 = vpop.permute.xlu0 %2413
        %2415 = vrot.lane.b32.xlu0 %v1376, 112
        %v2416 = vpop.permute.xlu0 %2415
        %2417 = vrot.lane.b32.xlu0 %v1382, 112
        %v2418 = vpop.permute.xlu0 %2417
        %2419 = vrot.lane.b32.xlu0 %v1388, 112
        %v2420 = vpop.permute.xlu0 %2419
        %2421 = vrot.lane.b32.xlu0 %v1394, 112
        %v2422 = vpop.permute.xlu0 %2421
        %2423 = vrot.lane.b32.xlu0 %v1400, 112
        %v2424 = vpop.permute.xlu0 %2423
        %2425 = vrot.lane.b32.xlu0 %v1406, 112
        %v2426 = vpop.permute.xlu0 %2425
        %2427 = vrot.lane.b32.xlu0 %v1412, 112
        %v2428 = vpop.permute.xlu0 %2427
        %2429 = vrot.lane.b32.xlu0 %v1418, 112
        %v2430 = vpop.permute.xlu0 %2429
        %2447 = vmatprep.subr.mxu0 0.0
        %2448 = vmatpush1.msra.mxu0 %v2400
        %2449 = vmatprep.subr.mxu0 0.0
        %2450 = vmatpush1.msra.mxu0 %v2402
        %2451 = vmatprep.subr.mxu0 0.0
        %2452 = vmatpush1.msra.mxu0 %v2404
        %2453 = vmatprep.subr.mxu0 0.0
        %2454 = vmatpush1.msra.mxu0 %v2406
        %2455 = vmatprep.subr.mxu0 0.0
        %2456 = vmatpush1.msra.mxu0 %v2408
        %2457 = vmatprep.subr.mxu0 0.0
        %2458 = vmatpush1.msra.mxu0 %v2410
        %2459 = vmatprep.subr.mxu0 0.0
        %2460 = vmatpush1.msra.mxu0 %v2412
        %2461 = vmatprep.subr.mxu0 0.0
        %2462 = vmatpush1.msra.mxu0 %v2414
        %2463 = vmatprep.subr.mxu0 0.0
        %2464 = vmatpush1.msra.mxu0 %v2416
        %2465 = vmatprep.subr.mxu0 0.0
        %2466 = vmatpush1.msra.mxu0 %v2418
        %2467 = vmatprep.subr.mxu0 0.0
        %2468 = vmatpush1.msra.mxu0 %v2420
        %2469 = vmatprep.subr.mxu0 0.0
        %2470 = vmatpush1.msra.mxu0 %v2422
        %2471 = vmatprep.subr.mxu0 0.0
        %2472 = vmatpush1.msra.mxu0 %v2424
        %2473 = vmatprep.subr.mxu0 0.0
        %2474 = vmatpush1.msra.mxu0 %v2426
        %2475 = vmatprep.subr.mxu0 0.0
        %2476 = vmatpush1.msra.mxu0 %v2428
        %2477 = vmatprep.subr.mxu0 0.0
        %2478 = vmatpush1.msra.mxu0 %v2430
        %2479 = vmatprep.subr.mxu0 0.0
        %2480 = vmatpush1.msra.mxu0 0.0
        %2481 = vmatprep.subr.mxu0 0.0
        %2482 = vmatpush1.msra.mxu0 0.0
        %2483 = vmatprep.subr.mxu0 0.0
        %2484 = vmatpush1.msra.mxu0 0.0
        %2485 = vmatprep.subr.mxu0 0.0
        %2486 = vmatpush1.msra.mxu0 0.0
        %2487 = vmatprep.subr.mxu0 0.0
        %2488 = vmatpush1.msra.mxu0 0.0
        %2489 = vmatprep.subr.mxu0 0.0
        %2490 = vmatpush1.msra.mxu0 0.0
        %2491 = vmatprep.subr.mxu0 0.0
        %2492 = vmatpush1.msra.mxu0 0.0
        %2493 = vmatprep.subr.mxu0 0.0
        %2494 = vmatpush1.msra.mxu0 0.0
        %2495 = vmatprep.subr.mxu0 0.0
        %2496 = vmatpush1.msra.mxu0 0.0
        %2497 = vmatprep.subr.mxu0 0.0
        %2498 = vmatpush1.msra.mxu0 0.0
        %2499 = vmatprep.subr.mxu0 0.0
        %2500 = vmatpush1.msra.mxu0 0.0
        %2501 = vmatprep.subr.mxu0 0.0
        %2502 = vmatpush1.msra.mxu0 0.0
        %2503 = vmatprep.subr.mxu0 0.0
        %2504 = vmatpush1.msra.mxu0 0.0
        %2505 = vmatprep.subr.mxu0 0.0
        %2506 = vmatpush1.msra.mxu0 0.0
        %2507 = vmatprep.subr.mxu0 0.0
        %2508 = vmatpush1.msra.mxu0 0.0
        %2509 = vmatprep.subr.mxu0 0.0
        %2510 = vmatpush1.msra.mxu0 0.0
        %2511 = vmatprep.mubr.f32.mxu0 0.0
        %2512 = vmatmul.mubr.f32.gmra.mrb[0].mxu0 %v2367
        %v2513 = vpop.f32.mrb[0].mxu0
        %v2514 = vadd.f32 0.0, %v2513
        %v2515 = vpop.f32.mrb[0].mxu0
        %2516 = vmatprep.mubr.f32.mxu0 0.0
        %2517 = vmatmul.mubr.f32.gmra.mrb[0].mxu0 %v2368
        %v2518 = vpop.f32.mrb[0].mxu0
        %v2519 = vadd.f32 0.0, %v2518
        %v2520 = vpop.f32.mrb[0].mxu0
        %2521 = vmatprep.mubr.f32.mxu0 0.0
        %2522 = vmatmul.mubr.f32.gmra.mrb[0].mxu0 %v2369
        %v2523 = vpop.f32.mrb[0].mxu0
        %v2524 = vadd.f32 0.0, %v2523
        %v2525 = vpop.f32.mrb[0].mxu0
        %2526 = vmatprep.mubr.f32.mxu0 0.0
        %2527 = vmatmul.mubr.f32.gmra.mrb[0].mxu0 %v2370
        %v2528 = vpop.f32.mrb[0].mxu0
        %v2529 = vadd.f32 0.0, %v2528
        %v2530 = vpop.f32.mrb[0].mxu0
        %2531 = vmatprep.mubr.f32.mxu0 0.0
        %2532 = vmatmul.mubr.f32.gmra.mrb[0].mxu0 %v2371
        %v2533 = vpop.f32.mrb[0].mxu0
        %v2534 = vadd.f32 0.0, %v2533
        %v2535 = vpop.f32.mrb[0].mxu0
        %2536 = vmatprep.mubr.f32.mxu0 0.0
        %2537 = vmatmul.mubr.f32.gmra.mrb[0].mxu0 %v2372
        %v2538 = vpop.f32.mrb[0].mxu0
        %v2539 = vadd.f32 0.0, %v2538
        %v2540 = vpop.f32.mrb[0].mxu0
        %2541 = vmatprep.mubr.f32.mxu0 0.0
        %2542 = vmatmul.mubr.f32.gmra.mrb[0].mxu0 %v2373
        %v2543 = vpop.f32.mrb[0].mxu0
        %v2544 = vadd.f32 0.0, %v2543
        %v2545 = vpop.f32.mrb[0].mxu0
        %2546 = vmatprep.mubr.f32.mxu0 0.0
        %2547 = vmatmul.mubr.f32.gmra.mrb[0].mxu0 %v2374
        %v2548 = vpop.f32.mrb[0].mxu0
        %v2549 = vadd.f32 0.0, %v2548
        %v2550 = vpop.f32.mrb[0].mxu0
        %2551 = vmatprep.mubr.f32.mxu0 0.0
        %2552 = vmatmul.mubr.f32.gmra.mrb[0].mxu0 %v2375
        %v2553 = vpop.f32.mrb[0].mxu0
        %v2554 = vadd.f32 0.0, %v2553
        %v2555 = vpop.f32.mrb[0].mxu0
        %2556 = vmatprep.mubr.f32.mxu0 0.0
        %2557 = vmatmul.mubr.f32.gmra.mrb[0].mxu0 %v2376
        %v2558 = vpop.f32.mrb[0].mxu0
        %v2559 = vadd.f32 0.0, %v2558
        %v2560 = vpop.f32.mrb[0].mxu0
        %2561 = vmatprep.mubr.f32.mxu0 0.0
        %2562 = vmatmul.mubr.f32.gmra.mrb[0].mxu0 %v2377
        %v2563 = vpop.f32.mrb[0].mxu0
        %v2564 = vadd.f32 0.0, %v2563
        %v2565 = vpop.f32.mrb[0].mxu0
        %2566 = vmatprep.mubr.f32.mxu0 0.0
        %2567 = vmatmul.mubr.f32.gmra.mrb[0].mxu0 %v2378
        %v2568 = vpop.f32.mrb[0].mxu0
        %v2569 = vadd.f32 0.0, %v2568
        %v2570 = vpop.f32.mrb[0].mxu0
        %2571 = vmatprep.mubr.f32.mxu0 0.0
        %2572 = vmatmul.mubr.f32.gmra.mrb[0].mxu0 %v2379
        %v2573 = vpop.f32.mrb[0].mxu0
        %v2574 = vadd.f32 0.0, %v2573
        %v2575 = vpop.f32.mrb[0].mxu0
        %2576 = vmatprep.mubr.f32.mxu0 0.0
        %2577 = vmatmul.mubr.f32.gmra.mrb[0].mxu0 %v2380
        %v2578 = vpop.f32.mrb[0].mxu0
        %v2579 = vadd.f32 0.0, %v2578
        %v2580 = vpop.f32.mrb[0].mxu0
        %2581 = vmatprep.mubr.f32.mxu0 0.0
        %2582 = vmatmul.mubr.f32.gmra.mrb[0].mxu0 %v2381
        %v2583 = vpop.f32.mrb[0].mxu0
        %v2584 = vadd.f32 0.0, %v2583
        %v2585 = vpop.f32.mrb[0].mxu0
        %2586 = vmatprep.mubr.f32.mxu0 0.0
        %2587 = vmatmul.mubr.f32.gmra.mrb[0].mxu0 %v2382
        %v2588 = vpop.f32.mrb[0].mxu0
        %v2589 = vadd.f32 0.0, %v2588
        %v2590 = vpop.f32.mrb[0].mxu0
        %2591 = vdwg.mxu0
        %2592 = vrot.lane.b32.xlu0 %v1326, 96
        %v2593 = vpop.permute.xlu0 %2592
        %2594 = vrot.lane.b32.xlu0 %v1332, 96
        %v2595 = vpop.permute.xlu0 %2594
        %2596 = vrot.lane.b32.xlu0 %v1338, 96
        %v2597 = vpop.permute.xlu0 %2596
        %2598 = vrot.lane.b32.xlu0 %v1344, 96
        %v2599 = vpop.permute.xlu0 %2598
        %2600 = vrot.lane.b32.xlu0 %v1350, 96
        %v2601 = vpop.permute.xlu0 %2600
        %2602 = vrot.lane.b32.xlu0 %v1356, 96
        %v2603 = vpop.permute.xlu0 %2602
        %2604 = vrot.lane.b32.xlu0 %v1362, 96
        %v2605 = vpop.permute.xlu0 %2604
        %2606 = vrot.lane.b32.xlu0 %v1368, 96
        %v2607 = vpop.permute.xlu0 %2606
        %2608 = vrot.lane.b32.xlu0 %v1374, 96
        %v2609 = vpop.permute.xlu0 %2608
        %2610 = vrot.lane.b32.xlu0 %v1380, 96
        %v2611 = vpop.permute.xlu0 %2610
        %2612 = vrot.lane.b32.xlu0 %v1386, 96
        %v2613 = vpop.permute.xlu0 %2612
        %2614 = vrot.lane.b32.xlu0 %v1392, 96
        %v2615 = vpop.permute.xlu0 %2614
        %2616 = vrot.lane.b32.xlu0 %v1398, 96
        %v2617 = vpop.permute.xlu0 %2616
        %2618 = vrot.lane.b32.xlu0 %v1404, 96
        %v2619 = vpop.permute.xlu0 %2618
        %2620 = vrot.lane.b32.xlu0 %v1410, 96
        %v2621 = vpop.permute.xlu0 %2620
        %2622 = vrot.lane.b32.xlu0 %v1416, 96
        %v2623 = vpop.permute.xlu0 %2622
        %2624 = vrot.lane.b32.xlu0 %v1326, 32
        %v2625 = vpop.permute.xlu0 %2624
        %2626 = vrot.lane.b32.xlu0 %v1332, 32
        %v2627 = vpop.permute.xlu0 %2626
        %2628 = vrot.lane.b32.xlu0 %v1338, 32
        %v2629 = vpop.permute.xlu0 %2628
        %2630 = vrot.lane.b32.xlu0 %v1344, 32
        %v2631 = vpop.permute.xlu0 %2630
        %2632 = vrot.lane.b32.xlu0 %v1350, 32
        %v2633 = vpop.permute.xlu0 %2632
        %2634 = vrot.lane.b32.xlu0 %v1356, 32
        %v2635 = vpop.permute.xlu0 %2634
        %2636 = vrot.lane.b32.xlu0 %v1362, 32
        %v2637 = vpop.permute.xlu0 %2636
        %2638 = vrot.lane.b32.xlu0 %v1368, 32
        %v2639 = vpop.permute.xlu0 %2638
        %2640 = vrot.lane.b32.xlu0 %v1374, 32
        %v2641 = vpop.permute.xlu0 %2640
        %2642 = vrot.lane.b32.xlu0 %v1380, 32
        %v2643 = vpop.permute.xlu0 %2642
        %2644 = vrot.lane.b32.xlu0 %v1386, 32
        %v2645 = vpop.permute.xlu0 %2644
        %2646 = vrot.lane.b32.xlu0 %v1392, 32
        %v2647 = vpop.permute.xlu0 %2646
        %2648 = vrot.lane.b32.xlu0 %v1398, 32
        %v2649 = vpop.permute.xlu0 %2648
        %2650 = vrot.lane.b32.xlu0 %v1404, 32
        %v2651 = vpop.permute.xlu0 %2650
        %2652 = vrot.lane.b32.xlu0 %v1410, 32
        %v2653 = vpop.permute.xlu0 %2652
        %2654 = vrot.lane.b32.xlu0 %v1416, 32
        %v2655 = vpop.permute.xlu0 %2654
        %v2656 = vsel %vm1131, %v2593, 0
        %v2658 = vsel %vm1131, %v2595, 0
        %v2660 = vsel %vm1131, %v2597, 0
        %v2662 = vsel %vm1131, %v2599, 0
        %v2664 = vsel %vm1131, %v2601, 0
        %v2666 = vsel %vm1131, %v2603, 0
        %v2668 = vsel %vm1131, %v2605, 0
        %v2670 = vsel %vm1131, %v2607, 0
        %v2672 = vsel %vm1131, %v2609, 0
        %v2674 = vsel %vm1131, %v2611, 0
        %v2676 = vsel %vm1131, %v2613, 0
        %v2678 = vsel %vm1131, %v2615, 0
        %v2680 = vsel %vm1131, %v2617, 0
        %v2682 = vsel %vm1131, %v2619, 0
        %v2684 = vsel %vm1131, %v2621, 0
        %v2686 = vsel %vm1131, %v2623, 0
        %v2688 = vsel %vm1131, %v2625, 0
        %v2690 = vsel %vm1131, %v2627, 0
        %v2692 = vsel %vm1131, %v2629, 0
        %v2694 = vsel %vm1131, %v2631, 0
        %v2696 = vsel %vm1131, %v2633, 0
        %v2698 = vsel %vm1131, %v2635, 0
        %v2700 = vsel %vm1131, %v2637, 0
        %v2702 = vsel %vm1131, %v2639, 0
        %v2704 = vsel %vm1131, %v2641, 0
        %v2706 = vsel %vm1131, %v2643, 0
        %v2708 = vsel %vm1131, %v2645, 0
        %v2710 = vsel %vm1131, %v2647, 0
        %v2712 = vsel %vm1131, %v2649, 0
        %v2714 = vsel %vm1131, %v2651, 0
        %v2716 = vsel %vm1131, %v2653, 0
        %v2718 = vsel %vm1131, %v2655, 0
        %2720 = vmatprep.subr.mxu0 0.0
        %2721 = vmatpush1.xpose.msra.mxu0 %v2688
        %2722 = vmatprep.subr.mxu0 0.0
        %2723 = vmatpush1.xpose.msra.mxu0 %v2690
        %2724 = vmatprep.subr.mxu0 0.0
        %2725 = vmatpush1.xpose.msra.mxu0 %v2692
        %2726 = vmatprep.subr.mxu0 0.0
        %2727 = vmatpush1.xpose.msra.mxu0 %v2694
        %2728 = vmatprep.subr.mxu0 0.0
        %2729 = vmatpush1.xpose.msra.mxu0 %v2696
        %2730 = vmatprep.subr.mxu0 0.0
        %2731 = vmatpush1.xpose.msra.mxu0 %v2698
        %2732 = vmatprep.subr.mxu0 0.0
        %2733 = vmatpush1.xpose.msra.mxu0 %v2700
        %2734 = vmatprep.subr.mxu0 0.0
        %2735 = vmatpush1.xpose.msra.mxu0 %v2702
        %2736 = vmatprep.subr.mxu0 0.0
        %2737 = vmatpush1.xpose.msra.mxu0 %v2704
        %2738 = vmatprep.subr.mxu0 0.0
        %2739 = vmatpush1.xpose.msra.mxu0 %v2706
        %2740 = vmatprep.subr.mxu0 0.0
        %2741 = vmatpush1.xpose.msra.mxu0 %v2708
        %2742 = vmatprep.subr.mxu0 0.0
        %2743 = vmatpush1.xpose.msra.mxu0 %v2710
        %2744 = vmatprep.subr.mxu0 0.0
        %2745 = vmatpush1.xpose.msra.mxu0 %v2712
        %2746 = vmatprep.subr.mxu0 0.0
        %2747 = vmatpush1.xpose.msra.mxu0 %v2714
        %2748 = vmatprep.subr.mxu0 0.0
        %2749 = vmatpush1.xpose.msra.mxu0 %v2716
        %2750 = vmatprep.subr.mxu0 0.0
        %2751 = vmatpush1.xpose.msra.mxu0 %v2718
        %2752 = vmatprep.subr.mxu0 0.0
        %2753 = vmatpush1.xpose.msra.mxu0 0.0
        %2754 = vmatprep.subr.mxu0 0.0
        %2755 = vmatpush1.xpose.msra.mxu0 0.0
        %2756 = vmatprep.subr.mxu0 0.0
        %2757 = vmatpush1.xpose.msra.mxu0 0.0
        %2758 = vmatprep.subr.mxu0 0.0
        %2759 = vmatpush1.xpose.msra.mxu0 0.0
        %2760 = vmatprep.subr.mxu0 0.0
        %2761 = vmatpush1.xpose.msra.mxu0 0.0
        %2762 = vmatprep.subr.mxu0 0.0
        %2763 = vmatpush1.xpose.msra.mxu0 0.0
        %2764 = vmatprep.subr.mxu0 0.0
        %2765 = vmatpush1.xpose.msra.mxu0 0.0
        %2766 = vmatprep.subr.mxu0 0.0
        %2767 = vmatpush1.xpose.msra.mxu0 0.0
        %2768 = vmatprep.subr.mxu0 0.0
        %2769 = vmatpush1.xpose.msra.mxu0 0.0
        %2770 = vmatprep.subr.mxu0 0.0
        %2771 = vmatpush1.xpose.msra.mxu0 0.0
        %2772 = vmatprep.subr.mxu0 0.0
        %2773 = vmatpush1.xpose.msra.mxu0 0.0
        %2774 = vmatprep.subr.mxu0 0.0
        %2775 = vmatpush1.xpose.msra.mxu0 0.0
        %2776 = vmatprep.subr.mxu0 0.0
        %2777 = vmatpush1.xpose.msra.mxu0 0.0
        %2778 = vmatprep.subr.mxu0 0.0
        %2779 = vmatpush1.xpose.msra.mxu0 0.0
        %2780 = vmatprep.subr.mxu0 0.0
        %2781 = vmatpush1.xpose.msra.mxu0 0.0
        %2782 = vmatprep.subr.mxu0 0.0
        %2783 = vmatpush1.xpose.msra.mxu0 0.0
        %2784 = vmatprep.mubr.f32.mxu0 0.0
        %2785 = vmatmul.mubr.f32.gmra.mrb[0].mxu0 %v2656
        %v2786 = vpop.f32.mrb[0].mxu0
        %v2787 = vadd.f32 %v714, %v2786
        %v2788 = vpop.f32.mrb[0].mxu0
        %2789 = vmatprep.mubr.f32.mxu0 0.0
        %2790 = vmatmul.mubr.f32.gmra.mrb[0].mxu0 %v2658
        %v2791 = vpop.f32.mrb[0].mxu0
        %v2792 = vadd.f32 %v715, %v2791
        %v2793 = vpop.f32.mrb[0].mxu0
        %2794 = vmatprep.mubr.f32.mxu0 0.0
        %2795 = vmatmul.mubr.f32.gmra.mrb[0].mxu0 %v2660
        %v2796 = vpop.f32.mrb[0].mxu0
        %v2797 = vadd.f32 %v716, %v2796
        %v2798 = vpop.f32.mrb[0].mxu0
        %2799 = vmatprep.mubr.f32.mxu0 0.0
        %2800 = vmatmul.mubr.f32.gmra.mrb[0].mxu0 %v2662
        %v2801 = vpop.f32.mrb[0].mxu0
        %v2802 = vadd.f32 %v717, %v2801
        %v2803 = vpop.f32.mrb[0].mxu0
        %2804 = vmatprep.mubr.f32.mxu0 0.0
        %2805 = vmatmul.mubr.f32.gmra.mrb[0].mxu0 %v2664
        %v2806 = vpop.f32.mrb[0].mxu0
        %v2807 = vadd.f32 %v718, %v2806
        %v2808 = vpop.f32.mrb[0].mxu0
        %2809 = vmatprep.mubr.f32.mxu0 0.0
        %2810 = vmatmul.mubr.f32.gmra.mrb[0].mxu0 %v2666
        %v2811 = vpop.f32.mrb[0].mxu0
        %v2812 = vadd.f32 %v719, %v2811
        %v2813 = vpop.f32.mrb[0].mxu0
        %2814 = vmatprep.mubr.f32.mxu0 0.0
        %2815 = vmatmul.mubr.f32.gmra.mrb[0].mxu0 %v2668
        %v2816 = vpop.f32.mrb[0].mxu0
        %v2817 = vadd.f32 %v720, %v2816
        %v2818 = vpop.f32.mrb[0].mxu0
        %2819 = vmatprep.mubr.f32.mxu0 0.0
        %2820 = vmatmul.mubr.f32.gmra.mrb[0].mxu0 %v2670
        %v2821 = vpop.f32.mrb[0].mxu0
        %v2822 = vadd.f32 %v721, %v2821
        %v2823 = vpop.f32.mrb[0].mxu0
        %2824 = vmatprep.mubr.f32.mxu0 0.0
        %2825 = vmatmul.mubr.f32.gmra.mrb[0].mxu0 %v2672
        %v2826 = vpop.f32.mrb[0].mxu0
        %v2827 = vadd.f32 %v722, %v2826
        %v2828 = vpop.f32.mrb[0].mxu0
        %2829 = vmatprep.mubr.f32.mxu0 0.0
        %2830 = vmatmul.mubr.f32.gmra.mrb[0].mxu0 %v2674
        %v2831 = vpop.f32.mrb[0].mxu0
        %v2832 = vadd.f32 %v723, %v2831
        %v2833 = vpop.f32.mrb[0].mxu0
        %2834 = vmatprep.mubr.f32.mxu0 0.0
        %2835 = vmatmul.mubr.f32.gmra.mrb[0].mxu0 %v2676
        %v2836 = vpop.f32.mrb[0].mxu0
        %v2837 = vadd.f32 %v724, %v2836
        %v2838 = vpop.f32.mrb[0].mxu0
        %2839 = vmatprep.mubr.f32.mxu0 0.0
        %2840 = vmatmul.mubr.f32.gmra.mrb[0].mxu0 %v2678
        %v2841 = vpop.f32.mrb[0].mxu0
        %v2842 = vadd.f32 %v725, %v2841
        %v2843 = vpop.f32.mrb[0].mxu0
        %2844 = vmatprep.mubr.f32.mxu0 0.0
        %2845 = vmatmul.mubr.f32.gmra.mrb[0].mxu0 %v2680
        %v2846 = vpop.f32.mrb[0].mxu0
        %v2847 = vadd.f32 %v726, %v2846
        %v2848 = vpop.f32.mrb[0].mxu0
        %2849 = vmatprep.mubr.f32.mxu0 0.0
        %2850 = vmatmul.mubr.f32.gmra.mrb[0].mxu0 %v2682
        %v2851 = vpop.f32.mrb[0].mxu0
        %v2852 = vadd.f32 %v727, %v2851
        %v2853 = vpop.f32.mrb[0].mxu0
        %2854 = vmatprep.mubr.f32.mxu0 0.0
        %2855 = vmatmul.mubr.f32.gmra.mrb[0].mxu0 %v2684
        %v2856 = vpop.f32.mrb[0].mxu0
        %v2857 = vadd.f32 %v728, %v2856
        %v2858 = vpop.f32.mrb[0].mxu0
        %2859 = vmatprep.mubr.f32.mxu0 0.0
        %2860 = vmatmul.mubr.f32.gmra.mrb[0].mxu0 %v2686
        %v2861 = vpop.f32.mrb[0].mxu0
        %v2862 = vadd.f32 %v729, %v2861
        %v2863 = vpop.f32.mrb[0].mxu0
        %2864 = vdwg.mxu0
        %2865 = vmax.xlane.f32.xlu0 %v2787
        %v2866 = vpop.xlane.xlu0 %2865
        %2867 = vmax.xlane.f32.xlu0 %v2792
        %v2868 = vpop.xlane.xlu0 %2867
        %2869 = vmax.xlane.f32.xlu0 %v2797
        %v2870 = vpop.xlane.xlu0 %2869
        %2871 = vmax.xlane.f32.xlu0 %v2802
        %v2872 = vpop.xlane.xlu0 %2871
        %2873 = vmax.xlane.f32.xlu0 %v2807
        %v2874 = vpop.xlane.xlu0 %2873
        %2875 = vmax.xlane.f32.xlu0 %v2812
        %v2876 = vpop.xlane.xlu0 %2875
        %2877 = vmax.xlane.f32.xlu0 %v2817
        %v2878 = vpop.xlane.xlu0 %2877
        %2879 = vmax.xlane.f32.xlu0 %v2822
        %v2880 = vpop.xlane.xlu0 %2879
        %2881 = vmax.xlane.f32.xlu0 %v2827
        %v2882 = vpop.xlane.xlu0 %2881
        %2883 = vmax.xlane.f32.xlu0 %v2832
        %v2884 = vpop.xlane.xlu0 %2883
        %2885 = vmax.xlane.f32.xlu0 %v2837
        %v2886 = vpop.xlane.xlu0 %2885
        %2887 = vmax.xlane.f32.xlu0 %v2842
        %v2888 = vpop.xlane.xlu0 %2887
        %2889 = vmax.xlane.f32.xlu0 %v2847
        %v2890 = vpop.xlane.xlu0 %2889
        %2891 = vmax.xlane.f32.xlu0 %v2852
        %v2892 = vpop.xlane.xlu0 %2891
        %2893 = vmax.xlane.f32.xlu0 %v2857
        %v2894 = vpop.xlane.xlu0 %2893
        %2895 = vmax.xlane.f32.xlu0 %v2862
        %v2896 = vpop.xlane.xlu0 %2895
        %v2897 = vsub.f32 %v2787, %v2866
        %v2898 = vsub.f32 %v2792, %v2868
        %v2899 = vsub.f32 %v2797, %v2870
        %v2900 = vsub.f32 %v2802, %v2872
        %v2901 = vsub.f32 %v2807, %v2874
        %v2902 = vsub.f32 %v2812, %v2876
        %v2903 = vsub.f32 %v2817, %v2878
        %v2904 = vsub.f32 %v2822, %v2880
        %v2905 = vsub.f32 %v2827, %v2882
        %v2906 = vsub.f32 %v2832, %v2884
        %v2907 = vsub.f32 %v2837, %v2886
        %v2908 = vsub.f32 %v2842, %v2888
        %v2909 = vsub.f32 %v2847, %v2890
        %v2910 = vsub.f32 %v2852, %v2892
        %v2911 = vsub.f32 %v2857, %v2894
        %v2912 = vsub.f32 %v2862, %v2896
        %v2913 = vmul.f32 %v2897, 1.442695
        %v2914 = vpow.pop %v2913
        %v2915 = vmul.f32 %v2898, 1.442695
        %v2916 = vpow.pop %v2915
        %v2917 = vmul.f32 %v2899, 1.442695
        %v2918 = vpow.pop %v2917
        %v2919 = vmul.f32 %v2900, 1.442695
        %v2920 = vpow.pop %v2919
        %v2921 = vmul.f32 %v2901, 1.442695
        %v2922 = vpow.pop %v2921
        %v2923 = vmul.f32 %v2902, 1.442695
        %v2924 = vpow.pop %v2923
        %v2925 = vmul.f32 %v2903, 1.442695
        %v2926 = vpow.pop %v2925
        %v2927 = vmul.f32 %v2904, 1.442695
        %v2928 = vpow.pop %v2927
        %v2929 = vmul.f32 %v2905, 1.442695
        %v2930 = vpow.pop %v2929
        %v2931 = vmul.f32 %v2906, 1.442695
        %v2932 = vpow.pop %v2931
        %v2933 = vmul.f32 %v2907, 1.442695
        %v2934 = vpow.pop %v2933
        %v2935 = vmul.f32 %v2908, 1.442695
        %v2936 = vpow.pop %v2935
        %v2937 = vmul.f32 %v2909, 1.442695
        %v2938 = vpow.pop %v2937
        %v2939 = vmul.f32 %v2910, 1.442695
        %v2940 = vpow.pop %v2939
        %v2941 = vmul.f32 %v2911, 1.442695
        %v2942 = vpow.pop %v2941
        %v2943 = vmul.f32 %v2912, 1.442695
        %v2944 = vpow.pop %v2943
        %2945 = vadd.xlane.f32.xlu0 %v2914
        %v2946 = vpop.xlane.xlu0 %2945
        %2947 = vadd.xlane.f32.xlu0 %v2916
        %v2948 = vpop.xlane.xlu0 %2947
        %2949 = vadd.xlane.f32.xlu0 %v2918
        %v2950 = vpop.xlane.xlu0 %2949
        %2951 = vadd.xlane.f32.xlu0 %v2920
        %v2952 = vpop.xlane.xlu0 %2951
        %2953 = vadd.xlane.f32.xlu0 %v2922
        %v2954 = vpop.xlane.xlu0 %2953
        %2955 = vadd.xlane.f32.xlu0 %v2924
        %v2956 = vpop.xlane.xlu0 %2955
        %2957 = vadd.xlane.f32.xlu0 %v2926
        %v2958 = vpop.xlane.xlu0 %2957
        %2959 = vadd.xlane.f32.xlu0 %v2928
        %v2960 = vpop.xlane.xlu0 %2959
        %2961 = vadd.xlane.f32.xlu0 %v2930
        %v2962 = vpop.xlane.xlu0 %2961
        %2963 = vadd.xlane.f32.xlu0 %v2932
        %v2964 = vpop.xlane.xlu0 %2963
        %2965 = vadd.xlane.f32.xlu0 %v2934
        %v2966 = vpop.xlane.xlu0 %2965
        %2967 = vadd.xlane.f32.xlu0 %v2936
        %v2968 = vpop.xlane.xlu0 %2967
        %2969 = vadd.xlane.f32.xlu0 %v2938
        %v2970 = vpop.xlane.xlu0 %2969
        %2971 = vadd.xlane.f32.xlu0 %v2940
        %v2972 = vpop.xlane.xlu0 %2971
        %2973 = vadd.xlane.f32.xlu0 %v2942
        %v2974 = vpop.xlane.xlu0 %2973
        %2975 = vadd.xlane.f32.xlu0 %v2944
        %v2976 = vpop.xlane.xlu0 %2975
        %v2977 = vrcp.pop %v2946
        %v2978 = vrcp.pop %v2948
        %v2979 = vrcp.pop %v2950
        %v2980 = vrcp.pop %v2952
        %v2981 = vrcp.pop %v2954
        %v2982 = vrcp.pop %v2956
        %v2983 = vrcp.pop %v2958
        %v2984 = vrcp.pop %v2960
        %v2985 = vrcp.pop %v2962
        %v2986 = vrcp.pop %v2964
        %v2987 = vrcp.pop %v2966
        %v2988 = vrcp.pop %v2968
        %v2989 = vrcp.pop %v2970
        %v2990 = vrcp.pop %v2972
        %v2991 = vrcp.pop %v2974
        %v2992 = vrcp.pop %v2976
        %v2993 = vmul.f32 %v2914, %v2977
        %v2994 = vmul.f32 %v2916, %v2978
        %v2995 = vmul.f32 %v2918, %v2979
        %v2996 = vmul.f32 %v2920, %v2980
        %v2997 = vmul.f32 %v2922, %v2981
        %v2998 = vmul.f32 %v2924, %v2982
        %v2999 = vmul.f32 %v2926, %v2983
        %v3000 = vmul.f32 %v2928, %v2984
        %v3001 = vmul.f32 %v2930, %v2985
        %v3002 = vmul.f32 %v2932, %v2986
        %v3003 = vmul.f32 %v2934, %v2987
        %v3004 = vmul.f32 %v2936, %v2988
        %v3005 = vmul.f32 %v2938, %v2989
        %v3006 = vmul.f32 %v2940, %v2990
        %v3007 = vmul.f32 %v2942, %v2991
        %v3008 = vmul.f32 %v2944, %v2992
        %3009 = vrot.lane.b32.xlu0 %v1328, 96
        %v3010 = vpop.permute.xlu0 %3009
        %3011 = vrot.lane.b32.xlu0 %v1334, 96
        %v3012 = vpop.permute.xlu0 %3011
        %3013 = vrot.lane.b32.xlu0 %v1340, 96
        %v3014 = vpop.permute.xlu0 %3013
        %3015 = vrot.lane.b32.xlu0 %v1346, 96
        %v3016 = vpop.permute.xlu0 %3015
        %3017 = vrot.lane.b32.xlu0 %v1352, 96
        %v3018 = vpop.permute.xlu0 %3017
        %3019 = vrot.lane.b32.xlu0 %v1358, 96
        %v3020 = vpop.permute.xlu0 %3019
        %3021 = vrot.lane.b32.xlu0 %v1364, 96
        %v3022 = vpop.permute.xlu0 %3021
        %3023 = vrot.lane.b32.xlu0 %v1370, 96
        %v3024 = vpop.permute.xlu0 %3023
        %3025 = vrot.lane.b32.xlu0 %v1376, 96
        %v3026 = vpop.permute.xlu0 %3025
        %3027 = vrot.lane.b32.xlu0 %v1382, 96
        %v3028 = vpop.permute.xlu0 %3027
        %3029 = vrot.lane.b32.xlu0 %v1388, 96
        %v3030 = vpop.permute.xlu0 %3029
        %3031 = vrot.lane.b32.xlu0 %v1394, 96
        %v3032 = vpop.permute.xlu0 %3031
        %3033 = vrot.lane.b32.xlu0 %v1400, 96
        %v3034 = vpop.permute.xlu0 %3033
        %3035 = vrot.lane.b32.xlu0 %v1406, 96
        %v3036 = vpop.permute.xlu0 %3035
        %3037 = vrot.lane.b32.xlu0 %v1412, 96
        %v3038 = vpop.permute.xlu0 %3037
        %3039 = vrot.lane.b32.xlu0 %v1418, 96
        %v3040 = vpop.permute.xlu0 %3039
        %3057 = vmatprep.subr.mxu0 0.0
        %3058 = vmatpush1.msra.mxu0 %v3010
        %3059 = vmatprep.subr.mxu0 0.0
        %3060 = vmatpush1.msra.mxu0 %v3012
        %3061 = vmatprep.subr.mxu0 0.0
        %3062 = vmatpush1.msra.mxu0 %v3014
        %3063 = vmatprep.subr.mxu0 0.0
        %3064 = vmatpush1.msra.mxu0 %v3016
        %3065 = vmatprep.subr.mxu0 0.0
        %3066 = vmatpush1.msra.mxu0 %v3018
        %3067 = vmatprep.subr.mxu0 0.0
        %3068 = vmatpush1.msra.mxu0 %v3020
        %3069 = vmatprep.subr.mxu0 0.0
        %3070 = vmatpush1.msra.mxu0 %v3022
        %3071 = vmatprep.subr.mxu0 0.0
        %3072 = vmatpush1.msra.mxu0 %v3024
        %3073 = vmatprep.subr.mxu0 0.0
        %3074 = vmatpush1.msra.mxu0 %v3026
        %3075 = vmatprep.subr.mxu0 0.0
        %3076 = vmatpush1.msra.mxu0 %v3028
        %3077 = vmatprep.subr.mxu0 0.0
        %3078 = vmatpush1.msra.mxu0 %v3030
        %3079 = vmatprep.subr.mxu0 0.0
        %3080 = vmatpush1.msra.mxu0 %v3032
        %3081 = vmatprep.subr.mxu0 0.0
        %3082 = vmatpush1.msra.mxu0 %v3034
        %3083 = vmatprep.subr.mxu0 0.0
        %3084 = vmatpush1.msra.mxu0 %v3036
        %3085 = vmatprep.subr.mxu0 0.0
        %3086 = vmatpush1.msra.mxu0 %v3038
        %3087 = vmatprep.subr.mxu0 0.0
        %3088 = vmatpush1.msra.mxu0 %v3040
        %3089 = vmatprep.subr.mxu0 0.0
        %3090 = vmatpush1.msra.mxu0 0.0
        %3091 = vmatprep.subr.mxu0 0.0
        %3092 = vmatpush1.msra.mxu0 0.0
        %3093 = vmatprep.subr.mxu0 0.0
        %3094 = vmatpush1.msra.mxu0 0.0
        %3095 = vmatprep.subr.mxu0 0.0
        %3096 = vmatpush1.msra.mxu0 0.0
        %3097 = vmatprep.subr.mxu0 0.0
        %3098 = vmatpush1.msra.mxu0 0.0
        %3099 = vmatprep.subr.mxu0 0.0
        %3100 = vmatpush1.msra.mxu0 0.0
        %3101 = vmatprep.subr.mxu0 0.0
        %3102 = vmatpush1.msra.mxu0 0.0
        %3103 = vmatprep.subr.mxu0 0.0
        %3104 = vmatpush1.msra.mxu0 0.0
        %3105 = vmatprep.subr.mxu0 0.0
        %3106 = vmatpush1.msra.mxu0 0.0
        %3107 = vmatprep.subr.mxu0 0.0
        %3108 = vmatpush1.msra.mxu0 0.0
        %3109 = vmatprep.subr.mxu0 0.0
        %3110 = vmatpush1.msra.mxu0 0.0
        %3111 = vmatprep.subr.mxu0 0.0
        %3112 = vmatpush1.msra.mxu0 0.0
        %3113 = vmatprep.subr.mxu0 0.0
        %3114 = vmatpush1.msra.mxu0 0.0
        %3115 = vmatprep.subr.mxu0 0.0
        %3116 = vmatpush1.msra.mxu0 0.0
        %3117 = vmatprep.subr.mxu0 0.0
        %3118 = vmatpush1.msra.mxu0 0.0
        %3119 = vmatprep.subr.mxu0 0.0
        %3120 = vmatpush1.msra.mxu0 0.0
        %3121 = vmatprep.mubr.f32.mxu0 0.0
        %3122 = vmatmul.mubr.f32.gmra.mrb[0].mxu0 %v2993
        %v3123 = vpop.f32.mrb[0].mxu0
        %v3124 = vadd.f32 0.0, %v3123
        %v3125 = vpop.f32.mrb[0].mxu0
        %3126 = vmatprep.mubr.f32.mxu0 0.0
        %3127 = vmatmul.mubr.f32.gmra.mrb[0].mxu0 %v2994
        %v3128 = vpop.f32.mrb[0].mxu0
        %v3129 = vadd.f32 0.0, %v3128
        %v3130 = vpop.f32.mrb[0].mxu0
        %3131 = vmatprep.mubr.f32.mxu0 0.0
        %3132 = vmatmul.mubr.f32.gmra.mrb[0].mxu0 %v2995
        %v3133 = vpop.f32.mrb[0].mxu0
        %v3134 = vadd.f32 0.0, %v3133
        %v3135 = vpop.f32.mrb[0].mxu0
        %3136 = vmatprep.mubr.f32.mxu0 0.0
        %3137 = vmatmul.mubr.f32.gmra.mrb[0].mxu0 %v2996
        %v3138 = vpop.f32.mrb[0].mxu0
        %v3139 = vadd.f32 0.0, %v3138
        %v3140 = vpop.f32.mrb[0].mxu0
        %3141 = vmatprep.mubr.f32.mxu0 0.0
        %3142 = vmatmul.mubr.f32.gmra.mrb[0].mxu0 %v2997
        %v3143 = vpop.f32.mrb[0].mxu0
        %v3144 = vadd.f32 0.0, %v3143
        %v3145 = vpop.f32.mrb[0].mxu0
        %3146 = vmatprep.mubr.f32.mxu0 0.0
        %3147 = vmatmul.mubr.f32.gmra.mrb[0].mxu0 %v2998
        %v3148 = vpop.f32.mrb[0].mxu0
        %v3149 = vadd.f32 0.0, %v3148
        %v3150 = vpop.f32.mrb[0].mxu0
        %3151 = vmatprep.mubr.f32.mxu0 0.0
        %3152 = vmatmul.mubr.f32.gmra.mrb[0].mxu0 %v2999
        %v3153 = vpop.f32.mrb[0].mxu0
        %v3154 = vadd.f32 0.0, %v3153
        %v3155 = vpop.f32.mrb[0].mxu0
        %3156 = vmatprep.mubr.f32.mxu0 0.0
        %3157 = vmatmul.mubr.f32.gmra.mrb[0].mxu0 %v3000
        %v3158 = vpop.f32.mrb[0].mxu0
        %v3159 = vadd.f32 0.0, %v3158
        %v3160 = vpop.f32.mrb[0].mxu0
        %3161 = vmatprep.mubr.f32.mxu0 0.0
        %3162 = vmatmul.mubr.f32.gmra.mrb[0].mxu0 %v3001
        %v3163 = vpop.f32.mrb[0].mxu0
        %v3164 = vadd.f32 0.0, %v3163
        %v3165 = vpop.f32.mrb[0].mxu0
        %3166 = vmatprep.mubr.f32.mxu0 0.0
        %3167 = vmatmul.mubr.f32.gmra.mrb[0].mxu0 %v3002
        %v3168 = vpop.f32.mrb[0].mxu0
        %v3169 = vadd.f32 0.0, %v3168
        %v3170 = vpop.f32.mrb[0].mxu0
        %3171 = vmatprep.mubr.f32.mxu0 0.0
        %3172 = vmatmul.mubr.f32.gmra.mrb[0].mxu0 %v3003
        %v3173 = vpop.f32.mrb[0].mxu0
        %v3174 = vadd.f32 0.0, %v3173
        %v3175 = vpop.f32.mrb[0].mxu0
        %3176 = vmatprep.mubr.f32.mxu0 0.0
        %3177 = vmatmul.mubr.f32.gmra.mrb[0].mxu0 %v3004
        %v3178 = vpop.f32.mrb[0].mxu0
        %v3179 = vadd.f32 0.0, %v3178
        %v3180 = vpop.f32.mrb[0].mxu0
        %3181 = vmatprep.mubr.f32.mxu0 0.0
        %3182 = vmatmul.mubr.f32.gmra.mrb[0].mxu0 %v3005
        %v3183 = vpop.f32.mrb[0].mxu0
        %v3184 = vadd.f32 0.0, %v3183
        %v3185 = vpop.f32.mrb[0].mxu0
        %3186 = vmatprep.mubr.f32.mxu0 0.0
        %3187 = vmatmul.mubr.f32.gmra.mrb[0].mxu0 %v3006
        %v3188 = vpop.f32.mrb[0].mxu0
        %v3189 = vadd.f32 0.0, %v3188
        %v3190 = vpop.f32.mrb[0].mxu0
        %3191 = vmatprep.mubr.f32.mxu0 0.0
        %3192 = vmatmul.mubr.f32.gmra.mrb[0].mxu0 %v3007
        %v3193 = vpop.f32.mrb[0].mxu0
        %v3194 = vadd.f32 0.0, %v3193
        %v3195 = vpop.f32.mrb[0].mxu0
        %3196 = vmatprep.mubr.f32.mxu0 0.0
        %3197 = vmatmul.mubr.f32.gmra.mrb[0].mxu0 %v3008
        %v3198 = vpop.f32.mrb[0].mxu0
        %v3199 = vadd.f32 0.0, %v3198
        %v3200 = vpop.f32.mrb[0].mxu0
        %3201 = vdwg.mxu0
        %3202 = vrot.lane.b32.xlu0 %v1326, 80
        %v3203 = vpop.permute.xlu0 %3202
        %3204 = vrot.lane.b32.xlu0 %v1332, 80
        %v3205 = vpop.permute.xlu0 %3204
        %3206 = vrot.lane.b32.xlu0 %v1338, 80
        %v3207 = vpop.permute.xlu0 %3206
        %3208 = vrot.lane.b32.xlu0 %v1344, 80
        %v3209 = vpop.permute.xlu0 %3208
        %3210 = vrot.lane.b32.xlu0 %v1350, 80
        %v3211 = vpop.permute.xlu0 %3210
        %3212 = vrot.lane.b32.xlu0 %v1356, 80
        %v3213 = vpop.permute.xlu0 %3212
        %3214 = vrot.lane.b32.xlu0 %v1362, 80
        %v3215 = vpop.permute.xlu0 %3214
        %3216 = vrot.lane.b32.xlu0 %v1368, 80
        %v3217 = vpop.permute.xlu0 %3216
        %3218 = vrot.lane.b32.xlu0 %v1374, 80
        %v3219 = vpop.permute.xlu0 %3218
        %3220 = vrot.lane.b32.xlu0 %v1380, 80
        %v3221 = vpop.permute.xlu0 %3220
        %3222 = vrot.lane.b32.xlu0 %v1386, 80
        %v3223 = vpop.permute.xlu0 %3222
        %3224 = vrot.lane.b32.xlu0 %v1392, 80
        %v3225 = vpop.permute.xlu0 %3224
        %3226 = vrot.lane.b32.xlu0 %v1398, 80
        %v3227 = vpop.permute.xlu0 %3226
        %3228 = vrot.lane.b32.xlu0 %v1404, 80
        %v3229 = vpop.permute.xlu0 %3228
        %3230 = vrot.lane.b32.xlu0 %v1410, 80
        %v3231 = vpop.permute.xlu0 %3230
        %3232 = vrot.lane.b32.xlu0 %v1416, 80
        %v3233 = vpop.permute.xlu0 %3232
        %3234 = vrot.lane.b32.xlu0 %v1326, 16
        %v3235 = vpop.permute.xlu0 %3234
        %3236 = vrot.lane.b32.xlu0 %v1332, 16
        %v3237 = vpop.permute.xlu0 %3236
        %3238 = vrot.lane.b32.xlu0 %v1338, 16
        %v3239 = vpop.permute.xlu0 %3238
        %3240 = vrot.lane.b32.xlu0 %v1344, 16
        %v3241 = vpop.permute.xlu0 %3240
        %3242 = vrot.lane.b32.xlu0 %v1350, 16
        %v3243 = vpop.permute.xlu0 %3242
        %3244 = vrot.lane.b32.xlu0 %v1356, 16
        %v3245 = vpop.permute.xlu0 %3244
        %3246 = vrot.lane.b32.xlu0 %v1362, 16
        %v3247 = vpop.permute.xlu0 %3246
        %3248 = vrot.lane.b32.xlu0 %v1368, 16
        %v3249 = vpop.permute.xlu0 %3248
        %3250 = vrot.lane.b32.xlu0 %v1374, 16
        %v3251 = vpop.permute.xlu0 %3250
        %3252 = vrot.lane.b32.xlu0 %v1380, 16
        %v3253 = vpop.permute.xlu0 %3252
        %3254 = vrot.lane.b32.xlu0 %v1386, 16
        %v3255 = vpop.permute.xlu0 %3254
        %3256 = vrot.lane.b32.xlu0 %v1392, 16
        %v3257 = vpop.permute.xlu0 %3256
        %3258 = vrot.lane.b32.xlu0 %v1398, 16
        %v3259 = vpop.permute.xlu0 %3258
        %3260 = vrot.lane.b32.xlu0 %v1404, 16
        %v3261 = vpop.permute.xlu0 %3260
        %3262 = vrot.lane.b32.xlu0 %v1410, 16
        %v3263 = vpop.permute.xlu0 %3262
        %3264 = vrot.lane.b32.xlu0 %v1416, 16
        %v3265 = vpop.permute.xlu0 %3264
        %v3266 = vsel %vm1131, %v3203, 0
        %v3268 = vsel %vm1131, %v3205, 0
        %v3270 = vsel %vm1131, %v3207, 0
        %v3272 = vsel %vm1131, %v3209, 0
        %v3274 = vsel %vm1131, %v3211, 0
        %v3276 = vsel %vm1131, %v3213, 0
        %v3278 = vsel %vm1131, %v3215, 0
        %v3280 = vsel %vm1131, %v3217, 0
        %v3282 = vsel %vm1131, %v3219, 0
        %v3284 = vsel %vm1131, %v3221, 0
        %v3286 = vsel %vm1131, %v3223, 0
        %v3288 = vsel %vm1131, %v3225, 0
        %v3290 = vsel %vm1131, %v3227, 0
        %v3292 = vsel %vm1131, %v3229, 0
        %v3294 = vsel %vm1131, %v3231, 0
        %v3296 = vsel %vm1131, %v3233, 0
        %v3298 = vsel %vm1131, %v3235, 0
        %v3300 = vsel %vm1131, %v3237, 0
        %v3302 = vsel %vm1131, %v3239, 0
        %v3304 = vsel %vm1131, %v3241, 0
        %v3306 = vsel %vm1131, %v3243, 0
        %v3308 = vsel %vm1131, %v3245, 0
        %v3310 = vsel %vm1131, %v3247, 0
        %v3312 = vsel %vm1131, %v3249, 0
        %v3314 = vsel %vm1131, %v3251, 0
        %v3316 = vsel %vm1131, %v3253, 0
        %v3318 = vsel %vm1131, %v3255, 0
        %v3320 = vsel %vm1131, %v3257, 0
        %v3322 = vsel %vm1131, %v3259, 0
        %v3324 = vsel %vm1131, %v3261, 0
        %v3326 = vsel %vm1131, %v3263, 0
        %v3328 = vsel %vm1131, %v3265, 0
        %3330 = vmatprep.subr.mxu0 0.0
        %3331 = vmatpush1.xpose.msra.mxu0 %v3298
        %3332 = vmatprep.subr.mxu0 0.0
        %3333 = vmatpush1.xpose.msra.mxu0 %v3300
        %3334 = vmatprep.subr.mxu0 0.0
        %3335 = vmatpush1.xpose.msra.mxu0 %v3302
        %3336 = vmatprep.subr.mxu0 0.0
        %3337 = vmatpush1.xpose.msra.mxu0 %v3304
        %3338 = vmatprep.subr.mxu0 0.0
        %3339 = vmatpush1.xpose.msra.mxu0 %v3306
        %3340 = vmatprep.subr.mxu0 0.0
        %3341 = vmatpush1.xpose.msra.mxu0 %v3308
        %3342 = vmatprep.subr.mxu0 0.0
        %3343 = vmatpush1.xpose.msra.mxu0 %v3310
        %3344 = vmatprep.subr.mxu0 0.0
        %3345 = vmatpush1.xpose.msra.mxu0 %v3312
        %3346 = vmatprep.subr.mxu0 0.0
        %3347 = vmatpush1.xpose.msra.mxu0 %v3314
        %3348 = vmatprep.subr.mxu0 0.0
        %3349 = vmatpush1.xpose.msra.mxu0 %v3316
        %3350 = vmatprep.subr.mxu0 0.0
        %3351 = vmatpush1.xpose.msra.mxu0 %v3318
        %3352 = vmatprep.subr.mxu0 0.0
        %3353 = vmatpush1.xpose.msra.mxu0 %v3320
        %3354 = vmatprep.subr.mxu0 0.0
        %3355 = vmatpush1.xpose.msra.mxu0 %v3322
        %3356 = vmatprep.subr.mxu0 0.0
        %3357 = vmatpush1.xpose.msra.mxu0 %v3324
        %3358 = vmatprep.subr.mxu0 0.0
        %3359 = vmatpush1.xpose.msra.mxu0 %v3326
        %3360 = vmatprep.subr.mxu0 0.0
        %3361 = vmatpush1.xpose.msra.mxu0 %v3328
        %3362 = vmatprep.subr.mxu0 0.0
        %3363 = vmatpush1.xpose.msra.mxu0 0.0
        %3364 = vmatprep.subr.mxu0 0.0
        %3365 = vmatpush1.xpose.msra.mxu0 0.0
        %3366 = vmatprep.subr.mxu0 0.0
        %3367 = vmatpush1.xpose.msra.mxu0 0.0
        %3368 = vmatprep.subr.mxu0 0.0
        %3369 = vmatpush1.xpose.msra.mxu0 0.0
        %3370 = vmatprep.subr.mxu0 0.0
        %3371 = vmatpush1.xpose.msra.mxu0 0.0
        %3372 = vmatprep.subr.mxu0 0.0
        %3373 = vmatpush1.xpose.msra.mxu0 0.0
        %3374 = vmatprep.subr.mxu0 0.0
        %3375 = vmatpush1.xpose.msra.mxu0 0.0
        %3376 = vmatprep.subr.mxu0 0.0
        %3377 = vmatpush1.xpose.msra.mxu0 0.0
        %3378 = vmatprep.subr.mxu0 0.0
        %3379 = vmatpush1.xpose.msra.mxu0 0.0
        %3380 = vmatprep.subr.mxu0 0.0
        %3381 = vmatpush1.xpose.msra.mxu0 0.0
        %3382 = vmatprep.subr.mxu0 0.0
        %3383 = vmatpush1.xpose.msra.mxu0 0.0
        %3384 = vmatprep.subr.mxu0 0.0
        %3385 = vmatpush1.xpose.msra.mxu0 0.0
        %3386 = vmatprep.subr.mxu0 0.0
        %3387 = vmatpush1.xpose.msra.mxu0 0.0
        %3388 = vmatprep.subr.mxu0 0.0
        %3389 = vmatpush1.xpose.msra.mxu0 0.0
        %3390 = vmatprep.subr.mxu0 0.0
        %3391 = vmatpush1.xpose.msra.mxu0 0.0
        %3392 = vmatprep.subr.mxu0 0.0
        %3393 = vmatpush1.xpose.msra.mxu0 0.0
        %3394 = vmatprep.mubr.f32.mxu0 0.0
        %3395 = vmatmul.mubr.f32.gmra.mrb[0].mxu0 %v3266
        %v3396 = vpop.f32.mrb[0].mxu0
        %v3397 = vadd.f32 %v714, %v3396
        %v3398 = vpop.f32.mrb[0].mxu0
        %3399 = vmatprep.mubr.f32.mxu0 0.0
        %3400 = vmatmul.mubr.f32.gmra.mrb[0].mxu0 %v3268
        %v3401 = vpop.f32.mrb[0].mxu0
        %v3402 = vadd.f32 %v715, %v3401
        %v3403 = vpop.f32.mrb[0].mxu0
        %3404 = vmatprep.mubr.f32.mxu0 0.0
        %3405 = vmatmul.mubr.f32.gmra.mrb[0].mxu0 %v3270
        %v3406 = vpop.f32.mrb[0].mxu0
        %v3407 = vadd.f32 %v716, %v3406
        %v3408 = vpop.f32.mrb[0].mxu0
        %3409 = vmatprep.mubr.f32.mxu0 0.0
        %3410 = vmatmul.mubr.f32.gmra.mrb[0].mxu0 %v3272
        %v3411 = vpop.f32.mrb[0].mxu0
        %v3412 = vadd.f32 %v717, %v3411
        %v3413 = vpop.f32.mrb[0].mxu0
        %3414 = vmatprep.mubr.f32.mxu0 0.0
        %3415 = vmatmul.mubr.f32.gmra.mrb[0].mxu0 %v3274
        %v3416 = vpop.f32.mrb[0].mxu0
        %v3417 = vadd.f32 %v718, %v3416
        %v3418 = vpop.f32.mrb[0].mxu0
        %3419 = vmatprep.mubr.f32.mxu0 0.0
        %3420 = vmatmul.mubr.f32.gmra.mrb[0].mxu0 %v3276
        %v3421 = vpop.f32.mrb[0].mxu0
        %v3422 = vadd.f32 %v719, %v3421
        %v3423 = vpop.f32.mrb[0].mxu0
        %3424 = vmatprep.mubr.f32.mxu0 0.0
        %3425 = vmatmul.mubr.f32.gmra.mrb[0].mxu0 %v3278
        %v3426 = vpop.f32.mrb[0].mxu0
        %v3427 = vadd.f32 %v720, %v3426
        %v3428 = vpop.f32.mrb[0].mxu0
        %3429 = vmatprep.mubr.f32.mxu0 0.0
        %3430 = vmatmul.mubr.f32.gmra.mrb[0].mxu0 %v3280
        %v3431 = vpop.f32.mrb[0].mxu0
        %v3432 = vadd.f32 %v721, %v3431
        %v3433 = vpop.f32.mrb[0].mxu0
        %3434 = vmatprep.mubr.f32.mxu0 0.0
        %3435 = vmatmul.mubr.f32.gmra.mrb[0].mxu0 %v3282
        %v3436 = vpop.f32.mrb[0].mxu0
        %v3437 = vadd.f32 %v722, %v3436
        %v3438 = vpop.f32.mrb[0].mxu0
        %3439 = vmatprep.mubr.f32.mxu0 0.0
        %3440 = vmatmul.mubr.f32.gmra.mrb[0].mxu0 %v3284
        %v3441 = vpop.f32.mrb[0].mxu0
        %v3442 = vadd.f32 %v723, %v3441
        %v3443 = vpop.f32.mrb[0].mxu0
        %3444 = vmatprep.mubr.f32.mxu0 0.0
        %3445 = vmatmul.mubr.f32.gmra.mrb[0].mxu0 %v3286
        %v3446 = vpop.f32.mrb[0].mxu0
        %v3447 = vadd.f32 %v724, %v3446
        %v3448 = vpop.f32.mrb[0].mxu0
        %3449 = vmatprep.mubr.f32.mxu0 0.0
        %3450 = vmatmul.mubr.f32.gmra.mrb[0].mxu0 %v3288
        %v3451 = vpop.f32.mrb[0].mxu0
        %v3452 = vadd.f32 %v725, %v3451
        %v3453 = vpop.f32.mrb[0].mxu0
        %3454 = vmatprep.mubr.f32.mxu0 0.0
        %3455 = vmatmul.mubr.f32.gmra.mrb[0].mxu0 %v3290
        %v3456 = vpop.f32.mrb[0].mxu0
        %v3457 = vadd.f32 %v726, %v3456
        %v3458 = vpop.f32.mrb[0].mxu0
        %3459 = vmatprep.mubr.f32.mxu0 0.0
        %3460 = vmatmul.mubr.f32.gmra.mrb[0].mxu0 %v3292
        %v3461 = vpop.f32.mrb[0].mxu0
        %v3462 = vadd.f32 %v727, %v3461
        %v3463 = vpop.f32.mrb[0].mxu0
        %3464 = vmatprep.mubr.f32.mxu0 0.0
        %3465 = vmatmul.mubr.f32.gmra.mrb[0].mxu0 %v3294
        %v3466 = vpop.f32.mrb[0].mxu0
        %v3467 = vadd.f32 %v728, %v3466
        %v3468 = vpop.f32.mrb[0].mxu0
        %3469 = vmatprep.mubr.f32.mxu0 0.0
        %3470 = vmatmul.mubr.f32.gmra.mrb[0].mxu0 %v3296
        %v3471 = vpop.f32.mrb[0].mxu0
        %v3472 = vadd.f32 %v729, %v3471
        %v3473 = vpop.f32.mrb[0].mxu0
        %3474 = vdwg.mxu0
        %3475 = vmax.xlane.f32.xlu0 %v3397
        %v3476 = vpop.xlane.xlu0 %3475
        %3477 = vmax.xlane.f32.xlu0 %v3402
        %v3478 = vpop.xlane.xlu0 %3477
        %3479 = vmax.xlane.f32.xlu0 %v3407
        %v3480 = vpop.xlane.xlu0 %3479
        %3481 = vmax.xlane.f32.xlu0 %v3412
        %v3482 = vpop.xlane.xlu0 %3481
        %3483 = vmax.xlane.f32.xlu0 %v3417
        %v3484 = vpop.xlane.xlu0 %3483
        %3485 = vmax.xlane.f32.xlu0 %v3422
        %v3486 = vpop.xlane.xlu0 %3485
        %3487 = vmax.xlane.f32.xlu0 %v3427
        %v3488 = vpop.xlane.xlu0 %3487
        %3489 = vmax.xlane.f32.xlu0 %v3432
        %v3490 = vpop.xlane.xlu0 %3489
        %3491 = vmax.xlane.f32.xlu0 %v3437
        %v3492 = vpop.xlane.xlu0 %3491
        %3493 = vmax.xlane.f32.xlu0 %v3442
        %v3494 = vpop.xlane.xlu0 %3493
        %3495 = vmax.xlane.f32.xlu0 %v3447
        %v3496 = vpop.xlane.xlu0 %3495
        %3497 = vmax.xlane.f32.xlu0 %v3452
        %v3498 = vpop.xlane.xlu0 %3497
        %3499 = vmax.xlane.f32.xlu0 %v3457
        %v3500 = vpop.xlane.xlu0 %3499
        %3501 = vmax.xlane.f32.xlu0 %v3462
        %v3502 = vpop.xlane.xlu0 %3501
        %3503 = vmax.xlane.f32.xlu0 %v3467
        %v3504 = vpop.xlane.xlu0 %3503
        %3505 = vmax.xlane.f32.xlu0 %v3472
        %v3506 = vpop.xlane.xlu0 %3505
        %v3507 = vsub.f32 %v3397, %v3476
        %v3508 = vsub.f32 %v3402, %v3478
        %v3509 = vsub.f32 %v3407, %v3480
        %v3510 = vsub.f32 %v3412, %v3482
        %v3511 = vsub.f32 %v3417, %v3484
        %v3512 = vsub.f32 %v3422, %v3486
        %v3513 = vsub.f32 %v3427, %v3488
        %v3514 = vsub.f32 %v3432, %v3490
        %v3515 = vsub.f32 %v3437, %v3492
        %v3516 = vsub.f32 %v3442, %v3494
        %v3517 = vsub.f32 %v3447, %v3496
        %v3518 = vsub.f32 %v3452, %v3498
        %v3519 = vsub.f32 %v3457, %v3500
        %v3520 = vsub.f32 %v3462, %v3502
        %v3521 = vsub.f32 %v3467, %v3504
        %v3522 = vsub.f32 %v3472, %v3506
        %v3523 = vmul.f32 %v3507, 1.442695
        %v3524 = vpow.pop %v3523
        %v3525 = vmul.f32 %v3508, 1.442695
        %v3526 = vpow.pop %v3525
        %v3527 = vmul.f32 %v3509, 1.442695
        %v3528 = vpow.pop %v3527
        %v3529 = vmul.f32 %v3510, 1.442695
        %v3530 = vpow.pop %v3529
        %v3531 = vmul.f32 %v3511, 1.442695
        %v3532 = vpow.pop %v3531
        %v3533 = vmul.f32 %v3512, 1.442695
        %v3534 = vpow.pop %v3533
        %v3535 = vmul.f32 %v3513, 1.442695
        %v3536 = vpow.pop %v3535
        %v3537 = vmul.f32 %v3514, 1.442695
        %v3538 = vpow.pop %v3537
        %v3539 = vmul.f32 %v3515, 1.442695
        %v3540 = vpow.pop %v3539
        %v3541 = vmul.f32 %v3516, 1.442695
        %v3542 = vpow.pop %v3541
        %v3543 = vmul.f32 %v3517, 1.442695
        %v3544 = vpow.pop %v3543
        %v3545 = vmul.f32 %v3518, 1.442695
        %v3546 = vpow.pop %v3545
        %v3547 = vmul.f32 %v3519, 1.442695
        %v3548 = vpow.pop %v3547
        %v3549 = vmul.f32 %v3520, 1.442695
        %v3550 = vpow.pop %v3549
        %v3551 = vmul.f32 %v3521, 1.442695
        %v3552 = vpow.pop %v3551
        %v3553 = vmul.f32 %v3522, 1.442695
        %v3554 = vpow.pop %v3553
        %3555 = vadd.xlane.f32.xlu0 %v3524
        %v3556 = vpop.xlane.xlu0 %3555
        %3557 = vadd.xlane.f32.xlu0 %v3526
        %v3558 = vpop.xlane.xlu0 %3557
        %3559 = vadd.xlane.f32.xlu0 %v3528
        %v3560 = vpop.xlane.xlu0 %3559
        %3561 = vadd.xlane.f32.xlu0 %v3530
        %v3562 = vpop.xlane.xlu0 %3561
        %3563 = vadd.xlane.f32.xlu0 %v3532
        %v3564 = vpop.xlane.xlu0 %3563
        %3565 = vadd.xlane.f32.xlu0 %v3534
        %v3566 = vpop.xlane.xlu0 %3565
        %3567 = vadd.xlane.f32.xlu0 %v3536
        %v3568 = vpop.xlane.xlu0 %3567
        %3569 = vadd.xlane.f32.xlu0 %v3538
        %v3570 = vpop.xlane.xlu0 %3569
        %3571 = vadd.xlane.f32.xlu0 %v3540
        %v3572 = vpop.xlane.xlu0 %3571
        %3573 = vadd.xlane.f32.xlu0 %v3542
        %v3574 = vpop.xlane.xlu0 %3573
        %3575 = vadd.xlane.f32.xlu0 %v3544
        %v3576 = vpop.xlane.xlu0 %3575
        %3577 = vadd.xlane.f32.xlu0 %v3546
        %v3578 = vpop.xlane.xlu0 %3577
        %3579 = vadd.xlane.f32.xlu0 %v3548
        %v3580 = vpop.xlane.xlu0 %3579
        %3581 = vadd.xlane.f32.xlu0 %v3550
        %v3582 = vpop.xlane.xlu0 %3581
        %3583 = vadd.xlane.f32.xlu0 %v3552
        %v3584 = vpop.xlane.xlu0 %3583
        %3585 = vadd.xlane.f32.xlu0 %v3554
        %v3586 = vpop.xlane.xlu0 %3585
        %v3587 = vrcp.pop %v3556
        %v3588 = vrcp.pop %v3558
        %v3589 = vrcp.pop %v3560
        %v3590 = vrcp.pop %v3562
        %v3591 = vrcp.pop %v3564
        %v3592 = vrcp.pop %v3566
        %v3593 = vrcp.pop %v3568
        %v3594 = vrcp.pop %v3570
        %v3595 = vrcp.pop %v3572
        %v3596 = vrcp.pop %v3574
        %v3597 = vrcp.pop %v3576
        %v3598 = vrcp.pop %v3578
        %v3599 = vrcp.pop %v3580
        %v3600 = vrcp.pop %v3582
        %v3601 = vrcp.pop %v3584
        %v3602 = vrcp.pop %v3586
        %v3603 = vmul.f32 %v3524, %v3587
        %v3604 = vmul.f32 %v3526, %v3588
        %v3605 = vmul.f32 %v3528, %v3589
        %v3606 = vmul.f32 %v3530, %v3590
        %v3607 = vmul.f32 %v3532, %v3591
        %v3608 = vmul.f32 %v3534, %v3592
        %v3609 = vmul.f32 %v3536, %v3593
        %v3610 = vmul.f32 %v3538, %v3594
        %v3611 = vmul.f32 %v3540, %v3595
        %v3612 = vmul.f32 %v3542, %v3596
        %v3613 = vmul.f32 %v3544, %v3597
        %v3614 = vmul.f32 %v3546, %v3598
        %v3615 = vmul.f32 %v3548, %v3599
        %v3616 = vmul.f32 %v3550, %v3600
        %v3617 = vmul.f32 %v3552, %v3601
        %v3618 = vmul.f32 %v3554, %v3602
        %3619 = vrot.lane.b32.xlu0 %v1328, 80
        %v3620 = vpop.permute.xlu0 %3619
        %3621 = vrot.lane.b32.xlu0 %v1334, 80
        %v3622 = vpop.permute.xlu0 %3621
        %3623 = vrot.lane.b32.xlu0 %v1340, 80
        %v3624 = vpop.permute.xlu0 %3623
        %3625 = vrot.lane.b32.xlu0 %v1346, 80
        %v3626 = vpop.permute.xlu0 %3625
        %3627 = vrot.lane.b32.xlu0 %v1352, 80
        %v3628 = vpop.permute.xlu0 %3627
        %3629 = vrot.lane.b32.xlu0 %v1358, 80
        %v3630 = vpop.permute.xlu0 %3629
        %3631 = vrot.lane.b32.xlu0 %v1364, 80
        %v3632 = vpop.permute.xlu0 %3631
        %3633 = vrot.lane.b32.xlu0 %v1370, 80
        %v3634 = vpop.permute.xlu0 %3633
        %3635 = vrot.lane.b32.xlu0 %v1376, 80
        %v3636 = vpop.permute.xlu0 %3635
        %3637 = vrot.lane.b32.xlu0 %v1382, 80
        %v3638 = vpop.permute.xlu0 %3637
        %3639 = vrot.lane.b32.xlu0 %v1388, 80
        %v3640 = vpop.permute.xlu0 %3639
        %3641 = vrot.lane.b32.xlu0 %v1394, 80
        %v3642 = vpop.permute.xlu0 %3641
        %3643 = vrot.lane.b32.xlu0 %v1400, 80
        %v3644 = vpop.permute.xlu0 %3643
        %3645 = vrot.lane.b32.xlu0 %v1406, 80
        %v3646 = vpop.permute.xlu0 %3645
        %3647 = vrot.lane.b32.xlu0 %v1412, 80
        %v3648 = vpop.permute.xlu0 %3647
        %3649 = vrot.lane.b32.xlu0 %v1418, 80
        %v3650 = vpop.permute.xlu0 %3649
        %3667 = vmatprep.subr.mxu0 0.0
        %3668 = vmatpush1.msra.mxu0 %v3620
        %3669 = vmatprep.subr.mxu0 0.0
        %3670 = vmatpush1.msra.mxu0 %v3622
        %3671 = vmatprep.subr.mxu0 0.0
        %3672 = vmatpush1.msra.mxu0 %v3624
        %3673 = vmatprep.subr.mxu0 0.0
        %3674 = vmatpush1.msra.mxu0 %v3626
        %3675 = vmatprep.subr.mxu0 0.0
        %3676 = vmatpush1.msra.mxu0 %v3628
        %3677 = vmatprep.subr.mxu0 0.0
        %3678 = vmatpush1.msra.mxu0 %v3630
        %3679 = vmatprep.subr.mxu0 0.0
        %3680 = vmatpush1.msra.mxu0 %v3632
        %3681 = vmatprep.subr.mxu0 0.0
        %3682 = vmatpush1.msra.mxu0 %v3634
        %3683 = vmatprep.subr.mxu0 0.0
        %3684 = vmatpush1.msra.mxu0 %v3636
        %3685 = vmatprep.subr.mxu0 0.0
        %3686 = vmatpush1.msra.mxu0 %v3638
        %3687 = vmatprep.subr.mxu0 0.0
        %3688 = vmatpush1.msra.mxu0 %v3640
        %3689 = vmatprep.subr.mxu0 0.0
        %3690 = vmatpush1.msra.mxu0 %v3642
        %3691 = vmatprep.subr.mxu0 0.0
        %3692 = vmatpush1.msra.mxu0 %v3644
        %3693 = vmatprep.subr.mxu0 0.0
        %3694 = vmatpush1.msra.mxu0 %v3646
        %3695 = vmatprep.subr.mxu0 0.0
        %3696 = vmatpush1.msra.mxu0 %v3648
        %3697 = vmatprep.subr.mxu0 0.0
        %3698 = vmatpush1.msra.mxu0 %v3650
        %3699 = vmatprep.subr.mxu0 0.0
        %3700 = vmatpush1.msra.mxu0 0.0
        %3701 = vmatprep.subr.mxu0 0.0
        %3702 = vmatpush1.msra.mxu0 0.0
        %3703 = vmatprep.subr.mxu0 0.0
        %3704 = vmatpush1.msra.mxu0 0.0
        %3705 = vmatprep.subr.mxu0 0.0
        %3706 = vmatpush1.msra.mxu0 0.0
        %3707 = vmatprep.subr.mxu0 0.0
        %3708 = vmatpush1.msra.mxu0 0.0
        %3709 = vmatprep.subr.mxu0 0.0
        %3710 = vmatpush1.msra.mxu0 0.0
        %3711 = vmatprep.subr.mxu0 0.0
        %3712 = vmatpush1.msra.mxu0 0.0
        %3713 = vmatprep.subr.mxu0 0.0
        %3714 = vmatpush1.msra.mxu0 0.0
        %3715 = vmatprep.subr.mxu0 0.0
        %3716 = vmatpush1.msra.mxu0 0.0
        %3717 = vmatprep.subr.mxu0 0.0
        %3718 = vmatpush1.msra.mxu0 0.0
        %3719 = vmatprep.subr.mxu0 0.0
        %3720 = vmatpush1.msra.mxu0 0.0
        %3721 = vmatprep.subr.mxu0 0.0
        %3722 = vmatpush1.msra.mxu0 0.0
        %3723 = vmatprep.subr.mxu0 0.0
        %3724 = vmatpush1.msra.mxu0 0.0
        %3725 = vmatprep.subr.mxu0 0.0
        %3726 = vmatpush1.msra.mxu0 0.0
        %3727 = vmatprep.subr.mxu0 0.0
        %3728 = vmatpush1.msra.mxu0 0.0
        %3729 = vmatprep.subr.mxu0 0.0
        %3730 = vmatpush1.msra.mxu0 0.0
        %3731 = vmatprep.mubr.f32.mxu0 0.0
        %3732 = vmatmul.mubr.f32.gmra.mrb[0].mxu0 %v3603
        %v3733 = vpop.f32.mrb[0].mxu0
        %v3734 = vadd.f32 0.0, %v3733
        %v3735 = vpop.f32.mrb[0].mxu0
        %3736 = vmatprep.mubr.f32.mxu0 0.0
        %3737 = vmatmul.mubr.f32.gmra.mrb[0].mxu0 %v3604
        %v3738 = vpop.f32.mrb[0].mxu0
        %v3739 = vadd.f32 0.0, %v3738
        %v3740 = vpop.f32.mrb[0].mxu0
        %3741 = vmatprep.mubr.f32.mxu0 0.0
        %3742 = vmatmul.mubr.f32.gmra.mrb[0].mxu0 %v3605
        %v3743 = vpop.f32.mrb[0].mxu0
        %v3744 = vadd.f32 0.0, %v3743
        %v3745 = vpop.f32.mrb[0].mxu0
        %3746 = vmatprep.mubr.f32.mxu0 0.0
        %3747 = vmatmul.mubr.f32.gmra.mrb[0].mxu0 %v3606
        %v3748 = vpop.f32.mrb[0].mxu0
        %v3749 = vadd.f32 0.0, %v3748
        %v3750 = vpop.f32.mrb[0].mxu0
        %3751 = vmatprep.mubr.f32.mxu0 0.0
        %3752 = vmatmul.mubr.f32.gmra.mrb[0].mxu0 %v3607
        %v3753 = vpop.f32.mrb[0].mxu0
        %v3754 = vadd.f32 0.0, %v3753
        %v3755 = vpop.f32.mrb[0].mxu0
        %3756 = vmatprep.mubr.f32.mxu0 0.0
        %3757 = vmatmul.mubr.f32.gmra.mrb[0].mxu0 %v3608
        %v3758 = vpop.f32.mrb[0].mxu0
        %v3759 = vadd.f32 0.0, %v3758
        %v3760 = vpop.f32.mrb[0].mxu0
        %3761 = vmatprep.mubr.f32.mxu0 0.0
        %3762 = vmatmul.mubr.f32.gmra.mrb[0].mxu0 %v3609
        %v3763 = vpop.f32.mrb[0].mxu0
        %v3764 = vadd.f32 0.0, %v3763
        %v3765 = vpop.f32.mrb[0].mxu0
        %3766 = vmatprep.mubr.f32.mxu0 0.0
        %3767 = vmatmul.mubr.f32.gmra.mrb[0].mxu0 %v3610
        %v3768 = vpop.f32.mrb[0].mxu0
        %v3769 = vadd.f32 0.0, %v3768
        %v3770 = vpop.f32.mrb[0].mxu0
        %3771 = vmatprep.mubr.f32.mxu0 0.0
        %3772 = vmatmul.mubr.f32.gmra.mrb[0].mxu0 %v3611
        %v3773 = vpop.f32.mrb[0].mxu0
        %v3774 = vadd.f32 0.0, %v3773
        %v3775 = vpop.f32.mrb[0].mxu0
        %3776 = vmatprep.mubr.f32.mxu0 0.0
        %3777 = vmatmul.mubr.f32.gmra.mrb[0].mxu0 %v3612
        %v3778 = vpop.f32.mrb[0].mxu0
        %v3779 = vadd.f32 0.0, %v3778
        %v3780 = vpop.f32.mrb[0].mxu0
        %3781 = vmatprep.mubr.f32.mxu0 0.0
        %3782 = vmatmul.mubr.f32.gmra.mrb[0].mxu0 %v3613
        %v3783 = vpop.f32.mrb[0].mxu0
        %v3784 = vadd.f32 0.0, %v3783
        %v3785 = vpop.f32.mrb[0].mxu0
        %3786 = vmatprep.mubr.f32.mxu0 0.0
        %3787 = vmatmul.mubr.f32.gmra.mrb[0].mxu0 %v3614
        %v3788 = vpop.f32.mrb[0].mxu0
        %v3789 = vadd.f32 0.0, %v3788
        %v3790 = vpop.f32.mrb[0].mxu0
        %3791 = vmatprep.mubr.f32.mxu0 0.0
        %3792 = vmatmul.mubr.f32.gmra.mrb[0].mxu0 %v3615
        %v3793 = vpop.f32.mrb[0].mxu0
        %v3794 = vadd.f32 0.0, %v3793
        %v3795 = vpop.f32.mrb[0].mxu0
        %3796 = vmatprep.mubr.f32.mxu0 0.0
        %3797 = vmatmul.mubr.f32.gmra.mrb[0].mxu0 %v3616
        %v3798 = vpop.f32.mrb[0].mxu0
        %v3799 = vadd.f32 0.0, %v3798
        %v3800 = vpop.f32.mrb[0].mxu0
        %3801 = vmatprep.mubr.f32.mxu0 0.0
        %3802 = vmatmul.mubr.f32.gmra.mrb[0].mxu0 %v3617
        %v3803 = vpop.f32.mrb[0].mxu0
        %v3804 = vadd.f32 0.0, %v3803
        %v3805 = vpop.f32.mrb[0].mxu0
        %3806 = vmatprep.mubr.f32.mxu0 0.0
        %3807 = vmatmul.mubr.f32.gmra.mrb[0].mxu0 %v3618
        %v3808 = vpop.f32.mrb[0].mxu0
        %v3809 = vadd.f32 0.0, %v3808
        %v3810 = vpop.f32.mrb[0].mxu0
        %3811 = vdwg.mxu0
        %3828 = vrot.lane.b32.xlu0 %v2514, 16
        %v3829 = vpop.permute.xlu0 %3828
        %3830 = vrot.lane.b32.xlu0 %v2519, 16
        %v3831 = vpop.permute.xlu0 %3830
        %3832 = vrot.lane.b32.xlu0 %v2524, 16
        %v3833 = vpop.permute.xlu0 %3832
        %3834 = vrot.lane.b32.xlu0 %v2529, 16
        %v3835 = vpop.permute.xlu0 %3834
        %3836 = vrot.lane.b32.xlu0 %v2534, 16
        %v3837 = vpop.permute.xlu0 %3836
        %3838 = vrot.lane.b32.xlu0 %v2539, 16
        %v3839 = vpop.permute.xlu0 %3838
        %3840 = vrot.lane.b32.xlu0 %v2544, 16
        %v3841 = vpop.permute.xlu0 %3840
        %3842 = vrot.lane.b32.xlu0 %v2549, 16
        %v3843 = vpop.permute.xlu0 %3842
        %3844 = vrot.lane.b32.xlu0 %v2554, 16
        %v3845 = vpop.permute.xlu0 %3844
        %3846 = vrot.lane.b32.xlu0 %v2559, 16
        %v3847 = vpop.permute.xlu0 %3846
        %3848 = vrot.lane.b32.xlu0 %v2564, 16
        %v3849 = vpop.permute.xlu0 %3848
        %3850 = vrot.lane.b32.xlu0 %v2569, 16
        %v3851 = vpop.permute.xlu0 %3850
        %3852 = vrot.lane.b32.xlu0 %v2574, 16
        %v3853 = vpop.permute.xlu0 %3852
        %3854 = vrot.lane.b32.xlu0 %v2579, 16
        %v3855 = vpop.permute.xlu0 %3854
        %3856 = vrot.lane.b32.xlu0 %v2584, 16
        %v3857 = vpop.permute.xlu0 %3856
        %3858 = vrot.lane.b32.xlu0 %v2589, 16
        %v3859 = vpop.permute.xlu0 %3858
        %3892 = vrot.lane.b32.xlu0 %v3124, 32
        %v3893 = vpop.permute.xlu0 %3892
        %3894 = vrot.lane.b32.xlu0 %v3129, 32
        %v3895 = vpop.permute.xlu0 %3894
        %3896 = vrot.lane.b32.xlu0 %v3134, 32
        %v3897 = vpop.permute.xlu0 %3896
        %3898 = vrot.lane.b32.xlu0 %v3139, 32
        %v3899 = vpop.permute.xlu0 %3898
        %3900 = vrot.lane.b32.xlu0 %v3144, 32
        %v3901 = vpop.permute.xlu0 %3900
        %3902 = vrot.lane.b32.xlu0 %v3149, 32
        %v3903 = vpop.permute.xlu0 %3902
        %3904 = vrot.lane.b32.xlu0 %v3154, 32
        %v3905 = vpop.permute.xlu0 %3904
        %3906 = vrot.lane.b32.xlu0 %v3159, 32
        %v3907 = vpop.permute.xlu0 %3906
        %3908 = vrot.lane.b32.xlu0 %v3164, 32
        %v3909 = vpop.permute.xlu0 %3908
        %3910 = vrot.lane.b32.xlu0 %v3169, 32
        %v3911 = vpop.permute.xlu0 %3910
        %3912 = vrot.lane.b32.xlu0 %v3174, 32
        %v3913 = vpop.permute.xlu0 %3912
        %3914 = vrot.lane.b32.xlu0 %v3179, 32
        %v3915 = vpop.permute.xlu0 %3914
        %3916 = vrot.lane.b32.xlu0 %v3184, 32
        %v3917 = vpop.permute.xlu0 %3916
        %3918 = vrot.lane.b32.xlu0 %v3189, 32
        %v3919 = vpop.permute.xlu0 %3918
        %3920 = vrot.lane.b32.xlu0 %v3194, 32
        %v3921 = vpop.permute.xlu0 %3920
        %3922 = vrot.lane.b32.xlu0 %v3199, 32
        %v3923 = vpop.permute.xlu0 %3922
        %3956 = vrot.lane.b32.xlu0 %v3734, 48
        %v3957 = vpop.permute.xlu0 %3956
        %3958 = vrot.lane.b32.xlu0 %v3739, 48
        %v3959 = vpop.permute.xlu0 %3958
        %3960 = vrot.lane.b32.xlu0 %v3744, 48
        %v3961 = vpop.permute.xlu0 %3960
        %3962 = vrot.lane.b32.xlu0 %v3749, 48
        %v3963 = vpop.permute.xlu0 %3962
        %3964 = vrot.lane.b32.xlu0 %v3754, 48
        %v3965 = vpop.permute.xlu0 %3964
        %3966 = vrot.lane.b32.xlu0 %v3759, 48
        %v3967 = vpop.permute.xlu0 %3966
        %3968 = vrot.lane.b32.xlu0 %v3764, 48
        %v3969 = vpop.permute.xlu0 %3968
        %3970 = vrot.lane.b32.xlu0 %v3769, 48
        %v3971 = vpop.permute.xlu0 %3970
        %3972 = vrot.lane.b32.xlu0 %v3774, 48
        %v3973 = vpop.permute.xlu0 %3972
        %3974 = vrot.lane.b32.xlu0 %v3779, 48
        %v3975 = vpop.permute.xlu0 %3974
        %3976 = vrot.lane.b32.xlu0 %v3784, 48
        %v3977 = vpop.permute.xlu0 %3976
        %3978 = vrot.lane.b32.xlu0 %v3789, 48
        %v3979 = vpop.permute.xlu0 %3978
        %3980 = vrot.lane.b32.xlu0 %v3794, 48
        %v3981 = vpop.permute.xlu0 %3980
        %3982 = vrot.lane.b32.xlu0 %v3799, 48
        %v3983 = vpop.permute.xlu0 %3982
        %3984 = vrot.lane.b32.xlu0 %v3804, 48
        %v3985 = vpop.permute.xlu0 %3984
        %3986 = vrot.lane.b32.xlu0 %v3809, 48
        %v3987 = vpop.permute.xlu0 %3986
        %v4004 = vsel %vm1131, %v1888, %v3829
        %v4005 = vsel %vm1131, %v1893, %v3831
        %v4006 = vsel %vm1131, %v1898, %v3833
        %v4007 = vsel %vm1131, %v1903, %v3835
        %v4008 = vsel %vm1131, %v1908, %v3837
        %v4009 = vsel %vm1131, %v1913, %v3839
        %v4010 = vsel %vm1131, %v1918, %v3841
        %v4011 = vsel %vm1131, %v1923, %v3843
        %v4012 = vsel %vm1131, %v1928, %v3845
        %v4013 = vsel %vm1131, %v1933, %v3847
        %v4014 = vsel %vm1131, %v1938, %v3849
        %v4015 = vsel %vm1131, %v1943, %v3851
        %v4016 = vsel %vm1131, %v1948, %v3853
        %v4017 = vsel %vm1131, %v1953, %v3855
        %v4018 = vsel %vm1131, %v1958, %v3857
        %v4019 = vsel %vm1131, %v1963, %v3859
        %v4020 = vsel %vm1148, %v4004, %v3893
        %v4021 = vsel %vm1148, %v4005, %v3895
        %v4022 = vsel %vm1148, %v4006, %v3897
        %v4023 = vsel %vm1148, %v4007, %v3899
        %v4024 = vsel %vm1148, %v4008, %v3901
        %v4025 = vsel %vm1148, %v4009, %v3903
        %v4026 = vsel %vm1148, %v4010, %v3905
        %v4027 = vsel %vm1148, %v4011, %v3907
        %v4028 = vsel %vm1148, %v4012, %v3909
        %v4029 = vsel %vm1148, %v4013, %v3911
        %v4030 = vsel %vm1148, %v4014, %v3913
        %v4031 = vsel %vm1148, %v4015, %v3915
        %v4032 = vsel %vm1148, %v4016, %v3917
        %v4033 = vsel %vm1148, %v4017, %v3919
        %v4034 = vsel %vm1148, %v4018, %v3921
        %v4035 = vsel %vm1148, %v4019, %v3923
        %v4036 = vsel %vm1165, %v4020, %v3957
        %v4037 = vsel %vm1165, %v4021, %v3959
        %v4038 = vsel %vm1165, %v4022, %v3961
        %v4039 = vsel %vm1165, %v4023, %v3963
        %v4040 = vsel %vm1165, %v4024, %v3965
        %v4041 = vsel %vm1165, %v4025, %v3967
        %v4042 = vsel %vm1165, %v4026, %v3969
        %v4043 = vsel %vm1165, %v4027, %v3971
        %v4044 = vsel %vm1165, %v4028, %v3973
        %v4045 = vsel %vm1165, %v4029, %v3975
        %v4046 = vsel %vm1165, %v4030, %v3977
        %v4047 = vsel %vm1165, %v4031, %v3979
        %v4048 = vsel %vm1165, %v4032, %v3981
        %v4049 = vsel %vm1165, %v4033, %v3983
        %v4050 = vsel %vm1165, %v4034, %v3985
        %v4051 = vsel %vm1165, %v4035, %v3987
        %v4052 = vld [vmem:[%s5] sm:$0xff]
        %v4053 = vld [vmem:[%s5 + $0x8] sm:$0xff]
        %v4054 = vld [vmem:[%s5 + $0x10] sm:$0xff]
        %v4055 = vld [vmem:[%s5 + $0x18] sm:$0xff]
        %v4056 = vld [vmem:[%s5 + $0x20] sm:$0xff]
        %v4057 = vld [vmem:[%s5 + $0x28] sm:$0xff]
        %v4058 = vld [vmem:[%s5 + $0x30] sm:$0xff]
        %v4059 = vld [vmem:[%s5 + $0x38] sm:$0xff]
        %v4060 = vld [vmem:[%s6] sm:$0x1]
        %v4062 = vlaneseq
        %v4063 = vshrl.u32 %v4062, 7
        %v4064 = vsub.s32 0, %v4063
        %v4065 = vrot.slane %v4060, %v4064
        %v4068 = vsel %vm1210, %v4036, 0
        %v4071 = vsel %vm1210, %v4037, 0
        %v4074 = vsel %vm1210, %v4038, 0
        %v4077 = vsel %vm1210, %v4039, 0
        %v4080 = vsel %vm1210, %v4040, 0
        %v4083 = vsel %vm1210, %v4041, 0
        %v4086 = vsel %vm1210, %v4042, 0
        %v4089 = vsel %vm1210, %v4043, 0
        %v4092 = vsel %vm1210, %v4044, 0
        %v4095 = vsel %vm1210, %v4045, 0
        %v4098 = vsel %vm1210, %v4046, 0
        %v4101 = vsel %vm1210, %v4047, 0
        %v4104 = vsel %vm1210, %v4048, 0
        %v4107 = vsel %vm1210, %v4049, 0
        %v4110 = vsel %vm1210, %v4050, 0
        %v4113 = vsel %vm1210, %v4051, 0
        %4115 = vmatprep.subr.mxu0 0.0
        %4116 = vmatpush1.msra.mxu0 %v4052
        %4117 = vmatprep.subr.mxu0 0.0
        %4118 = vmatpush1.msra.mxu0 %v4053
        %4119 = vmatprep.subr.mxu0 0.0
        %4120 = vmatpush1.msra.mxu0 %v4054
        %4121 = vmatprep.subr.mxu0 0.0
        %4122 = vmatpush1.msra.mxu0 %v4055
        %4123 = vmatprep.subr.mxu0 0.0
        %4124 = vmatpush1.msra.mxu0 %v4056
        %4125 = vmatprep.subr.mxu0 0.0
        %4126 = vmatpush1.msra.mxu0 %v4057
        %4127 = vmatprep.subr.mxu0 0.0
        %4128 = vmatpush1.msra.mxu0 %v4058
        %4129 = vmatprep.subr.mxu0 0.0
        %4130 = vmatpush1.msra.mxu0 %v4059
        %4131 = vmatprep.subr.mxu0 0.0
        %4132 = vmatpush1.msra.mxu0 0.0
        %4133 = vmatprep.subr.mxu0 0.0
        %4134 = vmatpush1.msra.mxu0 0.0
        %4135 = vmatprep.subr.mxu0 0.0
        %4136 = vmatpush1.msra.mxu0 0.0
        %4137 = vmatprep.subr.mxu0 0.0
        %4138 = vmatpush1.msra.mxu0 0.0
        %4139 = vmatprep.subr.mxu0 0.0
        %4140 = vmatpush1.msra.mxu0 0.0
        %4141 = vmatprep.subr.mxu0 0.0
        %4142 = vmatpush1.msra.mxu0 0.0
        %4143 = vmatprep.subr.mxu0 0.0
        %4144 = vmatpush1.msra.mxu0 0.0
        %4145 = vmatprep.subr.mxu0 0.0
        %4146 = vmatpush1.msra.mxu0 0.0
        %4147 = vmatprep.subr.mxu0 0.0
        %4148 = vmatpush1.msra.mxu0 0.0
        %4149 = vmatprep.subr.mxu0 0.0
        %4150 = vmatpush1.msra.mxu0 0.0
        %4151 = vmatprep.subr.mxu0 0.0
        %4152 = vmatpush1.msra.mxu0 0.0
        %4153 = vmatprep.subr.mxu0 0.0
        %4154 = vmatpush1.msra.mxu0 0.0
        %4155 = vmatprep.subr.mxu0 0.0
        %4156 = vmatpush1.msra.mxu0 0.0
        %4157 = vmatprep.subr.mxu0 0.0
        %4158 = vmatpush1.msra.mxu0 0.0
        %4159 = vmatprep.subr.mxu0 0.0
        %4160 = vmatpush1.msra.mxu0 0.0
        %4161 = vmatprep.subr.mxu0 0.0
        %4162 = vmatpush1.msra.mxu0 0.0
        %4163 = vmatprep.subr.mxu0 0.0
        %4164 = vmatpush1.msra.mxu0 0.0
        %4165 = vmatprep.subr.mxu0 0.0
        %4166 = vmatpush1.msra.mxu0 0.0
        %4167 = vmatprep.subr.mxu0 0.0
        %4168 = vmatpush1.msra.mxu0 0.0
        %4169 = vmatprep.subr.mxu0 0.0
        %4170 = vmatpush1.msra.mxu0 0.0
        %4171 = vmatprep.subr.mxu0 0.0
        %4172 = vmatpush1.msra.mxu0 0.0
        %4173 = vmatprep.subr.mxu0 0.0
        %4174 = vmatpush1.msra.mxu0 0.0
        %4175 = vmatprep.subr.mxu0 0.0
        %4176 = vmatpush1.msra.mxu0 0.0
        %4177 = vmatprep.subr.mxu0 0.0
        %4178 = vmatpush1.msra.mxu0 0.0
        %4179 = vmatprep.mubr.f32.mxu0 0.0
        %4180 = vmatmul.mubr.f32.gmra.mrb[0].mxu0 %v4068
        %v4181 = vpop.f32.mrb[0].mxu0
        %v4182 = vadd.f32 %v4065, %v4181
        %v4183 = vpop.f32.mrb[0].mxu0
        %4184 = vmatprep.mubr.f32.mxu0 0.0
        %4185 = vmatmul.mubr.f32.gmra.mrb[0].mxu0 %v4071
        %v4186 = vpop.f32.mrb[0].mxu0
        %v4187 = vadd.f32 %v4065, %v4186
        %v4188 = vpop.f32.mrb[0].mxu0
        %4189 = vmatprep.mubr.f32.mxu0 0.0
        %4190 = vmatmul.mubr.f32.gmra.mrb[0].mxu0 %v4074
        %v4191 = vpop.f32.mrb[0].mxu0
        %v4192 = vadd.f32 %v4065, %v4191
        %v4193 = vpop.f32.mrb[0].mxu0
        %4194 = vmatprep.mubr.f32.mxu0 0.0
        %4195 = vmatmul.mubr.f32.gmra.mrb[0].mxu0 %v4077
        %v4196 = vpop.f32.mrb[0].mxu0
        %v4197 = vadd.f32 %v4065, %v4196
        %v4198 = vpop.f32.mrb[0].mxu0
        %4199 = vmatprep.mubr.f32.mxu0 0.0
        %4200 = vmatmul.mubr.f32.gmra.mrb[0].mxu0 %v4080
        %v4201 = vpop.f32.mrb[0].mxu0
        %v4202 = vadd.f32 %v4065, %v4201
        %v4203 = vpop.f32.mrb[0].mxu0
        %4204 = vmatprep.mubr.f32.mxu0 0.0
        %4205 = vmatmul.mubr.f32.gmra.mrb[0].mxu0 %v4083
        %v4206 = vpop.f32.mrb[0].mxu0
        %v4207 = vadd.f32 %v4065, %v4206
        %v4208 = vpop.f32.mrb[0].mxu0
        %4209 = vmatprep.mubr.f32.mxu0 0.0
        %4210 = vmatmul.mubr.f32.gmra.mrb[0].mxu0 %v4086
        %v4211 = vpop.f32.mrb[0].mxu0
        %v4212 = vadd.f32 %v4065, %v4211
        %v4213 = vpop.f32.mrb[0].mxu0
        %4214 = vmatprep.mubr.f32.mxu0 0.0
        %4215 = vmatmul.mubr.f32.gmra.mrb[0].mxu0 %v4089
        %v4216 = vpop.f32.mrb[0].mxu0
        %v4217 = vadd.f32 %v4065, %v4216
        %v4218 = vpop.f32.mrb[0].mxu0
        %4219 = vmatprep.mubr.f32.mxu0 0.0
        %4220 = vmatmul.mubr.f32.gmra.mrb[0].mxu0 %v4092
        %v4221 = vpop.f32.mrb[0].mxu0
        %v4222 = vadd.f32 %v4065, %v4221
        %v4223 = vpop.f32.mrb[0].mxu0
        %4224 = vmatprep.mubr.f32.mxu0 0.0
        %4225 = vmatmul.mubr.f32.gmra.mrb[0].mxu0 %v4095
        %v4226 = vpop.f32.mrb[0].mxu0
        %v4227 = vadd.f32 %v4065, %v4226
        %v4228 = vpop.f32.mrb[0].mxu0
        %4229 = vmatprep.mubr.f32.mxu0 0.0
        %4230 = vmatmul.mubr.f32.gmra.mrb[0].mxu0 %v4098
        %v4231 = vpop.f32.mrb[0].mxu0
        %v4232 = vadd.f32 %v4065, %v4231
        %v4233 = vpop.f32.mrb[0].mxu0
        %4234 = vmatprep.mubr.f32.mxu0 0.0
        %4235 = vmatmul.mubr.f32.gmra.mrb[0].mxu0 %v4101
        %v4236 = vpop.f32.mrb[0].mxu0
        %v4237 = vadd.f32 %v4065, %v4236
        %v4238 = vpop.f32.mrb[0].mxu0
        %4239 = vmatprep.mubr.f32.mxu0 0.0
        %4240 = vmatmul.mubr.f32.gmra.mrb[0].mxu0 %v4104
        %v4241 = vpop.f32.mrb[0].mxu0
        %v4242 = vadd.f32 %v4065, %v4241
        %v4243 = vpop.f32.mrb[0].mxu0
        %4244 = vmatprep.mubr.f32.mxu0 0.0
        %4245 = vmatmul.mubr.f32.gmra.mrb[0].mxu0 %v4107
        %v4246 = vpop.f32.mrb[0].mxu0
        %v4247 = vadd.f32 %v4065, %v4246
        %v4248 = vpop.f32.mrb[0].mxu0
        %4249 = vmatprep.mubr.f32.mxu0 0.0
        %4250 = vmatmul.mubr.f32.gmra.mrb[0].mxu0 %v4110
        %v4251 = vpop.f32.mrb[0].mxu0
        %v4252 = vadd.f32 %v4065, %v4251
        %v4253 = vpop.f32.mrb[0].mxu0
        %4254 = vmatprep.mubr.f32.mxu0 0.0
        %4255 = vmatmul.mubr.f32.gmra.mrb[0].mxu0 %v4113
        %v4256 = vpop.f32.mrb[0].mxu0
        %v4257 = vadd.f32 %v4065, %v4256
        %v4258 = vpop.f32.mrb[0].mxu0
        %4259 = vdwg.mxu0
        %v4260 = vadd.f32 %v698, %v4182
        %v4261 = vadd.f32 %v699, %v4187
        %v4262 = vadd.f32 %v700, %v4192
        %v4263 = vadd.f32 %v701, %v4197
        %v4264 = vadd.f32 %v702, %v4202
        %v4265 = vadd.f32 %v703, %v4207
        %v4266 = vadd.f32 %v704, %v4212
        %v4267 = vadd.f32 %v705, %v4217
        %v4268 = vadd.f32 %v706, %v4222
        %v4269 = vadd.f32 %v707, %v4227
        %v4270 = vadd.f32 %v708, %v4232
        %v4271 = vadd.f32 %v709, %v4237
        %v4272 = vadd.f32 %v710, %v4242
        %v4273 = vadd.f32 %v711, %v4247
        %v4274 = vadd.f32 %v712, %v4252
        %v4275 = vadd.f32 %v713, %v4257
        %v4276 = vld [vmem:[%s7] sm:$0x1]
        %v4277 = vld [vmem:[%s8] sm:$0x1]
        %v4278 = vsel %vm1131, %v4260, 0.0
        %4279 = vadd.xlane.f32.xlu0 %v4278
        %v4280 = vpop.xlane.xlu0 %4279
        %v4281 = vsel %vm1131, %v4261, 0.0
        %4282 = vadd.xlane.f32.xlu0 %v4281
        %v4283 = vpop.xlane.xlu0 %4282
        %v4284 = vsel %vm1131, %v4262, 0.0
        %4285 = vadd.xlane.f32.xlu0 %v4284
        %v4286 = vpop.xlane.xlu0 %4285
        %v4287 = vsel %vm1131, %v4263, 0.0
        %4288 = vadd.xlane.f32.xlu0 %v4287
        %v4289 = vpop.xlane.xlu0 %4288
        %v4290 = vsel %vm1131, %v4264, 0.0
        %4291 = vadd.xlane.f32.xlu0 %v4290
        %v4292 = vpop.xlane.xlu0 %4291
        %v4293 = vsel %vm1131, %v4265, 0.0
        %4294 = vadd.xlane.f32.xlu0 %v4293
        %v4295 = vpop.xlane.xlu0 %4294
        %v4296 = vsel %vm1131, %v4266, 0.0
        %4297 = vadd.xlane.f32.xlu0 %v4296
        %v4298 = vpop.xlane.xlu0 %4297
        %v4299 = vsel %vm1131, %v4267, 0.0
        %4300 = vadd.xlane.f32.xlu0 %v4299
        %v4301 = vpop.xlane.xlu0 %4300
        %v4302 = vsel %vm1131, %v4268, 0.0
        %4303 = vadd.xlane.f32.xlu0 %v4302
        %v4304 = vpop.xlane.xlu0 %4303
        %v4305 = vsel %vm1131, %v4269, 0.0
        %4306 = vadd.xlane.f32.xlu0 %v4305
        %v4307 = vpop.xlane.xlu0 %4306
        %v4308 = vsel %vm1131, %v4270, 0.0
        %4309 = vadd.xlane.f32.xlu0 %v4308
        %v4310 = vpop.xlane.xlu0 %4309
        %v4311 = vsel %vm1131, %v4271, 0.0
        %4312 = vadd.xlane.f32.xlu0 %v4311
        %v4313 = vpop.xlane.xlu0 %4312
        %v4314 = vsel %vm1131, %v4272, 0.0
        %4315 = vadd.xlane.f32.xlu0 %v4314
        %v4316 = vpop.xlane.xlu0 %4315
        %v4317 = vsel %vm1131, %v4273, 0.0
        %4318 = vadd.xlane.f32.xlu0 %v4317
        %v4319 = vpop.xlane.xlu0 %4318
        %v4320 = vsel %vm1131, %v4274, 0.0
        %4321 = vadd.xlane.f32.xlu0 %v4320
        %v4322 = vpop.xlane.xlu0 %4321
        %v4323 = vsel %vm1131, %v4275, 0.0
        %4324 = vadd.xlane.f32.xlu0 %v4323
        %v4325 = vpop.xlane.xlu0 %4324
        %v4326 = vrcp.pop 16.0
        %v4327 = vmul.f32 %v4280, %v4326
        %v4328 = vmul.f32 %v4283, %v4326
        %v4329 = vmul.f32 %v4286, %v4326
        %v4330 = vmul.f32 %v4289, %v4326
        %v4331 = vmul.f32 %v4292, %v4326
        %v4332 = vmul.f32 %v4295, %v4326
        %v4333 = vmul.f32 %v4298, %v4326
        %v4334 = vmul.f32 %v4301, %v4326
        %v4335 = vmul.f32 %v4304, %v4326
        %v4336 = vmul.f32 %v4307, %v4326
        %v4337 = vmul.f32 %v4310, %v4326
        %v4338 = vmul.f32 %v4313, %v4326
        %v4339 = vmul.f32 %v4316, %v4326
        %v4340 = vmul.f32 %v4319, %v4326
        %v4341 = vmul.f32 %v4322, %v4326
        %v4342 = vmul.f32 %v4325, %v4326
        %v4343 = vsub.f32 %v4260, %v4327
        %v4344 = vsub.f32 %v4261, %v4328
        %v4345 = vsub.f32 %v4262, %v4329
        %v4346 = vsub.f32 %v4263, %v4330
        %v4347 = vsub.f32 %v4264, %v4331
        %v4348 = vsub.f32 %v4265, %v4332
        %v4349 = vsub.f32 %v4266, %v4333
        %v4350 = vsub.f32 %v4267, %v4334
        %v4351 = vsub.f32 %v4268, %v4335
        %v4352 = vsub.f32 %v4269, %v4336
        %v4353 = vsub.f32 %v4270, %v4337
        %v4354 = vsub.f32 %v4271, %v4338
        %v4355 = vsub.f32 %v4272, %v4339
        %v4356 = vsub.f32 %v4273, %v4340
        %v4357 = vsub.f32 %v4274, %v4341
        %v4358 = vsub.f32 %v4275, %v4342
        %v4359 = vmul.f32 %v4343, %v4343
        %v4360 = vmul.f32 %v4344, %v4344
        %v4361 = vmul.f32 %v4345, %v4345
        %v4362 = vmul.f32 %v4346, %v4346
        %v4363 = vmul.f32 %v4347, %v4347
        %v4364 = vmul.f32 %v4348, %v4348
        %v4365 = vmul.f32 %v4349, %v4349
        %v4366 = vmul.f32 %v4350, %v4350
        %v4367 = vmul.f32 %v4351, %v4351
        %v4368 = vmul.f32 %v4352, %v4352
        %v4369 = vmul.f32 %v4353, %v4353
        %v4370 = vmul.f32 %v4354, %v4354
        %v4371 = vmul.f32 %v4355, %v4355
        %v4372 = vmul.f32 %v4356, %v4356
        %v4373 = vmul.f32 %v4357, %v4357
        %v4374 = vmul.f32 %v4358, %v4358
        %v4375 = vsel %vm1131, %v4359, 0.0
        %4376 = vadd.xlane.f32.xlu0 %v4375
        %v4377 = vpop.xlane.xlu0 %4376
        %v4378 = vsel %vm1131, %v4360, 0.0
        %4379 = vadd.xlane.f32.xlu0 %v4378
        %v4380 = vpop.xlane.xlu0 %4379
        %v4381 = vsel %vm1131, %v4361, 0.0
        %4382 = vadd.xlane.f32.xlu0 %v4381
        %v4383 = vpop.xlane.xlu0 %4382
        %v4384 = vsel %vm1131, %v4362, 0.0
        %4385 = vadd.xlane.f32.xlu0 %v4384
        %v4386 = vpop.xlane.xlu0 %4385
        %v4387 = vsel %vm1131, %v4363, 0.0
        %4388 = vadd.xlane.f32.xlu0 %v4387
        %v4389 = vpop.xlane.xlu0 %4388
        %v4390 = vsel %vm1131, %v4364, 0.0
        %4391 = vadd.xlane.f32.xlu0 %v4390
        %v4392 = vpop.xlane.xlu0 %4391
        %v4393 = vsel %vm1131, %v4365, 0.0
        %4394 = vadd.xlane.f32.xlu0 %v4393
        %v4395 = vpop.xlane.xlu0 %4394
        %v4396 = vsel %vm1131, %v4366, 0.0
        %4397 = vadd.xlane.f32.xlu0 %v4396
        %v4398 = vpop.xlane.xlu0 %4397
        %v4399 = vsel %vm1131, %v4367, 0.0
        %4400 = vadd.xlane.f32.xlu0 %v4399
        %v4401 = vpop.xlane.xlu0 %4400
        %v4402 = vsel %vm1131, %v4368, 0.0
        %4403 = vadd.xlane.f32.xlu0 %v4402
        %v4404 = vpop.xlane.xlu0 %4403
        %v4405 = vsel %vm1131, %v4369, 0.0
        %4406 = vadd.xlane.f32.xlu0 %v4405
        %v4407 = vpop.xlane.xlu0 %4406
        %v4408 = vsel %vm1131, %v4370, 0.0
        %4409 = vadd.xlane.f32.xlu0 %v4408
        %v4410 = vpop.xlane.xlu0 %4409
        %v4411 = vsel %vm1131, %v4371, 0.0
        %4412 = vadd.xlane.f32.xlu0 %v4411
        %v4413 = vpop.xlane.xlu0 %4412
        %v4414 = vsel %vm1131, %v4372, 0.0
        %4415 = vadd.xlane.f32.xlu0 %v4414
        %v4416 = vpop.xlane.xlu0 %4415
        %v4417 = vsel %vm1131, %v4373, 0.0
        %4418 = vadd.xlane.f32.xlu0 %v4417
        %v4419 = vpop.xlane.xlu0 %4418
        %v4420 = vsel %vm1131, %v4374, 0.0
        %4421 = vadd.xlane.f32.xlu0 %v4420
        %v4422 = vpop.xlane.xlu0 %4421
        %v4423 = vmul.f32 %v4377, %v4326
        %v4424 = vmul.f32 %v4380, %v4326
        %v4425 = vmul.f32 %v4383, %v4326
        %v4426 = vmul.f32 %v4386, %v4326
        %v4427 = vmul.f32 %v4389, %v4326
        %v4428 = vmul.f32 %v4392, %v4326
        %v4429 = vmul.f32 %v4395, %v4326
        %v4430 = vmul.f32 %v4398, %v4326
        %v4431 = vmul.f32 %v4401, %v4326
        %v4432 = vmul.f32 %v4404, %v4326
        %v4433 = vmul.f32 %v4407, %v4326
        %v4434 = vmul.f32 %v4410, %v4326
        %v4435 = vmul.f32 %v4413, %v4326
        %v4436 = vmul.f32 %v4416, %v4326
        %v4437 = vmul.f32 %v4419, %v4326
        %v4438 = vmul.f32 %v4422, %v4326
        %v4440 = vlaneseq
        %v4441 = vshrl.u32 %v4440, 7
        %v4442 = vsub.s32 0, %v4441
        %v4443 = vrot.slane %v4276, %v4442
        %v4445 = vmul.f32 %v4443, %v4343
        %v4446 = vmul.f32 %v4443, %v4344
        %v4447 = vmul.f32 %v4443, %v4345
        %v4448 = vmul.f32 %v4443, %v4346
        %v4449 = vmul.f32 %v4443, %v4347
        %v4450 = vmul.f32 %v4443, %v4348
        %v4451 = vmul.f32 %v4443, %v4349
        %v4452 = vmul.f32 %v4443, %v4350
        %v4453 = vmul.f32 %v4443, %v4351
        %v4454 = vmul.f32 %v4443, %v4352
        %v4455 = vmul.f32 %v4443, %v4353
        %v4456 = vmul.f32 %v4443, %v4354
        %v4457 = vmul.f32 %v4443, %v4355
        %v4458 = vmul.f32 %v4443, %v4356
        %v4459 = vmul.f32 %v4443, %v4357
        %v4460 = vmul.f32 %v4443, %v4358
        %v4461 = vadd.f32 %v4423, 1e-05
        %v4462 = vadd.f32 %v4424, 1e-05
        %v4463 = vadd.f32 %v4425, 1e-05
        %v4464 = vadd.f32 %v4426, 1e-05
        %v4465 = vadd.f32 %v4427, 1e-05
        %v4466 = vadd.f32 %v4428, 1e-05
        %v4467 = vadd.f32 %v4429, 1e-05
        %v4468 = vadd.f32 %v4430, 1e-05
        %v4469 = vadd.f32 %v4431, 1e-05
        %v4470 = vadd.f32 %v4432, 1e-05
        %v4471 = vadd.f32 %v4433, 1e-05
        %v4472 = vadd.f32 %v4434, 1e-05
        %v4473 = vadd.f32 %v4435, 1e-05
        %v4474 = vadd.f32 %v4436, 1e-05
        %v4475 = vadd.f32 %v4437, 1e-05
        %v4476 = vadd.f32 %v4438, 1e-05
        %v4477 = vrsqrt.pop %v4461
        %v4478 = vmul.f32 %v4461, %v4477
        %vm4479 = vcmp.eq.f32.partialorder %v4461, inf
        %v4480 = vsel %vm4479, %v4461, %v4478
        %vm4481 = vcmp.eq.f32.partialorder %v4461, 0.0
        %v4482 = vand.u32 %v4461, 2147483648
        %v4483 = vsel %vm4481, %v4482, %v4480
        %v4484 = vrsqrt.pop %v4462
        %v4485 = vmul.f32 %v4462, %v4484
        %vm4486 = vcmp.eq.f32.partialorder %v4462, inf
        %v4487 = vsel %vm4486, %v4462, %v4485
        %vm4488 = vcmp.eq.f32.partialorder %v4462, 0.0
        %v4489 = vand.u32 %v4462, 2147483648
        %v4490 = vsel %vm4488, %v4489, %v4487
        %v4491 = vrsqrt.pop %v4463
        %v4492 = vmul.f32 %v4463, %v4491
        %vm4493 = vcmp.eq.f32.partialorder %v4463, inf
        %v4494 = vsel %vm4493, %v4463, %v4492
        %vm4495 = vcmp.eq.f32.partialorder %v4463, 0.0
        %v4496 = vand.u32 %v4463, 2147483648
        %v4497 = vsel %vm4495, %v4496, %v4494
        %v4498 = vrsqrt.pop %v4464
        %v4499 = vmul.f32 %v4464, %v4498
        %vm4500 = vcmp.eq.f32.partialorder %v4464, inf
        %v4501 = vsel %vm4500, %v4464, %v4499
        %vm4502 = vcmp.eq.f32.partialorder %v4464, 0.0
        %v4503 = vand.u32 %v4464, 2147483648
        %v4504 = vsel %vm4502, %v4503, %v4501
        %v4505 = vrsqrt.pop %v4465
        %v4506 = vmul.f32 %v4465, %v4505
        %vm4507 = vcmp.eq.f32.partialorder %v4465, inf
        %v4508 = vsel %vm4507, %v4465, %v4506
        %vm4509 = vcmp.eq.f32.partialorder %v4465, 0.0
        %v4510 = vand.u32 %v4465, 2147483648
        %v4511 = vsel %vm4509, %v4510, %v4508
        %v4512 = vrsqrt.pop %v4466
        %v4513 = vmul.f32 %v4466, %v4512
        %vm4514 = vcmp.eq.f32.partialorder %v4466, inf
        %v4515 = vsel %vm4514, %v4466, %v4513
        %vm4516 = vcmp.eq.f32.partialorder %v4466, 0.0
        %v4517 = vand.u32 %v4466, 2147483648
        %v4518 = vsel %vm4516, %v4517, %v4515
        %v4519 = vrsqrt.pop %v4467
        %v4520 = vmul.f32 %v4467, %v4519
        %vm4521 = vcmp.eq.f32.partialorder %v4467, inf
        %v4522 = vsel %vm4521, %v4467, %v4520
        %vm4523 = vcmp.eq.f32.partialorder %v4467, 0.0
        %v4524 = vand.u32 %v4467, 2147483648
        %v4525 = vsel %vm4523, %v4524, %v4522
        %v4526 = vrsqrt.pop %v4468
        %v4527 = vmul.f32 %v4468, %v4526
        %vm4528 = vcmp.eq.f32.partialorder %v4468, inf
        %v4529 = vsel %vm4528, %v4468, %v4527
        %vm4530 = vcmp.eq.f32.partialorder %v4468, 0.0
        %v4531 = vand.u32 %v4468, 2147483648
        %v4532 = vsel %vm4530, %v4531, %v4529
        %v4533 = vrsqrt.pop %v4469
        %v4534 = vmul.f32 %v4469, %v4533
        %vm4535 = vcmp.eq.f32.partialorder %v4469, inf
        %v4536 = vsel %vm4535, %v4469, %v4534
        %vm4537 = vcmp.eq.f32.partialorder %v4469, 0.0
        %v4538 = vand.u32 %v4469, 2147483648
        %v4539 = vsel %vm4537, %v4538, %v4536
        %v4540 = vrsqrt.pop %v4470
        %v4541 = vmul.f32 %v4470, %v4540
        %vm4542 = vcmp.eq.f32.partialorder %v4470, inf
        %v4543 = vsel %vm4542, %v4470, %v4541
        %vm4544 = vcmp.eq.f32.partialorder %v4470, 0.0
        %v4545 = vand.u32 %v4470, 2147483648
        %v4546 = vsel %vm4544, %v4545, %v4543
        %v4547 = vrsqrt.pop %v4471
        %v4548 = vmul.f32 %v4471, %v4547
        %vm4549 = vcmp.eq.f32.partialorder %v4471, inf
        %v4550 = vsel %vm4549, %v4471, %v4548
        %vm4551 = vcmp.eq.f32.partialorder %v4471, 0.0
        %v4552 = vand.u32 %v4471, 2147483648
        %v4553 = vsel %vm4551, %v4552, %v4550
        %v4554 = vrsqrt.pop %v4472
        %v4555 = vmul.f32 %v4472, %v4554
        %vm4556 = vcmp.eq.f32.partialorder %v4472, inf
        %v4557 = vsel %vm4556, %v4472, %v4555
        %vm4558 = vcmp.eq.f32.partialorder %v4472, 0.0
        %v4559 = vand.u32 %v4472, 2147483648
        %v4560 = vsel %vm4558, %v4559, %v4557
        %v4561 = vrsqrt.pop %v4473
        %v4562 = vmul.f32 %v4473, %v4561
        %vm4563 = vcmp.eq.f32.partialorder %v4473, inf
        %v4564 = vsel %vm4563, %v4473, %v4562
        %vm4565 = vcmp.eq.f32.partialorder %v4473, 0.0
        %v4566 = vand.u32 %v4473, 2147483648
        %v4567 = vsel %vm4565, %v4566, %v4564
        %v4568 = vrsqrt.pop %v4474
        %v4569 = vmul.f32 %v4474, %v4568
        %vm4570 = vcmp.eq.f32.partialorder %v4474, inf
        %v4571 = vsel %vm4570, %v4474, %v4569
        %vm4572 = vcmp.eq.f32.partialorder %v4474, 0.0
        %v4573 = vand.u32 %v4474, 2147483648
        %v4574 = vsel %vm4572, %v4573, %v4571
        %v4575 = vrsqrt.pop %v4475
        %v4576 = vmul.f32 %v4475, %v4575
        %vm4577 = vcmp.eq.f32.partialorder %v4475, inf
        %v4578 = vsel %vm4577, %v4475, %v4576
        %vm4579 = vcmp.eq.f32.partialorder %v4475, 0.0
        %v4580 = vand.u32 %v4475, 2147483648
        %v4581 = vsel %vm4579, %v4580, %v4578
        %v4582 = vrsqrt.pop %v4476
        %v4583 = vmul.f32 %v4476, %v4582
        %vm4584 = vcmp.eq.f32.partialorder %v4476, inf
        %v4585 = vsel %vm4584, %v4476, %v4583
        %vm4586 = vcmp.eq.f32.partialorder %v4476, 0.0
        %v4587 = vand.u32 %v4476, 2147483648
        %v4588 = vsel %vm4586, %v4587, %v4585
        %v4589 = vrcp.pop %v4483
        %v4590 = vmul.f32 %v4445, %v4589
        %v4591 = vrcp.pop %v4490
        %v4592 = vmul.f32 %v4446, %v4591
        %v4593 = vrcp.pop %v4497
        %v4594 = vmul.f32 %v4447, %v4593
        %v4595 = vrcp.pop %v4504
        %v4596 = vmul.f32 %v4448, %v4595
        %v4597 = vrcp.pop %v4511
        %v4598 = vmul.f32 %v4449, %v4597
        %v4599 = vrcp.pop %v4518
        %v4600 = vmul.f32 %v4450, %v4599
        %v4601 = vrcp.pop %v4525
        %v4602 = vmul.f32 %v4451, %v4601
        %v4603 = vrcp.pop %v4532
        %v4604 = vmul.f32 %v4452, %v4603
        %v4605 = vrcp.pop %v4539
        %v4606 = vmul.f32 %v4453, %v4605
        %v4607 = vrcp.pop %v4546
        %v4608 = vmul.f32 %v4454, %v4607
        %v4609 = vrcp.pop %v4553
        %v4610 = vmul.f32 %v4455, %v4609
        %v4611 = vrcp.pop %v4560
        %v4612 = vmul.f32 %v4456, %v4611
        %v4613 = vrcp.pop %v4567
        %v4614 = vmul.f32 %v4457, %v4613
        %v4615 = vrcp.pop %v4574
        %v4616 = vmul.f32 %v4458, %v4615
        %v4617 = vrcp.pop %v4581
        %v4618 = vmul.f32 %v4459, %v4617
        %v4619 = vrcp.pop %v4588
        %v4620 = vmul.f32 %v4460, %v4619
        %v4622 = vlaneseq
        %v4623 = vshrl.u32 %v4622, 7
        %v4624 = vsub.s32 0, %v4623
        %v4625 = vrot.slane %v4277, %v4624
        %v4627 = vadd.f32 %v4590, %v4625
        %v4628 = vadd.f32 %v4592, %v4625
        %v4629 = vadd.f32 %v4594, %v4625
        %v4630 = vadd.f32 %v4596, %v4625
        %v4631 = vadd.f32 %v4598, %v4625
        %v4632 = vadd.f32 %v4600, %v4625
        %v4633 = vadd.f32 %v4602, %v4625
        %v4634 = vadd.f32 %v4604, %v4625
        %v4635 = vadd.f32 %v4606, %v4625
        %v4636 = vadd.f32 %v4608, %v4625
        %v4637 = vadd.f32 %v4610, %v4625
        %v4638 = vadd.f32 %v4612, %v4625
        %v4639 = vadd.f32 %v4614, %v4625
        %v4640 = vadd.f32 %v4616, %v4625
        %v4641 = vadd.f32 %v4618, %v4625
        %v4642 = vadd.f32 %v4620, %v4625
        %v4643 = vld [vmem:[%s9] sm:$0xff]
        %v4644 = vld [vmem:[%s9 + $0x8] sm:$0xff]
        %v4645 = vld [vmem:[%s10] sm:$0x1]
        %v4647 = vlaneseq
        %v4648 = vshrl.u32 %v4647, 7
        %v4649 = vsub.s32 0, %v4648
        %v4650 = vrot.slane %v4645, %v4649
        %v4653 = vsel %vm1131, %v4627, 0
        %v4656 = vsel %vm1131, %v4628, 0
        %v4659 = vsel %vm1131, %v4629, 0
        %v4662 = vsel %vm1131, %v4630, 0
        %v4665 = vsel %vm1131, %v4631, 0
        %v4668 = vsel %vm1131, %v4632, 0
        %v4671 = vsel %vm1131, %v4633, 0
        %v4674 = vsel %vm1131, %v4634, 0
        %v4677 = vsel %vm1131, %v4635, 0
        %v4680 = vsel %vm1131, %v4636, 0
        %v4683 = vsel %vm1131, %v4637, 0
        %v4686 = vsel %vm1131, %v4638, 0
        %v4689 = vsel %vm1131, %v4639, 0
        %v4692 = vsel %vm1131, %v4640, 0
        %v4695 = vsel %vm1131, %v4641, 0
        %v4698 = vsel %vm1131, %v4642, 0
        %4700 = vmatprep.subr.mxu0 0.0
        %4701 = vmatpush1.msra.mxu0 %v4643
        %4702 = vmatprep.subr.mxu0 0.0
        %4703 = vmatpush1.msra.mxu0 %v4644
        %4704 = vmatprep.subr.mxu0 0.0
        %4705 = vmatpush1.msra.mxu0 0.0
        %4706 = vmatprep.subr.mxu0 0.0
        %4707 = vmatpush1.msra.mxu0 0.0
        %4708 = vmatprep.subr.mxu0 0.0
        %4709 = vmatpush1.msra.mxu0 0.0
        %4710 = vmatprep.subr.mxu0 0.0
        %4711 = vmatpush1.msra.mxu0 0.0
        %4712 = vmatprep.subr.mxu0 0.0
        %4713 = vmatpush1.msra.mxu0 0.0
        %4714 = vmatprep.subr.mxu0 0.0
        %4715 = vmatpush1.msra.mxu0 0.0
        %4716 = vmatprep.subr.mxu0 0.0
        %4717 = vmatpush1.msra.mxu0 0.0
        %4718 = vmatprep.subr.mxu0 0.0
        %4719 = vmatpush1.msra.mxu0 0.0
        %4720 = vmatprep.subr.mxu0 0.0
        %4721 = vmatpush1.msra.mxu0 0.0
        %4722 = vmatprep.subr.mxu0 0.0
        %4723 = vmatpush1.msra.mxu0 0.0
        %4724 = vmatprep.subr.mxu0 0.0
        %4725 = vmatpush1.msra.mxu0 0.0
        %4726 = vmatprep.subr.mxu0 0.0
        %4727 = vmatpush1.msra.mxu0 0.0
        %4728 = vmatprep.subr.mxu0 0.0
        %4729 = vmatpush1.msra.mxu0 0.0
        %4730 = vmatprep.subr.mxu0 0.0
        %4731 = vmatpush1.msra.mxu0 0.0
        %4732 = vmatprep.subr.mxu0 0.0
        %4733 = vmatpush1.msra.mxu0 0.0
        %4734 = vmatprep.subr.mxu0 0.0
        %4735 = vmatpush1.msra.mxu0 0.0
        %4736 = vmatprep.subr.mxu0 0.0
        %4737 = vmatpush1.msra.mxu0 0.0
        %4738 = vmatprep.subr.mxu0 0.0
        %4739 = vmatpush1.msra.mxu0 0.0
        %4740 = vmatprep.subr.mxu0 0.0
        %4741 = vmatpush1.msra.mxu0 0.0
        %4742 = vmatprep.subr.mxu0 0.0
        %4743 = vmatpush1.msra.mxu0 0.0
        %4744 = vmatprep.subr.mxu0 0.0
        %4745 = vmatpush1.msra.mxu0 0.0
        %4746 = vmatprep.subr.mxu0 0.0
        %4747 = vmatpush1.msra.mxu0 0.0
        %4748 = vmatprep.subr.mxu0 0.0
        %4749 = vmatpush1.msra.mxu0 0.0
        %4750 = vmatprep.subr.mxu0 0.0
        %4751 = vmatpush1.msra.mxu0 0.0
        %4752 = vmatprep.subr.mxu0 0.0
        %4753 = vmatpush1.msra.mxu0 0.0
        %4754 = vmatprep.subr.mxu0 0.0
        %4755 = vmatpush1.msra.mxu0 0.0
        %4756 = vmatprep.subr.mxu0 0.0
        %4757 = vmatpush1.msra.mxu0 0.0
        %4758 = vmatprep.subr.mxu0 0.0
        %4759 = vmatpush1.msra.mxu0 0.0
        %4760 = vmatprep.subr.mxu0 0.0
        %4761 = vmatpush1.msra.mxu0 0.0
        %4762 = vmatprep.subr.mxu0 0.0
        %4763 = vmatpush1.msra.mxu0 0.0
        %4764 = vmatprep.mubr.f32.mxu0 0.0
        %4765 = vmatmul.mubr.f32.gmra.mrb[0].mxu0 %v4653
        %v4766 = vpop.f32.mrb[0].mxu0
        %v4767 = vadd.f32 %v4650, %v4766
        %v4768 = vpop.f32.mrb[0].mxu0
        %4769 = vmatprep.mubr.f32.mxu0 0.0
        %4770 = vmatmul.mubr.f32.gmra.mrb[0].mxu0 %v4656
        %v4771 = vpop.f32.mrb[0].mxu0
        %v4772 = vadd.f32 %v4650, %v4771
        %v4773 = vpop.f32.mrb[0].mxu0
        %4774 = vmatprep.mubr.f32.mxu0 0.0
        %4775 = vmatmul.mubr.f32.gmra.mrb[0].mxu0 %v4659
        %v4776 = vpop.f32.mrb[0].mxu0
        %v4777 = vadd.f32 %v4650, %v4776
        %v4778 = vpop.f32.mrb[0].mxu0
        %4779 = vmatprep.mubr.f32.mxu0 0.0
        %4780 = vmatmul.mubr.f32.gmra.mrb[0].mxu0 %v4662
        %v4781 = vpop.f32.mrb[0].mxu0
        %v4782 = vadd.f32 %v4650, %v4781
        %v4783 = vpop.f32.mrb[0].mxu0
        %4784 = vmatprep.mubr.f32.mxu0 0.0
        %4785 = vmatmul.mubr.f32.gmra.mrb[0].mxu0 %v4665
        %v4786 = vpop.f32.mrb[0].mxu0
        %v4787 = vadd.f32 %v4650, %v4786
        %v4788 = vpop.f32.mrb[0].mxu0
        %4789 = vmatprep.mubr.f32.mxu0 0.0
        %4790 = vmatmul.mubr.f32.gmra.mrb[0].mxu0 %v4668
        %v4791 = vpop.f32.mrb[0].mxu0
        %v4792 = vadd.f32 %v4650, %v4791
        %v4793 = vpop.f32.mrb[0].mxu0
        %4794 = vmatprep.mubr.f32.mxu0 0.0
        %4795 = vmatmul.mubr.f32.gmra.mrb[0].mxu0 %v4671
        %v4796 = vpop.f32.mrb[0].mxu0
        %v4797 = vadd.f32 %v4650, %v4796
        %v4798 = vpop.f32.mrb[0].mxu0
        %4799 = vmatprep.mubr.f32.mxu0 0.0
        %4800 = vmatmul.mubr.f32.gmra.mrb[0].mxu0 %v4674
        %v4801 = vpop.f32.mrb[0].mxu0
        %v4802 = vadd.f32 %v4650, %v4801
        %v4803 = vpop.f32.mrb[0].mxu0
        %4804 = vmatprep.mubr.f32.mxu0 0.0
        %4805 = vmatmul.mubr.f32.gmra.mrb[0].mxu0 %v4677
        %v4806 = vpop.f32.mrb[0].mxu0
        %v4807 = vadd.f32 %v4650, %v4806
        %v4808 = vpop.f32.mrb[0].mxu0
        %4809 = vmatprep.mubr.f32.mxu0 0.0
        %4810 = vmatmul.mubr.f32.gmra.mrb[0].mxu0 %v4680
        %v4811 = vpop.f32.mrb[0].mxu0
        %v4812 = vadd.f32 %v4650, %v4811
        %v4813 = vpop.f32.mrb[0].mxu0
        %4814 = vmatprep.mubr.f32.mxu0 0.0
        %4815 = vmatmul.mubr.f32.gmra.mrb[0].mxu0 %v4683
        %v4816 = vpop.f32.mrb[0].mxu0
        %v4817 = vadd.f32 %v4650, %v4816
        %v4818 = vpop.f32.mrb[0].mxu0
        %4819 = vmatprep.mubr.f32.mxu0 0.0
        %4820 = vmatmul.mubr.f32.gmra.mrb[0].mxu0 %v4686
        %v4821 = vpop.f32.mrb[0].mxu0
        %v4822 = vadd.f32 %v4650, %v4821
        %v4823 = vpop.f32.mrb[0].mxu0
        %4824 = vmatprep.mubr.f32.mxu0 0.0
        %4825 = vmatmul.mubr.f32.gmra.mrb[0].mxu0 %v4689
        %v4826 = vpop.f32.mrb[0].mxu0
        %v4827 = vadd.f32 %v4650, %v4826
        %v4828 = vpop.f32.mrb[0].mxu0
        %4829 = vmatprep.mubr.f32.mxu0 0.0
        %4830 = vmatmul.mubr.f32.gmra.mrb[0].mxu0 %v4692
        %v4831 = vpop.f32.mrb[0].mxu0
        %v4832 = vadd.f32 %v4650, %v4831
        %v4833 = vpop.f32.mrb[0].mxu0
        %4834 = vmatprep.mubr.f32.mxu0 0.0
        %4835 = vmatmul.mubr.f32.gmra.mrb[0].mxu0 %v4695
        %v4836 = vpop.f32.mrb[0].mxu0
        %v4837 = vadd.f32 %v4650, %v4836
        %v4838 = vpop.f32.mrb[0].mxu0
        %4839 = vmatprep.mubr.f32.mxu0 0.0
        %4840 = vmatmul.mubr.f32.gmra.mrb[0].mxu0 %v4698
        %v4841 = vpop.f32.mrb[0].mxu0
        %v4842 = vadd.f32 %v4650, %v4841
        %v4843 = vpop.f32.mrb[0].mxu0
        %4844 = vdwg.mxu0
        %v4845 = vmax.f32 %v4767, 0.0
        %v4846 = vmax.f32 %v4772, 0.0
        %v4847 = vmax.f32 %v4777, 0.0
        %v4848 = vmax.f32 %v4782, 0.0
        %v4849 = vmax.f32 %v4787, 0.0
        %v4850 = vmax.f32 %v4792, 0.0
        %v4851 = vmax.f32 %v4797, 0.0
        %v4852 = vmax.f32 %v4802, 0.0
        %v4853 = vmax.f32 %v4807, 0.0
        %v4854 = vmax.f32 %v4812, 0.0
        %v4855 = vmax.f32 %v4817, 0.0
        %v4856 = vmax.f32 %v4822, 0.0
        %v4857 = vmax.f32 %v4827, 0.0
        %v4858 = vmax.f32 %v4832, 0.0
        %v4859 = vmax.f32 %v4837, 0.0
        %v4860 = vmax.f32 %v4842, 0.0
        %v4861 = vld [vmem:[%s11] sm:$0xff]
        %v4862 = vld [vmem:[%s11 + $0x8] sm:$0xff]
        %v4863 = vld [vmem:[%s11 + $0x10] sm:$0xff]
        %v4864 = vld [vmem:[%s11 + $0x18] sm:$0xff]
        %v4865 = vld [vmem:[%s11 + $0x20] sm:$0xff]
        %v4866 = vld [vmem:[%s11 + $0x28] sm:$0xff]
        %v4867 = vld [vmem:[%s11 + $0x30] sm:$0xff]
        %v4868 = vld [vmem:[%s11 + $0x38] sm:$0xff]
        %v4869 = vld [vmem:[%s12] sm:$0x1]
        %v4871 = vlaneseq
        %v4872 = vshrl.u32 %v4871, 7
        %v4873 = vsub.s32 0, %v4872
        %v4874 = vrot.slane %v4869, %v4873
        %v4877 = vsel %vm1210, %v4845, 0
        %v4880 = vsel %vm1210, %v4846, 0
        %v4883 = vsel %vm1210, %v4847, 0
        %v4886 = vsel %vm1210, %v4848, 0
        %v4889 = vsel %vm1210, %v4849, 0
        %v4892 = vsel %vm1210, %v4850, 0
        %v4895 = vsel %vm1210, %v4851, 0
        %v4898 = vsel %vm1210, %v4852, 0
        %v4901 = vsel %vm1210, %v4853, 0
        %v4904 = vsel %vm1210, %v4854, 0
        %v4907 = vsel %vm1210, %v4855, 0
        %v4910 = vsel %vm1210, %v4856, 0
        %v4913 = vsel %vm1210, %v4857, 0
        %v4916 = vsel %vm1210, %v4858, 0
        %v4919 = vsel %vm1210, %v4859, 0
        %v4922 = vsel %vm1210, %v4860, 0
        %4924 = vmatprep.subr.mxu0 0.0
        %4925 = vmatpush1.msra.mxu0 %v4861
        %4926 = vmatprep.subr.mxu0 0.0
        %4927 = vmatpush1.msra.mxu0 %v4862
        %4928 = vmatprep.subr.mxu0 0.0
        %4929 = vmatpush1.msra.mxu0 %v4863
        %4930 = vmatprep.subr.mxu0 0.0
        %4931 = vmatpush1.msra.mxu0 %v4864
        %4932 = vmatprep.subr.mxu0 0.0
        %4933 = vmatpush1.msra.mxu0 %v4865
        %4934 = vmatprep.subr.mxu0 0.0
        %4935 = vmatpush1.msra.mxu0 %v4866
        %4936 = vmatprep.subr.mxu0 0.0
        %4937 = vmatpush1.msra.mxu0 %v4867
        %4938 = vmatprep.subr.mxu0 0.0
        %4939 = vmatpush1.msra.mxu0 %v4868
        %4940 = vmatprep.subr.mxu0 0.0
        %4941 = vmatpush1.msra.mxu0 0.0
        %4942 = vmatprep.subr.mxu0 0.0
        %4943 = vmatpush1.msra.mxu0 0.0
        %4944 = vmatprep.subr.mxu0 0.0
        %4945 = vmatpush1.msra.mxu0 0.0
        %4946 = vmatprep.subr.mxu0 0.0
        %4947 = vmatpush1.msra.mxu0 0.0
        %4948 = vmatprep.subr.mxu0 0.0
        %4949 = vmatpush1.msra.mxu0 0.0
        %4950 = vmatprep.subr.mxu0 0.0
        %4951 = vmatpush1.msra.mxu0 0.0
        %4952 = vmatprep.subr.mxu0 0.0
        %4953 = vmatpush1.msra.mxu0 0.0
        %4954 = vmatprep.subr.mxu0 0.0
        %4955 = vmatpush1.msra.mxu0 0.0
        %4956 = vmatprep.subr.mxu0 0.0
        %4957 = vmatpush1.msra.mxu0 0.0
        %4958 = vmatprep.subr.mxu0 0.0
        %4959 = vmatpush1.msra.mxu0 0.0
        %4960 = vmatprep.subr.mxu0 0.0
        %4961 = vmatpush1.msra.mxu0 0.0
        %4962 = vmatprep.subr.mxu0 0.0
        %4963 = vmatpush1.msra.mxu0 0.0
        %4964 = vmatprep.subr.mxu0 0.0
        %4965 = vmatpush1.msra.mxu0 0.0
        %4966 = vmatprep.subr.mxu0 0.0
        %4967 = vmatpush1.msra.mxu0 0.0
        %4968 = vmatprep.subr.mxu0 0.0
        %4969 = vmatpush1.msra.mxu0 0.0
        %4970 = vmatprep.subr.mxu0 0.0
        %4971 = vmatpush1.msra.mxu0 0.0
        %4972 = vmatprep.subr.mxu0 0.0
        %4973 = vmatpush1.msra.mxu0 0.0
        %4974 = vmatprep.subr.mxu0 0.0
        %4975 = vmatpush1.msra.mxu0 0.0
        %4976 = vmatprep.subr.mxu0 0.0
        %4977 = vmatpush1.msra.mxu0 0.0
        %4978 = vmatprep.subr.mxu0 0.0
        %4979 = vmatpush1.msra.mxu0 0.0
        %4980 = vmatprep.subr.mxu0 0.0
        %4981 = vmatpush1.msra.mxu0 0.0
        %4982 = vmatprep.subr.mxu0 0.0
        %4983 = vmatpush1.msra.mxu0 0.0
        %4984 = vmatprep.subr.mxu0 0.0
        %4985 = vmatpush1.msra.mxu0 0.0
        %4986 = vmatprep.subr.mxu0 0.0
        %4987 = vmatpush1.msra.mxu0 0.0
        %4988 = vmatprep.mubr.f32.mxu0 0.0
        %4989 = vmatmul.mubr.f32.gmra.mrb[0].mxu0 %v4877
        %v4990 = vpop.f32.mrb[0].mxu0
        %v4991 = vadd.f32 %v4874, %v4990
        %v4992 = vpop.f32.mrb[0].mxu0
        %4993 = vmatprep.mubr.f32.mxu0 0.0
        %4994 = vmatmul.mubr.f32.gmra.mrb[0].mxu0 %v4880
        %v4995 = vpop.f32.mrb[0].mxu0
        %v4996 = vadd.f32 %v4874, %v4995
        %v4997 = vpop.f32.mrb[0].mxu0
        %4998 = vmatprep.mubr.f32.mxu0 0.0
        %4999 = vmatmul.mubr.f32.gmra.mrb[0].mxu0 %v4883
        %v5000 = vpop.f32.mrb[0].mxu0
        %v5001 = vadd.f32 %v4874, %v5000
        %v5002 = vpop.f32.mrb[0].mxu0
        %5003 = vmatprep.mubr.f32.mxu0 0.0
        %5004 = vmatmul.mubr.f32.gmra.mrb[0].mxu0 %v4886
        %v5005 = vpop.f32.mrb[0].mxu0
        %v5006 = vadd.f32 %v4874, %v5005
        %v5007 = vpop.f32.mrb[0].mxu0
        %5008 = vmatprep.mubr.f32.mxu0 0.0
        %5009 = vmatmul.mubr.f32.gmra.mrb[0].mxu0 %v4889
        %v5010 = vpop.f32.mrb[0].mxu0
        %v5011 = vadd.f32 %v4874, %v5010
        %v5012 = vpop.f32.mrb[0].mxu0
        %5013 = vmatprep.mubr.f32.mxu0 0.0
        %5014 = vmatmul.mubr.f32.gmra.mrb[0].mxu0 %v4892
        %v5015 = vpop.f32.mrb[0].mxu0
        %v5016 = vadd.f32 %v4874, %v5015
        %v5017 = vpop.f32.mrb[0].mxu0
        %5018 = vmatprep.mubr.f32.mxu0 0.0
        %5019 = vmatmul.mubr.f32.gmra.mrb[0].mxu0 %v4895
        %v5020 = vpop.f32.mrb[0].mxu0
        %v5021 = vadd.f32 %v4874, %v5020
        %v5022 = vpop.f32.mrb[0].mxu0
        %5023 = vmatprep.mubr.f32.mxu0 0.0
        %5024 = vmatmul.mubr.f32.gmra.mrb[0].mxu0 %v4898
        %v5025 = vpop.f32.mrb[0].mxu0
        %v5026 = vadd.f32 %v4874, %v5025
        %v5027 = vpop.f32.mrb[0].mxu0
        %5028 = vmatprep.mubr.f32.mxu0 0.0
        %5029 = vmatmul.mubr.f32.gmra.mrb[0].mxu0 %v4901
        %v5030 = vpop.f32.mrb[0].mxu0
        %v5031 = vadd.f32 %v4874, %v5030
        %v5032 = vpop.f32.mrb[0].mxu0
        %5033 = vmatprep.mubr.f32.mxu0 0.0
        %5034 = vmatmul.mubr.f32.gmra.mrb[0].mxu0 %v4904
        %v5035 = vpop.f32.mrb[0].mxu0
        %v5036 = vadd.f32 %v4874, %v5035
        %v5037 = vpop.f32.mrb[0].mxu0
        %5038 = vmatprep.mubr.f32.mxu0 0.0
        %5039 = vmatmul.mubr.f32.gmra.mrb[0].mxu0 %v4907
        %v5040 = vpop.f32.mrb[0].mxu0
        %v5041 = vadd.f32 %v4874, %v5040
        %v5042 = vpop.f32.mrb[0].mxu0
        %5043 = vmatprep.mubr.f32.mxu0 0.0
        %5044 = vmatmul.mubr.f32.gmra.mrb[0].mxu0 %v4910
        %v5045 = vpop.f32.mrb[0].mxu0
        %v5046 = vadd.f32 %v4874, %v5045
        %v5047 = vpop.f32.mrb[0].mxu0
        %5048 = vmatprep.mubr.f32.mxu0 0.0
        %5049 = vmatmul.mubr.f32.gmra.mrb[0].mxu0 %v4913
        %v5050 = vpop.f32.mrb[0].mxu0
        %v5051 = vadd.f32 %v4874, %v5050
        %v5052 = vpop.f32.mrb[0].mxu0
        %5053 = vmatprep.mubr.f32.mxu0 0.0
        %5054 = vmatmul.mubr.f32.gmra.mrb[0].mxu0 %v4916
        %v5055 = vpop.f32.mrb[0].mxu0
        %v5056 = vadd.f32 %v4874, %v5055
        %v5057 = vpop.f32.mrb[0].mxu0
        %5058 = vmatprep.mubr.f32.mxu0 0.0
        %5059 = vmatmul.mubr.f32.gmra.mrb[0].mxu0 %v4919
        %v5060 = vpop.f32.mrb[0].mxu0
        %v5061 = vadd.f32 %v4874, %v5060
        %v5062 = vpop.f32.mrb[0].mxu0
        %5063 = vmatprep.mubr.f32.mxu0 0.0
        %5064 = vmatmul.mubr.f32.gmra.mrb[0].mxu0 %v4922
        %v5065 = vpop.f32.mrb[0].mxu0
        %v5066 = vadd.f32 %v4874, %v5065
        %v5067 = vpop.f32.mrb[0].mxu0
        %5068 = vdwg.mxu0
        %v5069 = vadd.f32 %v4627, %v4991
        %v5070 = vadd.f32 %v4628, %v4996
        %v5071 = vadd.f32 %v4629, %v5001
        %v5072 = vadd.f32 %v4630, %v5006
        %v5073 = vadd.f32 %v4631, %v5011
        %v5074 = vadd.f32 %v4632, %v5016
        %v5075 = vadd.f32 %v4633, %v5021
        %v5076 = vadd.f32 %v4634, %v5026
        %v5077 = vadd.f32 %v4635, %v5031
        %v5078 = vadd.f32 %v4636, %v5036
        %v5079 = vadd.f32 %v4637, %v5041
        %v5080 = vadd.f32 %v4638, %v5046
        %v5081 = vadd.f32 %v4639, %v5051
        %v5082 = vadd.f32 %v4640, %v5056
        %v5083 = vadd.f32 %v4641, %v5061
        %v5084 = vadd.f32 %v4642, %v5066
        %v5085 = vld [vmem:[%s13] sm:$0x1]
        %v5086 = vld [vmem:[%s14] sm:$0x1]
        %v5087 = vsel %vm1131, %v5069, 0.0
        %5088 = vadd.xlane.f32.xlu0 %v5087
        %v5089 = vpop.xlane.xlu0 %5088
        %v5090 = vsel %vm1131, %v5070, 0.0
        %5091 = vadd.xlane.f32.xlu0 %v5090
        %v5092 = vpop.xlane.xlu0 %5091
        %v5093 = vsel %vm1131, %v5071, 0.0
        %5094 = vadd.xlane.f32.xlu0 %v5093
        %v5095 = vpop.xlane.xlu0 %5094
        %v5096 = vsel %vm1131, %v5072, 0.0
        %5097 = vadd.xlane.f32.xlu0 %v5096
        %v5098 = vpop.xlane.xlu0 %5097
        %v5099 = vsel %vm1131, %v5073, 0.0
        %5100 = vadd.xlane.f32.xlu0 %v5099
        %v5101 = vpop.xlane.xlu0 %5100
        %v5102 = vsel %vm1131, %v5074, 0.0
        %5103 = vadd.xlane.f32.xlu0 %v5102
        %v5104 = vpop.xlane.xlu0 %5103
        %v5105 = vsel %vm1131, %v5075, 0.0
        %5106 = vadd.xlane.f32.xlu0 %v5105
        %v5107 = vpop.xlane.xlu0 %5106
        %v5108 = vsel %vm1131, %v5076, 0.0
        %5109 = vadd.xlane.f32.xlu0 %v5108
        %v5110 = vpop.xlane.xlu0 %5109
        %v5111 = vsel %vm1131, %v5077, 0.0
        %5112 = vadd.xlane.f32.xlu0 %v5111
        %v5113 = vpop.xlane.xlu0 %5112
        %v5114 = vsel %vm1131, %v5078, 0.0
        %5115 = vadd.xlane.f32.xlu0 %v5114
        %v5116 = vpop.xlane.xlu0 %5115
        %v5117 = vsel %vm1131, %v5079, 0.0
        %5118 = vadd.xlane.f32.xlu0 %v5117
        %v5119 = vpop.xlane.xlu0 %5118
        %v5120 = vsel %vm1131, %v5080, 0.0
        %5121 = vadd.xlane.f32.xlu0 %v5120
        %v5122 = vpop.xlane.xlu0 %5121
        %v5123 = vsel %vm1131, %v5081, 0.0
        %5124 = vadd.xlane.f32.xlu0 %v5123
        %v5125 = vpop.xlane.xlu0 %5124
        %v5126 = vsel %vm1131, %v5082, 0.0
        %5127 = vadd.xlane.f32.xlu0 %v5126
        %v5128 = vpop.xlane.xlu0 %5127
        %v5129 = vsel %vm1131, %v5083, 0.0
        %5130 = vadd.xlane.f32.xlu0 %v5129
        %v5131 = vpop.xlane.xlu0 %5130
        %v5132 = vsel %vm1131, %v5084, 0.0
        %5133 = vadd.xlane.f32.xlu0 %v5132
        %v5134 = vpop.xlane.xlu0 %5133
        %v5135 = vmul.f32 %v5089, %v4326
        %v5136 = vmul.f32 %v5092, %v4326
        %v5137 = vmul.f32 %v5095, %v4326
        %v5138 = vmul.f32 %v5098, %v4326
        %v5139 = vmul.f32 %v5101, %v4326
        %v5140 = vmul.f32 %v5104, %v4326
        %v5141 = vmul.f32 %v5107, %v4326
        %v5142 = vmul.f32 %v5110, %v4326
        %v5143 = vmul.f32 %v5113, %v4326
        %v5144 = vmul.f32 %v5116, %v4326
        %v5145 = vmul.f32 %v5119, %v4326
        %v5146 = vmul.f32 %v5122, %v4326
        %v5147 = vmul.f32 %v5125, %v4326
        %v5148 = vmul.f32 %v5128, %v4326
        %v5149 = vmul.f32 %v5131, %v4326
        %v5150 = vmul.f32 %v5134, %v4326
        %v5151 = vsub.f32 %v5069, %v5135
        %v5152 = vsub.f32 %v5070, %v5136
        %v5153 = vsub.f32 %v5071, %v5137
        %v5154 = vsub.f32 %v5072, %v5138
        %v5155 = vsub.f32 %v5073, %v5139
        %v5156 = vsub.f32 %v5074, %v5140
        %v5157 = vsub.f32 %v5075, %v5141
        %v5158 = vsub.f32 %v5076, %v5142
        %v5159 = vsub.f32 %v5077, %v5143
        %v5160 = vsub.f32 %v5078, %v5144
        %v5161 = vsub.f32 %v5079, %v5145
        %v5162 = vsub.f32 %v5080, %v5146
        %v5163 = vsub.f32 %v5081, %v5147
        %v5164 = vsub.f32 %v5082, %v5148
        %v5165 = vsub.f32 %v5083, %v5149
        %v5166 = vsub.f32 %v5084, %v5150
        %v5167 = vmul.f32 %v5151, %v5151
        %v5168 = vmul.f32 %v5152, %v5152
        %v5169 = vmul.f32 %v5153, %v5153
        %v5170 = vmul.f32 %v5154, %v5154
        %v5171 = vmul.f32 %v5155, %v5155
        %v5172 = vmul.f32 %v5156, %v5156
        %v5173 = vmul.f32 %v5157, %v5157
        %v5174 = vmul.f32 %v5158, %v5158
        %v5175 = vmul.f32 %v5159, %v5159
        %v5176 = vmul.f32 %v5160, %v5160
        %v5177 = vmul.f32 %v5161, %v5161
        %v5178 = vmul.f32 %v5162, %v5162
        %v5179 = vmul.f32 %v5163, %v5163
        %v5180 = vmul.f32 %v5164, %v5164
        %v5181 = vmul.f32 %v5165, %v5165
        %v5182 = vmul.f32 %v5166, %v5166
        %v5183 = vsel %vm1131, %v5167, 0.0
        %5184 = vadd.xlane.f32.xlu0 %v5183
        %v5185 = vpop.xlane.xlu0 %5184
        %v5186 = vsel %vm1131, %v5168, 0.0
        %5187 = vadd.xlane.f32.xlu0 %v5186
        %v5188 = vpop.xlane.xlu0 %5187
        %v5189 = vsel %vm1131, %v5169, 0.0
        %5190 = vadd.xlane.f32.xlu0 %v5189
        %v5191 = vpop.xlane.xlu0 %5190
        %v5192 = vsel %vm1131, %v5170, 0.0
        %5193 = vadd.xlane.f32.xlu0 %v5192
        %v5194 = vpop.xlane.xlu0 %5193
        %v5195 = vsel %vm1131, %v5171, 0.0
        %5196 = vadd.xlane.f32.xlu0 %v5195
        %v5197 = vpop.xlane.xlu0 %5196
        %v5198 = vsel %vm1131, %v5172, 0.0
        %5199 = vadd.xlane.f32.xlu0 %v5198
        %v5200 = vpop.xlane.xlu0 %5199
        %v5201 = vsel %vm1131, %v5173, 0.0
        %5202 = vadd.xlane.f32.xlu0 %v5201
        %v5203 = vpop.xlane.xlu0 %5202
        %v5204 = vsel %vm1131, %v5174, 0.0
        %5205 = vadd.xlane.f32.xlu0 %v5204
        %v5206 = vpop.xlane.xlu0 %5205
        %v5207 = vsel %vm1131, %v5175, 0.0
        %5208 = vadd.xlane.f32.xlu0 %v5207
        %v5209 = vpop.xlane.xlu0 %5208
        %v5210 = vsel %vm1131, %v5176, 0.0
        %5211 = vadd.xlane.f32.xlu0 %v5210
        %v5212 = vpop.xlane.xlu0 %5211
        %v5213 = vsel %vm1131, %v5177, 0.0
        %5214 = vadd.xlane.f32.xlu0 %v5213
        %v5215 = vpop.xlane.xlu0 %5214
        %v5216 = vsel %vm1131, %v5178, 0.0
        %5217 = vadd.xlane.f32.xlu0 %v5216
        %v5218 = vpop.xlane.xlu0 %5217
        %v5219 = vsel %vm1131, %v5179, 0.0
        %5220 = vadd.xlane.f32.xlu0 %v5219
        %v5221 = vpop.xlane.xlu0 %5220
        %v5222 = vsel %vm1131, %v5180, 0.0
        %5223 = vadd.xlane.f32.xlu0 %v5222
        %v5224 = vpop.xlane.xlu0 %5223
        %v5225 = vsel %vm1131, %v5181, 0.0
        %5226 = vadd.xlane.f32.xlu0 %v5225
        %v5227 = vpop.xlane.xlu0 %5226
        %v5228 = vsel %vm1131, %v5182, 0.0
        %5229 = vadd.xlane.f32.xlu0 %v5228
        %v5230 = vpop.xlane.xlu0 %5229
        %v5231 = vmul.f32 %v5185, %v4326
        %v5232 = vmul.f32 %v5188, %v4326
        %v5233 = vmul.f32 %v5191, %v4326
        %v5234 = vmul.f32 %v5194, %v4326
        %v5235 = vmul.f32 %v5197, %v4326
        %v5236 = vmul.f32 %v5200, %v4326
        %v5237 = vmul.f32 %v5203, %v4326
        %v5238 = vmul.f32 %v5206, %v4326
        %v5239 = vmul.f32 %v5209, %v4326
        %v5240 = vmul.f32 %v5212, %v4326
        %v5241 = vmul.f32 %v5215, %v4326
        %v5242 = vmul.f32 %v5218, %v4326
        %v5243 = vmul.f32 %v5221, %v4326
        %v5244 = vmul.f32 %v5224, %v4326
        %v5245 = vmul.f32 %v5227, %v4326
        %v5246 = vmul.f32 %v5230, %v4326
        %v5248 = vlaneseq
        %v5249 = vshrl.u32 %v5248, 7
        %v5250 = vsub.s32 0, %v5249
        %v5251 = vrot.slane %v5085, %v5250
        %v5253 = vmul.f32 %v5251, %v5151
        %v5254 = vmul.f32 %v5251, %v5152
        %v5255 = vmul.f32 %v5251, %v5153
        %v5256 = vmul.f32 %v5251, %v5154
        %v5257 = vmul.f32 %v5251, %v5155
        %v5258 = vmul.f32 %v5251, %v5156
        %v5259 = vmul.f32 %v5251, %v5157
        %v5260 = vmul.f32 %v5251, %v5158
        %v5261 = vmul.f32 %v5251, %v5159
        %v5262 = vmul.f32 %v5251, %v5160
        %v5263 = vmul.f32 %v5251, %v5161
        %v5264 = vmul.f32 %v5251, %v5162
        %v5265 = vmul.f32 %v5251, %v5163
        %v5266 = vmul.f32 %v5251, %v5164
        %v5267 = vmul.f32 %v5251, %v5165
        %v5268 = vmul.f32 %v5251, %v5166
        %v5269 = vadd.f32 %v5231, 1e-05
        %v5270 = vadd.f32 %v5232, 1e-05
        %v5271 = vadd.f32 %v5233, 1e-05
        %v5272 = vadd.f32 %v5234, 1e-05
        %v5273 = vadd.f32 %v5235, 1e-05
        %v5274 = vadd.f32 %v5236, 1e-05
        %v5275 = vadd.f32 %v5237, 1e-05
        %v5276 = vadd.f32 %v5238, 1e-05
        %v5277 = vadd.f32 %v5239, 1e-05
        %v5278 = vadd.f32 %v5240, 1e-05
        %v5279 = vadd.f32 %v5241, 1e-05
        %v5280 = vadd.f32 %v5242, 1e-05
        %v5281 = vadd.f32 %v5243, 1e-05
        %v5282 = vadd.f32 %v5244, 1e-05
        %v5283 = vadd.f32 %v5245, 1e-05
        %v5284 = vadd.f32 %v5246, 1e-05
        %v5285 = vrsqrt.pop %v5269
        %v5286 = vmul.f32 %v5269, %v5285
        %vm5287 = vcmp.eq.f32.partialorder %v5269, inf
        %v5288 = vsel %vm5287, %v5269, %v5286
        %vm5289 = vcmp.eq.f32.partialorder %v5269, 0.0
        %v5290 = vand.u32 %v5269, 2147483648
        %v5291 = vsel %vm5289, %v5290, %v5288
        %v5292 = vrsqrt.pop %v5270
        %v5293 = vmul.f32 %v5270, %v5292
        %vm5294 = vcmp.eq.f32.partialorder %v5270, inf
        %v5295 = vsel %vm5294, %v5270, %v5293
        %vm5296 = vcmp.eq.f32.partialorder %v5270, 0.0
        %v5297 = vand.u32 %v5270, 2147483648
        %v5298 = vsel %vm5296, %v5297, %v5295
        %v5299 = vrsqrt.pop %v5271
        %v5300 = vmul.f32 %v5271, %v5299
        %vm5301 = vcmp.eq.f32.partialorder %v5271, inf
        %v5302 = vsel %vm5301, %v5271, %v5300
        %vm5303 = vcmp.eq.f32.partialorder %v5271, 0.0
        %v5304 = vand.u32 %v5271, 2147483648
        %v5305 = vsel %vm5303, %v5304, %v5302
        %v5306 = vrsqrt.pop %v5272
        %v5307 = vmul.f32 %v5272, %v5306
        %vm5308 = vcmp.eq.f32.partialorder %v5272, inf
        %v5309 = vsel %vm5308, %v5272, %v5307
        %vm5310 = vcmp.eq.f32.partialorder %v5272, 0.0
        %v5311 = vand.u32 %v5272, 2147483648
        %v5312 = vsel %vm5310, %v5311, %v5309
        %v5313 = vrsqrt.pop %v5273
        %v5314 = vmul.f32 %v5273, %v5313
        %vm5315 = vcmp.eq.f32.partialorder %v5273, inf
        %v5316 = vsel %vm5315, %v5273, %v5314
        %vm5317 = vcmp.eq.f32.partialorder %v5273, 0.0
        %v5318 = vand.u32 %v5273, 2147483648
        %v5319 = vsel %vm5317, %v5318, %v5316
        %v5320 = vrsqrt.pop %v5274
        %v5321 = vmul.f32 %v5274, %v5320
        %vm5322 = vcmp.eq.f32.partialorder %v5274, inf
        %v5323 = vsel %vm5322, %v5274, %v5321
        %vm5324 = vcmp.eq.f32.partialorder %v5274, 0.0
        %v5325 = vand.u32 %v5274, 2147483648
        %v5326 = vsel %vm5324, %v5325, %v5323
        %v5327 = vrsqrt.pop %v5275
        %v5328 = vmul.f32 %v5275, %v5327
        %vm5329 = vcmp.eq.f32.partialorder %v5275, inf
        %v5330 = vsel %vm5329, %v5275, %v5328
        %vm5331 = vcmp.eq.f32.partialorder %v5275, 0.0
        %v5332 = vand.u32 %v5275, 2147483648
        %v5333 = vsel %vm5331, %v5332, %v5330
        %v5334 = vrsqrt.pop %v5276
        %v5335 = vmul.f32 %v5276, %v5334
        %vm5336 = vcmp.eq.f32.partialorder %v5276, inf
        %v5337 = vsel %vm5336, %v5276, %v5335
        %vm5338 = vcmp.eq.f32.partialorder %v5276, 0.0
        %v5339 = vand.u32 %v5276, 2147483648
        %v5340 = vsel %vm5338, %v5339, %v5337
        %v5341 = vrsqrt.pop %v5277
        %v5342 = vmul.f32 %v5277, %v5341
        %vm5343 = vcmp.eq.f32.partialorder %v5277, inf
        %v5344 = vsel %vm5343, %v5277, %v5342
        %vm5345 = vcmp.eq.f32.partialorder %v5277, 0.0
        %v5346 = vand.u32 %v5277, 2147483648
        %v5347 = vsel %vm5345, %v5346, %v5344
        %v5348 = vrsqrt.pop %v5278
        %v5349 = vmul.f32 %v5278, %v5348
        %vm5350 = vcmp.eq.f32.partialorder %v5278, inf
        %v5351 = vsel %vm5350, %v5278, %v5349
        %vm5352 = vcmp.eq.f32.partialorder %v5278, 0.0
        %v5353 = vand.u32 %v5278, 2147483648
        %v5354 = vsel %vm5352, %v5353, %v5351
        %v5355 = vrsqrt.pop %v5279
        %v5356 = vmul.f32 %v5279, %v5355
        %vm5357 = vcmp.eq.f32.partialorder %v5279, inf
        %v5358 = vsel %vm5357, %v5279, %v5356
        %vm5359 = vcmp.eq.f32.partialorder %v5279, 0.0
        %v5360 = vand.u32 %v5279, 2147483648
        %v5361 = vsel %vm5359, %v5360, %v5358
        %v5362 = vrsqrt.pop %v5280
        %v5363 = vmul.f32 %v5280, %v5362
        %vm5364 = vcmp.eq.f32.partialorder %v5280, inf
        %v5365 = vsel %vm5364, %v5280, %v5363
        %vm5366 = vcmp.eq.f32.partialorder %v5280, 0.0
        %v5367 = vand.u32 %v5280, 2147483648
        %v5368 = vsel %vm5366, %v5367, %v5365
        %v5369 = vrsqrt.pop %v5281
        %v5370 = vmul.f32 %v5281, %v5369
        %vm5371 = vcmp.eq.f32.partialorder %v5281, inf
        %v5372 = vsel %vm5371, %v5281, %v5370
        %vm5373 = vcmp.eq.f32.partialorder %v5281, 0.0
        %v5374 = vand.u32 %v5281, 2147483648
        %v5375 = vsel %vm5373, %v5374, %v5372
        %v5376 = vrsqrt.pop %v5282
        %v5377 = vmul.f32 %v5282, %v5376
        %vm5378 = vcmp.eq.f32.partialorder %v5282, inf
        %v5379 = vsel %vm5378, %v5282, %v5377
        %vm5380 = vcmp.eq.f32.partialorder %v5282, 0.0
        %v5381 = vand.u32 %v5282, 2147483648
        %v5382 = vsel %vm5380, %v5381, %v5379
        %v5383 = vrsqrt.pop %v5283
        %v5384 = vmul.f32 %v5283, %v5383
        %vm5385 = vcmp.eq.f32.partialorder %v5283, inf
        %v5386 = vsel %vm5385, %v5283, %v5384
        %vm5387 = vcmp.eq.f32.partialorder %v5283, 0.0
        %v5388 = vand.u32 %v5283, 2147483648
        %v5389 = vsel %vm5387, %v5388, %v5386
        %v5390 = vrsqrt.pop %v5284
        %v5391 = vmul.f32 %v5284, %v5390
        %vm5392 = vcmp.eq.f32.partialorder %v5284, inf
        %v5393 = vsel %vm5392, %v5284, %v5391
        %vm5394 = vcmp.eq.f32.partialorder %v5284, 0.0
        %v5395 = vand.u32 %v5284, 2147483648
        %v5396 = vsel %vm5394, %v5395, %v5393
        %v5397 = vrcp.pop %v5291
        %v5398 = vmul.f32 %v5253, %v5397
        %v5399 = vrcp.pop %v5298
        %v5400 = vmul.f32 %v5254, %v5399
        %v5401 = vrcp.pop %v5305
        %v5402 = vmul.f32 %v5255, %v5401
        %v5403 = vrcp.pop %v5312
        %v5404 = vmul.f32 %v5256, %v5403
        %v5405 = vrcp.pop %v5319
        %v5406 = vmul.f32 %v5257, %v5405
        %v5407 = vrcp.pop %v5326
        %v5408 = vmul.f32 %v5258, %v5407
        %v5409 = vrcp.pop %v5333
        %v5410 = vmul.f32 %v5259, %v5409
        %v5411 = vrcp.pop %v5340
        %v5412 = vmul.f32 %v5260, %v5411
        %v5413 = vrcp.pop %v5347
        %v5414 = vmul.f32 %v5261, %v5413
        %v5415 = vrcp.pop %v5354
        %v5416 = vmul.f32 %v5262, %v5415
        %v5417 = vrcp.pop %v5361
        %v5418 = vmul.f32 %v5263, %v5417
        %v5419 = vrcp.pop %v5368
        %v5420 = vmul.f32 %v5264, %v5419
        %v5421 = vrcp.pop %v5375
        %v5422 = vmul.f32 %v5265, %v5421
        %v5423 = vrcp.pop %v5382
        %v5424 = vmul.f32 %v5266, %v5423
        %v5425 = vrcp.pop %v5389
        %v5426 = vmul.f32 %v5267, %v5425
        %v5427 = vrcp.pop %v5396
        %v5428 = vmul.f32 %v5268, %v5427
        %v5430 = vlaneseq
        %v5431 = vshrl.u32 %v5430, 7
        %v5432 = vsub.s32 0, %v5431
        %v5433 = vrot.slane %v5086, %v5432
        %v5435 = vadd.f32 %v5398, %v5433
        %v5436 = vadd.f32 %v5400, %v5433
        %v5437 = vadd.f32 %v5402, %v5433
        %v5438 = vadd.f32 %v5404, %v5433
        %v5439 = vadd.f32 %v5406, %v5433
        %v5440 = vadd.f32 %v5408, %v5433
        %v5441 = vadd.f32 %v5410, %v5433
        %v5442 = vadd.f32 %v5412, %v5433
        %v5443 = vadd.f32 %v5414, %v5433
        %v5444 = vadd.f32 %v5416, %v5433
        %v5445 = vadd.f32 %v5418, %v5433
        %v5446 = vadd.f32 %v5420, %v5433
        %v5447 = vadd.f32 %v5422, %v5433
        %v5448 = vadd.f32 %v5424, %v5433
        %v5449 = vadd.f32 %v5426, %v5433
        %v5450 = vadd.f32 %v5428, %v5433
        %v5451 = vsel %vm779, %v5448, 0.0
        %v5452 = vsel %vm780, %v5449, 0.0
        %v5453 = vsel %vm781, %v5450, 0.0
        %v5454 = vsel %vm782, %v5435, 0.0
        %v5455 = vsel %vm783, %v5436, 0.0
        %v5456 = vsel %vm784, %v5437, 0.0
        %v5457 = vsel %vm785, %v5438, 0.0
        %v5458 = vsel %vm786, %v5439, 0.0
        %v5459 = vsel %vm787, %v5440, 0.0
        %v5460 = vsel %vm788, %v5441, 0.0
        %v5461 = vsel %vm789, %v5442, 0.0
        %v5462 = vsel %vm790, %v5443, 0.0
        %v5463 = vsel %vm791, %v5444, 0.0
        %v5464 = vsel %vm792, %v5445, 0.0
        %v5465 = vsel %vm793, %v5446, 0.0
        %v5466 = vsel %vm794, %v5447, 0.0
        %v5467 = vsel %vm843, %v5449, 0.0
        %v5468 = vsel %vm844, %v5450, 0.0
        %v5469 = vsel %vm845, %v5435, 0.0
        %v5470 = vsel %vm846, %v5436, 0.0
        %v5471 = vsel %vm847, %v5437, 0.0
        %v5472 = vsel %vm848, %v5438, 0.0
        %v5473 = vsel %vm849, %v5439, 0.0
        %v5474 = vsel %vm850, %v5440, 0.0
        %v5475 = vsel %vm851, %v5441, 0.0
        %v5476 = vsel %vm852, %v5442, 0.0
        %v5477 = vsel %vm853, %v5443, 0.0
        %v5478 = vsel %vm854, %v5444, 0.0
        %v5479 = vsel %vm855, %v5445, 0.0
        %v5480 = vsel %vm856, %v5446, 0.0
        %v5481 = vsel %vm857, %v5447, 0.0
        %v5482 = vsel %vm858, %v5448, 0.0
        %v5483 = vsel %vm907, %v5450, 0.0
        %v5484 = vsel %vm908, %v5435, 0.0
        %v5485 = vsel %vm909, %v5436, 0.0
        %v5486 = vsel %vm910, %v5437, 0.0
        %v5487 = vsel %vm911, %v5438, 0.0
        %v5488 = vsel %vm912, %v5439, 0.0
        %v5489 = vsel %vm913, %v5440, 0.0
        %v5490 = vsel %vm914, %v5441, 0.0
        %v5491 = vsel %vm915, %v5442, 0.0
        %v5492 = vsel %vm916, %v5443, 0.0
        %v5493 = vsel %vm917, %v5444, 0.0
        %v5494 = vsel %vm918, %v5445, 0.0
        %v5495 = vsel %vm919, %v5446, 0.0
        %v5496 = vsel %vm920, %v5447, 0.0
        %v5497 = vsel %vm921, %v5448, 0.0
        %v5498 = vsel %vm922, %v5449, 0.0
        %5515 = vrot.lane.b32.xlu0 %v5467, 16
        %v5516 = vpop.permute.xlu0 %5515
        %5517 = vrot.lane.b32.xlu0 %v5468, 16
        %v5518 = vpop.permute.xlu0 %5517
        %5519 = vrot.lane.b32.xlu0 %v5469, 16
        %v5520 = vpop.permute.xlu0 %5519
        %5521 = vrot.lane.b32.xlu0 %v5470, 16
        %v5522 = vpop.permute.xlu0 %5521
        %5523 = vrot.lane.b32.xlu0 %v5471, 16
        %v5524 = vpop.permute.xlu0 %5523
        %5525 = vrot.lane.b32.xlu0 %v5472, 16
        %v5526 = vpop.permute.xlu0 %5525
        %5527 = vrot.lane.b32.xlu0 %v5473, 16
        %v5528 = vpop.permute.xlu0 %5527
        %5529 = vrot.lane.b32.xlu0 %v5474, 16
        %v5530 = vpop.permute.xlu0 %5529
        %5531 = vrot.lane.b32.xlu0 %v5475, 16
        %v5532 = vpop.permute.xlu0 %5531
        %5533 = vrot.lane.b32.xlu0 %v5476, 16
        %v5534 = vpop.permute.xlu0 %5533
        %5535 = vrot.lane.b32.xlu0 %v5477, 16
        %v5536 = vpop.permute.xlu0 %5535
        %5537 = vrot.lane.b32.xlu0 %v5478, 16
        %v5538 = vpop.permute.xlu0 %5537
        %5539 = vrot.lane.b32.xlu0 %v5479, 16
        %v5540 = vpop.permute.xlu0 %5539
        %5541 = vrot.lane.b32.xlu0 %v5480, 16
        %v5542 = vpop.permute.xlu0 %5541
        %5543 = vrot.lane.b32.xlu0 %v5481, 16
        %v5544 = vpop.permute.xlu0 %5543
        %5545 = vrot.lane.b32.xlu0 %v5482, 16
        %v5546 = vpop.permute.xlu0 %5545
        %5579 = vrot.lane.b32.xlu0 %v5483, 32
        %v5580 = vpop.permute.xlu0 %5579
        %5581 = vrot.lane.b32.xlu0 %v5484, 32
        %v5582 = vpop.permute.xlu0 %5581
        %5583 = vrot.lane.b32.xlu0 %v5485, 32
        %v5584 = vpop.permute.xlu0 %5583
        %5585 = vrot.lane.b32.xlu0 %v5486, 32
        %v5586 = vpop.permute.xlu0 %5585
        %5587 = vrot.lane.b32.xlu0 %v5487, 32
        %v5588 = vpop.permute.xlu0 %5587
        %5589 = vrot.lane.b32.xlu0 %v5488, 32
        %v5590 = vpop.permute.xlu0 %5589
        %5591 = vrot.lane.b32.xlu0 %v5489, 32
        %v5592 = vpop.permute.xlu0 %5591
        %5593 = vrot.lane.b32.xlu0 %v5490, 32
        %v5594 = vpop.permute.xlu0 %5593
        %5595 = vrot.lane.b32.xlu0 %v5491, 32
        %v5596 = vpop.permute.xlu0 %5595
        %5597 = vrot.lane.b32.xlu0 %v5492, 32
        %v5598 = vpop.permute.xlu0 %5597
        %5599 = vrot.lane.b32.xlu0 %v5493, 32
        %v5600 = vpop.permute.xlu0 %5599
        %5601 = vrot.lane.b32.xlu0 %v5494, 32
        %v5602 = vpop.permute.xlu0 %5601
        %5603 = vrot.lane.b32.xlu0 %v5495, 32
        %v5604 = vpop.permute.xlu0 %5603
        %5605 = vrot.lane.b32.xlu0 %v5496, 32
        %v5606 = vpop.permute.xlu0 %5605
        %5607 = vrot.lane.b32.xlu0 %v5497, 32
        %v5608 = vpop.permute.xlu0 %5607
        %5609 = vrot.lane.b32.xlu0 %v5498, 32
        %v5610 = vpop.permute.xlu0 %5609
        %5643 = vrot.lane.b32.xlu0 %v5435, 48
        %v5644 = vpop.permute.xlu0 %5643
        %5645 = vrot.lane.b32.xlu0 %v5436, 48
        %v5646 = vpop.permute.xlu0 %5645
        %5647 = vrot.lane.b32.xlu0 %v5437, 48
        %v5648 = vpop.permute.xlu0 %5647
        %5649 = vrot.lane.b32.xlu0 %v5438, 48
        %v5650 = vpop.permute.xlu0 %5649
        %5651 = vrot.lane.b32.xlu0 %v5439, 48
        %v5652 = vpop.permute.xlu0 %5651
        %5653 = vrot.lane.b32.xlu0 %v5440, 48
        %v5654 = vpop.permute.xlu0 %5653
        %5655 = vrot.lane.b32.xlu0 %v5441, 48
        %v5656 = vpop.permute.xlu0 %5655
        %5657 = vrot.lane.b32.xlu0 %v5442, 48
        %v5658 = vpop.permute.xlu0 %5657
        %5659 = vrot.lane.b32.xlu0 %v5443, 48
        %v5660 = vpop.permute.xlu0 %5659
        %5661 = vrot.lane.b32.xlu0 %v5444, 48
        %v5662 = vpop.permute.xlu0 %5661
        %5663 = vrot.lane.b32.xlu0 %v5445, 48
        %v5664 = vpop.permute.xlu0 %5663
        %5665 = vrot.lane.b32.xlu0 %v5446, 48
        %v5666 = vpop.permute.xlu0 %5665
        %5667 = vrot.lane.b32.xlu0 %v5447, 48
        %v5668 = vpop.permute.xlu0 %5667
        %5669 = vrot.lane.b32.xlu0 %v5448, 48
        %v5670 = vpop.permute.xlu0 %5669
        %5671 = vrot.lane.b32.xlu0 %v5449, 48
        %v5672 = vpop.permute.xlu0 %5671
        %5673 = vrot.lane.b32.xlu0 %v5450, 48
        %v5674 = vpop.permute.xlu0 %5673
        %v5691 = vsel %vm1131, %v5451, %v5516
        %v5692 = vsel %vm1131, %v5452, %v5518
        %v5693 = vsel %vm1131, %v5453, %v5520
        %v5694 = vsel %vm1131, %v5454, %v5522
        %v5695 = vsel %vm1131, %v5455, %v5524
        %v5696 = vsel %vm1131, %v5456, %v5526
        %v5697 = vsel %vm1131, %v5457, %v5528
        %v5698 = vsel %vm1131, %v5458, %v5530
        %v5699 = vsel %vm1131, %v5459, %v5532
        %v5700 = vsel %vm1131, %v5460, %v5534
        %v5701 = vsel %vm1131, %v5461, %v5536
        %v5702 = vsel %vm1131, %v5462, %v5538
        %v5703 = vsel %vm1131, %v5463, %v5540
        %v5704 = vsel %vm1131, %v5464, %v5542
        %v5705 = vsel %vm1131, %v5465, %v5544
        %v5706 = vsel %vm1131, %v5466, %v5546
        %v5707 = vsel %vm1148, %v5691, %v5580
        %v5708 = vsel %vm1148, %v5692, %v5582
        %v5709 = vsel %vm1148, %v5693, %v5584
        %v5710 = vsel %vm1148, %v5694, %v5586
        %v5711 = vsel %vm1148, %v5695, %v5588
        %v5712 = vsel %vm1148, %v5696, %v5590
        %v5713 = vsel %vm1148, %v5697, %v5592
        %v5714 = vsel %vm1148, %v5698, %v5594
        %v5715 = vsel %vm1148, %v5699, %v5596
        %v5716 = vsel %vm1148, %v5700, %v5598
        %v5717 = vsel %vm1148, %v5701, %v5600
        %v5718 = vsel %vm1148, %v5702, %v5602
        %v5719 = vsel %vm1148, %v5703, %v5604
        %v5720 = vsel %vm1148, %v5704, %v5606
        %v5721 = vsel %vm1148, %v5705, %v5608
        %v5722 = vsel %vm1148, %v5706, %v5610
        %v5723 = vsel %vm1165, %v5707, %v5644
        %v5724 = vsel %vm1165, %v5708, %v5646
        %v5725 = vsel %vm1165, %v5709, %v5648
        %v5726 = vsel %vm1165, %v5710, %v5650
        %v5727 = vsel %vm1165, %v5711, %v5652
        %v5728 = vsel %vm1165, %v5712, %v5654
        %v5729 = vsel %vm1165, %v5713, %v5656
        %v5730 = vsel %vm1165, %v5714, %v5658
        %v5731 = vsel %vm1165, %v5715, %v5660
        %v5732 = vsel %vm1165, %v5716, %v5662
        %v5733 = vsel %vm1165, %v5717, %v5664
        %v5734 = vsel %vm1165, %v5718, %v5666
        %v5735 = vsel %vm1165, %v5719, %v5668
        %v5736 = vsel %vm1165, %v5720, %v5670
        %v5737 = vsel %vm1165, %v5721, %v5672
        %v5738 = vsel %vm1165, %v5722, %v5674
        %s5739 = scalar_lea.vmem %s3, 128
        %v5740 = vld [vmem:[%s5739] sm:$0xff]
        %v5741 = vld [vmem:[%s5739 + $0x8] sm:$0xff]
        %v5742 = vld [vmem:[%s5739 + $0x10] sm:$0xff]
        %v5743 = vld [vmem:[%s5739 + $0x18] sm:$0xff]
        %v5744 = vld [vmem:[%s5739 + $0x20] sm:$0xff]
        %v5745 = vld [vmem:[%s5739 + $0x28] sm:$0xff]
        %v5746 = vld [vmem:[%s5739 + $0x30] sm:$0xff]
        %v5747 = vld [vmem:[%s5739 + $0x38] sm:$0xff]
        %v5748 = vld [vmem:[%s5739 + $0x40] sm:$0xff]
        %v5749 = vld [vmem:[%s5739 + $0x48] sm:$0xff]
        %v5750 = vld [vmem:[%s5739 + $0x50] sm:$0xff]
        %v5751 = vld [vmem:[%s5739 + $0x58] sm:$0xff]
        %v5752 = vld [vmem:[%s5739 + $0x60] sm:$0xff]
        %v5753 = vld [vmem:[%s5739 + $0x68] sm:$0xff]
        %v5754 = vld [vmem:[%s5739 + $0x70] sm:$0xff]
        %v5755 = vld [vmem:[%s5739 + $0x78] sm:$0xff]
        %s5756 = scalar_lea.vmem %s4, 2
        %v5757 = vld [vmem:[%s5756] sm:$0x3]
        %v5759 = vlaneseq
        %v5760 = vshrl.u32 %v5759, 7
        %v5761 = vsub.s32 0, %v5760
        %v5762 = vrot.slane %v5757, %v5761
        %v5763 = vlaneseq
        %v5764 = vshrl.u32 %v5763, 7
        %v5765 = vsub.s32 1, %v5764
        %v5766 = vrot.slane %v5757, %v5765
        %v5770 = vsel %vm1210, %v5723, 0
        %v5773 = vsel %vm1210, %v5724, 0
        %v5776 = vsel %vm1210, %v5725, 0
        %v5779 = vsel %vm1210, %v5726, 0
        %v5782 = vsel %vm1210, %v5727, 0
        %v5785 = vsel %vm1210, %v5728, 0
        %v5788 = vsel %vm1210, %v5729, 0
        %v5791 = vsel %vm1210, %v5730, 0
        %v5794 = vsel %vm1210, %v5731, 0
        %v5797 = vsel %vm1210, %v5732, 0
        %v5800 = vsel %vm1210, %v5733, 0
        %v5803 = vsel %vm1210, %v5734, 0
        %v5806 = vsel %vm1210, %v5735, 0
        %v5809 = vsel %vm1210, %v5736, 0
        %v5812 = vsel %vm1210, %v5737, 0
        %v5815 = vsel %vm1210, %v5738, 0
        %5817 = vmatprep.subr.mxu0 %v5741
        %5818 = vmatpush1.msra.mxu0 %v5740
        %5819 = vmatprep.subr.mxu0 %v5743
        %5820 = vmatpush1.msra.mxu0 %v5742
        %5821 = vmatprep.subr.mxu0 %v5745
        %5822 = vmatpush1.msra.mxu0 %v5744
        %5823 = vmatprep.subr.mxu0 %v5747
        %5824 = vmatpush1.msra.mxu0 %v5746
        %5825 = vmatprep.subr.mxu0 %v5749
        %5826 = vmatpush1.msra.mxu0 %v5748
        %5827 = vmatprep.subr.mxu0 %v5751
        %5828 = vmatpush1.msra.mxu0 %v5750
        %5829 = vmatprep.subr.mxu0 %v5753
        %5830 = vmatpush1.msra.mxu0 %v5752
        %5831 = vmatprep.subr.mxu0 %v5755
        %5832 = vmatpush1.msra.mxu0 %v5754
        %5833 = vmatprep.subr.mxu0 0.0
        %5834 = vmatpush1.msra.mxu0 0.0
        %5835 = vmatprep.subr.mxu0 0.0
        %5836 = vmatpush1.msra.mxu0 0.0
        %5837 = vmatprep.subr.mxu0 0.0
        %5838 = vmatpush1.msra.mxu0 0.0
        %5839 = vmatprep.subr.mxu0 0.0
        %5840 = vmatpush1.msra.mxu0 0.0
        %5841 = vmatprep.subr.mxu0 0.0
        %5842 = vmatpush1.msra.mxu0 0.0
        %5843 = vmatprep.subr.mxu0 0.0
        %5844 = vmatpush1.msra.mxu0 0.0
        %5845 = vmatprep.subr.mxu0 0.0
        %5846 = vmatpush1.msra.mxu0 0.0
        %5847 = vmatprep.subr.mxu0 0.0
        %5848 = vmatpush1.msra.mxu0 0.0
        %5849 = vmatprep.subr.mxu0 0.0
        %5850 = vmatpush1.msra.mxu0 0.0
        %5851 = vmatprep.subr.mxu0 0.0
        %5852 = vmatpush1.msra.mxu0 0.0
        %5853 = vmatprep.subr.mxu0 0.0
        %5854 = vmatpush1.msra.mxu0 0.0
        %5855 = vmatprep.subr.mxu0 0.0
        %5856 = vmatpush1.msra.mxu0 0.0
        %5857 = vmatprep.subr.mxu0 0.0
        %5858 = vmatpush1.msra.mxu0 0.0
        %5859 = vmatprep.subr.mxu0 0.0
        %5860 = vmatpush1.msra.mxu0 0.0
        %5861 = vmatprep.subr.mxu0 0.0
        %5862 = vmatpush1.msra.mxu0 0.0
        %5863 = vmatprep.subr.mxu0 0.0
        %5864 = vmatpush1.msra.mxu0 0.0
        %5865 = vmatprep.subr.mxu0 0.0
        %5866 = vmatpush1.msra.mxu0 0.0
        %5867 = vmatprep.subr.mxu0 0.0
        %5868 = vmatpush1.msra.mxu0 0.0
        %5869 = vmatprep.subr.mxu0 0.0
        %5870 = vmatpush1.msra.mxu0 0.0
        %5871 = vmatprep.subr.mxu0 0.0
        %5872 = vmatpush1.msra.mxu0 0.0
        %5873 = vmatprep.subr.mxu0 0.0
        %5874 = vmatpush1.msra.mxu0 0.0
        %5875 = vmatprep.subr.mxu0 0.0
        %5876 = vmatpush1.msra.mxu0 0.0
        %5877 = vmatprep.subr.mxu0 0.0
        %5878 = vmatpush1.msra.mxu0 0.0
        %5879 = vmatprep.subr.mxu0 0.0
        %5880 = vmatpush1.msra.mxu0 0.0
        %5881 = vmatprep.mubr.f32.mxu0 0.0
        %5882 = vmatmul.mubr.f32.gmra.mrb[0].mxu0 %v5770
        %v5883 = vpop.f32.mrb[0].mxu0
        %v5884 = vadd.f32 %v5762, %v5883
        %v5885 = vpop.f32.mrb[0].mxu0
        %v5886 = vadd.f32 %v5766, %v5885
        %5887 = vmatprep.mubr.f32.mxu0 0.0
        %5888 = vmatmul.mubr.f32.gmra.mrb[0].mxu0 %v5773
        %v5889 = vpop.f32.mrb[0].mxu0
        %v5890 = vadd.f32 %v5762, %v5889
        %v5891 = vpop.f32.mrb[0].mxu0
        %v5892 = vadd.f32 %v5766, %v5891
        %5893 = vmatprep.mubr.f32.mxu0 0.0
        %5894 = vmatmul.mubr.f32.gmra.mrb[0].mxu0 %v5776
        %v5895 = vpop.f32.mrb[0].mxu0
        %v5896 = vadd.f32 %v5762, %v5895
        %v5897 = vpop.f32.mrb[0].mxu0
        %v5898 = vadd.f32 %v5766, %v5897
        %5899 = vmatprep.mubr.f32.mxu0 0.0
        %5900 = vmatmul.mubr.f32.gmra.mrb[0].mxu0 %v5779
        %v5901 = vpop.f32.mrb[0].mxu0
        %v5902 = vadd.f32 %v5762, %v5901
        %v5903 = vpop.f32.mrb[0].mxu0
        %v5904 = vadd.f32 %v5766, %v5903
        %5905 = vmatprep.mubr.f32.mxu0 0.0
        %5906 = vmatmul.mubr.f32.gmra.mrb[0].mxu0 %v5782
        %v5907 = vpop.f32.mrb[0].mxu0
        %v5908 = vadd.f32 %v5762, %v5907
        %v5909 = vpop.f32.mrb[0].mxu0
        %v5910 = vadd.f32 %v5766, %v5909
        %5911 = vmatprep.mubr.f32.mxu0 0.0
        %5912 = vmatmul.mubr.f32.gmra.mrb[0].mxu0 %v5785
        %v5913 = vpop.f32.mrb[0].mxu0
        %v5914 = vadd.f32 %v5762, %v5913
        %v5915 = vpop.f32.mrb[0].mxu0
        %v5916 = vadd.f32 %v5766, %v5915
        %5917 = vmatprep.mubr.f32.mxu0 0.0
        %5918 = vmatmul.mubr.f32.gmra.mrb[0].mxu0 %v5788
        %v5919 = vpop.f32.mrb[0].mxu0
        %v5920 = vadd.f32 %v5762, %v5919
        %v5921 = vpop.f32.mrb[0].mxu0
        %v5922 = vadd.f32 %v5766, %v5921
        %5923 = vmatprep.mubr.f32.mxu0 0.0
        %5924 = vmatmul.mubr.f32.gmra.mrb[0].mxu0 %v5791
        %v5925 = vpop.f32.mrb[0].mxu0
        %v5926 = vadd.f32 %v5762, %v5925
        %v5927 = vpop.f32.mrb[0].mxu0
        %v5928 = vadd.f32 %v5766, %v5927
        %5929 = vmatprep.mubr.f32.mxu0 0.0
        %5930 = vmatmul.mubr.f32.gmra.mrb[0].mxu0 %v5794
        %v5931 = vpop.f32.mrb[0].mxu0
        %v5932 = vadd.f32 %v5762, %v5931
        %v5933 = vpop.f32.mrb[0].mxu0
        %v5934 = vadd.f32 %v5766, %v5933
        %5935 = vmatprep.mubr.f32.mxu0 0.0
        %5936 = vmatmul.mubr.f32.gmra.mrb[0].mxu0 %v5797
        %v5937 = vpop.f32.mrb[0].mxu0
        %v5938 = vadd.f32 %v5762, %v5937
        %v5939 = vpop.f32.mrb[0].mxu0
        %v5940 = vadd.f32 %v5766, %v5939
        %5941 = vmatprep.mubr.f32.mxu0 0.0
        %5942 = vmatmul.mubr.f32.gmra.mrb[0].mxu0 %v5800
        %v5943 = vpop.f32.mrb[0].mxu0
        %v5944 = vadd.f32 %v5762, %v5943
        %v5945 = vpop.f32.mrb[0].mxu0
        %v5946 = vadd.f32 %v5766, %v5945
        %5947 = vmatprep.mubr.f32.mxu0 0.0
        %5948 = vmatmul.mubr.f32.gmra.mrb[0].mxu0 %v5803
        %v5949 = vpop.f32.mrb[0].mxu0
        %v5950 = vadd.f32 %v5762, %v5949
        %v5951 = vpop.f32.mrb[0].mxu0
        %v5952 = vadd.f32 %v5766, %v5951
        %5953 = vmatprep.mubr.f32.mxu0 0.0
        %5954 = vmatmul.mubr.f32.gmra.mrb[0].mxu0 %v5806
        %v5955 = vpop.f32.mrb[0].mxu0
        %v5956 = vadd.f32 %v5762, %v5955
        %v5957 = vpop.f32.mrb[0].mxu0
        %v5958 = vadd.f32 %v5766, %v5957
        %5959 = vmatprep.mubr.f32.mxu0 0.0
        %5960 = vmatmul.mubr.f32.gmra.mrb[0].mxu0 %v5809
        %v5961 = vpop.f32.mrb[0].mxu0
        %v5962 = vadd.f32 %v5762, %v5961
        %v5963 = vpop.f32.mrb[0].mxu0
        %v5964 = vadd.f32 %v5766, %v5963
        %5965 = vmatprep.mubr.f32.mxu0 0.0
        %5966 = vmatmul.mubr.f32.gmra.mrb[0].mxu0 %v5812
        %v5967 = vpop.f32.mrb[0].mxu0
        %v5968 = vadd.f32 %v5762, %v5967
        %v5969 = vpop.f32.mrb[0].mxu0
        %v5970 = vadd.f32 %v5766, %v5969
        %5971 = vmatprep.mubr.f32.mxu0 0.0
        %5972 = vmatmul.mubr.f32.gmra.mrb[0].mxu0 %v5815
        %v5973 = vpop.f32.mrb[0].mxu0
        %v5974 = vadd.f32 %v5762, %v5973
        %v5975 = vpop.f32.mrb[0].mxu0
        %v5976 = vadd.f32 %v5766, %v5975
        %5977 = vdwg.mxu0
        %5994 = vrot.lane.b32.xlu0 %v5884, 64
        %v5995 = vpop.permute.xlu0 %5994
        %5996 = vrot.lane.b32.xlu0 %v5890, 64
        %v5997 = vpop.permute.xlu0 %5996
        %5998 = vrot.lane.b32.xlu0 %v5896, 64
        %v5999 = vpop.permute.xlu0 %5998
        %6000 = vrot.lane.b32.xlu0 %v5902, 64
        %v6001 = vpop.permute.xlu0 %6000
        %6002 = vrot.lane.b32.xlu0 %v5908, 64
        %v6003 = vpop.permute.xlu0 %6002
        %6004 = vrot.lane.b32.xlu0 %v5914, 64
        %v6005 = vpop.permute.xlu0 %6004
        %6006 = vrot.lane.b32.xlu0 %v5920, 64
        %v6007 = vpop.permute.xlu0 %6006
        %6008 = vrot.lane.b32.xlu0 %v5926, 64
        %v6009 = vpop.permute.xlu0 %6008
        %6010 = vrot.lane.b32.xlu0 %v5932, 64
        %v6011 = vpop.permute.xlu0 %6010
        %6012 = vrot.lane.b32.xlu0 %v5938, 64
        %v6013 = vpop.permute.xlu0 %6012
        %6014 = vrot.lane.b32.xlu0 %v5944, 64
        %v6015 = vpop.permute.xlu0 %6014
        %6016 = vrot.lane.b32.xlu0 %v5950, 64
        %v6017 = vpop.permute.xlu0 %6016
        %6018 = vrot.lane.b32.xlu0 %v5956, 64
        %v6019 = vpop.permute.xlu0 %6018
        %6020 = vrot.lane.b32.xlu0 %v5962, 64
        %v6021 = vpop.permute.xlu0 %6020
        %6022 = vrot.lane.b32.xlu0 %v5968, 64
        %v6023 = vpop.permute.xlu0 %6022
        %6024 = vrot.lane.b32.xlu0 %v5974, 64
        %v6025 = vpop.permute.xlu0 %6024
        %v6026 = vsel %vm1131, %v5884, 0
        %v6028 = vsel %vm1131, %v5890, 0
        %v6030 = vsel %vm1131, %v5896, 0
        %v6032 = vsel %vm1131, %v5902, 0
        %v6034 = vsel %vm1131, %v5908, 0
        %v6036 = vsel %vm1131, %v5914, 0
        %v6038 = vsel %vm1131, %v5920, 0
        %v6040 = vsel %vm1131, %v5926, 0
        %v6042 = vsel %vm1131, %v5932, 0
        %v6044 = vsel %vm1131, %v5938, 0
        %v6046 = vsel %vm1131, %v5944, 0
        %v6048 = vsel %vm1131, %v5950, 0
        %v6050 = vsel %vm1131, %v5956, 0
        %v6052 = vsel %vm1131, %v5962, 0
        %v6054 = vsel %vm1131, %v5968, 0
        %v6056 = vsel %vm1131, %v5974, 0
        %v6058 = vsel %vm1131, %v5995, 0
        %v6060 = vsel %vm1131, %v5997, 0
        %v6062 = vsel %vm1131, %v5999, 0
        %v6064 = vsel %vm1131, %v6001, 0
        %v6066 = vsel %vm1131, %v6003, 0
        %v6068 = vsel %vm1131, %v6005, 0
        %v6070 = vsel %vm1131, %v6007, 0
        %v6072 = vsel %vm1131, %v6009, 0
        %v6074 = vsel %vm1131, %v6011, 0
        %v6076 = vsel %vm1131, %v6013, 0
        %v6078 = vsel %vm1131, %v6015, 0
        %v6080 = vsel %vm1131, %v6017, 0
        %v6082 = vsel %vm1131, %v6019, 0
        %v6084 = vsel %vm1131, %v6021, 0
        %v6086 = vsel %vm1131, %v6023, 0
        %v6088 = vsel %vm1131, %v6025, 0
        %6090 = vmatprep.subr.mxu0 0.0
        %6091 = vmatpush1.xpose.msra.mxu0 %v6058
        %6092 = vmatprep.subr.mxu0 0.0
        %6093 = vmatpush1.xpose.msra.mxu0 %v6060
        %6094 = vmatprep.subr.mxu0 0.0
        %6095 = vmatpush1.xpose.msra.mxu0 %v6062
        %6096 = vmatprep.subr.mxu0 0.0
        %6097 = vmatpush1.xpose.msra.mxu0 %v6064
        %6098 = vmatprep.subr.mxu0 0.0
        %6099 = vmatpush1.xpose.msra.mxu0 %v6066
        %6100 = vmatprep.subr.mxu0 0.0
        %6101 = vmatpush1.xpose.msra.mxu0 %v6068
        %6102 = vmatprep.subr.mxu0 0.0
        %6103 = vmatpush1.xpose.msra.mxu0 %v6070
        %6104 = vmatprep.subr.mxu0 0.0
        %6105 = vmatpush1.xpose.msra.mxu0 %v6072
        %6106 = vmatprep.subr.mxu0 0.0
        %6107 = vmatpush1.xpose.msra.mxu0 %v6074
        %6108 = vmatprep.subr.mxu0 0.0
        %6109 = vmatpush1.xpose.msra.mxu0 %v6076
        %6110 = vmatprep.subr.mxu0 0.0
        %6111 = vmatpush1.xpose.msra.mxu0 %v6078
        %6112 = vmatprep.subr.mxu0 0.0
        %6113 = vmatpush1.xpose.msra.mxu0 %v6080
        %6114 = vmatprep.subr.mxu0 0.0
        %6115 = vmatpush1.xpose.msra.mxu0 %v6082
        %6116 = vmatprep.subr.mxu0 0.0
        %6117 = vmatpush1.xpose.msra.mxu0 %v6084
        %6118 = vmatprep.subr.mxu0 0.0
        %6119 = vmatpush1.xpose.msra.mxu0 %v6086
        %6120 = vmatprep.subr.mxu0 0.0
        %6121 = vmatpush1.xpose.msra.mxu0 %v6088
        %6122 = vmatprep.subr.mxu0 0.0
        %6123 = vmatpush1.xpose.msra.mxu0 0.0
        %6124 = vmatprep.subr.mxu0 0.0
        %6125 = vmatpush1.xpose.msra.mxu0 0.0
        %6126 = vmatprep.subr.mxu0 0.0
        %6127 = vmatpush1.xpose.msra.mxu0 0.0
        %6128 = vmatprep.subr.mxu0 0.0
        %6129 = vmatpush1.xpose.msra.mxu0 0.0
        %6130 = vmatprep.subr.mxu0 0.0
        %6131 = vmatpush1.xpose.msra.mxu0 0.0
        %6132 = vmatprep.subr.mxu0 0.0
        %6133 = vmatpush1.xpose.msra.mxu0 0.0
        %6134 = vmatprep.subr.mxu0 0.0
        %6135 = vmatpush1.xpose.msra.mxu0 0.0
        %6136 = vmatprep.subr.mxu0 0.0
        %6137 = vmatpush1.xpose.msra.mxu0 0.0
        %6138 = vmatprep.subr.mxu0 0.0
        %6139 = vmatpush1.xpose.msra.mxu0 0.0
        %6140 = vmatprep.subr.mxu0 0.0
        %6141 = vmatpush1.xpose.msra.mxu0 0.0
        %6142 = vmatprep.subr.mxu0 0.0
        %6143 = vmatpush1.xpose.msra.mxu0 0.0
        %6144 = vmatprep.subr.mxu0 0.0
        %6145 = vmatpush1.xpose.msra.mxu0 0.0
        %6146 = vmatprep.subr.mxu0 0.0
        %6147 = vmatpush1.xpose.msra.mxu0 0.0
        %6148 = vmatprep.subr.mxu0 0.0
        %6149 = vmatpush1.xpose.msra.mxu0 0.0
        %6150 = vmatprep.subr.mxu0 0.0
        %6151 = vmatpush1.xpose.msra.mxu0 0.0
        %6152 = vmatprep.subr.mxu0 0.0
        %6153 = vmatpush1.xpose.msra.mxu0 0.0
        %6154 = vmatprep.mubr.f32.mxu0 0.0
        %6155 = vmatmul.mubr.f32.gmra.mrb[0].mxu0 %v6026
        %v6156 = vpop.f32.mrb[0].mxu0
        %v6157 = vadd.f32 %v714, %v6156
        %v6158 = vpop.f32.mrb[0].mxu0
        %6159 = vmatprep.mubr.f32.mxu0 0.0
        %6160 = vmatmul.mubr.f32.gmra.mrb[0].mxu0 %v6028
        %v6161 = vpop.f32.mrb[0].mxu0
        %v6162 = vadd.f32 %v715, %v6161
        %v6163 = vpop.f32.mrb[0].mxu0
        %6164 = vmatprep.mubr.f32.mxu0 0.0
        %6165 = vmatmul.mubr.f32.gmra.mrb[0].mxu0 %v6030
        %v6166 = vpop.f32.mrb[0].mxu0
        %v6167 = vadd.f32 %v716, %v6166
        %v6168 = vpop.f32.mrb[0].mxu0
        %6169 = vmatprep.mubr.f32.mxu0 0.0
        %6170 = vmatmul.mubr.f32.gmra.mrb[0].mxu0 %v6032
        %v6171 = vpop.f32.mrb[0].mxu0
        %v6172 = vadd.f32 %v717, %v6171
        %v6173 = vpop.f32.mrb[0].mxu0
        %6174 = vmatprep.mubr.f32.mxu0 0.0
        %6175 = vmatmul.mubr.f32.gmra.mrb[0].mxu0 %v6034
        %v6176 = vpop.f32.mrb[0].mxu0
        %v6177 = vadd.f32 %v718, %v6176
        %v6178 = vpop.f32.mrb[0].mxu0
        %6179 = vmatprep.mubr.f32.mxu0 0.0
        %6180 = vmatmul.mubr.f32.gmra.mrb[0].mxu0 %v6036
        %v6181 = vpop.f32.mrb[0].mxu0
        %v6182 = vadd.f32 %v719, %v6181
        %v6183 = vpop.f32.mrb[0].mxu0
        %6184 = vmatprep.mubr.f32.mxu0 0.0
        %6185 = vmatmul.mubr.f32.gmra.mrb[0].mxu0 %v6038
        %v6186 = vpop.f32.mrb[0].mxu0
        %v6187 = vadd.f32 %v720, %v6186
        %v6188 = vpop.f32.mrb[0].mxu0
        %6189 = vmatprep.mubr.f32.mxu0 0.0
        %6190 = vmatmul.mubr.f32.gmra.mrb[0].mxu0 %v6040
        %v6191 = vpop.f32.mrb[0].mxu0
        %v6192 = vadd.f32 %v721, %v6191
        %v6193 = vpop.f32.mrb[0].mxu0
        %6194 = vmatprep.mubr.f32.mxu0 0.0
        %6195 = vmatmul.mubr.f32.gmra.mrb[0].mxu0 %v6042
        %v6196 = vpop.f32.mrb[0].mxu0
        %v6197 = vadd.f32 %v722, %v6196
        %v6198 = vpop.f32.mrb[0].mxu0
        %6199 = vmatprep.mubr.f32.mxu0 0.0
        %6200 = vmatmul.mubr.f32.gmra.mrb[0].mxu0 %v6044
        %v6201 = vpop.f32.mrb[0].mxu0
        %v6202 = vadd.f32 %v723, %v6201
        %v6203 = vpop.f32.mrb[0].mxu0
        %6204 = vmatprep.mubr.f32.mxu0 0.0
        %6205 = vmatmul.mubr.f32.gmra.mrb[0].mxu0 %v6046
        %v6206 = vpop.f32.mrb[0].mxu0
        %v6207 = vadd.f32 %v724, %v6206
        %v6208 = vpop.f32.mrb[0].mxu0
        %6209 = vmatprep.mubr.f32.mxu0 0.0
        %6210 = vmatmul.mubr.f32.gmra.mrb[0].mxu0 %v6048
        %v6211 = vpop.f32.mrb[0].mxu0
        %v6212 = vadd.f32 %v725, %v6211
        %v6213 = vpop.f32.mrb[0].mxu0
        %6214 = vmatprep.mubr.f32.mxu0 0.0
        %6215 = vmatmul.mubr.f32.gmra.mrb[0].mxu0 %v6050
        %v6216 = vpop.f32.mrb[0].mxu0
        %v6217 = vadd.f32 %v726, %v6216
        %v6218 = vpop.f32.mrb[0].mxu0
        %6219 = vmatprep.mubr.f32.mxu0 0.0
        %6220 = vmatmul.mubr.f32.gmra.mrb[0].mxu0 %v6052
        %v6221 = vpop.f32.mrb[0].mxu0
        %v6222 = vadd.f32 %v727, %v6221
        %v6223 = vpop.f32.mrb[0].mxu0
        %6224 = vmatprep.mubr.f32.mxu0 0.0
        %6225 = vmatmul.mubr.f32.gmra.mrb[0].mxu0 %v6054
        %v6226 = vpop.f32.mrb[0].mxu0
        %v6227 = vadd.f32 %v728, %v6226
        %v6228 = vpop.f32.mrb[0].mxu0
        %6229 = vmatprep.mubr.f32.mxu0 0.0
        %6230 = vmatmul.mubr.f32.gmra.mrb[0].mxu0 %v6056
        %v6231 = vpop.f32.mrb[0].mxu0
        %v6232 = vadd.f32 %v729, %v6231
        %v6233 = vpop.f32.mrb[0].mxu0
        %6234 = vdwg.mxu0
        %6235 = vmax.xlane.f32.xlu0 %v6157
        %v6236 = vpop.xlane.xlu0 %6235
        %6237 = vmax.xlane.f32.xlu0 %v6162
        %v6238 = vpop.xlane.xlu0 %6237
        %6239 = vmax.xlane.f32.xlu0 %v6167
        %v6240 = vpop.xlane.xlu0 %6239
        %6241 = vmax.xlane.f32.xlu0 %v6172
        %v6242 = vpop.xlane.xlu0 %6241
        %6243 = vmax.xlane.f32.xlu0 %v6177
        %v6244 = vpop.xlane.xlu0 %6243
        %6245 = vmax.xlane.f32.xlu0 %v6182
        %v6246 = vpop.xlane.xlu0 %6245
        %6247 = vmax.xlane.f32.xlu0 %v6187
        %v6248 = vpop.xlane.xlu0 %6247
        %6249 = vmax.xlane.f32.xlu0 %v6192
        %v6250 = vpop.xlane.xlu0 %6249
        %6251 = vmax.xlane.f32.xlu0 %v6197
        %v6252 = vpop.xlane.xlu0 %6251
        %6253 = vmax.xlane.f32.xlu0 %v6202
        %v6254 = vpop.xlane.xlu0 %6253
        %6255 = vmax.xlane.f32.xlu0 %v6207
        %v6256 = vpop.xlane.xlu0 %6255
        %6257 = vmax.xlane.f32.xlu0 %v6212
        %v6258 = vpop.xlane.xlu0 %6257
        %6259 = vmax.xlane.f32.xlu0 %v6217
        %v6260 = vpop.xlane.xlu0 %6259
        %6261 = vmax.xlane.f32.xlu0 %v6222
        %v6262 = vpop.xlane.xlu0 %6261
        %6263 = vmax.xlane.f32.xlu0 %v6227
        %v6264 = vpop.xlane.xlu0 %6263
        %6265 = vmax.xlane.f32.xlu0 %v6232
        %v6266 = vpop.xlane.xlu0 %6265
        %v6267 = vsub.f32 %v6157, %v6236
        %v6268 = vsub.f32 %v6162, %v6238
        %v6269 = vsub.f32 %v6167, %v6240
        %v6270 = vsub.f32 %v6172, %v6242
        %v6271 = vsub.f32 %v6177, %v6244
        %v6272 = vsub.f32 %v6182, %v6246
        %v6273 = vsub.f32 %v6187, %v6248
        %v6274 = vsub.f32 %v6192, %v6250
        %v6275 = vsub.f32 %v6197, %v6252
        %v6276 = vsub.f32 %v6202, %v6254
        %v6277 = vsub.f32 %v6207, %v6256
        %v6278 = vsub.f32 %v6212, %v6258
        %v6279 = vsub.f32 %v6217, %v6260
        %v6280 = vsub.f32 %v6222, %v6262
        %v6281 = vsub.f32 %v6227, %v6264
        %v6282 = vsub.f32 %v6232, %v6266
        %v6283 = vmul.f32 %v6267, 1.442695
        %v6284 = vpow.pop %v6283
        %v6285 = vmul.f32 %v6268, 1.442695
        %v6286 = vpow.pop %v6285
        %v6287 = vmul.f32 %v6269, 1.442695
        %v6288 = vpow.pop %v6287
        %v6289 = vmul.f32 %v6270, 1.442695
        %v6290 = vpow.pop %v6289
        %v6291 = vmul.f32 %v6271, 1.442695
        %v6292 = vpow.pop %v6291
        %v6293 = vmul.f32 %v6272, 1.442695
        %v6294 = vpow.pop %v6293
        %v6295 = vmul.f32 %v6273, 1.442695
        %v6296 = vpow.pop %v6295
        %v6297 = vmul.f32 %v6274, 1.442695
        %v6298 = vpow.pop %v6297
        %v6299 = vmul.f32 %v6275, 1.442695
        %v6300 = vpow.pop %v6299
        %v6301 = vmul.f32 %v6276, 1.442695
        %v6302 = vpow.pop %v6301
        %v6303 = vmul.f32 %v6277, 1.442695
        %v6304 = vpow.pop %v6303
        %v6305 = vmul.f32 %v6278, 1.442695
        %v6306 = vpow.pop %v6305
        %v6307 = vmul.f32 %v6279, 1.442695
        %v6308 = vpow.pop %v6307
        %v6309 = vmul.f32 %v6280, 1.442695
        %v6310 = vpow.pop %v6309
        %v6311 = vmul.f32 %v6281, 1.442695
        %v6312 = vpow.pop %v6311
        %v6313 = vmul.f32 %v6282, 1.442695
        %v6314 = vpow.pop %v6313
        %6315 = vadd.xlane.f32.xlu0 %v6284
        %v6316 = vpop.xlane.xlu0 %6315
        %6317 = vadd.xlane.f32.xlu0 %v6286
        %v6318 = vpop.xlane.xlu0 %6317
        %6319 = vadd.xlane.f32.xlu0 %v6288
        %v6320 = vpop.xlane.xlu0 %6319
        %6321 = vadd.xlane.f32.xlu0 %v6290
        %v6322 = vpop.xlane.xlu0 %6321
        %6323 = vadd.xlane.f32.xlu0 %v6292
        %v6324 = vpop.xlane.xlu0 %6323
        %6325 = vadd.xlane.f32.xlu0 %v6294
        %v6326 = vpop.xlane.xlu0 %6325
        %6327 = vadd.xlane.f32.xlu0 %v6296
        %v6328 = vpop.xlane.xlu0 %6327
        %6329 = vadd.xlane.f32.xlu0 %v6298
        %v6330 = vpop.xlane.xlu0 %6329
        %6331 = vadd.xlane.f32.xlu0 %v6300
        %v6332 = vpop.xlane.xlu0 %6331
        %6333 = vadd.xlane.f32.xlu0 %v6302
        %v6334 = vpop.xlane.xlu0 %6333
        %6335 = vadd.xlane.f32.xlu0 %v6304
        %v6336 = vpop.xlane.xlu0 %6335
        %6337 = vadd.xlane.f32.xlu0 %v6306
        %v6338 = vpop.xlane.xlu0 %6337
        %6339 = vadd.xlane.f32.xlu0 %v6308
        %v6340 = vpop.xlane.xlu0 %6339
        %6341 = vadd.xlane.f32.xlu0 %v6310
        %v6342 = vpop.xlane.xlu0 %6341
        %6343 = vadd.xlane.f32.xlu0 %v6312
        %v6344 = vpop.xlane.xlu0 %6343
        %6345 = vadd.xlane.f32.xlu0 %v6314
        %v6346 = vpop.xlane.xlu0 %6345
        %v6347 = vrcp.pop %v6316
        %v6348 = vrcp.pop %v6318
        %v6349 = vrcp.pop %v6320
        %v6350 = vrcp.pop %v6322
        %v6351 = vrcp.pop %v6324
        %v6352 = vrcp.pop %v6326
        %v6353 = vrcp.pop %v6328
        %v6354 = vrcp.pop %v6330
        %v6355 = vrcp.pop %v6332
        %v6356 = vrcp.pop %v6334
        %v6357 = vrcp.pop %v6336
        %v6358 = vrcp.pop %v6338
        %v6359 = vrcp.pop %v6340
        %v6360 = vrcp.pop %v6342
        %v6361 = vrcp.pop %v6344
        %v6362 = vrcp.pop %v6346
        %v6363 = vmul.f32 %v6284, %v6347
        %v6364 = vmul.f32 %v6286, %v6348
        %v6365 = vmul.f32 %v6288, %v6349
        %v6366 = vmul.f32 %v6290, %v6350
        %v6367 = vmul.f32 %v6292, %v6351
        %v6368 = vmul.f32 %v6294, %v6352
        %v6369 = vmul.f32 %v6296, %v6353
        %v6370 = vmul.f32 %v6298, %v6354
        %v6371 = vmul.f32 %v6300, %v6355
        %v6372 = vmul.f32 %v6302, %v6356
        %v6373 = vmul.f32 %v6304, %v6357
        %v6374 = vmul.f32 %v6306, %v6358
        %v6375 = vmul.f32 %v6308, %v6359
        %v6376 = vmul.f32 %v6310, %v6360
        %v6377 = vmul.f32 %v6312, %v6361
        %v6378 = vmul.f32 %v6314, %v6362
        %6379 = vmatprep.subr.mxu0 0.0
        %6380 = vmatpush1.msra.mxu0 %v5886
        %6381 = vmatprep.subr.mxu0 0.0
        %6382 = vmatpush1.msra.mxu0 %v5892
        %6383 = vmatprep.subr.mxu0 0.0
        %6384 = vmatpush1.msra.mxu0 %v5898
        %6385 = vmatprep.subr.mxu0 0.0
        %6386 = vmatpush1.msra.mxu0 %v5904
        %6387 = vmatprep.subr.mxu0 0.0
        %6388 = vmatpush1.msra.mxu0 %v5910
        %6389 = vmatprep.subr.mxu0 0.0
        %6390 = vmatpush1.msra.mxu0 %v5916
        %6391 = vmatprep.subr.mxu0 0.0
        %6392 = vmatpush1.msra.mxu0 %v5922
        %6393 = vmatprep.subr.mxu0 0.0
        %6394 = vmatpush1.msra.mxu0 %v5928
        %6395 = vmatprep.subr.mxu0 0.0
        %6396 = vmatpush1.msra.mxu0 %v5934
        %6397 = vmatprep.subr.mxu0 0.0
        %6398 = vmatpush1.msra.mxu0 %v5940
        %6399 = vmatprep.subr.mxu0 0.0
        %6400 = vmatpush1.msra.mxu0 %v5946
        %6401 = vmatprep.subr.mxu0 0.0
        %6402 = vmatpush1.msra.mxu0 %v5952
        %6403 = vmatprep.subr.mxu0 0.0
        %6404 = vmatpush1.msra.mxu0 %v5958
        %6405 = vmatprep.subr.mxu0 0.0
        %6406 = vmatpush1.msra.mxu0 %v5964
        %6407 = vmatprep.subr.mxu0 0.0
        %6408 = vmatpush1.msra.mxu0 %v5970
        %6409 = vmatprep.subr.mxu0 0.0
        %6410 = vmatpush1.msra.mxu0 %v5976
        %6411 = vmatprep.subr.mxu0 0.0
        %6412 = vmatpush1.msra.mxu0 0.0
        %6413 = vmatprep.subr.mxu0 0.0
        %6414 = vmatpush1.msra.mxu0 0.0
        %6415 = vmatprep.subr.mxu0 0.0
        %6416 = vmatpush1.msra.mxu0 0.0
        %6417 = vmatprep.subr.mxu0 0.0
        %6418 = vmatpush1.msra.mxu0 0.0
        %6419 = vmatprep.subr.mxu0 0.0
        %6420 = vmatpush1.msra.mxu0 0.0
        %6421 = vmatprep.subr.mxu0 0.0
        %6422 = vmatpush1.msra.mxu0 0.0
        %6423 = vmatprep.subr.mxu0 0.0
        %6424 = vmatpush1.msra.mxu0 0.0
        %6425 = vmatprep.subr.mxu0 0.0
        %6426 = vmatpush1.msra.mxu0 0.0
        %6427 = vmatprep.subr.mxu0 0.0
        %6428 = vmatpush1.msra.mxu0 0.0
        %6429 = vmatprep.subr.mxu0 0.0
        %6430 = vmatpush1.msra.mxu0 0.0
        %6431 = vmatprep.subr.mxu0 0.0
        %6432 = vmatpush1.msra.mxu0 0.0
        %6433 = vmatprep.subr.mxu0 0.0
        %6434 = vmatpush1.msra.mxu0 0.0
        %6435 = vmatprep.subr.mxu0 0.0
        %6436 = vmatpush1.msra.mxu0 0.0
        %6437 = vmatprep.subr.mxu0 0.0
        %6438 = vmatpush1.msra.mxu0 0.0
        %6439 = vmatprep.subr.mxu0 0.0
        %6440 = vmatpush1.msra.mxu0 0.0
        %6441 = vmatprep.subr.mxu0 0.0
        %6442 = vmatpush1.msra.mxu0 0.0
        %6443 = vmatprep.mubr.f32.mxu0 0.0
        %6444 = vmatmul.mubr.f32.gmra.mrb[0].mxu0 %v6363
        %v6445 = vpop.f32.mrb[0].mxu0
        %v6446 = vadd.f32 0.0, %v6445
        %v6447 = vpop.f32.mrb[0].mxu0
        %6448 = vmatprep.mubr.f32.mxu0 0.0
        %6449 = vmatmul.mubr.f32.gmra.mrb[0].mxu0 %v6364
        %v6450 = vpop.f32.mrb[0].mxu0
        %v6451 = vadd.f32 0.0, %v6450
        %v6452 = vpop.f32.mrb[0].mxu0
        %6453 = vmatprep.mubr.f32.mxu0 0.0
        %6454 = vmatmul.mubr.f32.gmra.mrb[0].mxu0 %v6365
        %v6455 = vpop.f32.mrb[0].mxu0
        %v6456 = vadd.f32 0.0, %v6455
        %v6457 = vpop.f32.mrb[0].mxu0
        %6458 = vmatprep.mubr.f32.mxu0 0.0
        %6459 = vmatmul.mubr.f32.gmra.mrb[0].mxu0 %v6366
        %v6460 = vpop.f32.mrb[0].mxu0
        %v6461 = vadd.f32 0.0, %v6460
        %v6462 = vpop.f32.mrb[0].mxu0
        %6463 = vmatprep.mubr.f32.mxu0 0.0
        %6464 = vmatmul.mubr.f32.gmra.mrb[0].mxu0 %v6367
        %v6465 = vpop.f32.mrb[0].mxu0
        %v6466 = vadd.f32 0.0, %v6465
        %v6467 = vpop.f32.mrb[0].mxu0
        %6468 = vmatprep.mubr.f32.mxu0 0.0
        %6469 = vmatmul.mubr.f32.gmra.mrb[0].mxu0 %v6368
        %v6470 = vpop.f32.mrb[0].mxu0
        %v6471 = vadd.f32 0.0, %v6470
        %v6472 = vpop.f32.mrb[0].mxu0
        %6473 = vmatprep.mubr.f32.mxu0 0.0
        %6474 = vmatmul.mubr.f32.gmra.mrb[0].mxu0 %v6369
        %v6475 = vpop.f32.mrb[0].mxu0
        %v6476 = vadd.f32 0.0, %v6475
        %v6477 = vpop.f32.mrb[0].mxu0
        %6478 = vmatprep.mubr.f32.mxu0 0.0
        %6479 = vmatmul.mubr.f32.gmra.mrb[0].mxu0 %v6370
        %v6480 = vpop.f32.mrb[0].mxu0
        %v6481 = vadd.f32 0.0, %v6480
        %v6482 = vpop.f32.mrb[0].mxu0
        %6483 = vmatprep.mubr.f32.mxu0 0.0
        %6484 = vmatmul.mubr.f32.gmra.mrb[0].mxu0 %v6371
        %v6485 = vpop.f32.mrb[0].mxu0
        %v6486 = vadd.f32 0.0, %v6485
        %v6487 = vpop.f32.mrb[0].mxu0
        %6488 = vmatprep.mubr.f32.mxu0 0.0
        %6489 = vmatmul.mubr.f32.gmra.mrb[0].mxu0 %v6372
        %v6490 = vpop.f32.mrb[0].mxu0
        %v6491 = vadd.f32 0.0, %v6490
        %v6492 = vpop.f32.mrb[0].mxu0
        %6493 = vmatprep.mubr.f32.mxu0 0.0
        %6494 = vmatmul.mubr.f32.gmra.mrb[0].mxu0 %v6373
        %v6495 = vpop.f32.mrb[0].mxu0
        %v6496 = vadd.f32 0.0, %v6495
        %v6497 = vpop.f32.mrb[0].mxu0
        %6498 = vmatprep.mubr.f32.mxu0 0.0
        %6499 = vmatmul.mubr.f32.gmra.mrb[0].mxu0 %v6374
        %v6500 = vpop.f32.mrb[0].mxu0
        %v6501 = vadd.f32 0.0, %v6500
        %v6502 = vpop.f32.mrb[0].mxu0
        %6503 = vmatprep.mubr.f32.mxu0 0.0
        %6504 = vmatmul.mubr.f32.gmra.mrb[0].mxu0 %v6375
        %v6505 = vpop.f32.mrb[0].mxu0
        %v6506 = vadd.f32 0.0, %v6505
        %v6507 = vpop.f32.mrb[0].mxu0
        %6508 = vmatprep.mubr.f32.mxu0 0.0
        %6509 = vmatmul.mubr.f32.gmra.mrb[0].mxu0 %v6376
        %v6510 = vpop.f32.mrb[0].mxu0
        %v6511 = vadd.f32 0.0, %v6510
        %v6512 = vpop.f32.mrb[0].mxu0
        %6513 = vmatprep.mubr.f32.mxu0 0.0
        %6514 = vmatmul.mubr.f32.gmra.mrb[0].mxu0 %v6377
        %v6515 = vpop.f32.mrb[0].mxu0
        %v6516 = vadd.f32 0.0, %v6515
        %v6517 = vpop.f32.mrb[0].mxu0
        %6518 = vmatprep.mubr.f32.mxu0 0.0
        %6519 = vmatmul.mubr.f32.gmra.mrb[0].mxu0 %v6378
        %v6520 = vpop.f32.mrb[0].mxu0
        %v6521 = vadd.f32 0.0, %v6520
        %v6522 = vpop.f32.mrb[0].mxu0
        %6523 = vdwg.mxu0
        %6524 = vrot.lane.b32.xlu0 %v5884, 112
        %v6525 = vpop.permute.xlu0 %6524
        %6526 = vrot.lane.b32.xlu0 %v5890, 112
        %v6527 = vpop.permute.xlu0 %6526
        %6528 = vrot.lane.b32.xlu0 %v5896, 112
        %v6529 = vpop.permute.xlu0 %6528
        %6530 = vrot.lane.b32.xlu0 %v5902, 112
        %v6531 = vpop.permute.xlu0 %6530
        %6532 = vrot.lane.b32.xlu0 %v5908, 112
        %v6533 = vpop.permute.xlu0 %6532
        %6534 = vrot.lane.b32.xlu0 %v5914, 112
        %v6535 = vpop.permute.xlu0 %6534
        %6536 = vrot.lane.b32.xlu0 %v5920, 112
        %v6537 = vpop.permute.xlu0 %6536
        %6538 = vrot.lane.b32.xlu0 %v5926, 112
        %v6539 = vpop.permute.xlu0 %6538
        %6540 = vrot.lane.b32.xlu0 %v5932, 112
        %v6541 = vpop.permute.xlu0 %6540
        %6542 = vrot.lane.b32.xlu0 %v5938, 112
        %v6543 = vpop.permute.xlu0 %6542
        %6544 = vrot.lane.b32.xlu0 %v5944, 112
        %v6545 = vpop.permute.xlu0 %6544
        %6546 = vrot.lane.b32.xlu0 %v5950, 112
        %v6547 = vpop.permute.xlu0 %6546
        %6548 = vrot.lane.b32.xlu0 %v5956, 112
        %v6549 = vpop.permute.xlu0 %6548
        %6550 = vrot.lane.b32.xlu0 %v5962, 112
        %v6551 = vpop.permute.xlu0 %6550
        %6552 = vrot.lane.b32.xlu0 %v5968, 112
        %v6553 = vpop.permute.xlu0 %6552
        %6554 = vrot.lane.b32.xlu0 %v5974, 112
        %v6555 = vpop.permute.xlu0 %6554
        %6556 = vrot.lane.b32.xlu0 %v5884, 48
        %v6557 = vpop.permute.xlu0 %6556
        %6558 = vrot.lane.b32.xlu0 %v5890, 48
        %v6559 = vpop.permute.xlu0 %6558
        %6560 = vrot.lane.b32.xlu0 %v5896, 48
        %v6561 = vpop.permute.xlu0 %6560
        %6562 = vrot.lane.b32.xlu0 %v5902, 48
        %v6563 = vpop.permute.xlu0 %6562
        %6564 = vrot.lane.b32.xlu0 %v5908, 48
        %v6565 = vpop.permute.xlu0 %6564
        %6566 = vrot.lane.b32.xlu0 %v5914, 48
        %v6567 = vpop.permute.xlu0 %6566
        %6568 = vrot.lane.b32.xlu0 %v5920, 48
        %v6569 = vpop.permute.xlu0 %6568
        %6570 = vrot.lane.b32.xlu0 %v5926, 48
        %v6571 = vpop.permute.xlu0 %6570
        %6572 = vrot.lane.b32.xlu0 %v5932, 48
        %v6573 = vpop.permute.xlu0 %6572
        %6574 = vrot.lane.b32.xlu0 %v5938, 48
        %v6575 = vpop.permute.xlu0 %6574
        %6576 = vrot.lane.b32.xlu0 %v5944, 48
        %v6577 = vpop.permute.xlu0 %6576
        %6578 = vrot.lane.b32.xlu0 %v5950, 48
        %v6579 = vpop.permute.xlu0 %6578
        %6580 = vrot.lane.b32.xlu0 %v5956, 48
        %v6581 = vpop.permute.xlu0 %6580
        %6582 = vrot.lane.b32.xlu0 %v5962, 48
        %v6583 = vpop.permute.xlu0 %6582
        %6584 = vrot.lane.b32.xlu0 %v5968, 48
        %v6585 = vpop.permute.xlu0 %6584
        %6586 = vrot.lane.b32.xlu0 %v5974, 48
        %v6587 = vpop.permute.xlu0 %6586
        %v6588 = vsel %vm1131, %v6525, 0
        %v6590 = vsel %vm1131, %v6527, 0
        %v6592 = vsel %vm1131, %v6529, 0
        %v6594 = vsel %vm1131, %v6531, 0
        %v6596 = vsel %vm1131, %v6533, 0
        %v6598 = vsel %vm1131, %v6535, 0
        %v6600 = vsel %vm1131, %v6537, 0
        %v6602 = vsel %vm1131, %v6539, 0
        %v6604 = vsel %vm1131, %v6541, 0
        %v6606 = vsel %vm1131, %v6543, 0
        %v6608 = vsel %vm1131, %v6545, 0
        %v6610 = vsel %vm1131, %v6547, 0
        %v6612 = vsel %vm1131, %v6549, 0
        %v6614 = vsel %vm1131, %v6551, 0
        %v6616 = vsel %vm1131, %v6553, 0
        %v6618 = vsel %vm1131, %v6555, 0
        %v6620 = vsel %vm1131, %v6557, 0
        %v6622 = vsel %vm1131, %v6559, 0
        %v6624 = vsel %vm1131, %v6561, 0
        %v6626 = vsel %vm1131, %v6563, 0
        %v6628 = vsel %vm1131, %v6565, 0
        %v6630 = vsel %vm1131, %v6567, 0
        %v6632 = vsel %vm1131, %v6569, 0
        %v6634 = vsel %vm1131, %v6571, 0
        %v6636 = vsel %vm1131, %v6573, 0
        %v6638 = vsel %vm1131, %v6575, 0
        %v6640 = vsel %vm1131, %v6577, 0
        %v6642 = vsel %vm1131, %v6579, 0
        %v6644 = vsel %vm1131, %v6581, 0
        %v6646 = vsel %vm1131, %v6583, 0
        %v6648 = vsel %vm1131, %v6585, 0
        %v6650 = vsel %vm1131, %v6587, 0
        %6652 = vmatprep.subr.mxu0 0.0
        %6653 = vmatpush1.xpose.msra.mxu0 %v6620
        %6654 = vmatprep.subr.mxu0 0.0
        %6655 = vmatpush1.xpose.msra.mxu0 %v6622
        %6656 = vmatprep.subr.mxu0 0.0
        %6657 = vmatpush1.xpose.msra.mxu0 %v6624
        %6658 = vmatprep.subr.mxu0 0.0
        %6659 = vmatpush1.xpose.msra.mxu0 %v6626
        %6660 = vmatprep.subr.mxu0 0.0
        %6661 = vmatpush1.xpose.msra.mxu0 %v6628
        %6662 = vmatprep.subr.mxu0 0.0
        %6663 = vmatpush1.xpose.msra.mxu0 %v6630
        %6664 = vmatprep.subr.mxu0 0.0
        %6665 = vmatpush1.xpose.msra.mxu0 %v6632
        %6666 = vmatprep.subr.mxu0 0.0
        %6667 = vmatpush1.xpose.msra.mxu0 %v6634
        %6668 = vmatprep.subr.mxu0 0.0
        %6669 = vmatpush1.xpose.msra.mxu0 %v6636
        %6670 = vmatprep.subr.mxu0 0.0
        %6671 = vmatpush1.xpose.msra.mxu0 %v6638
        %6672 = vmatprep.subr.mxu0 0.0
        %6673 = vmatpush1.xpose.msra.mxu0 %v6640
        %6674 = vmatprep.subr.mxu0 0.0
        %6675 = vmatpush1.xpose.msra.mxu0 %v6642
        %6676 = vmatprep.subr.mxu0 0.0
        %6677 = vmatpush1.xpose.msra.mxu0 %v6644
        %6678 = vmatprep.subr.mxu0 0.0
        %6679 = vmatpush1.xpose.msra.mxu0 %v6646
        %6680 = vmatprep.subr.mxu0 0.0
        %6681 = vmatpush1.xpose.msra.mxu0 %v6648
        %6682 = vmatprep.subr.mxu0 0.0
        %6683 = vmatpush1.xpose.msra.mxu0 %v6650
        %6684 = vmatprep.subr.mxu0 0.0
        %6685 = vmatpush1.xpose.msra.mxu0 0.0
        %6686 = vmatprep.subr.mxu0 0.0
        %6687 = vmatpush1.xpose.msra.mxu0 0.0
        %6688 = vmatprep.subr.mxu0 0.0
        %6689 = vmatpush1.xpose.msra.mxu0 0.0
        %6690 = vmatprep.subr.mxu0 0.0
        %6691 = vmatpush1.xpose.msra.mxu0 0.0
        %6692 = vmatprep.subr.mxu0 0.0
        %6693 = vmatpush1.xpose.msra.mxu0 0.0
        %6694 = vmatprep.subr.mxu0 0.0
        %6695 = vmatpush1.xpose.msra.mxu0 0.0
        %6696 = vmatprep.subr.mxu0 0.0
        %6697 = vmatpush1.xpose.msra.mxu0 0.0
        %6698 = vmatprep.subr.mxu0 0.0
        %6699 = vmatpush1.xpose.msra.mxu0 0.0
        %6700 = vmatprep.subr.mxu0 0.0
        %6701 = vmatpush1.xpose.msra.mxu0 0.0
        %6702 = vmatprep.subr.mxu0 0.0
        %6703 = vmatpush1.xpose.msra.mxu0 0.0
        %6704 = vmatprep.subr.mxu0 0.0
        %6705 = vmatpush1.xpose.msra.mxu0 0.0
        %6706 = vmatprep.subr.mxu0 0.0
        %6707 = vmatpush1.xpose.msra.mxu0 0.0
        %6708 = vmatprep.subr.mxu0 0.0
        %6709 = vmatpush1.xpose.msra.mxu0 0.0
        %6710 = vmatprep.subr.mxu0 0.0
        %6711 = vmatpush1.xpose.msra.mxu0 0.0
        %6712 = vmatprep.subr.mxu0 0.0
        %6713 = vmatpush1.xpose.msra.mxu0 0.0
        %6714 = vmatprep.subr.mxu0 0.0
        %6715 = vmatpush1.xpose.msra.mxu0 0.0
        %6716 = vmatprep.mubr.f32.mxu0 0.0
        %6717 = vmatmul.mubr.f32.gmra.mrb[0].mxu0 %v6588
        %v6718 = vpop.f32.mrb[0].mxu0
        %v6719 = vadd.f32 %v714, %v6718
        %v6720 = vpop.f32.mrb[0].mxu0
        %6721 = vmatprep.mubr.f32.mxu0 0.0
        %6722 = vmatmul.mubr.f32.gmra.mrb[0].mxu0 %v6590
        %v6723 = vpop.f32.mrb[0].mxu0
        %v6724 = vadd.f32 %v715, %v6723
        %v6725 = vpop.f32.mrb[0].mxu0
        %6726 = vmatprep.mubr.f32.mxu0 0.0
        %6727 = vmatmul.mubr.f32.gmra.mrb[0].mxu0 %v6592
        %v6728 = vpop.f32.mrb[0].mxu0
        %v6729 = vadd.f32 %v716, %v6728
        %v6730 = vpop.f32.mrb[0].mxu0
        %6731 = vmatprep.mubr.f32.mxu0 0.0
        %6732 = vmatmul.mubr.f32.gmra.mrb[0].mxu0 %v6594
        %v6733 = vpop.f32.mrb[0].mxu0
        %v6734 = vadd.f32 %v717, %v6733
        %v6735 = vpop.f32.mrb[0].mxu0
        %6736 = vmatprep.mubr.f32.mxu0 0.0
        %6737 = vmatmul.mubr.f32.gmra.mrb[0].mxu0 %v6596
        %v6738 = vpop.f32.mrb[0].mxu0
        %v6739 = vadd.f32 %v718, %v6738
        %v6740 = vpop.f32.mrb[0].mxu0
        %6741 = vmatprep.mubr.f32.mxu0 0.0
        %6742 = vmatmul.mubr.f32.gmra.mrb[0].mxu0 %v6598
        %v6743 = vpop.f32.mrb[0].mxu0
        %v6744 = vadd.f32 %v719, %v6743
        %v6745 = vpop.f32.mrb[0].mxu0
        %6746 = vmatprep.mubr.f32.mxu0 0.0
        %6747 = vmatmul.mubr.f32.gmra.mrb[0].mxu0 %v6600
        %v6748 = vpop.f32.mrb[0].mxu0
        %v6749 = vadd.f32 %v720, %v6748
        %v6750 = vpop.f32.mrb[0].mxu0
        %6751 = vmatprep.mubr.f32.mxu0 0.0
        %6752 = vmatmul.mubr.f32.gmra.mrb[0].mxu0 %v6602
        %v6753 = vpop.f32.mrb[0].mxu0
        %v6754 = vadd.f32 %v721, %v6753
        %v6755 = vpop.f32.mrb[0].mxu0
        %6756 = vmatprep.mubr.f32.mxu0 0.0
        %6757 = vmatmul.mubr.f32.gmra.mrb[0].mxu0 %v6604
        %v6758 = vpop.f32.mrb[0].mxu0
        %v6759 = vadd.f32 %v722, %v6758
        %v6760 = vpop.f32.mrb[0].mxu0
        %6761 = vmatprep.mubr.f32.mxu0 0.0
        %6762 = vmatmul.mubr.f32.gmra.mrb[0].mxu0 %v6606
        %v6763 = vpop.f32.mrb[0].mxu0
        %v6764 = vadd.f32 %v723, %v6763
        %v6765 = vpop.f32.mrb[0].mxu0
        %6766 = vmatprep.mubr.f32.mxu0 0.0
        %6767 = vmatmul.mubr.f32.gmra.mrb[0].mxu0 %v6608
        %v6768 = vpop.f32.mrb[0].mxu0
        %v6769 = vadd.f32 %v724, %v6768
        %v6770 = vpop.f32.mrb[0].mxu0
        %6771 = vmatprep.mubr.f32.mxu0 0.0
        %6772 = vmatmul.mubr.f32.gmra.mrb[0].mxu0 %v6610
        %v6773 = vpop.f32.mrb[0].mxu0
        %v6774 = vadd.f32 %v725, %v6773
        %v6775 = vpop.f32.mrb[0].mxu0
        %6776 = vmatprep.mubr.f32.mxu0 0.0
        %6777 = vmatmul.mubr.f32.gmra.mrb[0].mxu0 %v6612
        %v6778 = vpop.f32.mrb[0].mxu0
        %v6779 = vadd.f32 %v726, %v6778
        %v6780 = vpop.f32.mrb[0].mxu0
        %6781 = vmatprep.mubr.f32.mxu0 0.0
        %6782 = vmatmul.mubr.f32.gmra.mrb[0].mxu0 %v6614
        %v6783 = vpop.f32.mrb[0].mxu0
        %v6784 = vadd.f32 %v727, %v6783
        %v6785 = vpop.f32.mrb[0].mxu0
        %6786 = vmatprep.mubr.f32.mxu0 0.0
        %6787 = vmatmul.mubr.f32.gmra.mrb[0].mxu0 %v6616
        %v6788 = vpop.f32.mrb[0].mxu0
        %v6789 = vadd.f32 %v728, %v6788
        %v6790 = vpop.f32.mrb[0].mxu0
        %6791 = vmatprep.mubr.f32.mxu0 0.0
        %6792 = vmatmul.mubr.f32.gmra.mrb[0].mxu0 %v6618
        %v6793 = vpop.f32.mrb[0].mxu0
        %v6794 = vadd.f32 %v729, %v6793
        %v6795 = vpop.f32.mrb[0].mxu0
        %6796 = vdwg.mxu0
        %6797 = vmax.xlane.f32.xlu0 %v6719
        %v6798 = vpop.xlane.xlu0 %6797
        %6799 = vmax.xlane.f32.xlu0 %v6724
        %v6800 = vpop.xlane.xlu0 %6799
        %6801 = vmax.xlane.f32.xlu0 %v6729
        %v6802 = vpop.xlane.xlu0 %6801
        %6803 = vmax.xlane.f32.xlu0 %v6734
        %v6804 = vpop.xlane.xlu0 %6803
        %6805 = vmax.xlane.f32.xlu0 %v6739
        %v6806 = vpop.xlane.xlu0 %6805
        %6807 = vmax.xlane.f32.xlu0 %v6744
        %v6808 = vpop.xlane.xlu0 %6807
        %6809 = vmax.xlane.f32.xlu0 %v6749
        %v6810 = vpop.xlane.xlu0 %6809
        %6811 = vmax.xlane.f32.xlu0 %v6754
        %v6812 = vpop.xlane.xlu0 %6811
        %6813 = vmax.xlane.f32.xlu0 %v6759
        %v6814 = vpop.xlane.xlu0 %6813
        %6815 = vmax.xlane.f32.xlu0 %v6764
        %v6816 = vpop.xlane.xlu0 %6815
        %6817 = vmax.xlane.f32.xlu0 %v6769
        %v6818 = vpop.xlane.xlu0 %6817
        %6819 = vmax.xlane.f32.xlu0 %v6774
        %v6820 = vpop.xlane.xlu0 %6819
        %6821 = vmax.xlane.f32.xlu0 %v6779
        %v6822 = vpop.xlane.xlu0 %6821
        %6823 = vmax.xlane.f32.xlu0 %v6784
        %v6824 = vpop.xlane.xlu0 %6823
        %6825 = vmax.xlane.f32.xlu0 %v6789
        %v6826 = vpop.xlane.xlu0 %6825
        %6827 = vmax.xlane.f32.xlu0 %v6794
        %v6828 = vpop.xlane.xlu0 %6827
        %v6829 = vsub.f32 %v6719, %v6798
        %v6830 = vsub.f32 %v6724, %v6800
        %v6831 = vsub.f32 %v6729, %v6802
        %v6832 = vsub.f32 %v6734, %v6804
        %v6833 = vsub.f32 %v6739, %v6806
        %v6834 = vsub.f32 %v6744, %v6808
        %v6835 = vsub.f32 %v6749, %v6810
        %v6836 = vsub.f32 %v6754, %v6812
        %v6837 = vsub.f32 %v6759, %v6814
        %v6838 = vsub.f32 %v6764, %v6816
        %v6839 = vsub.f32 %v6769, %v6818
        %v6840 = vsub.f32 %v6774, %v6820
        %v6841 = vsub.f32 %v6779, %v6822
        %v6842 = vsub.f32 %v6784, %v6824
        %v6843 = vsub.f32 %v6789, %v6826
        %v6844 = vsub.f32 %v6794, %v6828
        %v6845 = vmul.f32 %v6829, 1.442695
        %v6846 = vpow.pop %v6845
        %v6847 = vmul.f32 %v6830, 1.442695
        %v6848 = vpow.pop %v6847
        %v6849 = vmul.f32 %v6831, 1.442695
        %v6850 = vpow.pop %v6849
        %v6851 = vmul.f32 %v6832, 1.442695
        %v6852 = vpow.pop %v6851
        %v6853 = vmul.f32 %v6833, 1.442695
        %v6854 = vpow.pop %v6853
        %v6855 = vmul.f32 %v6834, 1.442695
        %v6856 = vpow.pop %v6855
        %v6857 = vmul.f32 %v6835, 1.442695
        %v6858 = vpow.pop %v6857
        %v6859 = vmul.f32 %v6836, 1.442695
        %v6860 = vpow.pop %v6859
        %v6861 = vmul.f32 %v6837, 1.442695
        %v6862 = vpow.pop %v6861
        %v6863 = vmul.f32 %v6838, 1.442695
        %v6864 = vpow.pop %v6863
        %v6865 = vmul.f32 %v6839, 1.442695
        %v6866 = vpow.pop %v6865
        %v6867 = vmul.f32 %v6840, 1.442695
        %v6868 = vpow.pop %v6867
        %v6869 = vmul.f32 %v6841, 1.442695
        %v6870 = vpow.pop %v6869
        %v6871 = vmul.f32 %v6842, 1.442695
        %v6872 = vpow.pop %v6871
        %v6873 = vmul.f32 %v6843, 1.442695
        %v6874 = vpow.pop %v6873
        %v6875 = vmul.f32 %v6844, 1.442695
        %v6876 = vpow.pop %v6875
        %6877 = vadd.xlane.f32.xlu0 %v6846
        %v6878 = vpop.xlane.xlu0 %6877
        %6879 = vadd.xlane.f32.xlu0 %v6848
        %v6880 = vpop.xlane.xlu0 %6879
        %6881 = vadd.xlane.f32.xlu0 %v6850
        %v6882 = vpop.xlane.xlu0 %6881
        %6883 = vadd.xlane.f32.xlu0 %v6852
        %v6884 = vpop.xlane.xlu0 %6883
        %6885 = vadd.xlane.f32.xlu0 %v6854
        %v6886 = vpop.xlane.xlu0 %6885
        %6887 = vadd.xlane.f32.xlu0 %v6856
        %v6888 = vpop.xlane.xlu0 %6887
        %6889 = vadd.xlane.f32.xlu0 %v6858
        %v6890 = vpop.xlane.xlu0 %6889
        %6891 = vadd.xlane.f32.xlu0 %v6860
        %v6892 = vpop.xlane.xlu0 %6891
        %6893 = vadd.xlane.f32.xlu0 %v6862
        %v6894 = vpop.xlane.xlu0 %6893
        %6895 = vadd.xlane.f32.xlu0 %v6864
        %v6896 = vpop.xlane.xlu0 %6895
        %6897 = vadd.xlane.f32.xlu0 %v6866
        %v6898 = vpop.xlane.xlu0 %6897
        %6899 = vadd.xlane.f32.xlu0 %v6868
        %v6900 = vpop.xlane.xlu0 %6899
        %6901 = vadd.xlane.f32.xlu0 %v6870
        %v6902 = vpop.xlane.xlu0 %6901
        %6903 = vadd.xlane.f32.xlu0 %v6872
        %v6904 = vpop.xlane.xlu0 %6903
        %6905 = vadd.xlane.f32.xlu0 %v6874
        %v6906 = vpop.xlane.xlu0 %6905
        %6907 = vadd.xlane.f32.xlu0 %v6876
        %v6908 = vpop.xlane.xlu0 %6907
        %v6909 = vrcp.pop %v6878
        %v6910 = vrcp.pop %v6880
        %v6911 = vrcp.pop %v6882
        %v6912 = vrcp.pop %v6884
        %v6913 = vrcp.pop %v6886
        %v6914 = vrcp.pop %v6888
        %v6915 = vrcp.pop %v6890
        %v6916 = vrcp.pop %v6892
        %v6917 = vrcp.pop %v6894
        %v6918 = vrcp.pop %v6896
        %v6919 = vrcp.pop %v6898
        %v6920 = vrcp.pop %v6900
        %v6921 = vrcp.pop %v6902
        %v6922 = vrcp.pop %v6904
        %v6923 = vrcp.pop %v6906
        %v6924 = vrcp.pop %v6908
        %v6925 = vmul.f32 %v6846, %v6909
        %v6926 = vmul.f32 %v6848, %v6910
        %v6927 = vmul.f32 %v6850, %v6911
        %v6928 = vmul.f32 %v6852, %v6912
        %v6929 = vmul.f32 %v6854, %v6913
        %v6930 = vmul.f32 %v6856, %v6914
        %v6931 = vmul.f32 %v6858, %v6915
        %v6932 = vmul.f32 %v6860, %v6916
        %v6933 = vmul.f32 %v6862, %v6917
        %v6934 = vmul.f32 %v6864, %v6918
        %v6935 = vmul.f32 %v6866, %v6919
        %v6936 = vmul.f32 %v6868, %v6920
        %v6937 = vmul.f32 %v6870, %v6921
        %v6938 = vmul.f32 %v6872, %v6922
        %v6939 = vmul.f32 %v6874, %v6923
        %v6940 = vmul.f32 %v6876, %v6924
        %6957 = vrot.lane.b32.xlu0 %v5886, 112
        %v6958 = vpop.permute.xlu0 %6957
        %6959 = vrot.lane.b32.xlu0 %v5892, 112
        %v6960 = vpop.permute.xlu0 %6959
        %6961 = vrot.lane.b32.xlu0 %v5898, 112
        %v6962 = vpop.permute.xlu0 %6961
        %6963 = vrot.lane.b32.xlu0 %v5904, 112
        %v6964 = vpop.permute.xlu0 %6963
        %6965 = vrot.lane.b32.xlu0 %v5910, 112
        %v6966 = vpop.permute.xlu0 %6965
        %6967 = vrot.lane.b32.xlu0 %v5916, 112
        %v6968 = vpop.permute.xlu0 %6967
        %6969 = vrot.lane.b32.xlu0 %v5922, 112
        %v6970 = vpop.permute.xlu0 %6969
        %6971 = vrot.lane.b32.xlu0 %v5928, 112
        %v6972 = vpop.permute.xlu0 %6971
        %6973 = vrot.lane.b32.xlu0 %v5934, 112
        %v6974 = vpop.permute.xlu0 %6973
        %6975 = vrot.lane.b32.xlu0 %v5940, 112
        %v6976 = vpop.permute.xlu0 %6975
        %6977 = vrot.lane.b32.xlu0 %v5946, 112
        %v6978 = vpop.permute.xlu0 %6977
        %6979 = vrot.lane.b32.xlu0 %v5952, 112
        %v6980 = vpop.permute.xlu0 %6979
        %6981 = vrot.lane.b32.xlu0 %v5958, 112
        %v6982 = vpop.permute.xlu0 %6981
        %6983 = vrot.lane.b32.xlu0 %v5964, 112
        %v6984 = vpop.permute.xlu0 %6983
        %6985 = vrot.lane.b32.xlu0 %v5970, 112
        %v6986 = vpop.permute.xlu0 %6985
        %6987 = vrot.lane.b32.xlu0 %v5976, 112
        %v6988 = vpop.permute.xlu0 %6987
        %7005 = vmatprep.subr.mxu0 0.0
        %7006 = vmatpush1.msra.mxu0 %v6958
        %7007 = vmatprep.subr.mxu0 0.0
        %7008 = vmatpush1.msra.mxu0 %v6960
        %7009 = vmatprep.subr.mxu0 0.0
        %7010 = vmatpush1.msra.mxu0 %v6962
        %7011 = vmatprep.subr.mxu0 0.0
        %7012 = vmatpush1.msra.mxu0 %v6964
        %7013 = vmatprep.subr.mxu0 0.0
        %7014 = vmatpush1.msra.mxu0 %v6966
        %7015 = vmatprep.subr.mxu0 0.0
        %7016 = vmatpush1.msra.mxu0 %v6968
        %7017 = vmatprep.subr.mxu0 0.0
        %7018 = vmatpush1.msra.mxu0 %v6970
        %7019 = vmatprep.subr.mxu0 0.0
        %7020 = vmatpush1.msra.mxu0 %v6972
        %7021 = vmatprep.subr.mxu0 0.0
        %7022 = vmatpush1.msra.mxu0 %v6974
        %7023 = vmatprep.subr.mxu0 0.0
        %7024 = vmatpush1.msra.mxu0 %v6976
        %7025 = vmatprep.subr.mxu0 0.0
        %7026 = vmatpush1.msra.mxu0 %v6978
        %7027 = vmatprep.subr.mxu0 0.0
        %7028 = vmatpush1.msra.mxu0 %v6980
        %7029 = vmatprep.subr.mxu0 0.0
        %7030 = vmatpush1.msra.mxu0 %v6982
        %7031 = vmatprep.subr.mxu0 0.0
        %7032 = vmatpush1.msra.mxu0 %v6984
        %7033 = vmatprep.subr.mxu0 0.0
        %7034 = vmatpush1.msra.mxu0 %v6986
        %7035 = vmatprep.subr.mxu0 0.0
        %7036 = vmatpush1.msra.mxu0 %v6988
        %7037 = vmatprep.subr.mxu0 0.0
        %7038 = vmatpush1.msra.mxu0 0.0
        %7039 = vmatprep.subr.mxu0 0.0
        %7040 = vmatpush1.msra.mxu0 0.0
        %7041 = vmatprep.subr.mxu0 0.0
        %7042 = vmatpush1.msra.mxu0 0.0
        %7043 = vmatprep.subr.mxu0 0.0
        %7044 = vmatpush1.msra.mxu0 0.0
        %7045 = vmatprep.subr.mxu0 0.0
        %7046 = vmatpush1.msra.mxu0 0.0
        %7047 = vmatprep.subr.mxu0 0.0
        %7048 = vmatpush1.msra.mxu0 0.0
        %7049 = vmatprep.subr.mxu0 0.0
        %7050 = vmatpush1.msra.mxu0 0.0
        %7051 = vmatprep.subr.mxu0 0.0
        %7052 = vmatpush1.msra.mxu0 0.0
        %7053 = vmatprep.subr.mxu0 0.0
        %7054 = vmatpush1.msra.mxu0 0.0
        %7055 = vmatprep.subr.mxu0 0.0
        %7056 = vmatpush1.msra.mxu0 0.0
        %7057 = vmatprep.subr.mxu0 0.0
        %7058 = vmatpush1.msra.mxu0 0.0
        %7059 = vmatprep.subr.mxu0 0.0
        %7060 = vmatpush1.msra.mxu0 0.0
        %7061 = vmatprep.subr.mxu0 0.0
        %7062 = vmatpush1.msra.mxu0 0.0
        %7063 = vmatprep.subr.mxu0 0.0
        %7064 = vmatpush1.msra.mxu0 0.0
        %7065 = vmatprep.subr.mxu0 0.0
        %7066 = vmatpush1.msra.mxu0 0.0
        %7067 = vmatprep.subr.mxu0 0.0
        %7068 = vmatpush1.msra.mxu0 0.0
        %7069 = vmatprep.mubr.f32.mxu0 0.0
        %7070 = vmatmul.mubr.f32.gmra.mrb[0].mxu0 %v6925
        %v7071 = vpop.f32.mrb[0].mxu0
        %v7072 = vadd.f32 0.0, %v7071
        %v7073 = vpop.f32.mrb[0].mxu0
        %7074 = vmatprep.mubr.f32.mxu0 0.0
        %7075 = vmatmul.mubr.f32.gmra.mrb[0].mxu0 %v6926
        %v7076 = vpop.f32.mrb[0].mxu0
        %v7077 = vadd.f32 0.0, %v7076
        %v7078 = vpop.f32.mrb[0].mxu0
        %7079 = vmatprep.mubr.f32.mxu0 0.0
        %7080 = vmatmul.mubr.f32.gmra.mrb[0].mxu0 %v6927
        %v7081 = vpop.f32.mrb[0].mxu0
        %v7082 = vadd.f32 0.0, %v7081
        %v7083 = vpop.f32.mrb[0].mxu0
        %7084 = vmatprep.mubr.f32.mxu0 0.0
        %7085 = vmatmul.mubr.f32.gmra.mrb[0].mxu0 %v6928
        %v7086 = vpop.f32.mrb[0].mxu0
        %v7087 = vadd.f32 0.0, %v7086
        %v7088 = vpop.f32.mrb[0].mxu0
        %7089 = vmatprep.mubr.f32.mxu0 0.0
        %7090 = vmatmul.mubr.f32.gmra.mrb[0].mxu0 %v6929
        %v7091 = vpop.f32.mrb[0].mxu0
        %v7092 = vadd.f32 0.0, %v7091
        %v7093 = vpop.f32.mrb[0].mxu0
        %7094 = vmatprep.mubr.f32.mxu0 0.0
        %7095 = vmatmul.mubr.f32.gmra.mrb[0].mxu0 %v6930
        %v7096 = vpop.f32.mrb[0].mxu0
        %v7097 = vadd.f32 0.0, %v7096
        %v7098 = vpop.f32.mrb[0].mxu0
        %7099 = vmatprep.mubr.f32.mxu0 0.0
        %7100 = vmatmul.mubr.f32.gmra.mrb[0].mxu0 %v6931
        %v7101 = vpop.f32.mrb[0].mxu0
        %v7102 = vadd.f32 0.0, %v7101
        %v7103 = vpop.f32.mrb[0].mxu0
        %7104 = vmatprep.mubr.f32.mxu0 0.0
        %7105 = vmatmul.mubr.f32.gmra.mrb[0].mxu0 %v6932
        %v7106 = vpop.f32.mrb[0].mxu0
        %v7107 = vadd.f32 0.0, %v7106
        %v7108 = vpop.f32.mrb[0].mxu0
        %7109 = vmatprep.mubr.f32.mxu0 0.0
        %7110 = vmatmul.mubr.f32.gmra.mrb[0].mxu0 %v6933
        %v7111 = vpop.f32.mrb[0].mxu0
        %v7112 = vadd.f32 0.0, %v7111
        %v7113 = vpop.f32.mrb[0].mxu0
        %7114 = vmatprep.mubr.f32.mxu0 0.0
        %7115 = vmatmul.mubr.f32.gmra.mrb[0].mxu0 %v6934
        %v7116 = vpop.f32.mrb[0].mxu0
        %v7117 = vadd.f32 0.0, %v7116
        %v7118 = vpop.f32.mrb[0].mxu0
        %7119 = vmatprep.mubr.f32.mxu0 0.0
        %7120 = vmatmul.mubr.f32.gmra.mrb[0].mxu0 %v6935
        %v7121 = vpop.f32.mrb[0].mxu0
        %v7122 = vadd.f32 0.0, %v7121
        %v7123 = vpop.f32.mrb[0].mxu0
        %7124 = vmatprep.mubr.f32.mxu0 0.0
        %7125 = vmatmul.mubr.f32.gmra.mrb[0].mxu0 %v6936
        %v7126 = vpop.f32.mrb[0].mxu0
        %v7127 = vadd.f32 0.0, %v7126
        %v7128 = vpop.f32.mrb[0].mxu0
        %7129 = vmatprep.mubr.f32.mxu0 0.0
        %7130 = vmatmul.mubr.f32.gmra.mrb[0].mxu0 %v6937
        %v7131 = vpop.f32.mrb[0].mxu0
        %v7132 = vadd.f32 0.0, %v7131
        %v7133 = vpop.f32.mrb[0].mxu0
        %7134 = vmatprep.mubr.f32.mxu0 0.0
        %7135 = vmatmul.mubr.f32.gmra.mrb[0].mxu0 %v6938
        %v7136 = vpop.f32.mrb[0].mxu0
        %v7137 = vadd.f32 0.0, %v7136
        %v7138 = vpop.f32.mrb[0].mxu0
        %7139 = vmatprep.mubr.f32.mxu0 0.0
        %7140 = vmatmul.mubr.f32.gmra.mrb[0].mxu0 %v6939
        %v7141 = vpop.f32.mrb[0].mxu0
        %v7142 = vadd.f32 0.0, %v7141
        %v7143 = vpop.f32.mrb[0].mxu0
        %7144 = vmatprep.mubr.f32.mxu0 0.0
        %7145 = vmatmul.mubr.f32.gmra.mrb[0].mxu0 %v6940
        %v7146 = vpop.f32.mrb[0].mxu0
        %v7147 = vadd.f32 0.0, %v7146
        %v7148 = vpop.f32.mrb[0].mxu0
        %7149 = vdwg.mxu0
        %7150 = vrot.lane.b32.xlu0 %v5884, 96
        %v7151 = vpop.permute.xlu0 %7150
        %7152 = vrot.lane.b32.xlu0 %v5890, 96
        %v7153 = vpop.permute.xlu0 %7152
        %7154 = vrot.lane.b32.xlu0 %v5896, 96
        %v7155 = vpop.permute.xlu0 %7154
        %7156 = vrot.lane.b32.xlu0 %v5902, 96
        %v7157 = vpop.permute.xlu0 %7156
        %7158 = vrot.lane.b32.xlu0 %v5908, 96
        %v7159 = vpop.permute.xlu0 %7158
        %7160 = vrot.lane.b32.xlu0 %v5914, 96
        %v7161 = vpop.permute.xlu0 %7160
        %7162 = vrot.lane.b32.xlu0 %v5920, 96
        %v7163 = vpop.permute.xlu0 %7162
        %7164 = vrot.lane.b32.xlu0 %v5926, 96
        %v7165 = vpop.permute.xlu0 %7164
        %7166 = vrot.lane.b32.xlu0 %v5932, 96
        %v7167 = vpop.permute.xlu0 %7166
        %7168 = vrot.lane.b32.xlu0 %v5938, 96
        %v7169 = vpop.permute.xlu0 %7168
        %7170 = vrot.lane.b32.xlu0 %v5944, 96
        %v7171 = vpop.permute.xlu0 %7170
        %7172 = vrot.lane.b32.xlu0 %v5950, 96
        %v7173 = vpop.permute.xlu0 %7172
        %7174 = vrot.lane.b32.xlu0 %v5956, 96
        %v7175 = vpop.permute.xlu0 %7174
        %7176 = vrot.lane.b32.xlu0 %v5962, 96
        %v7177 = vpop.permute.xlu0 %7176
        %7178 = vrot.lane.b32.xlu0 %v5968, 96
        %v7179 = vpop.permute.xlu0 %7178
        %7180 = vrot.lane.b32.xlu0 %v5974, 96
        %v7181 = vpop.permute.xlu0 %7180
        %7182 = vrot.lane.b32.xlu0 %v5884, 32
        %v7183 = vpop.permute.xlu0 %7182
        %7184 = vrot.lane.b32.xlu0 %v5890, 32
        %v7185 = vpop.permute.xlu0 %7184
        %7186 = vrot.lane.b32.xlu0 %v5896, 32
        %v7187 = vpop.permute.xlu0 %7186
        %7188 = vrot.lane.b32.xlu0 %v5902, 32
        %v7189 = vpop.permute.xlu0 %7188
        %7190 = vrot.lane.b32.xlu0 %v5908, 32
        %v7191 = vpop.permute.xlu0 %7190
        %7192 = vrot.lane.b32.xlu0 %v5914, 32
        %v7193 = vpop.permute.xlu0 %7192
        %7194 = vrot.lane.b32.xlu0 %v5920, 32
        %v7195 = vpop.permute.xlu0 %7194
        %7196 = vrot.lane.b32.xlu0 %v5926, 32
        %v7197 = vpop.permute.xlu0 %7196
        %7198 = vrot.lane.b32.xlu0 %v5932, 32
        %v7199 = vpop.permute.xlu0 %7198
        %7200 = vrot.lane.b32.xlu0 %v5938, 32
        %v7201 = vpop.permute.xlu0 %7200
        %7202 = vrot.lane.b32.xlu0 %v5944, 32
        %v7203 = vpop.permute.xlu0 %7202
        %7204 = vrot.lane.b32.xlu0 %v5950, 32
        %v7205 = vpop.permute.xlu0 %7204
        %7206 = vrot.lane.b32.xlu0 %v5956, 32
        %v7207 = vpop.permute.xlu0 %7206
        %7208 = vrot.lane.b32.xlu0 %v5962, 32
        %v7209 = vpop.permute.xlu0 %7208
        %7210 = vrot.lane.b32.xlu0 %v5968, 32
        %v7211 = vpop.permute.xlu0 %7210
        %7212 = vrot.lane.b32.xlu0 %v5974, 32
        %v7213 = vpop.permute.xlu0 %7212
        %v7214 = vsel %vm1131, %v7151, 0
        %v7216 = vsel %vm1131, %v7153, 0
        %v7218 = vsel %vm1131, %v7155, 0
        %v7220 = vsel %vm1131, %v7157, 0
        %v7222 = vsel %vm1131, %v7159, 0
        %v7224 = vsel %vm1131, %v7161, 0
        %v7226 = vsel %vm1131, %v7163, 0
        %v7228 = vsel %vm1131, %v7165, 0
        %v7230 = vsel %vm1131, %v7167, 0
        %v7232 = vsel %vm1131, %v7169, 0
        %v7234 = vsel %vm1131, %v7171, 0
        %v7236 = vsel %vm1131, %v7173, 0
        %v7238 = vsel %vm1131, %v7175, 0
        %v7240 = vsel %vm1131, %v7177, 0
        %v7242 = vsel %vm1131, %v7179, 0
        %v7244 = vsel %vm1131, %v7181, 0
        %v7246 = vsel %vm1131, %v7183, 0
        %v7248 = vsel %vm1131, %v7185, 0
        %v7250 = vsel %vm1131, %v7187, 0
        %v7252 = vsel %vm1131, %v7189, 0
        %v7254 = vsel %vm1131, %v7191, 0
        %v7256 = vsel %vm1131, %v7193, 0
        %v7258 = vsel %vm1131, %v7195, 0
        %v7260 = vsel %vm1131, %v7197, 0
        %v7262 = vsel %vm1131, %v7199, 0
        %v7264 = vsel %vm1131, %v7201, 0
        %v7266 = vsel %vm1131, %v7203, 0
        %v7268 = vsel %vm1131, %v7205, 0
        %v7270 = vsel %vm1131, %v7207, 0
        %v7272 = vsel %vm1131, %v7209, 0
        %v7274 = vsel %vm1131, %v7211, 0
        %v7276 = vsel %vm1131, %v7213, 0
        %7278 = vmatprep.subr.mxu0 0.0
        %7279 = vmatpush1.xpose.msra.mxu0 %v7246
        %7280 = vmatprep.subr.mxu0 0.0
        %7281 = vmatpush1.xpose.msra.mxu0 %v7248
        %7282 = vmatprep.subr.mxu0 0.0
        %7283 = vmatpush1.xpose.msra.mxu0 %v7250
        %7284 = vmatprep.subr.mxu0 0.0
        %7285 = vmatpush1.xpose.msra.mxu0 %v7252
        %7286 = vmatprep.subr.mxu0 0.0
        %7287 = vmatpush1.xpose.msra.mxu0 %v7254
        %7288 = vmatprep.subr.mxu0 0.0
        %7289 = vmatpush1.xpose.msra.mxu0 %v7256
        %7290 = vmatprep.subr.mxu0 0.0
        %7291 = vmatpush1.xpose.msra.mxu0 %v7258
        %7292 = vmatprep.subr.mxu0 0.0
        %7293 = vmatpush1.xpose.msra.mxu0 %v7260
        %7294 = vmatprep.subr.mxu0 0.0
        %7295 = vmatpush1.xpose.msra.mxu0 %v7262
        %7296 = vmatprep.subr.mxu0 0.0
        %7297 = vmatpush1.xpose.msra.mxu0 %v7264
        %7298 = vmatprep.subr.mxu0 0.0
        %7299 = vmatpush1.xpose.msra.mxu0 %v7266
        %7300 = vmatprep.subr.mxu0 0.0
        %7301 = vmatpush1.xpose.msra.mxu0 %v7268
        %7302 = vmatprep.subr.mxu0 0.0
        %7303 = vmatpush1.xpose.msra.mxu0 %v7270
        %7304 = vmatprep.subr.mxu0 0.0
        %7305 = vmatpush1.xpose.msra.mxu0 %v7272
        %7306 = vmatprep.subr.mxu0 0.0
        %7307 = vmatpush1.xpose.msra.mxu0 %v7274
        %7308 = vmatprep.subr.mxu0 0.0
        %7309 = vmatpush1.xpose.msra.mxu0 %v7276
        %7310 = vmatprep.subr.mxu0 0.0
        %7311 = vmatpush1.xpose.msra.mxu0 0.0
        %7312 = vmatprep.subr.mxu0 0.0
        %7313 = vmatpush1.xpose.msra.mxu0 0.0
        %7314 = vmatprep.subr.mxu0 0.0
        %7315 = vmatpush1.xpose.msra.mxu0 0.0
        %7316 = vmatprep.subr.mxu0 0.0
        %7317 = vmatpush1.xpose.msra.mxu0 0.0
        %7318 = vmatprep.subr.mxu0 0.0
        %7319 = vmatpush1.xpose.msra.mxu0 0.0
        %7320 = vmatprep.subr.mxu0 0.0
        %7321 = vmatpush1.xpose.msra.mxu0 0.0
        %7322 = vmatprep.subr.mxu0 0.0
        %7323 = vmatpush1.xpose.msra.mxu0 0.0
        %7324 = vmatprep.subr.mxu0 0.0
        %7325 = vmatpush1.xpose.msra.mxu0 0.0
        %7326 = vmatprep.subr.mxu0 0.0
        %7327 = vmatpush1.xpose.msra.mxu0 0.0
        %7328 = vmatprep.subr.mxu0 0.0
        %7329 = vmatpush1.xpose.msra.mxu0 0.0
        %7330 = vmatprep.subr.mxu0 0.0
        %7331 = vmatpush1.xpose.msra.mxu0 0.0
        %7332 = vmatprep.subr.mxu0 0.0
        %7333 = vmatpush1.xpose.msra.mxu0 0.0
        %7334 = vmatprep.subr.mxu0 0.0
        %7335 = vmatpush1.xpose.msra.mxu0 0.0
        %7336 = vmatprep.subr.mxu0 0.0
        %7337 = vmatpush1.xpose.msra.mxu0 0.0
        %7338 = vmatprep.subr.mxu0 0.0
        %7339 = vmatpush1.xpose.msra.mxu0 0.0
        %7340 = vmatprep.subr.mxu0 0.0
        %7341 = vmatpush1.xpose.msra.mxu0 0.0
        %7342 = vmatprep.mubr.f32.mxu0 0.0
        %7343 = vmatmul.mubr.f32.gmra.mrb[0].mxu0 %v7214
        %v7344 = vpop.f32.mrb[0].mxu0
        %v7345 = vadd.f32 %v714, %v7344
        %v7346 = vpop.f32.mrb[0].mxu0
        %7347 = vmatprep.mubr.f32.mxu0 0.0
        %7348 = vmatmul.mubr.f32.gmra.mrb[0].mxu0 %v7216
        %v7349 = vpop.f32.mrb[0].mxu0
        %v7350 = vadd.f32 %v715, %v7349
        %v7351 = vpop.f32.mrb[0].mxu0
        %7352 = vmatprep.mubr.f32.mxu0 0.0
        %7353 = vmatmul.mubr.f32.gmra.mrb[0].mxu0 %v7218
        %v7354 = vpop.f32.mrb[0].mxu0
        %v7355 = vadd.f32 %v716, %v7354
        %v7356 = vpop.f32.mrb[0].mxu0
        %7357 = vmatprep.mubr.f32.mxu0 0.0
        %7358 = vmatmul.mubr.f32.gmra.mrb[0].mxu0 %v7220
        %v7359 = vpop.f32.mrb[0].mxu0
        %v7360 = vadd.f32 %v717, %v7359
        %v7361 = vpop.f32.mrb[0].mxu0
        %7362 = vmatprep.mubr.f32.mxu0 0.0
        %7363 = vmatmul.mubr.f32.gmra.mrb[0].mxu0 %v7222
        %v7364 = vpop.f32.mrb[0].mxu0
        %v7365 = vadd.f32 %v718, %v7364
        %v7366 = vpop.f32.mrb[0].mxu0
        %7367 = vmatprep.mubr.f32.mxu0 0.0
        %7368 = vmatmul.mubr.f32.gmra.mrb[0].mxu0 %v7224
        %v7369 = vpop.f32.mrb[0].mxu0
        %v7370 = vadd.f32 %v719, %v7369
        %v7371 = vpop.f32.mrb[0].mxu0
        %7372 = vmatprep.mubr.f32.mxu0 0.0
        %7373 = vmatmul.mubr.f32.gmra.mrb[0].mxu0 %v7226
        %v7374 = vpop.f32.mrb[0].mxu0
        %v7375 = vadd.f32 %v720, %v7374
        %v7376 = vpop.f32.mrb[0].mxu0
        %7377 = vmatprep.mubr.f32.mxu0 0.0
        %7378 = vmatmul.mubr.f32.gmra.mrb[0].mxu0 %v7228
        %v7379 = vpop.f32.mrb[0].mxu0
        %v7380 = vadd.f32 %v721, %v7379
        %v7381 = vpop.f32.mrb[0].mxu0
        %7382 = vmatprep.mubr.f32.mxu0 0.0
        %7383 = vmatmul.mubr.f32.gmra.mrb[0].mxu0 %v7230
        %v7384 = vpop.f32.mrb[0].mxu0
        %v7385 = vadd.f32 %v722, %v7384
        %v7386 = vpop.f32.mrb[0].mxu0
        %7387 = vmatprep.mubr.f32.mxu0 0.0
        %7388 = vmatmul.mubr.f32.gmra.mrb[0].mxu0 %v7232
        %v7389 = vpop.f32.mrb[0].mxu0
        %v7390 = vadd.f32 %v723, %v7389
        %v7391 = vpop.f32.mrb[0].mxu0
        %7392 = vmatprep.mubr.f32.mxu0 0.0
        %7393 = vmatmul.mubr.f32.gmra.mrb[0].mxu0 %v7234
        %v7394 = vpop.f32.mrb[0].mxu0
        %v7395 = vadd.f32 %v724, %v7394
        %v7396 = vpop.f32.mrb[0].mxu0
        %7397 = vmatprep.mubr.f32.mxu0 0.0
        %7398 = vmatmul.mubr.f32.gmra.mrb[0].mxu0 %v7236
        %v7399 = vpop.f32.mrb[0].mxu0
        %v7400 = vadd.f32 %v725, %v7399
        %v7401 = vpop.f32.mrb[0].mxu0
        %7402 = vmatprep.mubr.f32.mxu0 0.0
        %7403 = vmatmul.mubr.f32.gmra.mrb[0].mxu0 %v7238
        %v7404 = vpop.f32.mrb[0].mxu0
        %v7405 = vadd.f32 %v726, %v7404
        %v7406 = vpop.f32.mrb[0].mxu0
        %7407 = vmatprep.mubr.f32.mxu0 0.0
        %7408 = vmatmul.mubr.f32.gmra.mrb[0].mxu0 %v7240
        %v7409 = vpop.f32.mrb[0].mxu0
        %v7410 = vadd.f32 %v727, %v7409
        %v7411 = vpop.f32.mrb[0].mxu0
        %7412 = vmatprep.mubr.f32.mxu0 0.0
        %7413 = vmatmul.mubr.f32.gmra.mrb[0].mxu0 %v7242
        %v7414 = vpop.f32.mrb[0].mxu0
        %v7415 = vadd.f32 %v728, %v7414
        %v7416 = vpop.f32.mrb[0].mxu0
        %7417 = vmatprep.mubr.f32.mxu0 0.0
        %7418 = vmatmul.mubr.f32.gmra.mrb[0].mxu0 %v7244
        %v7419 = vpop.f32.mrb[0].mxu0
        %v7420 = vadd.f32 %v729, %v7419
        %v7421 = vpop.f32.mrb[0].mxu0
        %7422 = vdwg.mxu0
        %7423 = vmax.xlane.f32.xlu0 %v7345
        %v7424 = vpop.xlane.xlu0 %7423
        %7425 = vmax.xlane.f32.xlu0 %v7350
        %v7426 = vpop.xlane.xlu0 %7425
        %7427 = vmax.xlane.f32.xlu0 %v7355
        %v7428 = vpop.xlane.xlu0 %7427
        %7429 = vmax.xlane.f32.xlu0 %v7360
        %v7430 = vpop.xlane.xlu0 %7429
        %7431 = vmax.xlane.f32.xlu0 %v7365
        %v7432 = vpop.xlane.xlu0 %7431
        %7433 = vmax.xlane.f32.xlu0 %v7370
        %v7434 = vpop.xlane.xlu0 %7433
        %7435 = vmax.xlane.f32.xlu0 %v7375
        %v7436 = vpop.xlane.xlu0 %7435
        %7437 = vmax.xlane.f32.xlu0 %v7380
        %v7438 = vpop.xlane.xlu0 %7437
        %7439 = vmax.xlane.f32.xlu0 %v7385
        %v7440 = vpop.xlane.xlu0 %7439
        %7441 = vmax.xlane.f32.xlu0 %v7390
        %v7442 = vpop.xlane.xlu0 %7441
        %7443 = vmax.xlane.f32.xlu0 %v7395
        %v7444 = vpop.xlane.xlu0 %7443
        %7445 = vmax.xlane.f32.xlu0 %v7400
        %v7446 = vpop.xlane.xlu0 %7445
        %7447 = vmax.xlane.f32.xlu0 %v7405
        %v7448 = vpop.xlane.xlu0 %7447
        %7449 = vmax.xlane.f32.xlu0 %v7410
        %v7450 = vpop.xlane.xlu0 %7449
        %7451 = vmax.xlane.f32.xlu0 %v7415
        %v7452 = vpop.xlane.xlu0 %7451
        %7453 = vmax.xlane.f32.xlu0 %v7420
        %v7454 = vpop.xlane.xlu0 %7453
        %v7455 = vsub.f32 %v7345, %v7424
        %v7456 = vsub.f32 %v7350, %v7426
        %v7457 = vsub.f32 %v7355, %v7428
        %v7458 = vsub.f32 %v7360, %v7430
        %v7459 = vsub.f32 %v7365, %v7432
        %v7460 = vsub.f32 %v7370, %v7434
        %v7461 = vsub.f32 %v7375, %v7436
        %v7462 = vsub.f32 %v7380, %v7438
        %v7463 = vsub.f32 %v7385, %v7440
        %v7464 = vsub.f32 %v7390, %v7442
        %v7465 = vsub.f32 %v7395, %v7444
        %v7466 = vsub.f32 %v7400, %v7446
        %v7467 = vsub.f32 %v7405, %v7448
        %v7468 = vsub.f32 %v7410, %v7450
        %v7469 = vsub.f32 %v7415, %v7452
        %v7470 = vsub.f32 %v7420, %v7454
        %v7471 = vmul.f32 %v7455, 1.442695
        %v7472 = vpow.pop %v7471
        %v7473 = vmul.f32 %v7456, 1.442695
        %v7474 = vpow.pop %v7473
        %v7475 = vmul.f32 %v7457, 1.442695
        %v7476 = vpow.pop %v7475
        %v7477 = vmul.f32 %v7458, 1.442695
        %v7478 = vpow.pop %v7477
        %v7479 = vmul.f32 %v7459, 1.442695
        %v7480 = vpow.pop %v7479
        %v7481 = vmul.f32 %v7460, 1.442695
        %v7482 = vpow.pop %v7481
        %v7483 = vmul.f32 %v7461, 1.442695
        %v7484 = vpow.pop %v7483
        %v7485 = vmul.f32 %v7462, 1.442695
        %v7486 = vpow.pop %v7485
        %v7487 = vmul.f32 %v7463, 1.442695
        %v7488 = vpow.pop %v7487
        %v7489 = vmul.f32 %v7464, 1.442695
        %v7490 = vpow.pop %v7489
        %v7491 = vmul.f32 %v7465, 1.442695
        %v7492 = vpow.pop %v7491
        %v7493 = vmul.f32 %v7466, 1.442695
        %v7494 = vpow.pop %v7493
        %v7495 = vmul.f32 %v7467, 1.442695
        %v7496 = vpow.pop %v7495
        %v7497 = vmul.f32 %v7468, 1.442695
        %v7498 = vpow.pop %v7497
        %v7499 = vmul.f32 %v7469, 1.442695
        %v7500 = vpow.pop %v7499
        %v7501 = vmul.f32 %v7470, 1.442695
        %v7502 = vpow.pop %v7501
        %7503 = vadd.xlane.f32.xlu0 %v7472
        %v7504 = vpop.xlane.xlu0 %7503
        %7505 = vadd.xlane.f32.xlu0 %v7474
        %v7506 = vpop.xlane.xlu0 %7505
        %7507 = vadd.xlane.f32.xlu0 %v7476
        %v7508 = vpop.xlane.xlu0 %7507
        %7509 = vadd.xlane.f32.xlu0 %v7478
        %v7510 = vpop.xlane.xlu0 %7509
        %7511 = vadd.xlane.f32.xlu0 %v7480
        %v7512 = vpop.xlane.xlu0 %7511
        %7513 = vadd.xlane.f32.xlu0 %v7482
        %v7514 = vpop.xlane.xlu0 %7513
        %7515 = vadd.xlane.f32.xlu0 %v7484
        %v7516 = vpop.xlane.xlu0 %7515
        %7517 = vadd.xlane.f32.xlu0 %v7486
        %v7518 = vpop.xlane.xlu0 %7517
        %7519 = vadd.xlane.f32.xlu0 %v7488
        %v7520 = vpop.xlane.xlu0 %7519
        %7521 = vadd.xlane.f32.xlu0 %v7490
        %v7522 = vpop.xlane.xlu0 %7521
        %7523 = vadd.xlane.f32.xlu0 %v7492
        %v7524 = vpop.xlane.xlu0 %7523
        %7525 = vadd.xlane.f32.xlu0 %v7494
        %v7526 = vpop.xlane.xlu0 %7525
        %7527 = vadd.xlane.f32.xlu0 %v7496
        %v7528 = vpop.xlane.xlu0 %7527
        %7529 = vadd.xlane.f32.xlu0 %v7498
        %v7530 = vpop.xlane.xlu0 %7529
        %7531 = vadd.xlane.f32.xlu0 %v7500
        %v7532 = vpop.xlane.xlu0 %7531
        %7533 = vadd.xlane.f32.xlu0 %v7502
        %v7534 = vpop.xlane.xlu0 %7533
        %v7535 = vrcp.pop %v7504
        %v7536 = vrcp.pop %v7506
        %v7537 = vrcp.pop %v7508
        %v7538 = vrcp.pop %v7510
        %v7539 = vrcp.pop %v7512
        %v7540 = vrcp.pop %v7514
        %v7541 = vrcp.pop %v7516
        %v7542 = vrcp.pop %v7518
        %v7543 = vrcp.pop %v7520
        %v7544 = vrcp.pop %v7522
        %v7545 = vrcp.pop %v7524
        %v7546 = vrcp.pop %v7526
        %v7547 = vrcp.pop %v7528
        %v7548 = vrcp.pop %v7530
        %v7549 = vrcp.pop %v7532
        %v7550 = vrcp.pop %v7534
        %v7551 = vmul.f32 %v7472, %v7535
        %v7552 = vmul.f32 %v7474, %v7536
        %v7553 = vmul.f32 %v7476, %v7537
        %v7554 = vmul.f32 %v7478, %v7538
        %v7555 = vmul.f32 %v7480, %v7539
        %v7556 = vmul.f32 %v7482, %v7540
        %v7557 = vmul.f32 %v7484, %v7541
        %v7558 = vmul.f32 %v7486, %v7542
        %v7559 = vmul.f32 %v7488, %v7543
        %v7560 = vmul.f32 %v7490, %v7544
        %v7561 = vmul.f32 %v7492, %v7545
        %v7562 = vmul.f32 %v7494, %v7546
        %v7563 = vmul.f32 %v7496, %v7547
        %v7564 = vmul.f32 %v7498, %v7548
        %v7565 = vmul.f32 %v7500, %v7549
        %v7566 = vmul.f32 %v7502, %v7550
        %7567 = vrot.lane.b32.xlu0 %v5886, 96
        %v7568 = vpop.permute.xlu0 %7567
        %7569 = vrot.lane.b32.xlu0 %v5892, 96
        %v7570 = vpop.permute.xlu0 %7569
        %7571 = vrot.lane.b32.xlu0 %v5898, 96
        %v7572 = vpop.permute.xlu0 %7571
        %7573 = vrot.lane.b32.xlu0 %v5904, 96
        %v7574 = vpop.permute.xlu0 %7573
        %7575 = vrot.lane.b32.xlu0 %v5910, 96
        %v7576 = vpop.permute.xlu0 %7575
        %7577 = vrot.lane.b32.xlu0 %v5916, 96
        %v7578 = vpop.permute.xlu0 %7577
        %7579 = vrot.lane.b32.xlu0 %v5922, 96
        %v7580 = vpop.permute.xlu0 %7579
        %7581 = vrot.lane.b32.xlu0 %v5928, 96
        %v7582 = vpop.permute.xlu0 %7581
        %7583 = vrot.lane.b32.xlu0 %v5934, 96
        %v7584 = vpop.permute.xlu0 %7583
        %7585 = vrot.lane.b32.xlu0 %v5940, 96
        %v7586 = vpop.permute.xlu0 %7585
        %7587 = vrot.lane.b32.xlu0 %v5946, 96
        %v7588 = vpop.permute.xlu0 %7587
        %7589 = vrot.lane.b32.xlu0 %v5952, 96
        %v7590 = vpop.permute.xlu0 %7589
        %7591 = vrot.lane.b32.xlu0 %v5958, 96
        %v7592 = vpop.permute.xlu0 %7591
        %7593 = vrot.lane.b32.xlu0 %v5964, 96
        %v7594 = vpop.permute.xlu0 %7593
        %7595 = vrot.lane.b32.xlu0 %v5970, 96
        %v7596 = vpop.permute.xlu0 %7595
        %7597 = vrot.lane.b32.xlu0 %v5976, 96
        %v7598 = vpop.permute.xlu0 %7597
        %7615 = vmatprep.subr.mxu0 0.0
        %7616 = vmatpush1.msra.mxu0 %v7568
        %7617 = vmatprep.subr.mxu0 0.0
        %7618 = vmatpush1.msra.mxu0 %v7570
        %7619 = vmatprep.subr.mxu0 0.0
        %7620 = vmatpush1.msra.mxu0 %v7572
        %7621 = vmatprep.subr.mxu0 0.0
        %7622 = vmatpush1.msra.mxu0 %v7574
        %7623 = vmatprep.subr.mxu0 0.0
        %7624 = vmatpush1.msra.mxu0 %v7576
        %7625 = vmatprep.subr.mxu0 0.0
        %7626 = vmatpush1.msra.mxu0 %v7578
        %7627 = vmatprep.subr.mxu0 0.0
        %7628 = vmatpush1.msra.mxu0 %v7580
        %7629 = vmatprep.subr.mxu0 0.0
        %7630 = vmatpush1.msra.mxu0 %v7582
        %7631 = vmatprep.subr.mxu0 0.0
        %7632 = vmatpush1.msra.mxu0 %v7584
        %7633 = vmatprep.subr.mxu0 0.0
        %7634 = vmatpush1.msra.mxu0 %v7586
        %7635 = vmatprep.subr.mxu0 0.0
        %7636 = vmatpush1.msra.mxu0 %v7588
        %7637 = vmatprep.subr.mxu0 0.0
        %7638 = vmatpush1.msra.mxu0 %v7590
        %7639 = vmatprep.subr.mxu0 0.0
        %7640 = vmatpush1.msra.mxu0 %v7592
        %7641 = vmatprep.subr.mxu0 0.0
        %7642 = vmatpush1.msra.mxu0 %v7594
        %7643 = vmatprep.subr.mxu0 0.0
        %7644 = vmatpush1.msra.mxu0 %v7596
        %7645 = vmatprep.subr.mxu0 0.0
        %7646 = vmatpush1.msra.mxu0 %v7598
        %7647 = vmatprep.subr.mxu0 0.0
        %7648 = vmatpush1.msra.mxu0 0.0
        %7649 = vmatprep.subr.mxu0 0.0
        %7650 = vmatpush1.msra.mxu0 0.0
        %7651 = vmatprep.subr.mxu0 0.0
        %7652 = vmatpush1.msra.mxu0 0.0
        %7653 = vmatprep.subr.mxu0 0.0
        %7654 = vmatpush1.msra.mxu0 0.0
        %7655 = vmatprep.subr.mxu0 0.0
        %7656 = vmatpush1.msra.mxu0 0.0
        %7657 = vmatprep.subr.mxu0 0.0
        %7658 = vmatpush1.msra.mxu0 0.0
        %7659 = vmatprep.subr.mxu0 0.0
        %7660 = vmatpush1.msra.mxu0 0.0
        %7661 = vmatprep.subr.mxu0 0.0
        %7662 = vmatpush1.msra.mxu0 0.0
        %7663 = vmatprep.subr.mxu0 0.0
        %7664 = vmatpush1.msra.mxu0 0.0
        %7665 = vmatprep.subr.mxu0 0.0
        %7666 = vmatpush1.msra.mxu0 0.0
        %7667 = vmatprep.subr.mxu0 0.0
        %7668 = vmatpush1.msra.mxu0 0.0
        %7669 = vmatprep.subr.mxu0 0.0
        %7670 = vmatpush1.msra.mxu0 0.0
        %7671 = vmatprep.subr.mxu0 0.0
        %7672 = vmatpush1.msra.mxu0 0.0
        %7673 = vmatprep.subr.mxu0 0.0
        %7674 = vmatpush1.msra.mxu0 0.0
        %7675 = vmatprep.subr.mxu0 0.0
        %7676 = vmatpush1.msra.mxu0 0.0
        %7677 = vmatprep.subr.mxu0 0.0
        %7678 = vmatpush1.msra.mxu0 0.0
        %7679 = vmatprep.mubr.f32.mxu0 0.0
        %7680 = vmatmul.mubr.f32.gmra.mrb[0].mxu0 %v7551
        %v7681 = vpop.f32.mrb[0].mxu0
        %v7682 = vadd.f32 0.0, %v7681
        %v7683 = vpop.f32.mrb[0].mxu0
        %7684 = vmatprep.mubr.f32.mxu0 0.0
        %7685 = vmatmul.mubr.f32.gmra.mrb[0].mxu0 %v7552
        %v7686 = vpop.f32.mrb[0].mxu0
        %v7687 = vadd.f32 0.0, %v7686
        %v7688 = vpop.f32.mrb[0].mxu0
        %7689 = vmatprep.mubr.f32.mxu0 0.0
        %7690 = vmatmul.mubr.f32.gmra.mrb[0].mxu0 %v7553
        %v7691 = vpop.f32.mrb[0].mxu0
        %v7692 = vadd.f32 0.0, %v7691
        %v7693 = vpop.f32.mrb[0].mxu0
        %7694 = vmatprep.mubr.f32.mxu0 0.0
        %7695 = vmatmul.mubr.f32.gmra.mrb[0].mxu0 %v7554
        %v7696 = vpop.f32.mrb[0].mxu0
        %v7697 = vadd.f32 0.0, %v7696
        %v7698 = vpop.f32.mrb[0].mxu0
        %7699 = vmatprep.mubr.f32.mxu0 0.0
        %7700 = vmatmul.mubr.f32.gmra.mrb[0].mxu0 %v7555
        %v7701 = vpop.f32.mrb[0].mxu0
        %v7702 = vadd.f32 0.0, %v7701
        %v7703 = vpop.f32.mrb[0].mxu0
        %7704 = vmatprep.mubr.f32.mxu0 0.0
        %7705 = vmatmul.mubr.f32.gmra.mrb[0].mxu0 %v7556
        %v7706 = vpop.f32.mrb[0].mxu0
        %v7707 = vadd.f32 0.0, %v7706
        %v7708 = vpop.f32.mrb[0].mxu0
        %7709 = vmatprep.mubr.f32.mxu0 0.0
        %7710 = vmatmul.mubr.f32.gmra.mrb[0].mxu0 %v7557
        %v7711 = vpop.f32.mrb[0].mxu0
        %v7712 = vadd.f32 0.0, %v7711
        %v7713 = vpop.f32.mrb[0].mxu0
        %7714 = vmatprep.mubr.f32.mxu0 0.0
        %7715 = vmatmul.mubr.f32.gmra.mrb[0].mxu0 %v7558
        %v7716 = vpop.f32.mrb[0].mxu0
        %v7717 = vadd.f32 0.0, %v7716
        %v7718 = vpop.f32.mrb[0].mxu0
        %7719 = vmatprep.mubr.f32.mxu0 0.0
        %7720 = vmatmul.mubr.f32.gmra.mrb[0].mxu0 %v7559
        %v7721 = vpop.f32.mrb[0].mxu0
        %v7722 = vadd.f32 0.0, %v7721
        %v7723 = vpop.f32.mrb[0].mxu0
        %7724 = vmatprep.mubr.f32.mxu0 0.0
        %7725 = vmatmul.mubr.f32.gmra.mrb[0].mxu0 %v7560
        %v7726 = vpop.f32.mrb[0].mxu0
        %v7727 = vadd.f32 0.0, %v7726
        %v7728 = vpop.f32.mrb[0].mxu0
        %7729 = vmatprep.mubr.f32.mxu0 0.0
        %7730 = vmatmul.mubr.f32.gmra.mrb[0].mxu0 %v7561
        %v7731 = vpop.f32.mrb[0].mxu0
        %v7732 = vadd.f32 0.0, %v7731
        %v7733 = vpop.f32.mrb[0].mxu0
        %7734 = vmatprep.mubr.f32.mxu0 0.0
        %7735 = vmatmul.mubr.f32.gmra.mrb[0].mxu0 %v7562
        %v7736 = vpop.f32.mrb[0].mxu0
        %v7737 = vadd.f32 0.0, %v7736
        %v7738 = vpop.f32.mrb[0].mxu0
        %7739 = vmatprep.mubr.f32.mxu0 0.0
        %7740 = vmatmul.mubr.f32.gmra.mrb[0].mxu0 %v7563
        %v7741 = vpop.f32.mrb[0].mxu0
        %v7742 = vadd.f32 0.0, %v7741
        %v7743 = vpop.f32.mrb[0].mxu0
        %7744 = vmatprep.mubr.f32.mxu0 0.0
        %7745 = vmatmul.mubr.f32.gmra.mrb[0].mxu0 %v7564
        %v7746 = vpop.f32.mrb[0].mxu0
        %v7747 = vadd.f32 0.0, %v7746
        %v7748 = vpop.f32.mrb[0].mxu0
        %7749 = vmatprep.mubr.f32.mxu0 0.0
        %7750 = vmatmul.mubr.f32.gmra.mrb[0].mxu0 %v7565
        %v7751 = vpop.f32.mrb[0].mxu0
        %v7752 = vadd.f32 0.0, %v7751
        %v7753 = vpop.f32.mrb[0].mxu0
        %7754 = vmatprep.mubr.f32.mxu0 0.0
        %7755 = vmatmul.mubr.f32.gmra.mrb[0].mxu0 %v7566
        %v7756 = vpop.f32.mrb[0].mxu0
        %v7757 = vadd.f32 0.0, %v7756
        %v7758 = vpop.f32.mrb[0].mxu0
        %7759 = vdwg.mxu0
        %7760 = vrot.lane.b32.xlu0 %v5884, 80
        %v7761 = vpop.permute.xlu0 %7760
        %7762 = vrot.lane.b32.xlu0 %v5890, 80
        %v7763 = vpop.permute.xlu0 %7762
        %7764 = vrot.lane.b32.xlu0 %v5896, 80
        %v7765 = vpop.permute.xlu0 %7764
        %7766 = vrot.lane.b32.xlu0 %v5902, 80
        %v7767 = vpop.permute.xlu0 %7766
        %7768 = vrot.lane.b32.xlu0 %v5908, 80
        %v7769 = vpop.permute.xlu0 %7768
        %7770 = vrot.lane.b32.xlu0 %v5914, 80
        %v7771 = vpop.permute.xlu0 %7770
        %7772 = vrot.lane.b32.xlu0 %v5920, 80
        %v7773 = vpop.permute.xlu0 %7772
        %7774 = vrot.lane.b32.xlu0 %v5926, 80
        %v7775 = vpop.permute.xlu0 %7774
        %7776 = vrot.lane.b32.xlu0 %v5932, 80
        %v7777 = vpop.permute.xlu0 %7776
        %7778 = vrot.lane.b32.xlu0 %v5938, 80
        %v7779 = vpop.permute.xlu0 %7778
        %7780 = vrot.lane.b32.xlu0 %v5944, 80
        %v7781 = vpop.permute.xlu0 %7780
        %7782 = vrot.lane.b32.xlu0 %v5950, 80
        %v7783 = vpop.permute.xlu0 %7782
        %7784 = vrot.lane.b32.xlu0 %v5956, 80
        %v7785 = vpop.permute.xlu0 %7784
        %7786 = vrot.lane.b32.xlu0 %v5962, 80
        %v7787 = vpop.permute.xlu0 %7786
        %7788 = vrot.lane.b32.xlu0 %v5968, 80
        %v7789 = vpop.permute.xlu0 %7788
        %7790 = vrot.lane.b32.xlu0 %v5974, 80
        %v7791 = vpop.permute.xlu0 %7790
        %7792 = vrot.lane.b32.xlu0 %v5884, 16
        %v7793 = vpop.permute.xlu0 %7792
        %7794 = vrot.lane.b32.xlu0 %v5890, 16
        %v7795 = vpop.permute.xlu0 %7794
        %7796 = vrot.lane.b32.xlu0 %v5896, 16
        %v7797 = vpop.permute.xlu0 %7796
        %7798 = vrot.lane.b32.xlu0 %v5902, 16
        %v7799 = vpop.permute.xlu0 %7798
        %7800 = vrot.lane.b32.xlu0 %v5908, 16
        %v7801 = vpop.permute.xlu0 %7800
        %7802 = vrot.lane.b32.xlu0 %v5914, 16
        %v7803 = vpop.permute.xlu0 %7802
        %7804 = vrot.lane.b32.xlu0 %v5920, 16
        %v7805 = vpop.permute.xlu0 %7804
        %7806 = vrot.lane.b32.xlu0 %v5926, 16
        %v7807 = vpop.permute.xlu0 %7806
        %7808 = vrot.lane.b32.xlu0 %v5932, 16
        %v7809 = vpop.permute.xlu0 %7808
        %7810 = vrot.lane.b32.xlu0 %v5938, 16
        %v7811 = vpop.permute.xlu0 %7810
        %7812 = vrot.lane.b32.xlu0 %v5944, 16
        %v7813 = vpop.permute.xlu0 %7812
        %7814 = vrot.lane.b32.xlu0 %v5950, 16
        %v7815 = vpop.permute.xlu0 %7814
        %7816 = vrot.lane.b32.xlu0 %v5956, 16
        %v7817 = vpop.permute.xlu0 %7816
        %7818 = vrot.lane.b32.xlu0 %v5962, 16
        %v7819 = vpop.permute.xlu0 %7818
        %7820 = vrot.lane.b32.xlu0 %v5968, 16
        %v7821 = vpop.permute.xlu0 %7820
        %7822 = vrot.lane.b32.xlu0 %v5974, 16
        %v7823 = vpop.permute.xlu0 %7822
        %v7824 = vsel %vm1131, %v7761, 0
        %v7826 = vsel %vm1131, %v7763, 0
        %v7828 = vsel %vm1131, %v7765, 0
        %v7830 = vsel %vm1131, %v7767, 0
        %v7832 = vsel %vm1131, %v7769, 0
        %v7834 = vsel %vm1131, %v7771, 0
        %v7836 = vsel %vm1131, %v7773, 0
        %v7838 = vsel %vm1131, %v7775, 0
        %v7840 = vsel %vm1131, %v7777, 0
        %v7842 = vsel %vm1131, %v7779, 0
        %v7844 = vsel %vm1131, %v7781, 0
        %v7846 = vsel %vm1131, %v7783, 0
        %v7848 = vsel %vm1131, %v7785, 0
        %v7850 = vsel %vm1131, %v7787, 0
        %v7852 = vsel %vm1131, %v7789, 0
        %v7854 = vsel %vm1131, %v7791, 0
        %v7856 = vsel %vm1131, %v7793, 0
        %v7858 = vsel %vm1131, %v7795, 0
        %v7860 = vsel %vm1131, %v7797, 0
        %v7862 = vsel %vm1131, %v7799, 0
        %v7864 = vsel %vm1131, %v7801, 0
        %v7866 = vsel %vm1131, %v7803, 0
        %v7868 = vsel %vm1131, %v7805, 0
        %v7870 = vsel %vm1131, %v7807, 0
        %v7872 = vsel %vm1131, %v7809, 0
        %v7874 = vsel %vm1131, %v7811, 0
        %v7876 = vsel %vm1131, %v7813, 0
        %v7878 = vsel %vm1131, %v7815, 0
        %v7880 = vsel %vm1131, %v7817, 0
        %v7882 = vsel %vm1131, %v7819, 0
        %v7884 = vsel %vm1131, %v7821, 0
        %v7886 = vsel %vm1131, %v7823, 0
        %7888 = vmatprep.subr.mxu0 0.0
        %7889 = vmatpush1.xpose.msra.mxu0 %v7856
        %7890 = vmatprep.subr.mxu0 0.0
        %7891 = vmatpush1.xpose.msra.mxu0 %v7858
        %7892 = vmatprep.subr.mxu0 0.0
        %7893 = vmatpush1.xpose.msra.mxu0 %v7860
        %7894 = vmatprep.subr.mxu0 0.0
        %7895 = vmatpush1.xpose.msra.mxu0 %v7862
        %7896 = vmatprep.subr.mxu0 0.0
        %7897 = vmatpush1.xpose.msra.mxu0 %v7864
        %7898 = vmatprep.subr.mxu0 0.0
        %7899 = vmatpush1.xpose.msra.mxu0 %v7866
        %7900 = vmatprep.subr.mxu0 0.0
        %7901 = vmatpush1.xpose.msra.mxu0 %v7868
        %7902 = vmatprep.subr.mxu0 0.0
        %7903 = vmatpush1.xpose.msra.mxu0 %v7870
        %7904 = vmatprep.subr.mxu0 0.0
        %7905 = vmatpush1.xpose.msra.mxu0 %v7872
        %7906 = vmatprep.subr.mxu0 0.0
        %7907 = vmatpush1.xpose.msra.mxu0 %v7874
        %7908 = vmatprep.subr.mxu0 0.0
        %7909 = vmatpush1.xpose.msra.mxu0 %v7876
        %7910 = vmatprep.subr.mxu0 0.0
        %7911 = vmatpush1.xpose.msra.mxu0 %v7878
        %7912 = vmatprep.subr.mxu0 0.0
        %7913 = vmatpush1.xpose.msra.mxu0 %v7880
        %7914 = vmatprep.subr.mxu0 0.0
        %7915 = vmatpush1.xpose.msra.mxu0 %v7882
        %7916 = vmatprep.subr.mxu0 0.0
        %7917 = vmatpush1.xpose.msra.mxu0 %v7884
        %7918 = vmatprep.subr.mxu0 0.0
        %7919 = vmatpush1.xpose.msra.mxu0 %v7886
        %7920 = vmatprep.subr.mxu0 0.0
        %7921 = vmatpush1.xpose.msra.mxu0 0.0
        %7922 = vmatprep.subr.mxu0 0.0
        %7923 = vmatpush1.xpose.msra.mxu0 0.0
        %7924 = vmatprep.subr.mxu0 0.0
        %7925 = vmatpush1.xpose.msra.mxu0 0.0
        %7926 = vmatprep.subr.mxu0 0.0
        %7927 = vmatpush1.xpose.msra.mxu0 0.0
        %7928 = vmatprep.subr.mxu0 0.0
        %7929 = vmatpush1.xpose.msra.mxu0 0.0
        %7930 = vmatprep.subr.mxu0 0.0
        %7931 = vmatpush1.xpose.msra.mxu0 0.0
        %7932 = vmatprep.subr.mxu0 0.0
        %7933 = vmatpush1.xpose.msra.mxu0 0.0
        %7934 = vmatprep.subr.mxu0 0.0
        %7935 = vmatpush1.xpose.msra.mxu0 0.0
        %7936 = vmatprep.subr.mxu0 0.0
        %7937 = vmatpush1.xpose.msra.mxu0 0.0
        %7938 = vmatprep.subr.mxu0 0.0
        %7939 = vmatpush1.xpose.msra.mxu0 0.0
        %7940 = vmatprep.subr.mxu0 0.0
        %7941 = vmatpush1.xpose.msra.mxu0 0.0
        %7942 = vmatprep.subr.mxu0 0.0
        %7943 = vmatpush1.xpose.msra.mxu0 0.0
        %7944 = vmatprep.subr.mxu0 0.0
        %7945 = vmatpush1.xpose.msra.mxu0 0.0
        %7946 = vmatprep.subr.mxu0 0.0
        %7947 = vmatpush1.xpose.msra.mxu0 0.0
        %7948 = vmatprep.subr.mxu0 0.0
        %7949 = vmatpush1.xpose.msra.mxu0 0.0
        %7950 = vmatprep.subr.mxu0 0.0
        %7951 = vmatpush1.xpose.msra.mxu0 0.0
        %7952 = vmatprep.mubr.f32.mxu0 0.0
        %7953 = vmatmul.mubr.f32.gmra.mrb[0].mxu0 %v7824
        %v7954 = vpop.f32.mrb[0].mxu0
        %v7955 = vadd.f32 %v714, %v7954
        %v7956 = vpop.f32.mrb[0].mxu0
        %7957 = vmatprep.mubr.f32.mxu0 0.0
        %7958 = vmatmul.mubr.f32.gmra.mrb[0].mxu0 %v7826
        %v7959 = vpop.f32.mrb[0].mxu0
        %v7960 = vadd.f32 %v715, %v7959
        %v7961 = vpop.f32.mrb[0].mxu0
        %7962 = vmatprep.mubr.f32.mxu0 0.0
        %7963 = vmatmul.mubr.f32.gmra.mrb[0].mxu0 %v7828
        %v7964 = vpop.f32.mrb[0].mxu0
        %v7965 = vadd.f32 %v716, %v7964
        %v7966 = vpop.f32.mrb[0].mxu0
        %7967 = vmatprep.mubr.f32.mxu0 0.0
        %7968 = vmatmul.mubr.f32.gmra.mrb[0].mxu0 %v7830
        %v7969 = vpop.f32.mrb[0].mxu0
        %v7970 = vadd.f32 %v717, %v7969
        %v7971 = vpop.f32.mrb[0].mxu0
        %7972 = vmatprep.mubr.f32.mxu0 0.0
        %7973 = vmatmul.mubr.f32.gmra.mrb[0].mxu0 %v7832
        %v7974 = vpop.f32.mrb[0].mxu0
        %v7975 = vadd.f32 %v718, %v7974
        %v7976 = vpop.f32.mrb[0].mxu0
        %7977 = vmatprep.mubr.f32.mxu0 0.0
        %7978 = vmatmul.mubr.f32.gmra.mrb[0].mxu0 %v7834
        %v7979 = vpop.f32.mrb[0].mxu0
        %v7980 = vadd.f32 %v719, %v7979
        %v7981 = vpop.f32.mrb[0].mxu0
        %7982 = vmatprep.mubr.f32.mxu0 0.0
        %7983 = vmatmul.mubr.f32.gmra.mrb[0].mxu0 %v7836
        %v7984 = vpop.f32.mrb[0].mxu0
        %v7985 = vadd.f32 %v720, %v7984
        %v7986 = vpop.f32.mrb[0].mxu0
        %7987 = vmatprep.mubr.f32.mxu0 0.0
        %7988 = vmatmul.mubr.f32.gmra.mrb[0].mxu0 %v7838
        %v7989 = vpop.f32.mrb[0].mxu0
        %v7990 = vadd.f32 %v721, %v7989
        %v7991 = vpop.f32.mrb[0].mxu0
        %7992 = vmatprep.mubr.f32.mxu0 0.0
        %7993 = vmatmul.mubr.f32.gmra.mrb[0].mxu0 %v7840
        %v7994 = vpop.f32.mrb[0].mxu0
        %v7995 = vadd.f32 %v722, %v7994
        %v7996 = vpop.f32.mrb[0].mxu0
        %7997 = vmatprep.mubr.f32.mxu0 0.0
        %7998 = vmatmul.mubr.f32.gmra.mrb[0].mxu0 %v7842
        %v7999 = vpop.f32.mrb[0].mxu0
        %v8000 = vadd.f32 %v723, %v7999
        %v8001 = vpop.f32.mrb[0].mxu0
        %8002 = vmatprep.mubr.f32.mxu0 0.0
        %8003 = vmatmul.mubr.f32.gmra.mrb[0].mxu0 %v7844
        %v8004 = vpop.f32.mrb[0].mxu0
        %v8005 = vadd.f32 %v724, %v8004
        %v8006 = vpop.f32.mrb[0].mxu0
        %8007 = vmatprep.mubr.f32.mxu0 0.0
        %8008 = vmatmul.mubr.f32.gmra.mrb[0].mxu0 %v7846
        %v8009 = vpop.f32.mrb[0].mxu0
        %v8010 = vadd.f32 %v725, %v8009
        %v8011 = vpop.f32.mrb[0].mxu0
        %8012 = vmatprep.mubr.f32.mxu0 0.0
        %8013 = vmatmul.mubr.f32.gmra.mrb[0].mxu0 %v7848
        %v8014 = vpop.f32.mrb[0].mxu0
        %v8015 = vadd.f32 %v726, %v8014
        %v8016 = vpop.f32.mrb[0].mxu0
        %8017 = vmatprep.mubr.f32.mxu0 0.0
        %8018 = vmatmul.mubr.f32.gmra.mrb[0].mxu0 %v7850
        %v8019 = vpop.f32.mrb[0].mxu0
        %v8020 = vadd.f32 %v727, %v8019
        %v8021 = vpop.f32.mrb[0].mxu0
        %8022 = vmatprep.mubr.f32.mxu0 0.0
        %8023 = vmatmul.mubr.f32.gmra.mrb[0].mxu0 %v7852
        %v8024 = vpop.f32.mrb[0].mxu0
        %v8025 = vadd.f32 %v728, %v8024
        %v8026 = vpop.f32.mrb[0].mxu0
        %8027 = vmatprep.mubr.f32.mxu0 0.0
        %8028 = vmatmul.mubr.f32.gmra.mrb[0].mxu0 %v7854
        %v8029 = vpop.f32.mrb[0].mxu0
        %v8030 = vadd.f32 %v729, %v8029
        %v8031 = vpop.f32.mrb[0].mxu0
        %8032 = vdwg.mxu0
        %8033 = vmax.xlane.f32.xlu0 %v7955
        %v8034 = vpop.xlane.xlu0 %8033
        %8035 = vmax.xlane.f32.xlu0 %v7960
        %v8036 = vpop.xlane.xlu0 %8035
        %8037 = vmax.xlane.f32.xlu0 %v7965
        %v8038 = vpop.xlane.xlu0 %8037
        %8039 = vmax.xlane.f32.xlu0 %v7970
        %v8040 = vpop.xlane.xlu0 %8039
        %8041 = vmax.xlane.f32.xlu0 %v7975
        %v8042 = vpop.xlane.xlu0 %8041
        %8043 = vmax.xlane.f32.xlu0 %v7980
        %v8044 = vpop.xlane.xlu0 %8043
        %8045 = vmax.xlane.f32.xlu0 %v7985
        %v8046 = vpop.xlane.xlu0 %8045
        %8047 = vmax.xlane.f32.xlu0 %v7990
        %v8048 = vpop.xlane.xlu0 %8047
        %8049 = vmax.xlane.f32.xlu0 %v7995
        %v8050 = vpop.xlane.xlu0 %8049
        %8051 = vmax.xlane.f32.xlu0 %v8000
        %v8052 = vpop.xlane.xlu0 %8051
        %8053 = vmax.xlane.f32.xlu0 %v8005
        %v8054 = vpop.xlane.xlu0 %8053
        %8055 = vmax.xlane.f32.xlu0 %v8010
        %v8056 = vpop.xlane.xlu0 %8055
        %8057 = vmax.xlane.f32.xlu0 %v8015
        %v8058 = vpop.xlane.xlu0 %8057
        %8059 = vmax.xlane.f32.xlu0 %v8020
        %v8060 = vpop.xlane.xlu0 %8059
        %8061 = vmax.xlane.f32.xlu0 %v8025
        %v8062 = vpop.xlane.xlu0 %8061
        %8063 = vmax.xlane.f32.xlu0 %v8030
        %v8064 = vpop.xlane.xlu0 %8063
        %v8065 = vsub.f32 %v7955, %v8034
        %v8066 = vsub.f32 %v7960, %v8036
        %v8067 = vsub.f32 %v7965, %v8038
        %v8068 = vsub.f32 %v7970, %v8040
        %v8069 = vsub.f32 %v7975, %v8042
        %v8070 = vsub.f32 %v7980, %v8044
        %v8071 = vsub.f32 %v7985, %v8046
        %v8072 = vsub.f32 %v7990, %v8048
        %v8073 = vsub.f32 %v7995, %v8050
        %v8074 = vsub.f32 %v8000, %v8052
        %v8075 = vsub.f32 %v8005, %v8054
        %v8076 = vsub.f32 %v8010, %v8056
        %v8077 = vsub.f32 %v8015, %v8058
        %v8078 = vsub.f32 %v8020, %v8060
        %v8079 = vsub.f32 %v8025, %v8062
        %v8080 = vsub.f32 %v8030, %v8064
        %v8081 = vmul.f32 %v8065, 1.442695
        %v8082 = vpow.pop %v8081
        %v8083 = vmul.f32 %v8066, 1.442695
        %v8084 = vpow.pop %v8083
        %v8085 = vmul.f32 %v8067, 1.442695
        %v8086 = vpow.pop %v8085
        %v8087 = vmul.f32 %v8068, 1.442695
        %v8088 = vpow.pop %v8087
        %v8089 = vmul.f32 %v8069, 1.442695
        %v8090 = vpow.pop %v8089
        %v8091 = vmul.f32 %v8070, 1.442695
        %v8092 = vpow.pop %v8091
        %v8093 = vmul.f32 %v8071, 1.442695
        %v8094 = vpow.pop %v8093
        %v8095 = vmul.f32 %v8072, 1.442695
        %v8096 = vpow.pop %v8095
        %v8097 = vmul.f32 %v8073, 1.442695
        %v8098 = vpow.pop %v8097
        %v8099 = vmul.f32 %v8074, 1.442695
        %v8100 = vpow.pop %v8099
        %v8101 = vmul.f32 %v8075, 1.442695
        %v8102 = vpow.pop %v8101
        %v8103 = vmul.f32 %v8076, 1.442695
        %v8104 = vpow.pop %v8103
        %v8105 = vmul.f32 %v8077, 1.442695
        %v8106 = vpow.pop %v8105
        %v8107 = vmul.f32 %v8078, 1.442695
        %v8108 = vpow.pop %v8107
        %v8109 = vmul.f32 %v8079, 1.442695
        %v8110 = vpow.pop %v8109
        %v8111 = vmul.f32 %v8080, 1.442695
        %v8112 = vpow.pop %v8111
        %8113 = vadd.xlane.f32.xlu0 %v8082
        %v8114 = vpop.xlane.xlu0 %8113
        %8115 = vadd.xlane.f32.xlu0 %v8084
        %v8116 = vpop.xlane.xlu0 %8115
        %8117 = vadd.xlane.f32.xlu0 %v8086
        %v8118 = vpop.xlane.xlu0 %8117
        %8119 = vadd.xlane.f32.xlu0 %v8088
        %v8120 = vpop.xlane.xlu0 %8119
        %8121 = vadd.xlane.f32.xlu0 %v8090
        %v8122 = vpop.xlane.xlu0 %8121
        %8123 = vadd.xlane.f32.xlu0 %v8092
        %v8124 = vpop.xlane.xlu0 %8123
        %8125 = vadd.xlane.f32.xlu0 %v8094
        %v8126 = vpop.xlane.xlu0 %8125
        %8127 = vadd.xlane.f32.xlu0 %v8096
        %v8128 = vpop.xlane.xlu0 %8127
        %8129 = vadd.xlane.f32.xlu0 %v8098
        %v8130 = vpop.xlane.xlu0 %8129
        %8131 = vadd.xlane.f32.xlu0 %v8100
        %v8132 = vpop.xlane.xlu0 %8131
        %8133 = vadd.xlane.f32.xlu0 %v8102
        %v8134 = vpop.xlane.xlu0 %8133
        %8135 = vadd.xlane.f32.xlu0 %v8104
        %v8136 = vpop.xlane.xlu0 %8135
        %8137 = vadd.xlane.f32.xlu0 %v8106
        %v8138 = vpop.xlane.xlu0 %8137
        %8139 = vadd.xlane.f32.xlu0 %v8108
        %v8140 = vpop.xlane.xlu0 %8139
        %8141 = vadd.xlane.f32.xlu0 %v8110
        %v8142 = vpop.xlane.xlu0 %8141
        %8143 = vadd.xlane.f32.xlu0 %v8112
        %v8144 = vpop.xlane.xlu0 %8143
        %v8145 = vrcp.pop %v8114
        %v8146 = vrcp.pop %v8116
        %v8147 = vrcp.pop %v8118
        %v8148 = vrcp.pop %v8120
        %v8149 = vrcp.pop %v8122
        %v8150 = vrcp.pop %v8124
        %v8151 = vrcp.pop %v8126
        %v8152 = vrcp.pop %v8128
        %v8153 = vrcp.pop %v8130
        %v8154 = vrcp.pop %v8132
        %v8155 = vrcp.pop %v8134
        %v8156 = vrcp.pop %v8136
        %v8157 = vrcp.pop %v8138
        %v8158 = vrcp.pop %v8140
        %v8159 = vrcp.pop %v8142
        %v8160 = vrcp.pop %v8144
        %v8161 = vmul.f32 %v8082, %v8145
        %v8162 = vmul.f32 %v8084, %v8146
        %v8163 = vmul.f32 %v8086, %v8147
        %v8164 = vmul.f32 %v8088, %v8148
        %v8165 = vmul.f32 %v8090, %v8149
        %v8166 = vmul.f32 %v8092, %v8150
        %v8167 = vmul.f32 %v8094, %v8151
        %v8168 = vmul.f32 %v8096, %v8152
        %v8169 = vmul.f32 %v8098, %v8153
        %v8170 = vmul.f32 %v8100, %v8154
        %v8171 = vmul.f32 %v8102, %v8155
        %v8172 = vmul.f32 %v8104, %v8156
        %v8173 = vmul.f32 %v8106, %v8157
        %v8174 = vmul.f32 %v8108, %v8158
        %v8175 = vmul.f32 %v8110, %v8159
        %v8176 = vmul.f32 %v8112, %v8160
        %8177 = vrot.lane.b32.xlu0 %v5886, 80
        %v8178 = vpop.permute.xlu0 %8177
        %8179 = vrot.lane.b32.xlu0 %v5892, 80
        %v8180 = vpop.permute.xlu0 %8179
        %8181 = vrot.lane.b32.xlu0 %v5898, 80
        %v8182 = vpop.permute.xlu0 %8181
        %8183 = vrot.lane.b32.xlu0 %v5904, 80
        %v8184 = vpop.permute.xlu0 %8183
        %8185 = vrot.lane.b32.xlu0 %v5910, 80
        %v8186 = vpop.permute.xlu0 %8185
        %8187 = vrot.lane.b32.xlu0 %v5916, 80
        %v8188 = vpop.permute.xlu0 %8187
        %8189 = vrot.lane.b32.xlu0 %v5922, 80
        %v8190 = vpop.permute.xlu0 %8189
        %8191 = vrot.lane.b32.xlu0 %v5928, 80
        %v8192 = vpop.permute.xlu0 %8191
        %8193 = vrot.lane.b32.xlu0 %v5934, 80
        %v8194 = vpop.permute.xlu0 %8193
        %8195 = vrot.lane.b32.xlu0 %v5940, 80
        %v8196 = vpop.permute.xlu0 %8195
        %8197 = vrot.lane.b32.xlu0 %v5946, 80
        %v8198 = vpop.permute.xlu0 %8197
        %8199 = vrot.lane.b32.xlu0 %v5952, 80
        %v8200 = vpop.permute.xlu0 %8199
        %8201 = vrot.lane.b32.xlu0 %v5958, 80
        %v8202 = vpop.permute.xlu0 %8201
        %8203 = vrot.lane.b32.xlu0 %v5964, 80
        %v8204 = vpop.permute.xlu0 %8203
        %8205 = vrot.lane.b32.xlu0 %v5970, 80
        %v8206 = vpop.permute.xlu0 %8205
        %8207 = vrot.lane.b32.xlu0 %v5976, 80
        %v8208 = vpop.permute.xlu0 %8207
        %8225 = vmatprep.subr.mxu0 0.0
        %8226 = vmatpush1.msra.mxu0 %v8178
        %8227 = vmatprep.subr.mxu0 0.0
        %8228 = vmatpush1.msra.mxu0 %v8180
        %8229 = vmatprep.subr.mxu0 0.0
        %8230 = vmatpush1.msra.mxu0 %v8182
        %8231 = vmatprep.subr.mxu0 0.0
        %8232 = vmatpush1.msra.mxu0 %v8184
        %8233 = vmatprep.subr.mxu0 0.0
        %8234 = vmatpush1.msra.mxu0 %v8186
        %8235 = vmatprep.subr.mxu0 0.0
        %8236 = vmatpush1.msra.mxu0 %v8188
        %8237 = vmatprep.subr.mxu0 0.0
        %8238 = vmatpush1.msra.mxu0 %v8190
        %8239 = vmatprep.subr.mxu0 0.0
        %8240 = vmatpush1.msra.mxu0 %v8192
        %8241 = vmatprep.subr.mxu0 0.0
        %8242 = vmatpush1.msra.mxu0 %v8194
        %8243 = vmatprep.subr.mxu0 0.0
        %8244 = vmatpush1.msra.mxu0 %v8196
        %8245 = vmatprep.subr.mxu0 0.0
        %8246 = vmatpush1.msra.mxu0 %v8198
        %8247 = vmatprep.subr.mxu0 0.0
        %8248 = vmatpush1.msra.mxu0 %v8200
        %8249 = vmatprep.subr.mxu0 0.0
        %8250 = vmatpush1.msra.mxu0 %v8202
        %8251 = vmatprep.subr.mxu0 0.0
        %8252 = vmatpush1.msra.mxu0 %v8204
        %8253 = vmatprep.subr.mxu0 0.0
        %8254 = vmatpush1.msra.mxu0 %v8206
        %8255 = vmatprep.subr.mxu0 0.0
        %8256 = vmatpush1.msra.mxu0 %v8208
        %8257 = vmatprep.subr.mxu0 0.0
        %8258 = vmatpush1.msra.mxu0 0.0
        %8259 = vmatprep.subr.mxu0 0.0
        %8260 = vmatpush1.msra.mxu0 0.0
        %8261 = vmatprep.subr.mxu0 0.0
        %8262 = vmatpush1.msra.mxu0 0.0
        %8263 = vmatprep.subr.mxu0 0.0
        %8264 = vmatpush1.msra.mxu0 0.0
        %8265 = vmatprep.subr.mxu0 0.0
        %8266 = vmatpush1.msra.mxu0 0.0
        %8267 = vmatprep.subr.mxu0 0.0
        %8268 = vmatpush1.msra.mxu0 0.0
        %8269 = vmatprep.subr.mxu0 0.0
        %8270 = vmatpush1.msra.mxu0 0.0
        %8271 = vmatprep.subr.mxu0 0.0
        %8272 = vmatpush1.msra.mxu0 0.0
        %8273 = vmatprep.subr.mxu0 0.0
        %8274 = vmatpush1.msra.mxu0 0.0
        %8275 = vmatprep.subr.mxu0 0.0
        %8276 = vmatpush1.msra.mxu0 0.0
        %8277 = vmatprep.subr.mxu0 0.0
        %8278 = vmatpush1.msra.mxu0 0.0
        %8279 = vmatprep.subr.mxu0 0.0
        %8280 = vmatpush1.msra.mxu0 0.0
        %8281 = vmatprep.subr.mxu0 0.0
        %8282 = vmatpush1.msra.mxu0 0.0
        %8283 = vmatprep.subr.mxu0 0.0
        %8284 = vmatpush1.msra.mxu0 0.0
        %8285 = vmatprep.subr.mxu0 0.0
        %8286 = vmatpush1.msra.mxu0 0.0
        %8287 = vmatprep.subr.mxu0 0.0
        %8288 = vmatpush1.msra.mxu0 0.0
        %8289 = vmatprep.mubr.f32.mxu0 0.0
        %8290 = vmatmul.mubr.f32.gmra.mrb[0].mxu0 %v8161
        %v8291 = vpop.f32.mrb[0].mxu0
        %v8292 = vadd.f32 0.0, %v8291
        %v8293 = vpop.f32.mrb[0].mxu0
        %8294 = vmatprep.mubr.f32.mxu0 0.0
        %8295 = vmatmul.mubr.f32.gmra.mrb[0].mxu0 %v8162
        %v8296 = vpop.f32.mrb[0].mxu0
        %v8297 = vadd.f32 0.0, %v8296
        %v8298 = vpop.f32.mrb[0].mxu0
        %8299 = vmatprep.mubr.f32.mxu0 0.0
        %8300 = vmatmul.mubr.f32.gmra.mrb[0].mxu0 %v8163
        %v8301 = vpop.f32.mrb[0].mxu0
        %v8302 = vadd.f32 0.0, %v8301
        %v8303 = vpop.f32.mrb[0].mxu0
        %8304 = vmatprep.mubr.f32.mxu0 0.0
        %8305 = vmatmul.mubr.f32.gmra.mrb[0].mxu0 %v8164
        %v8306 = vpop.f32.mrb[0].mxu0
        %v8307 = vadd.f32 0.0, %v8306
        %v8308 = vpop.f32.mrb[0].mxu0
        %8309 = vmatprep.mubr.f32.mxu0 0.0
        %8310 = vmatmul.mubr.f32.gmra.mrb[0].mxu0 %v8165
        %v8311 = vpop.f32.mrb[0].mxu0
        %v8312 = vadd.f32 0.0, %v8311
        %v8313 = vpop.f32.mrb[0].mxu0
        %8314 = vmatprep.mubr.f32.mxu0 0.0
        %8315 = vmatmul.mubr.f32.gmra.mrb[0].mxu0 %v8166
        %v8316 = vpop.f32.mrb[0].mxu0
        %v8317 = vadd.f32 0.0, %v8316
        %v8318 = vpop.f32.mrb[0].mxu0
        %8319 = vmatprep.mubr.f32.mxu0 0.0
        %8320 = vmatmul.mubr.f32.gmra.mrb[0].mxu0 %v8167
        %v8321 = vpop.f32.mrb[0].mxu0
        %v8322 = vadd.f32 0.0, %v8321
        %v8323 = vpop.f32.mrb[0].mxu0
        %8324 = vmatprep.mubr.f32.mxu0 0.0
        %8325 = vmatmul.mubr.f32.gmra.mrb[0].mxu0 %v8168
        %v8326 = vpop.f32.mrb[0].mxu0
        %v8327 = vadd.f32 0.0, %v8326
        %v8328 = vpop.f32.mrb[0].mxu0
        %8329 = vmatprep.mubr.f32.mxu0 0.0
        %8330 = vmatmul.mubr.f32.gmra.mrb[0].mxu0 %v8169
        %v8331 = vpop.f32.mrb[0].mxu0
        %v8332 = vadd.f32 0.0, %v8331
        %v8333 = vpop.f32.mrb[0].mxu0
        %8334 = vmatprep.mubr.f32.mxu0 0.0
        %8335 = vmatmul.mubr.f32.gmra.mrb[0].mxu0 %v8170
        %v8336 = vpop.f32.mrb[0].mxu0
        %v8337 = vadd.f32 0.0, %v8336
        %v8338 = vpop.f32.mrb[0].mxu0
        %8339 = vmatprep.mubr.f32.mxu0 0.0
        %8340 = vmatmul.mubr.f32.gmra.mrb[0].mxu0 %v8171
        %v8341 = vpop.f32.mrb[0].mxu0
        %v8342 = vadd.f32 0.0, %v8341
        %v8343 = vpop.f32.mrb[0].mxu0
        %8344 = vmatprep.mubr.f32.mxu0 0.0
        %8345 = vmatmul.mubr.f32.gmra.mrb[0].mxu0 %v8172
        %v8346 = vpop.f32.mrb[0].mxu0
        %v8347 = vadd.f32 0.0, %v8346
        %v8348 = vpop.f32.mrb[0].mxu0
        %8349 = vmatprep.mubr.f32.mxu0 0.0
        %8350 = vmatmul.mubr.f32.gmra.mrb[0].mxu0 %v8173
        %v8351 = vpop.f32.mrb[0].mxu0
        %v8352 = vadd.f32 0.0, %v8351
        %v8353 = vpop.f32.mrb[0].mxu0
        %8354 = vmatprep.mubr.f32.mxu0 0.0
        %8355 = vmatmul.mubr.f32.gmra.mrb[0].mxu0 %v8174
        %v8356 = vpop.f32.mrb[0].mxu0
        %v8357 = vadd.f32 0.0, %v8356
        %v8358 = vpop.f32.mrb[0].mxu0
        %8359 = vmatprep.mubr.f32.mxu0 0.0
        %8360 = vmatmul.mubr.f32.gmra.mrb[0].mxu0 %v8175
        %v8361 = vpop.f32.mrb[0].mxu0
        %v8362 = vadd.f32 0.0, %v8361
        %v8363 = vpop.f32.mrb[0].mxu0
        %8364 = vmatprep.mubr.f32.mxu0 0.0
        %8365 = vmatmul.mubr.f32.gmra.mrb[0].mxu0 %v8176
        %v8366 = vpop.f32.mrb[0].mxu0
        %v8367 = vadd.f32 0.0, %v8366
        %v8368 = vpop.f32.mrb[0].mxu0
        %8369 = vdwg.mxu0
        %8386 = vrot.lane.b32.xlu0 %v7072, 16
        %v8387 = vpop.permute.xlu0 %8386
        %8388 = vrot.lane.b32.xlu0 %v7077, 16
        %v8389 = vpop.permute.xlu0 %8388
        %8390 = vrot.lane.b32.xlu0 %v7082, 16
        %v8391 = vpop.permute.xlu0 %8390
        %8392 = vrot.lane.b32.xlu0 %v7087, 16
        %v8393 = vpop.permute.xlu0 %8392
        %8394 = vrot.lane.b32.xlu0 %v7092, 16
        %v8395 = vpop.permute.xlu0 %8394
        %8396 = vrot.lane.b32.xlu0 %v7097, 16
        %v8397 = vpop.permute.xlu0 %8396
        %8398 = vrot.lane.b32.xlu0 %v7102, 16
        %v8399 = vpop.permute.xlu0 %8398
        %8400 = vrot.lane.b32.xlu0 %v7107, 16
        %v8401 = vpop.permute.xlu0 %8400
        %8402 = vrot.lane.b32.xlu0 %v7112, 16
        %v8403 = vpop.permute.xlu0 %8402
        %8404 = vrot.lane.b32.xlu0 %v7117, 16
        %v8405 = vpop.permute.xlu0 %8404
        %8406 = vrot.lane.b32.xlu0 %v7122, 16
        %v8407 = vpop.permute.xlu0 %8406
        %8408 = vrot.lane.b32.xlu0 %v7127, 16
        %v8409 = vpop.permute.xlu0 %8408
        %8410 = vrot.lane.b32.xlu0 %v7132, 16
        %v8411 = vpop.permute.xlu0 %8410
        %8412 = vrot.lane.b32.xlu0 %v7137, 16
        %v8413 = vpop.permute.xlu0 %8412
        %8414 = vrot.lane.b32.xlu0 %v7142, 16
        %v8415 = vpop.permute.xlu0 %8414
        %8416 = vrot.lane.b32.xlu0 %v7147, 16
        %v8417 = vpop.permute.xlu0 %8416
        %8450 = vrot.lane.b32.xlu0 %v7682, 32
        %v8451 = vpop.permute.xlu0 %8450
        %8452 = vrot.lane.b32.xlu0 %v7687, 32
        %v8453 = vpop.permute.xlu0 %8452
        %8454 = vrot.lane.b32.xlu0 %v7692, 32
        %v8455 = vpop.permute.xlu0 %8454
        %8456 = vrot.lane.b32.xlu0 %v7697, 32
        %v8457 = vpop.permute.xlu0 %8456
        %8458 = vrot.lane.b32.xlu0 %v7702, 32
        %v8459 = vpop.permute.xlu0 %8458
        %8460 = vrot.lane.b32.xlu0 %v7707, 32
        %v8461 = vpop.permute.xlu0 %8460
        %8462 = vrot.lane.b32.xlu0 %v7712, 32
        %v8463 = vpop.permute.xlu0 %8462
        %8464 = vrot.lane.b32.xlu0 %v7717, 32
        %v8465 = vpop.permute.xlu0 %8464
        %8466 = vrot.lane.b32.xlu0 %v7722, 32
        %v8467 = vpop.permute.xlu0 %8466
        %8468 = vrot.lane.b32.xlu0 %v7727, 32
        %v8469 = vpop.permute.xlu0 %8468
        %8470 = vrot.lane.b32.xlu0 %v7732, 32
        %v8471 = vpop.permute.xlu0 %8470
        %8472 = vrot.lane.b32.xlu0 %v7737, 32
        %v8473 = vpop.permute.xlu0 %8472
        %8474 = vrot.lane.b32.xlu0 %v7742, 32
        %v8475 = vpop.permute.xlu0 %8474
        %8476 = vrot.lane.b32.xlu0 %v7747, 32
        %v8477 = vpop.permute.xlu0 %8476
        %8478 = vrot.lane.b32.xlu0 %v7752, 32
        %v8479 = vpop.permute.xlu0 %8478
        %8480 = vrot.lane.b32.xlu0 %v7757, 32
        %v8481 = vpop.permute.xlu0 %8480
        %8514 = vrot.lane.b32.xlu0 %v8292, 48
        %v8515 = vpop.permute.xlu0 %8514
        %8516 = vrot.lane.b32.xlu0 %v8297, 48
        %v8517 = vpop.permute.xlu0 %8516
        %8518 = vrot.lane.b32.xlu0 %v8302, 48
        %v8519 = vpop.permute.xlu0 %8518
        %8520 = vrot.lane.b32.xlu0 %v8307, 48
        %v8521 = vpop.permute.xlu0 %8520
        %8522 = vrot.lane.b32.xlu0 %v8312, 48
        %v8523 = vpop.permute.xlu0 %8522
        %8524 = vrot.lane.b32.xlu0 %v8317, 48
        %v8525 = vpop.permute.xlu0 %8524
        %8526 = vrot.lane.b32.xlu0 %v8322, 48
        %v8527 = vpop.permute.xlu0 %8526
        %8528 = vrot.lane.b32.xlu0 %v8327, 48
        %v8529 = vpop.permute.xlu0 %8528
        %8530 = vrot.lane.b32.xlu0 %v8332, 48
        %v8531 = vpop.permute.xlu0 %8530
        %8532 = vrot.lane.b32.xlu0 %v8337, 48
        %v8533 = vpop.permute.xlu0 %8532
        %8534 = vrot.lane.b32.xlu0 %v8342, 48
        %v8535 = vpop.permute.xlu0 %8534
        %8536 = vrot.lane.b32.xlu0 %v8347, 48
        %v8537 = vpop.permute.xlu0 %8536
        %8538 = vrot.lane.b32.xlu0 %v8352, 48
        %v8539 = vpop.permute.xlu0 %8538
        %8540 = vrot.lane.b32.xlu0 %v8357, 48
        %v8541 = vpop.permute.xlu0 %8540
        %8542 = vrot.lane.b32.xlu0 %v8362, 48
        %v8543 = vpop.permute.xlu0 %8542
        %8544 = vrot.lane.b32.xlu0 %v8367, 48
        %v8545 = vpop.permute.xlu0 %8544
        %v8562 = vsel %vm1131, %v6446, %v8387
        %v8563 = vsel %vm1131, %v6451, %v8389
        %v8564 = vsel %vm1131, %v6456, %v8391
        %v8565 = vsel %vm1131, %v6461, %v8393
        %v8566 = vsel %vm1131, %v6466, %v8395
        %v8567 = vsel %vm1131, %v6471, %v8397
        %v8568 = vsel %vm1131, %v6476, %v8399
        %v8569 = vsel %vm1131, %v6481, %v8401
        %v8570 = vsel %vm1131, %v6486, %v8403
        %v8571 = vsel %vm1131, %v6491, %v8405
        %v8572 = vsel %vm1131, %v6496, %v8407
        %v8573 = vsel %vm1131, %v6501, %v8409
        %v8574 = vsel %vm1131, %v6506, %v8411
        %v8575 = vsel %vm1131, %v6511, %v8413
        %v8576 = vsel %vm1131, %v6516, %v8415
        %v8577 = vsel %vm1131, %v6521, %v8417
        %v8578 = vsel %vm1148, %v8562, %v8451
        %v8579 = vsel %vm1148, %v8563, %v8453
        %v8580 = vsel %vm1148, %v8564, %v8455
        %v8581 = vsel %vm1148, %v8565, %v8457
        %v8582 = vsel %vm1148, %v8566, %v8459
        %v8583 = vsel %vm1148, %v8567, %v8461
        %v8584 = vsel %vm1148, %v8568, %v8463
        %v8585 = vsel %vm1148, %v8569, %v8465
        %v8586 = vsel %vm1148, %v8570, %v8467
        %v8587 = vsel %vm1148, %v8571, %v8469
        %v8588 = vsel %vm1148, %v8572, %v8471
        %v8589 = vsel %vm1148, %v8573, %v8473
        %v8590 = vsel %vm1148, %v8574, %v8475
        %v8591 = vsel %vm1148, %v8575, %v8477
        %v8592 = vsel %vm1148, %v8576, %v8479
        %v8593 = vsel %vm1148, %v8577, %v8481
        %v8594 = vsel %vm1165, %v8578, %v8515
        %v8595 = vsel %vm1165, %v8579, %v8517
        %v8596 = vsel %vm1165, %v8580, %v8519
        %v8597 = vsel %vm1165, %v8581, %v8521
        %v8598 = vsel %vm1165, %v8582, %v8523
        %v8599 = vsel %vm1165, %v8583, %v8525
        %v8600 = vsel %vm1165, %v8584, %v8527
        %v8601 = vsel %vm1165, %v8585, %v8529
        %v8602 = vsel %vm1165, %v8586, %v8531
        %v8603 = vsel %vm1165, %v8587, %v8533
        %v8604 = vsel %vm1165, %v8588, %v8535
        %v8605 = vsel %vm1165, %v8589, %v8537
        %v8606 = vsel %vm1165, %v8590, %v8539
        %v8607 = vsel %vm1165, %v8591, %v8541
        %v8608 = vsel %vm1165, %v8592, %v8543
        %v8609 = vsel %vm1165, %v8593, %v8545
        %s8610 = scalar_lea.vmem %s5, 64
        %v8611 = vld [vmem:[%s8610] sm:$0xff]
        %v8612 = vld [vmem:[%s8610 + $0x8] sm:$0xff]
        %v8613 = vld [vmem:[%s8610 + $0x10] sm:$0xff]
        %v8614 = vld [vmem:[%s8610 + $0x18] sm:$0xff]
        %v8615 = vld [vmem:[%s8610 + $0x20] sm:$0xff]
        %v8616 = vld [vmem:[%s8610 + $0x28] sm:$0xff]
        %v8617 = vld [vmem:[%s8610 + $0x30] sm:$0xff]
        %v8618 = vld [vmem:[%s8610 + $0x38] sm:$0xff]
        %s8619 = scalar_lea.vmem %s6, 1
        %v8620 = vld [vmem:[%s8619] sm:$0x1]
        %v8622 = vlaneseq
        %v8623 = vshrl.u32 %v8622, 7
        %v8624 = vsub.s32 0, %v8623
        %v8625 = vrot.slane %v8620, %v8624
        %v8628 = vsel %vm1210, %v8594, 0
        %v8631 = vsel %vm1210, %v8595, 0
        %v8634 = vsel %vm1210, %v8596, 0
        %v8637 = vsel %vm1210, %v8597, 0
        %v8640 = vsel %vm1210, %v8598, 0
        %v8643 = vsel %vm1210, %v8599, 0
        %v8646 = vsel %vm1210, %v8600, 0
        %v8649 = vsel %vm1210, %v8601, 0
        %v8652 = vsel %vm1210, %v8602, 0
        %v8655 = vsel %vm1210, %v8603, 0
        %v8658 = vsel %vm1210, %v8604, 0
        %v8661 = vsel %vm1210, %v8605, 0
        %v8664 = vsel %vm1210, %v8606, 0
        %v8667 = vsel %vm1210, %v8607, 0
        %v8670 = vsel %vm1210, %v8608, 0
        %v8673 = vsel %vm1210, %v8609, 0
        %8675 = vmatprep.subr.mxu0 0.0
        %8676 = vmatpush1.msra.mxu0 %v8611
        %8677 = vmatprep.subr.mxu0 0.0
        %8678 = vmatpush1.msra.mxu0 %v8612
        %8679 = vmatprep.subr.mxu0 0.0
        %8680 = vmatpush1.msra.mxu0 %v8613
        %8681 = vmatprep.subr.mxu0 0.0
        %8682 = vmatpush1.msra.mxu0 %v8614
        %8683 = vmatprep.subr.mxu0 0.0
        %8684 = vmatpush1.msra.mxu0 %v8615
        %8685 = vmatprep.subr.mxu0 0.0
        %8686 = vmatpush1.msra.mxu0 %v8616
        %8687 = vmatprep.subr.mxu0 0.0
        %8688 = vmatpush1.msra.mxu0 %v8617
        %8689 = vmatprep.subr.mxu0 0.0
        %8690 = vmatpush1.msra.mxu0 %v8618
        %8691 = vmatprep.subr.mxu0 0.0
        %8692 = vmatpush1.msra.mxu0 0.0
        %8693 = vmatprep.subr.mxu0 0.0
        %8694 = vmatpush1.msra.mxu0 0.0
        %8695 = vmatprep.subr.mxu0 0.0
        %8696 = vmatpush1.msra.mxu0 0.0
        %8697 = vmatprep.subr.mxu0 0.0
        %8698 = vmatpush1.msra.mxu0 0.0
        %8699 = vmatprep.subr.mxu0 0.0
        %8700 = vmatpush1.msra.mxu0 0.0
        %8701 = vmatprep.subr.mxu0 0.0
        %8702 = vmatpush1.msra.mxu0 0.0
        %8703 = vmatprep.subr.mxu0 0.0
        %8704 = vmatpush1.msra.mxu0 0.0
        %8705 = vmatprep.subr.mxu0 0.0
        %8706 = vmatpush1.msra.mxu0 0.0
        %8707 = vmatprep.subr.mxu0 0.0
        %8708 = vmatpush1.msra.mxu0 0.0
        %8709 = vmatprep.subr.mxu0 0.0
        %8710 = vmatpush1.msra.mxu0 0.0
        %8711 = vmatprep.subr.mxu0 0.0
        %8712 = vmatpush1.msra.mxu0 0.0
        %8713 = vmatprep.subr.mxu0 0.0
        %8714 = vmatpush1.msra.mxu0 0.0
        %8715 = vmatprep.subr.mxu0 0.0
        %8716 = vmatpush1.msra.mxu0 0.0
        %8717 = vmatprep.subr.mxu0 0.0
        %8718 = vmatpush1.msra.mxu0 0.0
        %8719 = vmatprep.subr.mxu0 0.0
        %8720 = vmatpush1.msra.mxu0 0.0
        %8721 = vmatprep.subr.mxu0 0.0
        %8722 = vmatpush1.msra.mxu0 0.0
        %8723 = vmatprep.subr.mxu0 0.0
        %8724 = vmatpush1.msra.mxu0 0.0
        %8725 = vmatprep.subr.mxu0 0.0
        %8726 = vmatpush1.msra.mxu0 0.0
        %8727 = vmatprep.subr.mxu0 0.0
        %8728 = vmatpush1.msra.mxu0 0.0
        %8729 = vmatprep.subr.mxu0 0.0
        %8730 = vmatpush1.msra.mxu0 0.0
        %8731 = vmatprep.subr.mxu0 0.0
        %8732 = vmatpush1.msra.mxu0 0.0
        %8733 = vmatprep.subr.mxu0 0.0
        %8734 = vmatpush1.msra.mxu0 0.0
        %8735 = vmatprep.subr.mxu0 0.0
        %8736 = vmatpush1.msra.mxu0 0.0
        %8737 = vmatprep.subr.mxu0 0.0
        %8738 = vmatpush1.msra.mxu0 0.0
        %8739 = vmatprep.mubr.f32.mxu0 0.0
        %8740 = vmatmul.mubr.f32.gmra.mrb[0].mxu0 %v8628
        %v8741 = vpop.f32.mrb[0].mxu0
        %v8742 = vadd.f32 %v8625, %v8741
        %v8743 = vpop.f32.mrb[0].mxu0
        %8744 = vmatprep.mubr.f32.mxu0 0.0
        %8745 = vmatmul.mubr.f32.gmra.mrb[0].mxu0 %v8631
        %v8746 = vpop.f32.mrb[0].mxu0
        %v8747 = vadd.f32 %v8625, %v8746
        %v8748 = vpop.f32.mrb[0].mxu0
        %8749 = vmatprep.mubr.f32.mxu0 0.0
        %8750 = vmatmul.mubr.f32.gmra.mrb[0].mxu0 %v8634
        %v8751 = vpop.f32.mrb[0].mxu0
        %v8752 = vadd.f32 %v8625, %v8751
        %v8753 = vpop.f32.mrb[0].mxu0
        %8754 = vmatprep.mubr.f32.mxu0 0.0
        %8755 = vmatmul.mubr.f32.gmra.mrb[0].mxu0 %v8637
        %v8756 = vpop.f32.mrb[0].mxu0
        %v8757 = vadd.f32 %v8625, %v8756
        %v8758 = vpop.f32.mrb[0].mxu0
        %8759 = vmatprep.mubr.f32.mxu0 0.0
        %8760 = vmatmul.mubr.f32.gmra.mrb[0].mxu0 %v8640
        %v8761 = vpop.f32.mrb[0].mxu0
        %v8762 = vadd.f32 %v8625, %v8761
        %v8763 = vpop.f32.mrb[0].mxu0
        %8764 = vmatprep.mubr.f32.mxu0 0.0
        %8765 = vmatmul.mubr.f32.gmra.mrb[0].mxu0 %v8643
        %v8766 = vpop.f32.mrb[0].mxu0
        %v8767 = vadd.f32 %v8625, %v8766
        %v8768 = vpop.f32.mrb[0].mxu0
        %8769 = vmatprep.mubr.f32.mxu0 0.0
        %8770 = vmatmul.mubr.f32.gmra.mrb[0].mxu0 %v8646
        %v8771 = vpop.f32.mrb[0].mxu0
        %v8772 = vadd.f32 %v8625, %v8771
        %v8773 = vpop.f32.mrb[0].mxu0
        %8774 = vmatprep.mubr.f32.mxu0 0.0
        %8775 = vmatmul.mubr.f32.gmra.mrb[0].mxu0 %v8649
        %v8776 = vpop.f32.mrb[0].mxu0
        %v8777 = vadd.f32 %v8625, %v8776
        %v8778 = vpop.f32.mrb[0].mxu0
        %8779 = vmatprep.mubr.f32.mxu0 0.0
        %8780 = vmatmul.mubr.f32.gmra.mrb[0].mxu0 %v8652
        %v8781 = vpop.f32.mrb[0].mxu0
        %v8782 = vadd.f32 %v8625, %v8781
        %v8783 = vpop.f32.mrb[0].mxu0
        %8784 = vmatprep.mubr.f32.mxu0 0.0
        %8785 = vmatmul.mubr.f32.gmra.mrb[0].mxu0 %v8655
        %v8786 = vpop.f32.mrb[0].mxu0
        %v8787 = vadd.f32 %v8625, %v8786
        %v8788 = vpop.f32.mrb[0].mxu0
        %8789 = vmatprep.mubr.f32.mxu0 0.0
        %8790 = vmatmul.mubr.f32.gmra.mrb[0].mxu0 %v8658
        %v8791 = vpop.f32.mrb[0].mxu0
        %v8792 = vadd.f32 %v8625, %v8791
        %v8793 = vpop.f32.mrb[0].mxu0
        %8794 = vmatprep.mubr.f32.mxu0 0.0
        %8795 = vmatmul.mubr.f32.gmra.mrb[0].mxu0 %v8661
        %v8796 = vpop.f32.mrb[0].mxu0
        %v8797 = vadd.f32 %v8625, %v8796
        %v8798 = vpop.f32.mrb[0].mxu0
        %8799 = vmatprep.mubr.f32.mxu0 0.0
        %8800 = vmatmul.mubr.f32.gmra.mrb[0].mxu0 %v8664
        %v8801 = vpop.f32.mrb[0].mxu0
        %v8802 = vadd.f32 %v8625, %v8801
        %v8803 = vpop.f32.mrb[0].mxu0
        %8804 = vmatprep.mubr.f32.mxu0 0.0
        %8805 = vmatmul.mubr.f32.gmra.mrb[0].mxu0 %v8667
        %v8806 = vpop.f32.mrb[0].mxu0
        %v8807 = vadd.f32 %v8625, %v8806
        %v8808 = vpop.f32.mrb[0].mxu0
        %8809 = vmatprep.mubr.f32.mxu0 0.0
        %8810 = vmatmul.mubr.f32.gmra.mrb[0].mxu0 %v8670
        %v8811 = vpop.f32.mrb[0].mxu0
        %v8812 = vadd.f32 %v8625, %v8811
        %v8813 = vpop.f32.mrb[0].mxu0
        %8814 = vmatprep.mubr.f32.mxu0 0.0
        %8815 = vmatmul.mubr.f32.gmra.mrb[0].mxu0 %v8673
        %v8816 = vpop.f32.mrb[0].mxu0
        %v8817 = vadd.f32 %v8625, %v8816
        %v8818 = vpop.f32.mrb[0].mxu0
        %8819 = vdwg.mxu0
        %v8820 = vadd.f32 %v5435, %v8742
        %v8821 = vadd.f32 %v5436, %v8747
        %v8822 = vadd.f32 %v5437, %v8752
        %v8823 = vadd.f32 %v5438, %v8757
        %v8824 = vadd.f32 %v5439, %v8762
        %v8825 = vadd.f32 %v5440, %v8767
        %v8826 = vadd.f32 %v5441, %v8772
        %v8827 = vadd.f32 %v5442, %v8777
        %v8828 = vadd.f32 %v5443, %v8782
        %v8829 = vadd.f32 %v5444, %v8787
        %v8830 = vadd.f32 %v5445, %v8792
        %v8831 = vadd.f32 %v5446, %v8797
        %v8832 = vadd.f32 %v5447, %v8802
        %v8833 = vadd.f32 %v5448, %v8807
        %v8834 = vadd.f32 %v5449, %v8812
        %v8835 = vadd.f32 %v5450, %v8817
        %s8836 = scalar_lea.vmem %s7, 1
        %v8837 = vld [vmem:[%s8836] sm:$0x1]
        %s8838 = scalar_lea.vmem %s8, 1
        %v8839 = vld [vmem:[%s8838] sm:$0x1]
        %v8840 = vsel %vm1131, %v8820, 0.0
        %8841 = vadd.xlane.f32.xlu0 %v8840
        %v8842 = vpop.xlane.xlu0 %8841
        %v8843 = vsel %vm1131, %v8821, 0.0
        %8844 = vadd.xlane.f32.xlu0 %v8843
        %v8845 = vpop.xlane.xlu0 %8844
        %v8846 = vsel %vm1131, %v8822, 0.0
        %8847 = vadd.xlane.f32.xlu0 %v8846
        %v8848 = vpop.xlane.xlu0 %8847
        %v8849 = vsel %vm1131, %v8823, 0.0
        %8850 = vadd.xlane.f32.xlu0 %v8849
        %v8851 = vpop.xlane.xlu0 %8850
        %v8852 = vsel %vm1131, %v8824, 0.0
        %8853 = vadd.xlane.f32.xlu0 %v8852
        %v8854 = vpop.xlane.xlu0 %8853
        %v8855 = vsel %vm1131, %v8825, 0.0
        %8856 = vadd.xlane.f32.xlu0 %v8855
        %v8857 = vpop.xlane.xlu0 %8856
        %v8858 = vsel %vm1131, %v8826, 0.0
        %8859 = vadd.xlane.f32.xlu0 %v8858
        %v8860 = vpop.xlane.xlu0 %8859
        %v8861 = vsel %vm1131, %v8827, 0.0
        %8862 = vadd.xlane.f32.xlu0 %v8861
        %v8863 = vpop.xlane.xlu0 %8862
        %v8864 = vsel %vm1131, %v8828, 0.0
        %8865 = vadd.xlane.f32.xlu0 %v8864
        %v8866 = vpop.xlane.xlu0 %8865
        %v8867 = vsel %vm1131, %v8829, 0.0
        %8868 = vadd.xlane.f32.xlu0 %v8867
        %v8869 = vpop.xlane.xlu0 %8868
        %v8870 = vsel %vm1131, %v8830, 0.0
        %8871 = vadd.xlane.f32.xlu0 %v8870
        %v8872 = vpop.xlane.xlu0 %8871
        %v8873 = vsel %vm1131, %v8831, 0.0
        %8874 = vadd.xlane.f32.xlu0 %v8873
        %v8875 = vpop.xlane.xlu0 %8874
        %v8876 = vsel %vm1131, %v8832, 0.0
        %8877 = vadd.xlane.f32.xlu0 %v8876
        %v8878 = vpop.xlane.xlu0 %8877
        %v8879 = vsel %vm1131, %v8833, 0.0
        %8880 = vadd.xlane.f32.xlu0 %v8879
        %v8881 = vpop.xlane.xlu0 %8880
        %v8882 = vsel %vm1131, %v8834, 0.0
        %8883 = vadd.xlane.f32.xlu0 %v8882
        %v8884 = vpop.xlane.xlu0 %8883
        %v8885 = vsel %vm1131, %v8835, 0.0
        %8886 = vadd.xlane.f32.xlu0 %v8885
        %v8887 = vpop.xlane.xlu0 %8886
        %v8888 = vmul.f32 %v8842, %v4326
        %v8889 = vmul.f32 %v8845, %v4326
        %v8890 = vmul.f32 %v8848, %v4326
        %v8891 = vmul.f32 %v8851, %v4326
        %v8892 = vmul.f32 %v8854, %v4326
        %v8893 = vmul.f32 %v8857, %v4326
        %v8894 = vmul.f32 %v8860, %v4326
        %v8895 = vmul.f32 %v8863, %v4326
        %v8896 = vmul.f32 %v8866, %v4326
        %v8897 = vmul.f32 %v8869, %v4326
        %v8898 = vmul.f32 %v8872, %v4326
        %v8899 = vmul.f32 %v8875, %v4326
        %v8900 = vmul.f32 %v8878, %v4326
        %v8901 = vmul.f32 %v8881, %v4326
        %v8902 = vmul.f32 %v8884, %v4326
        %v8903 = vmul.f32 %v8887, %v4326
        %v8904 = vsub.f32 %v8820, %v8888
        %v8905 = vsub.f32 %v8821, %v8889
        %v8906 = vsub.f32 %v8822, %v8890
        %v8907 = vsub.f32 %v8823, %v8891
        %v8908 = vsub.f32 %v8824, %v8892
        %v8909 = vsub.f32 %v8825, %v8893
        %v8910 = vsub.f32 %v8826, %v8894
        %v8911 = vsub.f32 %v8827, %v8895
        %v8912 = vsub.f32 %v8828, %v8896
        %v8913 = vsub.f32 %v8829, %v8897
        %v8914 = vsub.f32 %v8830, %v8898
        %v8915 = vsub.f32 %v8831, %v8899
        %v8916 = vsub.f32 %v8832, %v8900
        %v8917 = vsub.f32 %v8833, %v8901
        %v8918 = vsub.f32 %v8834, %v8902
        %v8919 = vsub.f32 %v8835, %v8903
        %v8920 = vmul.f32 %v8904, %v8904
        %v8921 = vmul.f32 %v8905, %v8905
        %v8922 = vmul.f32 %v8906, %v8906
        %v8923 = vmul.f32 %v8907, %v8907
        %v8924 = vmul.f32 %v8908, %v8908
        %v8925 = vmul.f32 %v8909, %v8909
        %v8926 = vmul.f32 %v8910, %v8910
        %v8927 = vmul.f32 %v8911, %v8911
        %v8928 = vmul.f32 %v8912, %v8912
        %v8929 = vmul.f32 %v8913, %v8913
        %v8930 = vmul.f32 %v8914, %v8914
        %v8931 = vmul.f32 %v8915, %v8915
        %v8932 = vmul.f32 %v8916, %v8916
        %v8933 = vmul.f32 %v8917, %v8917
        %v8934 = vmul.f32 %v8918, %v8918
        %v8935 = vmul.f32 %v8919, %v8919
        %v8936 = vsel %vm1131, %v8920, 0.0
        %8937 = vadd.xlane.f32.xlu0 %v8936
        %v8938 = vpop.xlane.xlu0 %8937
        %v8939 = vsel %vm1131, %v8921, 0.0
        %8940 = vadd.xlane.f32.xlu0 %v8939
        %v8941 = vpop.xlane.xlu0 %8940
        %v8942 = vsel %vm1131, %v8922, 0.0
        %8943 = vadd.xlane.f32.xlu0 %v8942
        %v8944 = vpop.xlane.xlu0 %8943
        %v8945 = vsel %vm1131, %v8923, 0.0
        %8946 = vadd.xlane.f32.xlu0 %v8945
        %v8947 = vpop.xlane.xlu0 %8946
        %v8948 = vsel %vm1131, %v8924, 0.0
        %8949 = vadd.xlane.f32.xlu0 %v8948
        %v8950 = vpop.xlane.xlu0 %8949
        %v8951 = vsel %vm1131, %v8925, 0.0
        %8952 = vadd.xlane.f32.xlu0 %v8951
        %v8953 = vpop.xlane.xlu0 %8952
        %v8954 = vsel %vm1131, %v8926, 0.0
        %8955 = vadd.xlane.f32.xlu0 %v8954
        %v8956 = vpop.xlane.xlu0 %8955
        %v8957 = vsel %vm1131, %v8927, 0.0
        %8958 = vadd.xlane.f32.xlu0 %v8957
        %v8959 = vpop.xlane.xlu0 %8958
        %v8960 = vsel %vm1131, %v8928, 0.0
        %8961 = vadd.xlane.f32.xlu0 %v8960
        %v8962 = vpop.xlane.xlu0 %8961
        %v8963 = vsel %vm1131, %v8929, 0.0
        %8964 = vadd.xlane.f32.xlu0 %v8963
        %v8965 = vpop.xlane.xlu0 %8964
        %v8966 = vsel %vm1131, %v8930, 0.0
        %8967 = vadd.xlane.f32.xlu0 %v8966
        %v8968 = vpop.xlane.xlu0 %8967
        %v8969 = vsel %vm1131, %v8931, 0.0
        %8970 = vadd.xlane.f32.xlu0 %v8969
        %v8971 = vpop.xlane.xlu0 %8970
        %v8972 = vsel %vm1131, %v8932, 0.0
        %8973 = vadd.xlane.f32.xlu0 %v8972
        %v8974 = vpop.xlane.xlu0 %8973
        %v8975 = vsel %vm1131, %v8933, 0.0
        %8976 = vadd.xlane.f32.xlu0 %v8975
        %v8977 = vpop.xlane.xlu0 %8976
        %v8978 = vsel %vm1131, %v8934, 0.0
        %8979 = vadd.xlane.f32.xlu0 %v8978
        %v8980 = vpop.xlane.xlu0 %8979
        %v8981 = vsel %vm1131, %v8935, 0.0
        %8982 = vadd.xlane.f32.xlu0 %v8981
        %v8983 = vpop.xlane.xlu0 %8982
        %v8984 = vmul.f32 %v8938, %v4326
        %v8985 = vmul.f32 %v8941, %v4326
        %v8986 = vmul.f32 %v8944, %v4326
        %v8987 = vmul.f32 %v8947, %v4326
        %v8988 = vmul.f32 %v8950, %v4326
        %v8989 = vmul.f32 %v8953, %v4326
        %v8990 = vmul.f32 %v8956, %v4326
        %v8991 = vmul.f32 %v8959, %v4326
        %v8992 = vmul.f32 %v8962, %v4326
        %v8993 = vmul.f32 %v8965, %v4326
        %v8994 = vmul.f32 %v8968, %v4326
        %v8995 = vmul.f32 %v8971, %v4326
        %v8996 = vmul.f32 %v8974, %v4326
        %v8997 = vmul.f32 %v8977, %v4326
        %v8998 = vmul.f32 %v8980, %v4326
        %v8999 = vmul.f32 %v8983, %v4326
        %v9001 = vlaneseq
        %v9002 = vshrl.u32 %v9001, 7
        %v9003 = vsub.s32 0, %v9002
        %v9004 = vrot.slane %v8837, %v9003
        %v9006 = vmul.f32 %v9004, %v8904
        %v9007 = vmul.f32 %v9004, %v8905
        %v9008 = vmul.f32 %v9004, %v8906
        %v9009 = vmul.f32 %v9004, %v8907
        %v9010 = vmul.f32 %v9004, %v8908
        %v9011 = vmul.f32 %v9004, %v8909
        %v9012 = vmul.f32 %v9004, %v8910
        %v9013 = vmul.f32 %v9004, %v8911
        %v9014 = vmul.f32 %v9004, %v8912
        %v9015 = vmul.f32 %v9004, %v8913
        %v9016 = vmul.f32 %v9004, %v8914
        %v9017 = vmul.f32 %v9004, %v8915
        %v9018 = vmul.f32 %v9004, %v8916
        %v9019 = vmul.f32 %v9004, %v8917
        %v9020 = vmul.f32 %v9004, %v8918
        %v9021 = vmul.f32 %v9004, %v8919
        %v9022 = vadd.f32 %v8984, 1e-05
        %v9023 = vadd.f32 %v8985, 1e-05
        %v9024 = vadd.f32 %v8986, 1e-05
        %v9025 = vadd.f32 %v8987, 1e-05
        %v9026 = vadd.f32 %v8988, 1e-05
        %v9027 = vadd.f32 %v8989, 1e-05
        %v9028 = vadd.f32 %v8990, 1e-05
        %v9029 = vadd.f32 %v8991, 1e-05
        %v9030 = vadd.f32 %v8992, 1e-05
        %v9031 = vadd.f32 %v8993, 1e-05
        %v9032 = vadd.f32 %v8994, 1e-05
        %v9033 = vadd.f32 %v8995, 1e-05
        %v9034 = vadd.f32 %v8996, 1e-05
        %v9035 = vadd.f32 %v8997, 1e-05
        %v9036 = vadd.f32 %v8998, 1e-05
        %v9037 = vadd.f32 %v8999, 1e-05
        %v9038 = vrsqrt.pop %v9022
        %v9039 = vmul.f32 %v9022, %v9038
        %vm9040 = vcmp.eq.f32.partialorder %v9022, inf
        %v9041 = vsel %vm9040, %v9022, %v9039
        %vm9042 = vcmp.eq.f32.partialorder %v9022, 0.0
        %v9043 = vand.u32 %v9022, 2147483648
        %v9044 = vsel %vm9042, %v9043, %v9041
        %v9045 = vrsqrt.pop %v9023
        %v9046 = vmul.f32 %v9023, %v9045
        %vm9047 = vcmp.eq.f32.partialorder %v9023, inf
        %v9048 = vsel %vm9047, %v9023, %v9046
        %vm9049 = vcmp.eq.f32.partialorder %v9023, 0.0
        %v9050 = vand.u32 %v9023, 2147483648
        %v9051 = vsel %vm9049, %v9050, %v9048
        %v9052 = vrsqrt.pop %v9024
        %v9053 = vmul.f32 %v9024, %v9052
        %vm9054 = vcmp.eq.f32.partialorder %v9024, inf
        %v9055 = vsel %vm9054, %v9024, %v9053
        %vm9056 = vcmp.eq.f32.partialorder %v9024, 0.0
        %v9057 = vand.u32 %v9024, 2147483648
        %v9058 = vsel %vm9056, %v9057, %v9055
        %v9059 = vrsqrt.pop %v9025
        %v9060 = vmul.f32 %v9025, %v9059
        %vm9061 = vcmp.eq.f32.partialorder %v9025, inf
        %v9062 = vsel %vm9061, %v9025, %v9060
        %vm9063 = vcmp.eq.f32.partialorder %v9025, 0.0
        %v9064 = vand.u32 %v9025, 2147483648
        %v9065 = vsel %vm9063, %v9064, %v9062
        %v9066 = vrsqrt.pop %v9026
        %v9067 = vmul.f32 %v9026, %v9066
        %vm9068 = vcmp.eq.f32.partialorder %v9026, inf
        %v9069 = vsel %vm9068, %v9026, %v9067
        %vm9070 = vcmp.eq.f32.partialorder %v9026, 0.0
        %v9071 = vand.u32 %v9026, 2147483648
        %v9072 = vsel %vm9070, %v9071, %v9069
        %v9073 = vrsqrt.pop %v9027
        %v9074 = vmul.f32 %v9027, %v9073
        %vm9075 = vcmp.eq.f32.partialorder %v9027, inf
        %v9076 = vsel %vm9075, %v9027, %v9074
        %vm9077 = vcmp.eq.f32.partialorder %v9027, 0.0
        %v9078 = vand.u32 %v9027, 2147483648
        %v9079 = vsel %vm9077, %v9078, %v9076
        %v9080 = vrsqrt.pop %v9028
        %v9081 = vmul.f32 %v9028, %v9080
        %vm9082 = vcmp.eq.f32.partialorder %v9028, inf
        %v9083 = vsel %vm9082, %v9028, %v9081
        %vm9084 = vcmp.eq.f32.partialorder %v9028, 0.0
        %v9085 = vand.u32 %v9028, 2147483648
        %v9086 = vsel %vm9084, %v9085, %v9083
        %v9087 = vrsqrt.pop %v9029
        %v9088 = vmul.f32 %v9029, %v9087
        %vm9089 = vcmp.eq.f32.partialorder %v9029, inf
        %v9090 = vsel %vm9089, %v9029, %v9088
        %vm9091 = vcmp.eq.f32.partialorder %v9029, 0.0
        %v9092 = vand.u32 %v9029, 2147483648
        %v9093 = vsel %vm9091, %v9092, %v9090
        %v9094 = vrsqrt.pop %v9030
        %v9095 = vmul.f32 %v9030, %v9094
        %vm9096 = vcmp.eq.f32.partialorder %v9030, inf
        %v9097 = vsel %vm9096, %v9030, %v9095
        %vm9098 = vcmp.eq.f32.partialorder %v9030, 0.0
        %v9099 = vand.u32 %v9030, 2147483648
        %v9100 = vsel %vm9098, %v9099, %v9097
        %v9101 = vrsqrt.pop %v9031
        %v9102 = vmul.f32 %v9031, %v9101
        %vm9103 = vcmp.eq.f32.partialorder %v9031, inf
        %v9104 = vsel %vm9103, %v9031, %v9102
        %vm9105 = vcmp.eq.f32.partialorder %v9031, 0.0
        %v9106 = vand.u32 %v9031, 2147483648
        %v9107 = vsel %vm9105, %v9106, %v9104
        %v9108 = vrsqrt.pop %v9032
        %v9109 = vmul.f32 %v9032, %v9108
        %vm9110 = vcmp.eq.f32.partialorder %v9032, inf
        %v9111 = vsel %vm9110, %v9032, %v9109
        %vm9112 = vcmp.eq.f32.partialorder %v9032, 0.0
        %v9113 = vand.u32 %v9032, 2147483648
        %v9114 = vsel %vm9112, %v9113, %v9111
        %v9115 = vrsqrt.pop %v9033
        %v9116 = vmul.f32 %v9033, %v9115
        %vm9117 = vcmp.eq.f32.partialorder %v9033, inf
        %v9118 = vsel %vm9117, %v9033, %v9116
        %vm9119 = vcmp.eq.f32.partialorder %v9033, 0.0
        %v9120 = vand.u32 %v9033, 2147483648
        %v9121 = vsel %vm9119, %v9120, %v9118
        %v9122 = vrsqrt.pop %v9034
        %v9123 = vmul.f32 %v9034, %v9122
        %vm9124 = vcmp.eq.f32.partialorder %v9034, inf
        %v9125 = vsel %vm9124, %v9034, %v9123
        %vm9126 = vcmp.eq.f32.partialorder %v9034, 0.0
        %v9127 = vand.u32 %v9034, 2147483648
        %v9128 = vsel %vm9126, %v9127, %v9125
        %v9129 = vrsqrt.pop %v9035
        %v9130 = vmul.f32 %v9035, %v9129
        %vm9131 = vcmp.eq.f32.partialorder %v9035, inf
        %v9132 = vsel %vm9131, %v9035, %v9130
        %vm9133 = vcmp.eq.f32.partialorder %v9035, 0.0
        %v9134 = vand.u32 %v9035, 2147483648
        %v9135 = vsel %vm9133, %v9134, %v9132
        %v9136 = vrsqrt.pop %v9036
        %v9137 = vmul.f32 %v9036, %v9136
        %vm9138 = vcmp.eq.f32.partialorder %v9036, inf
        %v9139 = vsel %vm9138, %v9036, %v9137
        %vm9140 = vcmp.eq.f32.partialorder %v9036, 0.0
        %v9141 = vand.u32 %v9036, 2147483648
        %v9142 = vsel %vm9140, %v9141, %v9139
        %v9143 = vrsqrt.pop %v9037
        %v9144 = vmul.f32 %v9037, %v9143
        %vm9145 = vcmp.eq.f32.partialorder %v9037, inf
        %v9146 = vsel %vm9145, %v9037, %v9144
        %vm9147 = vcmp.eq.f32.partialorder %v9037, 0.0
        %v9148 = vand.u32 %v9037, 2147483648
        %v9149 = vsel %vm9147, %v9148, %v9146
        %v9150 = vrcp.pop %v9044
        %v9151 = vmul.f32 %v9006, %v9150
        %v9152 = vrcp.pop %v9051
        %v9153 = vmul.f32 %v9007, %v9152
        %v9154 = vrcp.pop %v9058
        %v9155 = vmul.f32 %v9008, %v9154
        %v9156 = vrcp.pop %v9065
        %v9157 = vmul.f32 %v9009, %v9156
        %v9158 = vrcp.pop %v9072
        %v9159 = vmul.f32 %v9010, %v9158
        %v9160 = vrcp.pop %v9079
        %v9161 = vmul.f32 %v9011, %v9160
        %v9162 = vrcp.pop %v9086
        %v9163 = vmul.f32 %v9012, %v9162
        %v9164 = vrcp.pop %v9093
        %v9165 = vmul.f32 %v9013, %v9164
        %v9166 = vrcp.pop %v9100
        %v9167 = vmul.f32 %v9014, %v9166
        %v9168 = vrcp.pop %v9107
        %v9169 = vmul.f32 %v9015, %v9168
        %v9170 = vrcp.pop %v9114
        %v9171 = vmul.f32 %v9016, %v9170
        %v9172 = vrcp.pop %v9121
        %v9173 = vmul.f32 %v9017, %v9172
        %v9174 = vrcp.pop %v9128
        %v9175 = vmul.f32 %v9018, %v9174
        %v9176 = vrcp.pop %v9135
        %v9177 = vmul.f32 %v9019, %v9176
        %v9178 = vrcp.pop %v9142
        %v9179 = vmul.f32 %v9020, %v9178
        %v9180 = vrcp.pop %v9149
        %v9181 = vmul.f32 %v9021, %v9180
        %v9183 = vlaneseq
        %v9184 = vshrl.u32 %v9183, 7
        %v9185 = vsub.s32 0, %v9184
        %v9186 = vrot.slane %v8839, %v9185
        %v9188 = vadd.f32 %v9151, %v9186
        %v9189 = vadd.f32 %v9153, %v9186
        %v9190 = vadd.f32 %v9155, %v9186
        %v9191 = vadd.f32 %v9157, %v9186
        %v9192 = vadd.f32 %v9159, %v9186
        %v9193 = vadd.f32 %v9161, %v9186
        %v9194 = vadd.f32 %v9163, %v9186
        %v9195 = vadd.f32 %v9165, %v9186
        %v9196 = vadd.f32 %v9167, %v9186
        %v9197 = vadd.f32 %v9169, %v9186
        %v9198 = vadd.f32 %v9171, %v9186
        %v9199 = vadd.f32 %v9173, %v9186
        %v9200 = vadd.f32 %v9175, %v9186
        %v9201 = vadd.f32 %v9177, %v9186
        %v9202 = vadd.f32 %v9179, %v9186
        %v9203 = vadd.f32 %v9181, %v9186
        %s9204 = scalar_lea.vmem %s9, 16
        %v9205 = vld [vmem:[%s9204] sm:$0xff]
        %v9206 = vld [vmem:[%s9204 + $0x8] sm:$0xff]
        %s9207 = scalar_lea.vmem %s10, 1
        %v9208 = vld [vmem:[%s9207] sm:$0x1]
        %v9210 = vlaneseq
        %v9211 = vshrl.u32 %v9210, 7
        %v9212 = vsub.s32 0, %v9211
        %v9213 = vrot.slane %v9208, %v9212
        %v9216 = vsel %vm1131, %v9188, 0
        %v9219 = vsel %vm1131, %v9189, 0
        %v9222 = vsel %vm1131, %v9190, 0
        %v9225 = vsel %vm1131, %v9191, 0
        %v9228 = vsel %vm1131, %v9192, 0
        %v9231 = vsel %vm1131, %v9193, 0
        %v9234 = vsel %vm1131, %v9194, 0
        %v9237 = vsel %vm1131, %v9195, 0
        %v9240 = vsel %vm1131, %v9196, 0
        %v9243 = vsel %vm1131, %v9197, 0
        %v9246 = vsel %vm1131, %v9198, 0
        %v9249 = vsel %vm1131, %v9199, 0
        %v9252 = vsel %vm1131, %v9200, 0
        %v9255 = vsel %vm1131, %v9201, 0
        %v9258 = vsel %vm1131, %v9202, 0
        %v9261 = vsel %vm1131, %v9203, 0
        %9263 = vmatprep.subr.mxu0 0.0
        %9264 = vmatpush1.msra.mxu0 %v9205
        %9265 = vmatprep.subr.mxu0 0.0
        %9266 = vmatpush1.msra.mxu0 %v9206
        %9267 = vmatprep.subr.mxu0 0.0
        %9268 = vmatpush1.msra.mxu0 0.0
        %9269 = vmatprep.subr.mxu0 0.0
        %9270 = vmatpush1.msra.mxu0 0.0
        %9271 = vmatprep.subr.mxu0 0.0
        %9272 = vmatpush1.msra.mxu0 0.0
        %9273 = vmatprep.subr.mxu0 0.0
        %9274 = vmatpush1.msra.mxu0 0.0
        %9275 = vmatprep.subr.mxu0 0.0
        %9276 = vmatpush1.msra.mxu0 0.0
        %9277 = vmatprep.subr.mxu0 0.0
        %9278 = vmatpush1.msra.mxu0 0.0
        %9279 = vmatprep.subr.mxu0 0.0
        %9280 = vmatpush1.msra.mxu0 0.0
        %9281 = vmatprep.subr.mxu0 0.0
        %9282 = vmatpush1.msra.mxu0 0.0
        %9283 = vmatprep.subr.mxu0 0.0
        %9284 = vmatpush1.msra.mxu0 0.0
        %9285 = vmatprep.subr.mxu0 0.0
        %9286 = vmatpush1.msra.mxu0 0.0
        %9287 = vmatprep.subr.mxu0 0.0
        %9288 = vmatpush1.msra.mxu0 0.0
        %9289 = vmatprep.subr.mxu0 0.0
        %9290 = vmatpush1.msra.mxu0 0.0
        %9291 = vmatprep.subr.mxu0 0.0
        %9292 = vmatpush1.msra.mxu0 0.0
        %9293 = vmatprep.subr.mxu0 0.0
        %9294 = vmatpush1.msra.mxu0 0.0
        %9295 = vmatprep.subr.mxu0 0.0
        %9296 = vmatpush1.msra.mxu0 0.0
        %9297 = vmatprep.subr.mxu0 0.0
        %9298 = vmatpush1.msra.mxu0 0.0
        %9299 = vmatprep.subr.mxu0 0.0
        %9300 = vmatpush1.msra.mxu0 0.0
        %9301 = vmatprep.subr.mxu0 0.0
        %9302 = vmatpush1.msra.mxu0 0.0
        %9303 = vmatprep.subr.mxu0 0.0
        %9304 = vmatpush1.msra.mxu0 0.0
        %9305 = vmatprep.subr.mxu0 0.0
        %9306 = vmatpush1.msra.mxu0 0.0
        %9307 = vmatprep.subr.mxu0 0.0
        %9308 = vmatpush1.msra.mxu0 0.0
        %9309 = vmatprep.subr.mxu0 0.0
        %9310 = vmatpush1.msra.mxu0 0.0
        %9311 = vmatprep.subr.mxu0 0.0
        %9312 = vmatpush1.msra.mxu0 0.0
        %9313 = vmatprep.subr.mxu0 0.0
        %9314 = vmatpush1.msra.mxu0 0.0
        %9315 = vmatprep.subr.mxu0 0.0
        %9316 = vmatpush1.msra.mxu0 0.0
        %9317 = vmatprep.subr.mxu0 0.0
        %9318 = vmatpush1.msra.mxu0 0.0
        %9319 = vmatprep.subr.mxu0 0.0
        %9320 = vmatpush1.msra.mxu0 0.0
        %9321 = vmatprep.subr.mxu0 0.0
        %9322 = vmatpush1.msra.mxu0 0.0
        %9323 = vmatprep.subr.mxu0 0.0
        %9324 = vmatpush1.msra.mxu0 0.0
        %9325 = vmatprep.subr.mxu0 0.0
        %9326 = vmatpush1.msra.mxu0 0.0
        %9327 = vmatprep.mubr.f32.mxu0 0.0
        %9328 = vmatmul.mubr.f32.gmra.mrb[0].mxu0 %v9216
        %v9329 = vpop.f32.mrb[0].mxu0
        %v9330 = vadd.f32 %v9213, %v9329
        %v9331 = vpop.f32.mrb[0].mxu0
        %9332 = vmatprep.mubr.f32.mxu0 0.0
        %9333 = vmatmul.mubr.f32.gmra.mrb[0].mxu0 %v9219
        %v9334 = vpop.f32.mrb[0].mxu0
        %v9335 = vadd.f32 %v9213, %v9334
        %v9336 = vpop.f32.mrb[0].mxu0
        %9337 = vmatprep.mubr.f32.mxu0 0.0
        %9338 = vmatmul.mubr.f32.gmra.mrb[0].mxu0 %v9222
        %v9339 = vpop.f32.mrb[0].mxu0
        %v9340 = vadd.f32 %v9213, %v9339
        %v9341 = vpop.f32.mrb[0].mxu0
        %9342 = vmatprep.mubr.f32.mxu0 0.0
        %9343 = vmatmul.mubr.f32.gmra.mrb[0].mxu0 %v9225
        %v9344 = vpop.f32.mrb[0].mxu0
        %v9345 = vadd.f32 %v9213, %v9344
        %v9346 = vpop.f32.mrb[0].mxu0
        %9347 = vmatprep.mubr.f32.mxu0 0.0
        %9348 = vmatmul.mubr.f32.gmra.mrb[0].mxu0 %v9228
        %v9349 = vpop.f32.mrb[0].mxu0
        %v9350 = vadd.f32 %v9213, %v9349
        %v9351 = vpop.f32.mrb[0].mxu0
        %9352 = vmatprep.mubr.f32.mxu0 0.0
        %9353 = vmatmul.mubr.f32.gmra.mrb[0].mxu0 %v9231
        %v9354 = vpop.f32.mrb[0].mxu0
        %v9355 = vadd.f32 %v9213, %v9354
        %v9356 = vpop.f32.mrb[0].mxu0
        %9357 = vmatprep.mubr.f32.mxu0 0.0
        %9358 = vmatmul.mubr.f32.gmra.mrb[0].mxu0 %v9234
        %v9359 = vpop.f32.mrb[0].mxu0
        %v9360 = vadd.f32 %v9213, %v9359
        %v9361 = vpop.f32.mrb[0].mxu0
        %9362 = vmatprep.mubr.f32.mxu0 0.0
        %9363 = vmatmul.mubr.f32.gmra.mrb[0].mxu0 %v9237
        %v9364 = vpop.f32.mrb[0].mxu0
        %v9365 = vadd.f32 %v9213, %v9364
        %v9366 = vpop.f32.mrb[0].mxu0
        %9367 = vmatprep.mubr.f32.mxu0 0.0
        %9368 = vmatmul.mubr.f32.gmra.mrb[0].mxu0 %v9240
        %v9369 = vpop.f32.mrb[0].mxu0
        %v9370 = vadd.f32 %v9213, %v9369
        %v9371 = vpop.f32.mrb[0].mxu0
        %9372 = vmatprep.mubr.f32.mxu0 0.0
        %9373 = vmatmul.mubr.f32.gmra.mrb[0].mxu0 %v9243
        %v9374 = vpop.f32.mrb[0].mxu0
        %v9375 = vadd.f32 %v9213, %v9374
        %v9376 = vpop.f32.mrb[0].mxu0
        %9377 = vmatprep.mubr.f32.mxu0 0.0
        %9378 = vmatmul.mubr.f32.gmra.mrb[0].mxu0 %v9246
        %v9379 = vpop.f32.mrb[0].mxu0
        %v9380 = vadd.f32 %v9213, %v9379
        %v9381 = vpop.f32.mrb[0].mxu0
        %9382 = vmatprep.mubr.f32.mxu0 0.0
        %9383 = vmatmul.mubr.f32.gmra.mrb[0].mxu0 %v9249
        %v9384 = vpop.f32.mrb[0].mxu0
        %v9385 = vadd.f32 %v9213, %v9384
        %v9386 = vpop.f32.mrb[0].mxu0
        %9387 = vmatprep.mubr.f32.mxu0 0.0
        %9388 = vmatmul.mubr.f32.gmra.mrb[0].mxu0 %v9252
        %v9389 = vpop.f32.mrb[0].mxu0
        %v9390 = vadd.f32 %v9213, %v9389
        %v9391 = vpop.f32.mrb[0].mxu0
        %9392 = vmatprep.mubr.f32.mxu0 0.0
        %9393 = vmatmul.mubr.f32.gmra.mrb[0].mxu0 %v9255
        %v9394 = vpop.f32.mrb[0].mxu0
        %v9395 = vadd.f32 %v9213, %v9394
        %v9396 = vpop.f32.mrb[0].mxu0
        %9397 = vmatprep.mubr.f32.mxu0 0.0
        %9398 = vmatmul.mubr.f32.gmra.mrb[0].mxu0 %v9258
        %v9399 = vpop.f32.mrb[0].mxu0
        %v9400 = vadd.f32 %v9213, %v9399
        %v9401 = vpop.f32.mrb[0].mxu0
        %9402 = vmatprep.mubr.f32.mxu0 0.0
        %9403 = vmatmul.mubr.f32.gmra.mrb[0].mxu0 %v9261
        %v9404 = vpop.f32.mrb[0].mxu0
        %v9405 = vadd.f32 %v9213, %v9404
        %v9406 = vpop.f32.mrb[0].mxu0
        %9407 = vdwg.mxu0
        %v9408 = vmax.f32 %v9330, 0.0
        %v9409 = vmax.f32 %v9335, 0.0
        %v9410 = vmax.f32 %v9340, 0.0
        %v9411 = vmax.f32 %v9345, 0.0
        %v9412 = vmax.f32 %v9350, 0.0
        %v9413 = vmax.f32 %v9355, 0.0
        %v9414 = vmax.f32 %v9360, 0.0
        %v9415 = vmax.f32 %v9365, 0.0
        %v9416 = vmax.f32 %v9370, 0.0
        %v9417 = vmax.f32 %v9375, 0.0
        %v9418 = vmax.f32 %v9380, 0.0
        %v9419 = vmax.f32 %v9385, 0.0
        %v9420 = vmax.f32 %v9390, 0.0
        %v9421 = vmax.f32 %v9395, 0.0
        %v9422 = vmax.f32 %v9400, 0.0
        %v9423 = vmax.f32 %v9405, 0.0
        %s9424 = scalar_lea.vmem %s11, 64
        %v9425 = vld [vmem:[%s9424] sm:$0xff]
        %v9426 = vld [vmem:[%s9424 + $0x8] sm:$0xff]
        %v9427 = vld [vmem:[%s9424 + $0x10] sm:$0xff]
        %v9428 = vld [vmem:[%s9424 + $0x18] sm:$0xff]
        %v9429 = vld [vmem:[%s9424 + $0x20] sm:$0xff]
        %v9430 = vld [vmem:[%s9424 + $0x28] sm:$0xff]
        %v9431 = vld [vmem:[%s9424 + $0x30] sm:$0xff]
        %v9432 = vld [vmem:[%s9424 + $0x38] sm:$0xff]
        %s9433 = scalar_lea.vmem %s12, 1
        %v9434 = vld [vmem:[%s9433] sm:$0x1]
        %v9436 = vlaneseq
        %v9437 = vshrl.u32 %v9436, 7
        %v9438 = vsub.s32 0, %v9437
        %v9439 = vrot.slane %v9434, %v9438
        %v9442 = vsel %vm1210, %v9408, 0
        %v9445 = vsel %vm1210, %v9409, 0
        %v9448 = vsel %vm1210, %v9410, 0
        %v9451 = vsel %vm1210, %v9411, 0
        %v9454 = vsel %vm1210, %v9412, 0
        %v9457 = vsel %vm1210, %v9413, 0
        %v9460 = vsel %vm1210, %v9414, 0
        %v9463 = vsel %vm1210, %v9415, 0
        %v9466 = vsel %vm1210, %v9416, 0
        %v9469 = vsel %vm1210, %v9417, 0
        %v9472 = vsel %vm1210, %v9418, 0
        %v9475 = vsel %vm1210, %v9419, 0
        %v9478 = vsel %vm1210, %v9420, 0
        %v9481 = vsel %vm1210, %v9421, 0
        %v9484 = vsel %vm1210, %v9422, 0
        %v9487 = vsel %vm1210, %v9423, 0
        %9489 = vmatprep.subr.mxu0 0.0
        %9490 = vmatpush1.msra.mxu0 %v9425
        %9491 = vmatprep.subr.mxu0 0.0
        %9492 = vmatpush1.msra.mxu0 %v9426
        %9493 = vmatprep.subr.mxu0 0.0
        %9494 = vmatpush1.msra.mxu0 %v9427
        %9495 = vmatprep.subr.mxu0 0.0
        %9496 = vmatpush1.msra.mxu0 %v9428
        %9497 = vmatprep.subr.mxu0 0.0
        %9498 = vmatpush1.msra.mxu0 %v9429
        %9499 = vmatprep.subr.mxu0 0.0
        %9500 = vmatpush1.msra.mxu0 %v9430
        %9501 = vmatprep.subr.mxu0 0.0
        %9502 = vmatpush1.msra.mxu0 %v9431
        %9503 = vmatprep.subr.mxu0 0.0
        %9504 = vmatpush1.msra.mxu0 %v9432
        %9505 = vmatprep.subr.mxu0 0.0
        %9506 = vmatpush1.msra.mxu0 0.0
        %9507 = vmatprep.subr.mxu0 0.0
        %9508 = vmatpush1.msra.mxu0 0.0
        %9509 = vmatprep.subr.mxu0 0.0
        %9510 = vmatpush1.msra.mxu0 0.0
        %9511 = vmatprep.subr.mxu0 0.0
        %9512 = vmatpush1.msra.mxu0 0.0
        %9513 = vmatprep.subr.mxu0 0.0
        %9514 = vmatpush1.msra.mxu0 0.0
        %9515 = vmatprep.subr.mxu0 0.0
        %9516 = vmatpush1.msra.mxu0 0.0
        %9517 = vmatprep.subr.mxu0 0.0
        %9518 = vmatpush1.msra.mxu0 0.0
        %9519 = vmatprep.subr.mxu0 0.0
        %9520 = vmatpush1.msra.mxu0 0.0
        %9521 = vmatprep.subr.mxu0 0.0
        %9522 = vmatpush1.msra.mxu0 0.0
        %9523 = vmatprep.subr.mxu0 0.0
        %9524 = vmatpush1.msra.mxu0 0.0
        %9525 = vmatprep.subr.mxu0 0.0
        %9526 = vmatpush1.msra.mxu0 0.0
        %9527 = vmatprep.subr.mxu0 0.0
        %9528 = vmatpush1.msra.mxu0 0.0
        %9529 = vmatprep.subr.mxu0 0.0
        %9530 = vmatpush1.msra.mxu0 0.0
        %9531 = vmatprep.subr.mxu0 0.0
        %9532 = vmatpush1.msra.mxu0 0.0
        %9533 = vmatprep.subr.mxu0 0.0
        %9534 = vmatpush1.msra.mxu0 0.0
        %9535 = vmatprep.subr.mxu0 0.0
        %9536 = vmatpush1.msra.mxu0 0.0
        %9537 = vmatprep.subr.mxu0 0.0
        %9538 = vmatpush1.msra.mxu0 0.0
        %9539 = vmatprep.subr.mxu0 0.0
        %9540 = vmatpush1.msra.mxu0 0.0
        %9541 = vmatprep.subr.mxu0 0.0
        %9542 = vmatpush1.msra.mxu0 0.0
        %9543 = vmatprep.subr.mxu0 0.0
        %9544 = vmatpush1.msra.mxu0 0.0
        %9545 = vmatprep.subr.mxu0 0.0
        %9546 = vmatpush1.msra.mxu0 0.0
        %9547 = vmatprep.subr.mxu0 0.0
        %9548 = vmatpush1.msra.mxu0 0.0
        %9549 = vmatprep.subr.mxu0 0.0
        %9550 = vmatpush1.msra.mxu0 0.0
        %9551 = vmatprep.subr.mxu0 0.0
        %9552 = vmatpush1.msra.mxu0 0.0
        %9553 = vmatprep.mubr.f32.mxu0 0.0
        %9554 = vmatmul.mubr.f32.gmra.mrb[0].mxu0 %v9442
        %v9555 = vpop.f32.mrb[0].mxu0
        %v9556 = vadd.f32 %v9439, %v9555
        %v9557 = vpop.f32.mrb[0].mxu0
        %9558 = vmatprep.mubr.f32.mxu0 0.0
        %9559 = vmatmul.mubr.f32.gmra.mrb[0].mxu0 %v9445
        %v9560 = vpop.f32.mrb[0].mxu0
        %v9561 = vadd.f32 %v9439, %v9560
        %v9562 = vpop.f32.mrb[0].mxu0
        %9563 = vmatprep.mubr.f32.mxu0 0.0
        %9564 = vmatmul.mubr.f32.gmra.mrb[0].mxu0 %v9448
        %v9565 = vpop.f32.mrb[0].mxu0
        %v9566 = vadd.f32 %v9439, %v9565
        %v9567 = vpop.f32.mrb[0].mxu0
        %9568 = vmatprep.mubr.f32.mxu0 0.0
        %9569 = vmatmul.mubr.f32.gmra.mrb[0].mxu0 %v9451
        %v9570 = vpop.f32.mrb[0].mxu0
        %v9571 = vadd.f32 %v9439, %v9570
        %v9572 = vpop.f32.mrb[0].mxu0
        %9573 = vmatprep.mubr.f32.mxu0 0.0
        %9574 = vmatmul.mubr.f32.gmra.mrb[0].mxu0 %v9454
        %v9575 = vpop.f32.mrb[0].mxu0
        %v9576 = vadd.f32 %v9439, %v9575
        %v9577 = vpop.f32.mrb[0].mxu0
        %9578 = vmatprep.mubr.f32.mxu0 0.0
        %9579 = vmatmul.mubr.f32.gmra.mrb[0].mxu0 %v9457
        %v9580 = vpop.f32.mrb[0].mxu0
        %v9581 = vadd.f32 %v9439, %v9580
        %v9582 = vpop.f32.mrb[0].mxu0
        %9583 = vmatprep.mubr.f32.mxu0 0.0
        %9584 = vmatmul.mubr.f32.gmra.mrb[0].mxu0 %v9460
        %v9585 = vpop.f32.mrb[0].mxu0
        %v9586 = vadd.f32 %v9439, %v9585
        %v9587 = vpop.f32.mrb[0].mxu0
        %9588 = vmatprep.mubr.f32.mxu0 0.0
        %9589 = vmatmul.mubr.f32.gmra.mrb[0].mxu0 %v9463
        %v9590 = vpop.f32.mrb[0].mxu0
        %v9591 = vadd.f32 %v9439, %v9590
        %v9592 = vpop.f32.mrb[0].mxu0
        %9593 = vmatprep.mubr.f32.mxu0 0.0
        %9594 = vmatmul.mubr.f32.gmra.mrb[0].mxu0 %v9466
        %v9595 = vpop.f32.mrb[0].mxu0
        %v9596 = vadd.f32 %v9439, %v9595
        %v9597 = vpop.f32.mrb[0].mxu0
        %9598 = vmatprep.mubr.f32.mxu0 0.0
        %9599 = vmatmul.mubr.f32.gmra.mrb[0].mxu0 %v9469
        %v9600 = vpop.f32.mrb[0].mxu0
        %v9601 = vadd.f32 %v9439, %v9600
        %v9602 = vpop.f32.mrb[0].mxu0
        %9603 = vmatprep.mubr.f32.mxu0 0.0
        %9604 = vmatmul.mubr.f32.gmra.mrb[0].mxu0 %v9472
        %v9605 = vpop.f32.mrb[0].mxu0
        %v9606 = vadd.f32 %v9439, %v9605
        %v9607 = vpop.f32.mrb[0].mxu0
        %9608 = vmatprep.mubr.f32.mxu0 0.0
        %9609 = vmatmul.mubr.f32.gmra.mrb[0].mxu0 %v9475
        %v9610 = vpop.f32.mrb[0].mxu0
        %v9611 = vadd.f32 %v9439, %v9610
        %v9612 = vpop.f32.mrb[0].mxu0
        %9613 = vmatprep.mubr.f32.mxu0 0.0
        %9614 = vmatmul.mubr.f32.gmra.mrb[0].mxu0 %v9478
        %v9615 = vpop.f32.mrb[0].mxu0
        %v9616 = vadd.f32 %v9439, %v9615
        %v9617 = vpop.f32.mrb[0].mxu0
        %9618 = vmatprep.mubr.f32.mxu0 0.0
        %9619 = vmatmul.mubr.f32.gmra.mrb[0].mxu0 %v9481
        %v9620 = vpop.f32.mrb[0].mxu0
        %v9621 = vadd.f32 %v9439, %v9620
        %v9622 = vpop.f32.mrb[0].mxu0
        %9623 = vmatprep.mubr.f32.mxu0 0.0
        %9624 = vmatmul.mubr.f32.gmra.mrb[0].mxu0 %v9484
        %v9625 = vpop.f32.mrb[0].mxu0
        %v9626 = vadd.f32 %v9439, %v9625
        %v9627 = vpop.f32.mrb[0].mxu0
        %9628 = vmatprep.mubr.f32.mxu0 0.0
        %9629 = vmatmul.mubr.f32.gmra.mrb[0].mxu0 %v9487
        %v9630 = vpop.f32.mrb[0].mxu0
        %v9631 = vadd.f32 %v9439, %v9630
        %v9632 = vpop.f32.mrb[0].mxu0
        %9633 = vdwg.mxu0
        %v9634 = vadd.f32 %v9188, %v9556
        %v9635 = vadd.f32 %v9189, %v9561
        %v9636 = vadd.f32 %v9190, %v9566
        %v9637 = vadd.f32 %v9191, %v9571
        %v9638 = vadd.f32 %v9192, %v9576
        %v9639 = vadd.f32 %v9193, %v9581
        %v9640 = vadd.f32 %v9194, %v9586
        %v9641 = vadd.f32 %v9195, %v9591
        %v9642 = vadd.f32 %v9196, %v9596
        %v9643 = vadd.f32 %v9197, %v9601
        %v9644 = vadd.f32 %v9198, %v9606
        %v9645 = vadd.f32 %v9199, %v9611
        %v9646 = vadd.f32 %v9200, %v9616
        %v9647 = vadd.f32 %v9201, %v9621
        %v9648 = vadd.f32 %v9202, %v9626
        %v9649 = vadd.f32 %v9203, %v9631
        %s9650 = scalar_lea.vmem %s13, 1
        %v9651 = vld [vmem:[%s9650] sm:$0x1]
        %s9652 = scalar_lea.vmem %s14, 1
        %v9653 = vld [vmem:[%s9652] sm:$0x1]
        %v9654 = vsel %vm1131, %v9634, 0.0
        %9655 = vadd.xlane.f32.xlu0 %v9654
        %v9656 = vpop.xlane.xlu0 %9655
        %v9657 = vsel %vm1131, %v9635, 0.0
        %9658 = vadd.xlane.f32.xlu0 %v9657
        %v9659 = vpop.xlane.xlu0 %9658
        %v9660 = vsel %vm1131, %v9636, 0.0
        %9661 = vadd.xlane.f32.xlu0 %v9660
        %v9662 = vpop.xlane.xlu0 %9661
        %v9663 = vsel %vm1131, %v9637, 0.0
        %9664 = vadd.xlane.f32.xlu0 %v9663
        %v9665 = vpop.xlane.xlu0 %9664
        %v9666 = vsel %vm1131, %v9638, 0.0
        %9667 = vadd.xlane.f32.xlu0 %v9666
        %v9668 = vpop.xlane.xlu0 %9667
        %v9669 = vsel %vm1131, %v9639, 0.0
        %9670 = vadd.xlane.f32.xlu0 %v9669
        %v9671 = vpop.xlane.xlu0 %9670
        %v9672 = vsel %vm1131, %v9640, 0.0
        %9673 = vadd.xlane.f32.xlu0 %v9672
        %v9674 = vpop.xlane.xlu0 %9673
        %v9675 = vsel %vm1131, %v9641, 0.0
        %9676 = vadd.xlane.f32.xlu0 %v9675
        %v9677 = vpop.xlane.xlu0 %9676
        %v9678 = vsel %vm1131, %v9642, 0.0
        %9679 = vadd.xlane.f32.xlu0 %v9678
        %v9680 = vpop.xlane.xlu0 %9679
        %v9681 = vsel %vm1131, %v9643, 0.0
        %9682 = vadd.xlane.f32.xlu0 %v9681
        %v9683 = vpop.xlane.xlu0 %9682
        %v9684 = vsel %vm1131, %v9644, 0.0
        %9685 = vadd.xlane.f32.xlu0 %v9684
        %v9686 = vpop.xlane.xlu0 %9685
        %v9687 = vsel %vm1131, %v9645, 0.0
        %9688 = vadd.xlane.f32.xlu0 %v9687
        %v9689 = vpop.xlane.xlu0 %9688
        %v9690 = vsel %vm1131, %v9646, 0.0
        %9691 = vadd.xlane.f32.xlu0 %v9690
        %v9692 = vpop.xlane.xlu0 %9691
        %v9693 = vsel %vm1131, %v9647, 0.0
        %9694 = vadd.xlane.f32.xlu0 %v9693
        %v9695 = vpop.xlane.xlu0 %9694
        %v9696 = vsel %vm1131, %v9648, 0.0
        %9697 = vadd.xlane.f32.xlu0 %v9696
        %v9698 = vpop.xlane.xlu0 %9697
        %v9699 = vsel %vm1131, %v9649, 0.0
        %9700 = vadd.xlane.f32.xlu0 %v9699
        %v9701 = vpop.xlane.xlu0 %9700
        %v9702 = vmul.f32 %v9656, %v4326
        %v9703 = vmul.f32 %v9659, %v4326
        %v9704 = vmul.f32 %v9662, %v4326
        %v9705 = vmul.f32 %v9665, %v4326
        %v9706 = vmul.f32 %v9668, %v4326
        %v9707 = vmul.f32 %v9671, %v4326
        %v9708 = vmul.f32 %v9674, %v4326
        %v9709 = vmul.f32 %v9677, %v4326
        %v9710 = vmul.f32 %v9680, %v4326
        %v9711 = vmul.f32 %v9683, %v4326
        %v9712 = vmul.f32 %v9686, %v4326
        %v9713 = vmul.f32 %v9689, %v4326
        %v9714 = vmul.f32 %v9692, %v4326
        %v9715 = vmul.f32 %v9695, %v4326
        %v9716 = vmul.f32 %v9698, %v4326
        %v9717 = vmul.f32 %v9701, %v4326
        %v9718 = vsub.f32 %v9634, %v9702
        %v9719 = vsub.f32 %v9635, %v9703
        %v9720 = vsub.f32 %v9636, %v9704
        %v9721 = vsub.f32 %v9637, %v9705
        %v9722 = vsub.f32 %v9638, %v9706
        %v9723 = vsub.f32 %v9639, %v9707
        %v9724 = vsub.f32 %v9640, %v9708
        %v9725 = vsub.f32 %v9641, %v9709
        %v9726 = vsub.f32 %v9642, %v9710
        %v9727 = vsub.f32 %v9643, %v9711
        %v9728 = vsub.f32 %v9644, %v9712
        %v9729 = vsub.f32 %v9645, %v9713
        %v9730 = vsub.f32 %v9646, %v9714
        %v9731 = vsub.f32 %v9647, %v9715
        %v9732 = vsub.f32 %v9648, %v9716
        %v9733 = vsub.f32 %v9649, %v9717
        %v9734 = vmul.f32 %v9718, %v9718
        %v9735 = vmul.f32 %v9719, %v9719
        %v9736 = vmul.f32 %v9720, %v9720
        %v9737 = vmul.f32 %v9721, %v9721
        %v9738 = vmul.f32 %v9722, %v9722
        %v9739 = vmul.f32 %v9723, %v9723
        %v9740 = vmul.f32 %v9724, %v9724
        %v9741 = vmul.f32 %v9725, %v9725
        %v9742 = vmul.f32 %v9726, %v9726
        %v9743 = vmul.f32 %v9727, %v9727
        %v9744 = vmul.f32 %v9728, %v9728
        %v9745 = vmul.f32 %v9729, %v9729
        %v9746 = vmul.f32 %v9730, %v9730
        %v9747 = vmul.f32 %v9731, %v9731
        %v9748 = vmul.f32 %v9732, %v9732
        %v9749 = vmul.f32 %v9733, %v9733
        %v9750 = vsel %vm1131, %v9734, 0.0
        %9751 = vadd.xlane.f32.xlu0 %v9750
        %v9752 = vpop.xlane.xlu0 %9751
        %v9753 = vsel %vm1131, %v9735, 0.0
        %9754 = vadd.xlane.f32.xlu0 %v9753
        %v9755 = vpop.xlane.xlu0 %9754
        %v9756 = vsel %vm1131, %v9736, 0.0
        %9757 = vadd.xlane.f32.xlu0 %v9756
        %v9758 = vpop.xlane.xlu0 %9757
        %v9759 = vsel %vm1131, %v9737, 0.0
        %9760 = vadd.xlane.f32.xlu0 %v9759
        %v9761 = vpop.xlane.xlu0 %9760
        %v9762 = vsel %vm1131, %v9738, 0.0
        %9763 = vadd.xlane.f32.xlu0 %v9762
        %v9764 = vpop.xlane.xlu0 %9763
        %v9765 = vsel %vm1131, %v9739, 0.0
        %9766 = vadd.xlane.f32.xlu0 %v9765
        %v9767 = vpop.xlane.xlu0 %9766
        %v9768 = vsel %vm1131, %v9740, 0.0
        %9769 = vadd.xlane.f32.xlu0 %v9768
        %v9770 = vpop.xlane.xlu0 %9769
        %v9771 = vsel %vm1131, %v9741, 0.0
        %9772 = vadd.xlane.f32.xlu0 %v9771
        %v9773 = vpop.xlane.xlu0 %9772
        %v9774 = vsel %vm1131, %v9742, 0.0
        %9775 = vadd.xlane.f32.xlu0 %v9774
        %v9776 = vpop.xlane.xlu0 %9775
        %v9777 = vsel %vm1131, %v9743, 0.0
        %9778 = vadd.xlane.f32.xlu0 %v9777
        %v9779 = vpop.xlane.xlu0 %9778
        %v9780 = vsel %vm1131, %v9744, 0.0
        %9781 = vadd.xlane.f32.xlu0 %v9780
        %v9782 = vpop.xlane.xlu0 %9781
        %v9783 = vsel %vm1131, %v9745, 0.0
        %9784 = vadd.xlane.f32.xlu0 %v9783
        %v9785 = vpop.xlane.xlu0 %9784
        %v9786 = vsel %vm1131, %v9746, 0.0
        %9787 = vadd.xlane.f32.xlu0 %v9786
        %v9788 = vpop.xlane.xlu0 %9787
        %v9789 = vsel %vm1131, %v9747, 0.0
        %9790 = vadd.xlane.f32.xlu0 %v9789
        %v9791 = vpop.xlane.xlu0 %9790
        %v9792 = vsel %vm1131, %v9748, 0.0
        %9793 = vadd.xlane.f32.xlu0 %v9792
        %v9794 = vpop.xlane.xlu0 %9793
        %v9795 = vsel %vm1131, %v9749, 0.0
        %9796 = vadd.xlane.f32.xlu0 %v9795
        %v9797 = vpop.xlane.xlu0 %9796
        %v9798 = vmul.f32 %v9752, %v4326
        %v9799 = vmul.f32 %v9755, %v4326
        %v9800 = vmul.f32 %v9758, %v4326
        %v9801 = vmul.f32 %v9761, %v4326
        %v9802 = vmul.f32 %v9764, %v4326
        %v9803 = vmul.f32 %v9767, %v4326
        %v9804 = vmul.f32 %v9770, %v4326
        %v9805 = vmul.f32 %v9773, %v4326
        %v9806 = vmul.f32 %v9776, %v4326
        %v9807 = vmul.f32 %v9779, %v4326
        %v9808 = vmul.f32 %v9782, %v4326
        %v9809 = vmul.f32 %v9785, %v4326
        %v9810 = vmul.f32 %v9788, %v4326
        %v9811 = vmul.f32 %v9791, %v4326
        %v9812 = vmul.f32 %v9794, %v4326
        %v9813 = vmul.f32 %v9797, %v4326
        %v9815 = vlaneseq
        %v9816 = vshrl.u32 %v9815, 7
        %v9817 = vsub.s32 0, %v9816
        %v9818 = vrot.slane %v9651, %v9817
        %v9820 = vmul.f32 %v9818, %v9718
        %v9821 = vmul.f32 %v9818, %v9719
        %v9822 = vmul.f32 %v9818, %v9720
        %v9823 = vmul.f32 %v9818, %v9721
        %v9824 = vmul.f32 %v9818, %v9722
        %v9825 = vmul.f32 %v9818, %v9723
        %v9826 = vmul.f32 %v9818, %v9724
        %v9827 = vmul.f32 %v9818, %v9725
        %v9828 = vmul.f32 %v9818, %v9726
        %v9829 = vmul.f32 %v9818, %v9727
        %v9830 = vmul.f32 %v9818, %v9728
        %v9831 = vmul.f32 %v9818, %v9729
        %v9832 = vmul.f32 %v9818, %v9730
        %v9833 = vmul.f32 %v9818, %v9731
        %v9834 = vmul.f32 %v9818, %v9732
        %v9835 = vmul.f32 %v9818, %v9733
        %v9836 = vadd.f32 %v9798, 1e-05
        %v9837 = vadd.f32 %v9799, 1e-05
        %v9838 = vadd.f32 %v9800, 1e-05
        %v9839 = vadd.f32 %v9801, 1e-05
        %v9840 = vadd.f32 %v9802, 1e-05
        %v9841 = vadd.f32 %v9803, 1e-05
        %v9842 = vadd.f32 %v9804, 1e-05
        %v9843 = vadd.f32 %v9805, 1e-05
        %v9844 = vadd.f32 %v9806, 1e-05
        %v9845 = vadd.f32 %v9807, 1e-05
        %v9846 = vadd.f32 %v9808, 1e-05
        %v9847 = vadd.f32 %v9809, 1e-05
        %v9848 = vadd.f32 %v9810, 1e-05
        %v9849 = vadd.f32 %v9811, 1e-05
        %v9850 = vadd.f32 %v9812, 1e-05
        %v9851 = vadd.f32 %v9813, 1e-05
        %v9852 = vrsqrt.pop %v9836
        %v9853 = vmul.f32 %v9836, %v9852
        %vm9854 = vcmp.eq.f32.partialorder %v9836, inf
        %v9855 = vsel %vm9854, %v9836, %v9853
        %vm9856 = vcmp.eq.f32.partialorder %v9836, 0.0
        %v9857 = vand.u32 %v9836, 2147483648
        %v9858 = vsel %vm9856, %v9857, %v9855
        %v9859 = vrsqrt.pop %v9837
        %v9860 = vmul.f32 %v9837, %v9859
        %vm9861 = vcmp.eq.f32.partialorder %v9837, inf
        %v9862 = vsel %vm9861, %v9837, %v9860
        %vm9863 = vcmp.eq.f32.partialorder %v9837, 0.0
        %v9864 = vand.u32 %v9837, 2147483648
        %v9865 = vsel %vm9863, %v9864, %v9862
        %v9866 = vrsqrt.pop %v9838
        %v9867 = vmul.f32 %v9838, %v9866
        %vm9868 = vcmp.eq.f32.partialorder %v9838, inf
        %v9869 = vsel %vm9868, %v9838, %v9867
        %vm9870 = vcmp.eq.f32.partialorder %v9838, 0.0
        %v9871 = vand.u32 %v9838, 2147483648
        %v9872 = vsel %vm9870, %v9871, %v9869
        %v9873 = vrsqrt.pop %v9839
        %v9874 = vmul.f32 %v9839, %v9873
        %vm9875 = vcmp.eq.f32.partialorder %v9839, inf
        %v9876 = vsel %vm9875, %v9839, %v9874
        %vm9877 = vcmp.eq.f32.partialorder %v9839, 0.0
        %v9878 = vand.u32 %v9839, 2147483648
        %v9879 = vsel %vm9877, %v9878, %v9876
        %v9880 = vrsqrt.pop %v9840
        %v9881 = vmul.f32 %v9840, %v9880
        %vm9882 = vcmp.eq.f32.partialorder %v9840, inf
        %v9883 = vsel %vm9882, %v9840, %v9881
        %vm9884 = vcmp.eq.f32.partialorder %v9840, 0.0
        %v9885 = vand.u32 %v9840, 2147483648
        %v9886 = vsel %vm9884, %v9885, %v9883
        %v9887 = vrsqrt.pop %v9841
        %v9888 = vmul.f32 %v9841, %v9887
        %vm9889 = vcmp.eq.f32.partialorder %v9841, inf
        %v9890 = vsel %vm9889, %v9841, %v9888
        %vm9891 = vcmp.eq.f32.partialorder %v9841, 0.0
        %v9892 = vand.u32 %v9841, 2147483648
        %v9893 = vsel %vm9891, %v9892, %v9890
        %v9894 = vrsqrt.pop %v9842
        %v9895 = vmul.f32 %v9842, %v9894
        %vm9896 = vcmp.eq.f32.partialorder %v9842, inf
        %v9897 = vsel %vm9896, %v9842, %v9895
        %vm9898 = vcmp.eq.f32.partialorder %v9842, 0.0
        %v9899 = vand.u32 %v9842, 2147483648
        %v9900 = vsel %vm9898, %v9899, %v9897
        %v9901 = vrsqrt.pop %v9843
        %v9902 = vmul.f32 %v9843, %v9901
        %vm9903 = vcmp.eq.f32.partialorder %v9843, inf
        %v9904 = vsel %vm9903, %v9843, %v9902
        %vm9905 = vcmp.eq.f32.partialorder %v9843, 0.0
        %v9906 = vand.u32 %v9843, 2147483648
        %v9907 = vsel %vm9905, %v9906, %v9904
        %v9908 = vrsqrt.pop %v9844
        %v9909 = vmul.f32 %v9844, %v9908
        %vm9910 = vcmp.eq.f32.partialorder %v9844, inf
        %v9911 = vsel %vm9910, %v9844, %v9909
        %vm9912 = vcmp.eq.f32.partialorder %v9844, 0.0
        %v9913 = vand.u32 %v9844, 2147483648
        %v9914 = vsel %vm9912, %v9913, %v9911
        %v9915 = vrsqrt.pop %v9845
        %v9916 = vmul.f32 %v9845, %v9915
        %vm9917 = vcmp.eq.f32.partialorder %v9845, inf
        %v9918 = vsel %vm9917, %v9845, %v9916
        %vm9919 = vcmp.eq.f32.partialorder %v9845, 0.0
        %v9920 = vand.u32 %v9845, 2147483648
        %v9921 = vsel %vm9919, %v9920, %v9918
        %v9922 = vrsqrt.pop %v9846
        %v9923 = vmul.f32 %v9846, %v9922
        %vm9924 = vcmp.eq.f32.partialorder %v9846, inf
        %v9925 = vsel %vm9924, %v9846, %v9923
        %vm9926 = vcmp.eq.f32.partialorder %v9846, 0.0
        %v9927 = vand.u32 %v9846, 2147483648
        %v9928 = vsel %vm9926, %v9927, %v9925
        %v9929 = vrsqrt.pop %v9847
        %v9930 = vmul.f32 %v9847, %v9929
        %vm9931 = vcmp.eq.f32.partialorder %v9847, inf
        %v9932 = vsel %vm9931, %v9847, %v9930
        %vm9933 = vcmp.eq.f32.partialorder %v9847, 0.0
        %v9934 = vand.u32 %v9847, 2147483648
        %v9935 = vsel %vm9933, %v9934, %v9932
        %v9936 = vrsqrt.pop %v9848
        %v9937 = vmul.f32 %v9848, %v9936
        %vm9938 = vcmp.eq.f32.partialorder %v9848, inf
        %v9939 = vsel %vm9938, %v9848, %v9937
        %vm9940 = vcmp.eq.f32.partialorder %v9848, 0.0
        %v9941 = vand.u32 %v9848, 2147483648
        %v9942 = vsel %vm9940, %v9941, %v9939
        %v9943 = vrsqrt.pop %v9849
        %v9944 = vmul.f32 %v9849, %v9943
        %vm9945 = vcmp.eq.f32.partialorder %v9849, inf
        %v9946 = vsel %vm9945, %v9849, %v9944
        %vm9947 = vcmp.eq.f32.partialorder %v9849, 0.0
        %v9948 = vand.u32 %v9849, 2147483648
        %v9949 = vsel %vm9947, %v9948, %v9946
        %v9950 = vrsqrt.pop %v9850
        %v9951 = vmul.f32 %v9850, %v9950
        %vm9952 = vcmp.eq.f32.partialorder %v9850, inf
        %v9953 = vsel %vm9952, %v9850, %v9951
        %vm9954 = vcmp.eq.f32.partialorder %v9850, 0.0
        %v9955 = vand.u32 %v9850, 2147483648
        %v9956 = vsel %vm9954, %v9955, %v9953
        %v9957 = vrsqrt.pop %v9851
        %v9958 = vmul.f32 %v9851, %v9957
        %vm9959 = vcmp.eq.f32.partialorder %v9851, inf
        %v9960 = vsel %vm9959, %v9851, %v9958
        %vm9961 = vcmp.eq.f32.partialorder %v9851, 0.0
        %v9962 = vand.u32 %v9851, 2147483648
        %v9963 = vsel %vm9961, %v9962, %v9960
        %v9964 = vrcp.pop %v9858
        %v9965 = vmul.f32 %v9820, %v9964
        %v9966 = vrcp.pop %v9865
        %v9967 = vmul.f32 %v9821, %v9966
        %v9968 = vrcp.pop %v9872
        %v9969 = vmul.f32 %v9822, %v9968
        %v9970 = vrcp.pop %v9879
        %v9971 = vmul.f32 %v9823, %v9970
        %v9972 = vrcp.pop %v9886
        %v9973 = vmul.f32 %v9824, %v9972
        %v9974 = vrcp.pop %v9893
        %v9975 = vmul.f32 %v9825, %v9974
        %v9976 = vrcp.pop %v9900
        %v9977 = vmul.f32 %v9826, %v9976
        %v9978 = vrcp.pop %v9907
        %v9979 = vmul.f32 %v9827, %v9978
        %v9980 = vrcp.pop %v9914
        %v9981 = vmul.f32 %v9828, %v9980
        %v9982 = vrcp.pop %v9921
        %v9983 = vmul.f32 %v9829, %v9982
        %v9984 = vrcp.pop %v9928
        %v9985 = vmul.f32 %v9830, %v9984
        %v9986 = vrcp.pop %v9935
        %v9987 = vmul.f32 %v9831, %v9986
        %v9988 = vrcp.pop %v9942
        %v9989 = vmul.f32 %v9832, %v9988
        %v9990 = vrcp.pop %v9949
        %v9991 = vmul.f32 %v9833, %v9990
        %v9992 = vrcp.pop %v9956
        %v9993 = vmul.f32 %v9834, %v9992
        %v9994 = vrcp.pop %v9963
        %v9995 = vmul.f32 %v9835, %v9994
        %v9997 = vlaneseq
        %v9998 = vshrl.u32 %v9997, 7
        %v9999 = vsub.s32 0, %v9998
        %v10000 = vrot.slane %v9653, %v9999
        %v10002 = vadd.f32 %v9965, %v10000
        %v10003 = vadd.f32 %v9967, %v10000
        %v10004 = vadd.f32 %v9969, %v10000
        %v10005 = vadd.f32 %v9971, %v10000
        %v10006 = vadd.f32 %v9973, %v10000
        %v10007 = vadd.f32 %v9975, %v10000
        %v10008 = vadd.f32 %v9977, %v10000
        %v10009 = vadd.f32 %v9979, %v10000
        %v10010 = vadd.f32 %v9981, %v10000
        %v10011 = vadd.f32 %v9983, %v10000
        %v10012 = vadd.f32 %v9985, %v10000
        %v10013 = vadd.f32 %v9987, %v10000
        %v10014 = vadd.f32 %v9989, %v10000
        %v10015 = vadd.f32 %v9991, %v10000
        %v10016 = vadd.f32 %v9993, %v10000
        %v10017 = vadd.f32 %v9995, %v10000
        %10019 = vrot.lane.b32.xlu0 %v10003, 16
        %v10020 = vpop.permute.xlu0 %10019
        %10023 = vrot.lane.b32.xlu0 %v10004, 32
        %v10024 = vpop.permute.xlu0 %10023
        %10027 = vrot.lane.b32.xlu0 %v10005, 48
        %v10028 = vpop.permute.xlu0 %10027
        %10031 = vrot.lane.b32.xlu0 %v10006, 64
        %v10032 = vpop.permute.xlu0 %10031
        %10035 = vrot.lane.b32.xlu0 %v10007, 80
        %v10036 = vpop.permute.xlu0 %10035
        %10039 = vrot.lane.b32.xlu0 %v10008, 96
        %v10040 = vpop.permute.xlu0 %10039
        %10043 = vrot.lane.b32.xlu0 %v10009, 112
        %v10044 = vpop.permute.xlu0 %10043
        %10047 = vrot.lane.b32.xlu0 %v10011, 16
        %v10048 = vpop.permute.xlu0 %10047
        %10051 = vrot.lane.b32.xlu0 %v10012, 32
        %v10052 = vpop.permute.xlu0 %10051
        %10055 = vrot.lane.b32.xlu0 %v10013, 48
        %v10056 = vpop.permute.xlu0 %10055
        %10059 = vrot.lane.b32.xlu0 %v10014, 64
        %v10060 = vpop.permute.xlu0 %10059
        %10063 = vrot.lane.b32.xlu0 %v10015, 80
        %v10064 = vpop.permute.xlu0 %10063
        %10067 = vrot.lane.b32.xlu0 %v10016, 96
        %v10068 = vpop.permute.xlu0 %10067
        %10071 = vrot.lane.b32.xlu0 %v10017, 112
        %v10072 = vpop.permute.xlu0 %10071
        %v10074 = vsel %vm1131, %v10002, %v10020
        %v10075 = vsel %vm1148, %v10074, %v10024
        %v10076 = vsel %vm1165, %v10075, %v10028
        %v10077 = vsel %vm1210, %v10076, %v10032
        %vm10078 = vcmask 654336
        %v10079 = vsel %vm10078, %v10077, %v10036
        %vm10080 = vcmask 785408
        %v10081 = vsel %vm10080, %v10079, %v10040
        %vm10082 = vcmask 916480
        %v10083 = vsel %vm10082, %v10081, %v10044
        %v10084 = vsel %vm1131, %v10010, %v10048
        %v10085 = vsel %vm1148, %v10084, %v10052
        %v10086 = vsel %vm1165, %v10085, %v10056
        %v10087 = vsel %vm1210, %v10086, %v10060
        %v10088 = vsel %vm10078, %v10087, %v10064
        %v10089 = vsel %vm10080, %v10088, %v10068
        %v10090 = vsel %vm10082, %v10089, %v10072
        %v10091 = vld [vmem:[%s15] sm:$0xff]
        %v10092 = vld [vmem:[%s15 + $0x8] sm:$0xff]
        %v10093 = vld [vmem:[%s15 + $0x10] sm:$0xff]
        %v10094 = vld [vmem:[%s15 + $0x18] sm:$0xff]
        %v10095 = vld [vmem:[%s15 + $0x20] sm:$0xff]
        %v10096 = vld [vmem:[%s15 + $0x28] sm:$0xff]
        %v10097 = vld [vmem:[%s15 + $0x30] sm:$0xff]
        %v10098 = vld [vmem:[%s15 + $0x38] sm:$0xff]
        %v10099 = vld [vmem:[%s15 + $0x40] sm:$0xff]
        %v10100 = vld [vmem:[%s15 + $0x48] sm:$0xff]
        %v10101 = vld [vmem:[%s15 + $0x50] sm:$0xff]
        %v10102 = vld [vmem:[%s15 + $0x58] sm:$0xff]
        %v10103 = vld [vmem:[%s15 + $0x60] sm:$0xff]
        %v10104 = vld [vmem:[%s15 + $0x68] sm:$0xff]
        %v10105 = vld [vmem:[%s15 + $0x70] sm:$0xff]
        %v10106 = vld [vmem:[%s15 + $0x78] sm:$0xff]
        %v10107 = vld [vmem:[%s15 + $0x80] sm:$0xff]
        %v10108 = vld [vmem:[%s15 + $0x88] sm:$0xff]
        %v10109 = vld [vmem:[%s15 + $0x90] sm:$0xff]
        %v10110 = vld [vmem:[%s15 + $0x98] sm:$0xff]
        %v10111 = vld [vmem:[%s15 + $0xa0] sm:$0xff]
        %v10112 = vld [vmem:[%s15 + $0xa8] sm:$0xff]
        %v10113 = vld [vmem:[%s15 + $0xb0] sm:$0xff]
        %v10114 = vld [vmem:[%s15 + $0xb8] sm:$0xff]
        %v10115 = vld [vmem:[%s15 + $0xc0] sm:$0xff]
        %v10116 = vld [vmem:[%s15 + $0xc8] sm:$0xff]
        %v10117 = vld [vmem:[%s15 + $0xd0] sm:$0xff]
        %v10118 = vld [vmem:[%s15 + $0xd8] sm:$0xff]
        %v10119 = vld [vmem:[%s15 + $0xe0] sm:$0xff]
        %v10120 = vld [vmem:[%s15 + $0xe8] sm:$0xff]
        %v10121 = vld [vmem:[%s15 + $0xf0] sm:$0xff]
        %v10122 = vld [vmem:[%s15 + $0xf8] sm:$0xff]
        %v10123 = vld [vmem:[%s16] sm:$0x1]
        %v10125 = vlaneseq
        %v10126 = vshrl.u32 %v10125, 7
        %v10127 = vsub.s32 0, %v10126
        %v10128 = vrot.slane %v10123, %v10127
        %10130 = vmatprep.subr.mxu0 0.0
        %10131 = vmatpush1.msra.mxu0 %v10091
        %10132 = vmatprep.subr.mxu0 0.0
        %10133 = vmatpush1.msra.mxu0 %v10092
        %10134 = vmatprep.subr.mxu0 0.0
        %10135 = vmatpush1.msra.mxu0 %v10093
        %10136 = vmatprep.subr.mxu0 0.0
        %10137 = vmatpush1.msra.mxu0 %v10094
        %10138 = vmatprep.subr.mxu0 0.0
        %10139 = vmatpush1.msra.mxu0 %v10095
        %10140 = vmatprep.subr.mxu0 0.0
        %10141 = vmatpush1.msra.mxu0 %v10096
        %10142 = vmatprep.subr.mxu0 0.0
        %10143 = vmatpush1.msra.mxu0 %v10097
        %10144 = vmatprep.subr.mxu0 0.0
        %10145 = vmatpush1.msra.mxu0 %v10098
        %10146 = vmatprep.subr.mxu0 0.0
        %10147 = vmatpush1.msra.mxu0 %v10099
        %10148 = vmatprep.subr.mxu0 0.0
        %10149 = vmatpush1.msra.mxu0 %v10100
        %10150 = vmatprep.subr.mxu0 0.0
        %10151 = vmatpush1.msra.mxu0 %v10101
        %10152 = vmatprep.subr.mxu0 0.0
        %10153 = vmatpush1.msra.mxu0 %v10102
        %10154 = vmatprep.subr.mxu0 0.0
        %10155 = vmatpush1.msra.mxu0 %v10103
        %10156 = vmatprep.subr.mxu0 0.0
        %10157 = vmatpush1.msra.mxu0 %v10104
        %10158 = vmatprep.subr.mxu0 0.0
        %10159 = vmatpush1.msra.mxu0 %v10105
        %10160 = vmatprep.subr.mxu0 0.0
        %10161 = vmatpush1.msra.mxu0 %v10106
        %10162 = vmatprep.subr.mxu0 0.0
        %10163 = vmatpush1.msra.mxu0 %v10107
        %10164 = vmatprep.subr.mxu0 0.0
        %10165 = vmatpush1.msra.mxu0 %v10108
        %10166 = vmatprep.subr.mxu0 0.0
        %10167 = vmatpush1.msra.mxu0 %v10109
        %10168 = vmatprep.subr.mxu0 0.0
        %10169 = vmatpush1.msra.mxu0 %v10110
        %10170 = vmatprep.subr.mxu0 0.0
        %10171 = vmatpush1.msra.mxu0 %v10111
        %10172 = vmatprep.subr.mxu0 0.0
        %10173 = vmatpush1.msra.mxu0 %v10112
        %10174 = vmatprep.subr.mxu0 0.0
        %10175 = vmatpush1.msra.mxu0 %v10113
        %10176 = vmatprep.subr.mxu0 0.0
        %10177 = vmatpush1.msra.mxu0 %v10114
        %10178 = vmatprep.subr.mxu0 0.0
        %10179 = vmatpush1.msra.mxu0 %v10115
        %10180 = vmatprep.subr.mxu0 0.0
        %10181 = vmatpush1.msra.mxu0 %v10116
        %10182 = vmatprep.subr.mxu0 0.0
        %10183 = vmatpush1.msra.mxu0 %v10117
        %10184 = vmatprep.subr.mxu0 0.0
        %10185 = vmatpush1.msra.mxu0 %v10118
        %10186 = vmatprep.subr.mxu0 0.0
        %10187 = vmatpush1.msra.mxu0 %v10119
        %10188 = vmatprep.subr.mxu0 0.0
        %10189 = vmatpush1.msra.mxu0 %v10120
        %10190 = vmatprep.subr.mxu0 0.0
        %10191 = vmatpush1.msra.mxu0 %v10121
        %10192 = vmatprep.subr.mxu0 0.0
        %10193 = vmatpush1.msra.mxu0 %v10122
        %10194 = vmatprep.mubr.f32.mxu0 %v10090
        %10195 = vmatmul.mubr.f32.gmra.mrb[0].mxu0 %v10083
        %v10196 = vpop.f32.mrb[0].mxu0
        %v10197 = vadd.f32 %v10128, %v10196
        %v10198 = vpop.f32.mrb[0].mxu0
        %10199 = vdwg.mxu0
        %v10200 = vmax.f32 %v10197, 0.0
        %v10201 = vld [vmem:[%s17] sm:$0xff]
        %v10202 = vld [vmem:[%s17 + $0x8] sm:$0xff]
        %v10203 = vld [vmem:[%s17 + $0x10] sm:$0xff]
        %v10204 = vld [vmem:[%s17 + $0x18] sm:$0xff]
        %v10205 = vld [vmem:[%s17 + $0x20] sm:$0xff]
        %v10206 = vld [vmem:[%s17 + $0x28] sm:$0xff]
        %v10207 = vld [vmem:[%s17 + $0x30] sm:$0xff]
        %v10208 = vld [vmem:[%s17 + $0x38] sm:$0xff]
        %v10209 = vld [vmem:[%s18] sm:$0x1]
        %v10211 = vlaneseq
        %v10212 = vshrl.u32 %v10211, 7
        %v10213 = vsub.s32 0, %v10212
        %v10214 = vrot.slane %v10209, %v10213
        %v10217 = vsel %vm1210, %v10200, 0
        %10219 = vmatprep.subr.mxu0 0.0
        %10220 = vmatpush1.msra.mxu0 %v10201
        %10221 = vmatprep.subr.mxu0 0.0
        %10222 = vmatpush1.msra.mxu0 %v10202
        %10223 = vmatprep.subr.mxu0 0.0
        %10224 = vmatpush1.msra.mxu0 %v10203
        %10225 = vmatprep.subr.mxu0 0.0
        %10226 = vmatpush1.msra.mxu0 %v10204
        %10227 = vmatprep.subr.mxu0 0.0
        %10228 = vmatpush1.msra.mxu0 %v10205
        %10229 = vmatprep.subr.mxu0 0.0
        %10230 = vmatpush1.msra.mxu0 %v10206
        %10231 = vmatprep.subr.mxu0 0.0
        %10232 = vmatpush1.msra.mxu0 %v10207
        %10233 = vmatprep.subr.mxu0 0.0
        %10234 = vmatpush1.msra.mxu0 %v10208
        %10235 = vmatprep.subr.mxu0 0.0
        %10236 = vmatpush1.msra.mxu0 0.0
        %10237 = vmatprep.subr.mxu0 0.0
        %10238 = vmatpush1.msra.mxu0 0.0
        %10239 = vmatprep.subr.mxu0 0.0
        %10240 = vmatpush1.msra.mxu0 0.0
        %10241 = vmatprep.subr.mxu0 0.0
        %10242 = vmatpush1.msra.mxu0 0.0
        %10243 = vmatprep.subr.mxu0 0.0
        %10244 = vmatpush1.msra.mxu0 0.0
        %10245 = vmatprep.subr.mxu0 0.0
        %10246 = vmatpush1.msra.mxu0 0.0
        %10247 = vmatprep.subr.mxu0 0.0
        %10248 = vmatpush1.msra.mxu0 0.0
        %10249 = vmatprep.subr.mxu0 0.0
        %10250 = vmatpush1.msra.mxu0 0.0
        %10251 = vmatprep.subr.mxu0 0.0
        %10252 = vmatpush1.msra.mxu0 0.0
        %10253 = vmatprep.subr.mxu0 0.0
        %10254 = vmatpush1.msra.mxu0 0.0
        %10255 = vmatprep.subr.mxu0 0.0
        %10256 = vmatpush1.msra.mxu0 0.0
        %10257 = vmatprep.subr.mxu0 0.0
        %10258 = vmatpush1.msra.mxu0 0.0
        %10259 = vmatprep.subr.mxu0 0.0
        %10260 = vmatpush1.msra.mxu0 0.0
        %10261 = vmatprep.subr.mxu0 0.0
        %10262 = vmatpush1.msra.mxu0 0.0
        %10263 = vmatprep.subr.mxu0 0.0
        %10264 = vmatpush1.msra.mxu0 0.0
        %10265 = vmatprep.subr.mxu0 0.0
        %10266 = vmatpush1.msra.mxu0 0.0
        %10267 = vmatprep.subr.mxu0 0.0
        %10268 = vmatpush1.msra.mxu0 0.0
        %10269 = vmatprep.subr.mxu0 0.0
        %10270 = vmatpush1.msra.mxu0 0.0
        %10271 = vmatprep.subr.mxu0 0.0
        %10272 = vmatpush1.msra.mxu0 0.0
        %10273 = vmatprep.subr.mxu0 0.0
        %10274 = vmatpush1.msra.mxu0 0.0
        %10275 = vmatprep.subr.mxu0 0.0
        %10276 = vmatpush1.msra.mxu0 0.0
        %10277 = vmatprep.subr.mxu0 0.0
        %10278 = vmatpush1.msra.mxu0 0.0
        %10279 = vmatprep.subr.mxu0 0.0
        %10280 = vmatpush1.msra.mxu0 0.0
        %10281 = vmatprep.subr.mxu0 0.0
        %10282 = vmatpush1.msra.mxu0 0.0
        %10283 = vmatprep.mubr.f32.mxu0 0.0
        %10284 = vmatmul.mubr.f32.gmra.mrb[0].mxu0 %v10217
        %v10285 = vpop.f32.mrb[0].mxu0
        %v10286 = vadd.f32 %v10214, %v10285
        %v10287 = vpop.f32.mrb[0].mxu0
        %10288 = vdwg.mxu0
        %v10289 = vmax.f32 %v10286, 0.0
        %10290 = vst.msk [vmem:[%s595] sm:$0xff] %vm1148, %v10289
        %s10291 = sand.u32 %s445, 1
        %s10292 = scalar_lea.sflag [#allocation3], %s10291
        %s10293 = sand.u32 %s445, 1
        %s10294 = smul.addr %s10293, 8
        %s10295 = scalar_lea.vmem [#allocation2], %s10294
        // Predicated region
        $region97: #{conv_transformer_fe.1} parent=95 // pred_check
          %p10296 = pneg %p455
        $region98: #{conv_transformer_fe.1} parent=95 // pred_check_branch
          %10298 = sbr.rel (%p10296) target = $region100
        $region99: #{conv_transformer_fe.1} parent=95 // pred_region
          %s10300 = ssub.s32 128, 128
          %10301 = vsyncadd %s10292, %s10300
          %s10302 = smul.addr %s33, 128
          %s10303 = scalar_lea.hbm %s19, %s10302
          %s10305 = sshll.u32 %s10295, 4
          %s10306 = int_to_ptr.vmem [resolvable:$true] %s10305
          %10308 = dma.vmem_to_hbm [thread:$0]  %s10306, 128, %s10303, %s10292
        $region100: #{conv_transformer_fe.1} parent=95 // pred_fallthru
          _
      $region96: #{conv_transformer_fe.1} parent=5 // pred_fallthru
        _
      %p10309 = scmp.le.s32.totalorder 2, %s28
      // Predicated region
      $region101: #{conv_transformer_fe.1} parent=5 // pred_check
        %p10310 = pneg %p10309
      $region102: #{conv_transformer_fe.1} parent=5 // pred_check_branch
        %10312 = sbr.rel (%p10310) target = $region104
      $region103: #{conv_transformer_fe.1} parent=5 // pred_region
        %s10313 = ssub.s32 %s28, 2
        // Predicated region
        $region105: #{conv_transformer_fe.1} parent=103 // pred_check
          %p10314 = pneg %p461
        $region106: #{conv_transformer_fe.1} parent=103 // pred_check_branch
          %10316 = sbr.rel (%p10314) target = $region108
        $region107: #{conv_transformer_fe.1} parent=103 // pred_region
          %s10317 = sand.u32 %s446, 1
          %s10318 = scalar_lea.sflag [#allocation3], %s10317
          %s10319 = sand.u32 %s446, 1
          %s10320 = smul.addr %s10319, 8
          %s10321 = scalar_lea.vmem [#allocation2], %s10320
          %10322 = dma.done %s10318, 128
        $region108: #{conv_transformer_fe.1} parent=103 // pred_fallthru
          _
      $region104: #{conv_transformer_fe.1} parent=5 // pred_fallthru
        _
    $region6: #{conv_transformer_fe.1} parent=1 // loop_footer
      %s32 = sadd.s32 1, %s28
    $region7: #{conv_transformer_fe.1} parent=1 // loop_footer_branch
      %27 = sbr.rel target = $region3
    $region8: #{conv_transformer_fe.1} parent=1 // loop_exit
      _
    %10323 = vsyncpa [#allocation3], 1
    %s10324 = scalar_lea.sflag [#allocation3], 1
    %10325 = vsyncpa %s10324, 1

</llo_original>
